<compile_context>
chip_gen: v6e
topology: v6e:2x2x1
jax: 0.10.0
libtpu: 0.0.40
codegen_flags: <defaults>
</compile_context>

<pallas_src>
import math
import functools

import jax
import jax.numpy as jnp
from jax.experimental import pallas as pl
from jax.experimental.pallas import tpu as pltpu

KERNEL_SIZE_LAYER = [7, 7]
BN_EPS = 1e-5
C_PAD = 128  # lane-dense channel padding (vreg lane width)


def calculate_imagesize_after_convblocks(input_size, kernel_size=3, stride=1, padding=1):
    conv_size = (input_size - kernel_size + 2 * padding) // stride + 1
    return math.ceil((conv_size - 2) / 2) + 1


# ----------------------------- Pallas kernels ------------------------------

def _conv_block_kernel(a_ref, w_ref, o_ref):
    """One VConv2d -> BatchNorm2d -> ReLU -> MaxPool2d(2,2) block.

    a_ref: (4*Q, D) bf16 im2col matrix; rows are grouped by the position inside
           the 2x2 pooling window (quadrant-major), so the pool is a max of four
           contiguous row blocks.
    w_ref: (D, 128) bf16 weights (all VConv2d s-branches stacked along D, the
           weightFeatureMap folded in, Cout zero-padded to 128 lanes).
    o_ref: (Q, 128) bf16 pooled output, rows ordered (n, h, w).
    """
    q = o_ref.shape[0]
    y = jnp.dot(a_ref[...], w_ref[...], preferred_element_type=jnp.float32)
    # Training-mode BatchNorm2d (gamma=1, beta=0). The VConv2d bias is dropped:
    # the mean subtraction cancels any per-channel constant exactly.
    mean = jnp.mean(y, axis=0, keepdims=True)
    var = jnp.mean(jnp.square(y - mean), axis=0, keepdims=True)
    y = (y - mean) * jax.lax.rsqrt(var + BN_EPS)
    y = jnp.maximum(y, 0.0)                                       # ReLU
    p = jnp.maximum(jnp.maximum(y[0:q, :], y[q:2 * q, :]),        # fused 2x2 max-pool
                    jnp.maximum(y[2 * q:3 * q, :], y[3 * q:4 * q, :]))
    o_ref[...] = p.astype(o_ref.dtype)


def _conv_block_classifier_kernel(a_ref, w_ref, wc_ref, bc_ref, o_ref):
    """Last conv block fused with the Linear classifier.

    a_ref rows are ordered (quadrant, h, w, n) so that after pooling the rows of
    a fixed spatial position are N contiguous rows -> the classifier is a sum of
    per-position (N,128)@(128,128) dots (torch's x.view(N,-1) @ W^T + b).
    """
    n = o_ref.shape[0]
    npos = wc_ref.shape[0]
    q = npos * n
    y = jnp.dot(a_ref[...], w_ref[...], preferred_element_type=jnp.float32)
    mean = jnp.mean(y, axis=0, keepdims=True)
    var = jnp.mean(jnp.square(y - mean), axis=0, keepdims=True)
    y = (y - mean) * jax.lax.rsqrt(var + BN_EPS)
    y = jnp.maximum(y, 0.0)
    p = jnp.maximum(jnp.maximum(y[0:q, :], y[q:2 * q, :]),
                    jnp.maximum(y[2 * q:3 * q, :], y[3 * q:4 * q, :]))
    p = p.astype(jnp.bfloat16)
    acc = jnp.zeros((n, C_PAD), jnp.float32)
    for pos in range(npos):
        acc = acc + jnp.dot(p[pos * n:(pos + 1) * n, :], wc_ref[pos],
                            preferred_element_type=jnp.float32)
    o_ref[...] = acc + bc_ref[...]


def _vmem_call(kernel, out_shape, *args):
    """Everything is tiny -> single grid point, whole arrays resident in VMEM."""
    return pl.pallas_call(
        kernel,
        out_shape=out_shape,
        in_specs=[pl.BlockSpec(memory_space=pltpu.MemorySpace.VMEM)] * len(args),
        out_specs=pl.BlockSpec(memory_space=pltpu.MemorySpace.VMEM),
    )(*args)


# ------------------------------ glue / model -------------------------------

def _vconv_im2col(x_nhwc, k, order):
    """im2col for VConv2d (all s-branches, exact PyTorch crop/re-pad semantics),
    with rows grouped by 2x2-pooling-window quadrant.

    order='nhw' -> within-quadrant row order (n, h, w) (feeds the next block);
    order='hwn' -> (h, w, n) (feeds the fused classifier).
    """
    n, hin, win, cin = x_nhwc.shape
    assert hin == win, "square inputs assumed (as in the reference network)"
    s_num = (k + 1) // 2
    ho = hin - k + 2 + 1                               # stride-1, pad-1 conv output size
    assert ho % 2 == 0, "even conv output assumed"     # TODO(synk): odd-size ceil_mode path
    hp = ho // 2

    g0 = jnp.pad(x_nhwc, ((0, 0), (1, 1), (1, 1), (0, 0)))
    cols = []
    for s in range(s_num):
        ks = k - 2 * s
        if s <= 1:                                     # padding - s >= 0: shared padded grid
            g, off = g0, s
        else:                                          # padding - s < 0: crop by s, re-pad by 1
            g = jnp.pad(x_nhwc[:, s:hin - s, s:win - s, :],
                        ((0, 0), (1, 1), (1, 1), (0, 0)))
            off = 0
        for kh in range(ks):
            for kw in range(ks):
                cols.append(g[:, off + kh:off + kh + ho, off + kw:off + kw + ho, :])
    a = jnp.concatenate(cols, axis=-1)                 # (N, Ho, Ho, T*Cin)
    d = a.shape[-1]
    a = a.reshape(n, hp, 2, hp, 2, d)                  # (n, io, pi, jo, pj, D)
    perm = (2, 4, 0, 1, 3, 5) if order == "nhw" else (2, 4, 1, 3, 0, 5)
    a = jnp.transpose(a, perm)
    return a.reshape(4 * n * hp * hp, d), hp


def student_net9_forward(folded, x_nchw, *, cout, num_classes):
    x = jnp.transpose(x_nchw, (0, 2, 3, 1)).astype(jnp.bfloat16)   # NCHW -> NHWC, bf16
    n = x.shape[0]
    wblocks = folded["w_blocks"]
    nb = len(wblocks)

    for i in range(nb - 1):                                        # all but last block
        a, hp = _vconv_im2col(x, KERNEL_SIZE_LAYER[i], order="nhw")
        y = _vmem_call(_conv_block_kernel,
                       jax.ShapeDtypeStruct((n * hp * hp, C_PAD), jnp.bfloat16),
                       a, wblocks[i])
        x = y.reshape(n, hp, hp, C_PAD)[:, :, :, :cout]            # drop lane padding

    # last block fused with the classifier
    a, hp = _vconv_im2col(x, KERNEL_SIZE_LAYER[nb - 1], order="hwn")
    logits = _vmem_call(_conv_block_classifier_kernel,
                        jax.ShapeDtypeStruct((n, C_PAD), jnp.float32),
                        a, wblocks[nb - 1], folded["wc"], folded["bc"])
    return logits[:, :num_classes]


def fold_params(params, num_classes, feature_size):
    """One-time (hoisted) parameter folding: wfm normalization folded into the
    conv GEMM weights, channel dims zero-padded to 128 lanes, classifier weight
    permuted to (position, channel, class) and padded, everything MXU-ready."""
    def fold_conv(w_oihw, wfm):
        cout, cin, k, _ = w_oihw.shape
        wfm_n = wfm / jnp.sum(wfm)                     # VConv2d renormalizes each forward
        s_num = (k + 1) // 2
        rows = []
        for s in range(s_num):
            ks = k - 2 * s
            for kh in range(ks):
                for kw in range(ks):
                    rows.append(wfm_n[s] * jnp.transpose(w_oihw[:, :, s + kh, s + kw]))
        wmat = jnp.concatenate(rows, axis=0)           # (T*Cin, Cout)
        wmat = jnp.pad(wmat, ((0, 0), (0, C_PAD - cout)))
        return wmat.astype(jnp.bfloat16)

    w_blocks = [fold_conv(w, wfm) for (w, _b, wfm) in params["features"]]
    cout = params["features"][0][0].shape[0]

    w_lin, b_lin = params["classifier"]
    npos = feature_size * feature_size
    wc = w_lin.reshape(num_classes, cout, npos)        # torch view flattens (C, H, W)
    wc = jnp.transpose(wc, (2, 1, 0))                  # (P, C, O)
    wc = jnp.pad(wc, ((0, 0), (0, C_PAD - cout), (0, C_PAD - num_classes)))
    bc = jnp.pad(b_lin, (0, C_PAD - num_classes)).reshape(1, C_PAD).astype(jnp.float32)
    # Conv biases are intentionally dropped: BN(gamma=1, beta=0) cancels them.
    return {"w_blocks": w_blocks, "wc": wc.astype(jnp.bfloat16), "bc": bc}


def init_params(key, in_channels=3, num_classes=12, input_image_size=32):
    """Deterministic re-implementation of Student_net9._initialize_weights."""
    cfg_channels = [12, 12]
    keys = jax.random.split(key, len(KERNEL_SIZE_LAYER) + 1)
    feats = []
    cin = in_channels
    for i, (k, cout) in enumerate(zip(KERNEL_SIZE_LAYER, cfg_channels)):
        fan_out = cout * k * k
        std = math.sqrt(2.0 / fan_out)                 # kaiming_normal_, fan_out, relu
        w = std * jax.random.normal(keys[i], (cout, cin, k, k), jnp.float32)
        b = jnp.zeros((cout,), jnp.float32)            # constant_(bias, 0)
        s_num = (k + 1) // 2
        wfm = jnp.full((s_num,), 1.0 / s_num, jnp.float32)
        feats.append((w, b, wfm))
        cin = cout
    s = input_image_size
    for k in KERNEL_SIZE_LAYER:
        s = calculate_imagesize_after_convblocks(s, kernel_size=k)
    feat_dim = s * s * cfg_channels[-1]
    w_lin = 0.01 * jax.random.normal(keys[-1], (num_classes, feat_dim), jnp.float32)
    b_lin = jnp.zeros((num_classes,), jnp.float32)
    return {"features": feats, "classifier": (w_lin, b_lin)}, s


if __name__ == "__main__":
    key = jax.random.PRNGKey(0)
    pkey, xkey = jax.random.split(key)

    N, Cin, H = 2, 3, 32
    num_classes = 12
    params, feat_size = init_params(pkey, in_channels=Cin,
                                    num_classes=num_classes,
                                    input_image_size=H)
    folded = fold_params(params, num_classes=num_classes, feature_size=feat_size)
    x = jax.random.normal(xkey, (N, Cin, H, H), jnp.float32)

    fwd = jax.jit(functools.partial(student_net9_forward,
                                    cout=params["features"][0][0].shape[0],
                                    num_classes=num_classes))
    out = jax.block_until_ready(fwd(folded, x))

    assert out.shape == (N, num_classes), out.shape
    assert bool(jnp.all(jnp.isfinite(out)))
    print("KERNEL_OK")
</pallas_src>

<mosaic_0001>
module attributes {stable_mosaic.version = 11 : i64} {
  func.func @_conv_block_kernel(%arg0: memref<1568x252xbf16, #tpu.memory_space<vmem>>, %arg1: memref<252x128xbf16, #tpu.memory_space<vmem>>, %arg2: memref<392x128xbf16, #tpu.memory_space<vmem>>) attributes {dimension_semantics = [], scalar_prefetch = 0 : i64, scratch_operands = 0 : i64, tpu.core_type = #tpu.core_type<tc>} {
    %c0 = arith.constant 0 : index
    %c0_0 = arith.constant 0 : index
    %0 = vector.load %arg0[%c0, %c0_0] : memref<1568x252xbf16, #tpu.memory_space<vmem>>, vector<1568x252xbf16>
    %c0_1 = arith.constant 0 : index
    %c0_2 = arith.constant 0 : index
    %1 = vector.load %arg1[%c0_1, %c0_2] : memref<252x128xbf16, #tpu.memory_space<vmem>>, vector<252x128xbf16>
    %cst = arith.constant dense<0.000000e+00> : vector<1568x128xf32>
    %2 = tpu.matmul %0, %1, %cst {dimension_numbers = #tpu.dot_dimension_numbers<[1], [0], [0], [1], [0, 0, 1, 1], [], []>} : vector<1568x252xbf16>, vector<252x128xbf16>, vector<1568x128xf32> -> vector<1568x128xf32>
    %cst_3 = arith.constant dense<0.000000e+00> : vector<128xf32>
    %3 = vector.multi_reduction <add>, %2, %cst_3 [0] : vector<1568x128xf32> to vector<128xf32>
    %4 = vector.shape_cast %3 : vector<128xf32> to vector<1x128xf32>
    %cst_4 = arith.constant 1.568000e+03 : f32
    %5 = vector.broadcast %cst_4 : f32 to vector<1x128xf32>
    %6 = arith.divf %4, %5 : vector<1x128xf32>
    %7 = vector.broadcast %6 : vector<1x128xf32> to vector<1568x128xf32>
    %8 = arith.subf %2, %7 : vector<1568x128xf32>
    %9 = arith.mulf %8, %8 : vector<1568x128xf32>
    %cst_5 = arith.constant dense<0.000000e+00> : vector<128xf32>
    %10 = vector.multi_reduction <add>, %9, %cst_5 [0] : vector<1568x128xf32> to vector<128xf32>
    %11 = vector.shape_cast %10 : vector<128xf32> to vector<1x128xf32>
    %cst_6 = arith.constant 1.568000e+03 : f32
    %12 = vector.broadcast %cst_6 : f32 to vector<1x128xf32>
    %13 = arith.divf %11, %12 : vector<1x128xf32>
    %14 = vector.broadcast %6 : vector<1x128xf32> to vector<1568x128xf32>
    %15 = arith.subf %2, %14 : vector<1568x128xf32>
    %cst_7 = arith.constant 9.99999974E-6 : f32
    %16 = vector.broadcast %cst_7 : f32 to vector<1x128xf32>
    %17 = arith.addf %13, %16 : vector<1x128xf32>
    %18 = math.rsqrt %17 : vector<1x128xf32>
    %19 = vector.broadcast %18 : vector<1x128xf32> to vector<1568x128xf32>
    %20 = arith.mulf %15, %19 : vector<1568x128xf32>
    %cst_8 = arith.constant 0.000000e+00 : f32
    %21 = vector.broadcast %cst_8 : f32 to vector<1568x128xf32>
    %22 = arith.maximumf %20, %21 : vector<1568x128xf32>
    %23 = vector.extract_strided_slice %22 {offsets = [0, 0], sizes = [392, 128], strides = [1, 1]} : vector<1568x128xf32> to vector<392x128xf32>
    %24 = vector.extract_strided_slice %22 {offsets = [392, 0], sizes = [392, 128], strides = [1, 1]} : vector<1568x128xf32> to vector<392x128xf32>
    %25 = arith.maximumf %23, %24 : vector<392x128xf32>
    %26 = vector.extract_strided_slice %22 {offsets = [784, 0], sizes = [392, 128], strides = [1, 1]} : vector<1568x128xf32> to vector<392x128xf32>
    %27 = vector.extract_strided_slice %22 {offsets = [1176, 0], sizes = [392, 128], strides = [1, 1]} : vector<1568x128xf32> to vector<392x128xf32>
    %28 = arith.maximumf %26, %27 : vector<392x128xf32>
    %29 = arith.maximumf %25, %28 : vector<392x128xf32>
    %30 = arith.truncf %29 : vector<392x128xf32> to vector<392x128xbf16>
    %c0_9 = arith.constant 0 : index
    %c0_10 = arith.constant 0 : index
    %31 = vector.load %arg2[%c0_9, %c0_10] : memref<392x128xbf16, #tpu.memory_space<vmem>>, vector<392x128xbf16>
    tpu.vector_store %arg2[%c0_9, %c0_10], %30 {strides = array<i32>} : memref<392x128xbf16, #tpu.memory_space<vmem>>, vector<392x128xbf16>,
    return
  }
}

module attributes {stable_mosaic.version = 11 : i64} {
  func.func @_conv_block_classifier_kernel(%arg0: memref<200x1008xbf16, #tpu.memory_space<vmem>>, %arg1: memref<1008x128xbf16, #tpu.memory_space<vmem>>, %arg2: memref<25x128x128xbf16, #tpu.memory_space<vmem>>, %arg3: memref<1x128xf32, #tpu.memory_space<vmem>>, %arg4: memref<2x128xf32, #tpu.memory_space<vmem>>) attributes {dimension_semantics = [], scalar_prefetch = 0 : i64, scratch_operands = 0 : i64, tpu.core_type = #tpu.core_type<tc>} {
    %c0 = arith.constant 0 : index
    %c0_0 = arith.constant 0 : index
    %0 = vector.load %arg0[%c0, %c0_0] : memref<200x1008xbf16, #tpu.memory_space<vmem>>, vector<200x1008xbf16>
    %c0_1 = arith.constant 0 : index
    %c0_2 = arith.constant 0 : index
    %1 = vector.load %arg1[%c0_1, %c0_2] : memref<1008x128xbf16, #tpu.memory_space<vmem>>, vector<1008x128xbf16>
    %cst = arith.constant dense<0.000000e+00> : vector<200x128xf32>
    %2 = tpu.matmul %0, %1, %cst {dimension_numbers = #tpu.dot_dimension_numbers<[1], [0], [0], [1], [0, 0, 1, 1], [], []>} : vector<200x1008xbf16>, vector<1008x128xbf16>, vector<200x128xf32> -> vector<200x128xf32>
    %cst_3 = arith.constant dense<0.000000e+00> : vector<128xf32>
    %3 = vector.multi_reduction <add>, %2, %cst_3 [0] : vector<200x128xf32> to vector<128xf32>
    %4 = vector.shape_cast %3 : vector<128xf32> to vector<1x128xf32>
    %cst_4 = arith.constant 2.000000e+02 : f32
    %5 = vector.broadcast %cst_4 : f32 to vector<1x128xf32>
    %6 = arith.divf %4, %5 : vector<1x128xf32>
    %7 = vector.broadcast %6 : vector<1x128xf32> to vector<200x128xf32>
    %8 = arith.subf %2, %7 : vector<200x128xf32>
    %9 = arith.mulf %8, %8 : vector<200x128xf32>
    %cst_5 = arith.constant dense<0.000000e+00> : vector<128xf32>
    %10 = vector.multi_reduction <add>, %9, %cst_5 [0] : vector<200x128xf32> to vector<128xf32>
    %11 = vector.shape_cast %10 : vector<128xf32> to vector<1x128xf32>
    %cst_6 = arith.constant 2.000000e+02 : f32
    %12 = vector.broadcast %cst_6 : f32 to vector<1x128xf32>
    %13 = arith.divf %11, %12 : vector<1x128xf32>
    %14 = vector.broadcast %6 : vector<1x128xf32> to vector<200x128xf32>
    %15 = arith.subf %2, %14 : vector<200x128xf32>
    %cst_7 = arith.constant 9.99999974E-6 : f32
    %16 = vector.broadcast %cst_7 : f32 to vector<1x128xf32>
    %17 = arith.addf %13, %16 : vector<1x128xf32>
    %18 = math.rsqrt %17 : vector<1x128xf32>
    %19 = vector.broadcast %18 : vector<1x128xf32> to vector<200x128xf32>
    %20 = arith.mulf %15, %19 : vector<200x128xf32>
    %cst_8 = arith.constant 0.000000e+00 : f32
    %21 = vector.broadcast %cst_8 : f32 to vector<200x128xf32>
    %22 = arith.maximumf %20, %21 : vector<200x128xf32>
    %23 = vector.extract_strided_slice %22 {offsets = [0, 0], sizes = [50, 128], strides = [1, 1]} : vector<200x128xf32> to vector<50x128xf32>
    %24 = vector.extract_strided_slice %22 {offsets = [50, 0], sizes = [50, 128], strides = [1, 1]} : vector<200x128xf32> to vector<50x128xf32>
    %25 = arith.maximumf %23, %24 : vector<50x128xf32>
    %26 = vector.extract_strided_slice %22 {offsets = [100, 0], sizes = [50, 128], strides = [1, 1]} : vector<200x128xf32> to vector<50x128xf32>
    %27 = vector.extract_strided_slice %22 {offsets = [150, 0], sizes = [50, 128], strides = [1, 1]} : vector<200x128xf32> to vector<50x128xf32>
    %28 = arith.maximumf %26, %27 : vector<50x128xf32>
    %29 = arith.maximumf %25, %28 : vector<50x128xf32>
    %30 = arith.truncf %29 : vector<50x128xf32> to vector<50x128xbf16>
    %cst_9 = arith.constant 0.000000e+00 : f32
    %31 = vector.broadcast %cst_9 : f32 to vector<2x128xf32>
    %32 = vector.extract_strided_slice %30 {offsets = [0, 0], sizes = [2, 128], strides = [1, 1]} : vector<50x128xbf16> to vector<2x128xbf16>
    %c0_10 = arith.constant 0 : index
    %c0_11 = arith.constant 0 : index
    %c0_12 = arith.constant 0 : index
    %33 = vector.load %arg2[%c0_10, %c0_11, %c0_12] : memref<25x128x128xbf16, #tpu.memory_space<vmem>>, vector<1x128x128xbf16>
    %34 = vector.shape_cast %33 : vector<1x128x128xbf16> to vector<128x128xbf16>
    %cst_13 = arith.constant dense<0.000000e+00> : vector<2x128xf32>
    %35 = tpu.matmul %32, %34, %cst_13 {dimension_numbers = #tpu.dot_dimension_numbers<[1], [0], [0], [1], [0, 0, 1, 1], [], []>} : vector<2x128xbf16>, vector<128x128xbf16>, vector<2x128xf32> -> vector<2x128xf32>
    %36 = arith.addf %31, %35 : vector<2x128xf32>
    %37 = vector.extract_strided_slice %30 {offsets = [2, 0], sizes = [2, 128], strides = [1, 1]} : vector<50x128xbf16> to vector<2x128xbf16>
    %c1 = arith.constant 1 : index
    %c0_14 = arith.constant 0 : index
    %c0_15 = arith.constant 0 : index
    %38 = vector.load %arg2[%c1, %c0_14, %c0_15] : memref<25x128x128xbf16, #tpu.memory_space<vmem>>, vector<1x128x128xbf16>
    %39 = vector.shape_cast %38 : vector<1x128x128xbf16> to vector<128x128xbf16>
    %cst_16 = arith.constant dense<0.000000e+00> : vector<2x128xf32>
    %40 = tpu.matmul %37, %39, %cst_16 {dimension_numbers = #tpu.dot_dimension_numbers<[1], [0], [0], [1], [0, 0, 1, 1], [], []>} : vector<2x128xbf16>, vector<128x128xbf16>, vector<2x128xf32> -> vector<2x128xf32>
    %41 = arith.addf %36, %40 : vector<2x128xf32>
    %42 = vector.extract_strided_slice %30 {offsets = [4, 0], sizes = [2, 128], strides = [1, 1]} : vector<50x128xbf16> to vector<2x128xbf16>
    %c2 = arith.constant 2 : index
    %c0_17 = arith.constant 0 : index
    %c0_18 = arith.constant 0 : index
    %43 = vector.load %arg2[%c2, %c0_17, %c0_18] : memref<25x128x128xbf16, #tpu.memory_space<vmem>>, vector<1x128x128xbf16>
    %44 = vector.shape_cast %43 : vector<1x128x128xbf16> to vector<128x128xbf16>
    %cst_19 = arith.constant dense<0.000000e+00> : vector<2x128xf32>
    %45 = tpu.matmul %42, %44, %cst_19 {dimension_numbers = #tpu.dot_dimension_numbers<[1], [0], [0], [1], [0, 0, 1, 1], [], []>} : vector<2x128xbf16>, vector<128x128xbf16>, vector<2x128xf32> -> vector<2x128xf32>
    %46 = arith.addf %41, %45 : vector<2x128xf32>
    %47 = vector.extract_strided_slice %30 {offsets = [6, 0], sizes = [2, 128], strides = [1, 1]} : vector<50x128xbf16> to vector<2x128xbf16>
    %c3 = arith.constant 3 : index
    %c0_20 = arith.constant 0 : index
    %c0_21 = arith.constant 0 : index
    %48 = vector.load %arg2[%c3, %c0_20, %c0_21] : memref<25x128x128xbf16, #tpu.memory_space<vmem>>, vector<1x128x128xbf16>
    %49 = vector.shape_cast %48 : vector<1x128x128xbf16> to vector<128x128xbf16>
    %cst_22 = arith.constant dense<0.000000e+00> : vector<2x128xf32>
    %50 = tpu.matmul %47, %49, %cst_22 {dimension_numbers = #tpu.dot_dimension_numbers<[1], [0], [0], [1], [0, 0, 1, 1], [], []>} : vector<2x128xbf16>, vector<128x128xbf16>, vector<2x128xf32> -> vector<2x128xf32>
    %51 = arith.addf %46, %50 : vector<2x128xf32>
    %52 = vector.extract_strided_slice %30 {offsets = [8, 0], sizes = [2, 128], strides = [1, 1]} : vector<50x128xbf16> to vector<2x128xbf16>
    %c4 = arith.constant 4 : index
    %c0_23 = arith.constant 0 : index
    %c0_24 = arith.constant 0 : index
    %53 = vector.load %arg2[%c4, %c0_23, %c0_24] : memref<25x128x128xbf16, #tpu.memory_space<vmem>>, vector<1x128x128xbf16>
    %54 = vector.shape_cast %53 : vector<1x128x128xbf16> to vector<128x128xbf16>
    %cst_25 = arith.constant dense<0.000000e+00> : vector<2x128xf32>
    %55 = tpu.matmul %52, %54, %cst_25 {dimension_numbers = #tpu.dot_dimension_numbers<[1], [0], [0], [1], [0, 0, 1, 1], [], []>} : vector<2x128xbf16>, vector<128x128xbf16>, vector<2x128xf32> -> vector<2x128xf32>
    %56 = arith.addf %51, %55 : vector<2x128xf32>
    %57 = vector.extract_strided_slice %30 {offsets = [10, 0], sizes = [2, 128], strides = [1, 1]} : vector<50x128xbf16> to vector<2x128xbf16>
    %c5 = arith.constant 5 : index
    %c0_26 = arith.constant 0 : index
    %c0_27 = arith.constant 0 : index
    %58 = vector.load %arg2[%c5, %c0_26, %c0_27] : memref<25x128x128xbf16, #tpu.memory_space<vmem>>, vector<1x128x128xbf16>
    %59 = vector.shape_cast %58 : vector<1x128x128xbf16> to vector<128x128xbf16>
    %cst_28 = arith.constant dense<0.000000e+00> : vector<2x128xf32>
    %60 = tpu.matmul %57, %59, %cst_28 {dimension_numbers = #tpu.dot_dimension_numbers<[1], [0], [0], [1], [0, 0, 1, 1], [], []>} : vector<2x128xbf16>, vector<128x128xbf16>, vector<2x128xf32> -> vector<2x128xf32>
    %61 = arith.addf %56, %60 : vector<2x128xf32>
    %62 = vector.extract_strided_slice %30 {offsets = [12, 0], sizes = [2, 128], strides = [1, 1]} : vector<50x128xbf16> to vector<2x128xbf16>
    %c6 = arith.constant 6 : index
    %c0_29 = arith.constant 0 : index
    %c0_30 = arith.constant 0 : index
    %63 = vector.load %arg2[%c6, %c0_29, %c0_30] : memref<25x128x128xbf16, #tpu.memory_space<vmem>>, vector<1x128x128xbf16>
    %64 = vector.shape_cast %63 : vector<1x128x128xbf16> to vector<128x128xbf16>
    %cst_31 = arith.constant dense<0.000000e+00> : vector<2x128xf32>
    %65 = tpu.matmul %62, %64, %cst_31 {dimension_numbers = #tpu.dot_dimension_numbers<[1], [0], [0], [1], [0, 0, 1, 1], [], []>} : vector<2x128xbf16>, vector<128x128xbf16>, vector<2x128xf32> -> vector<2x128xf32>
    %66 = arith.addf %61, %65 : vector<2x128xf32>
    %67 = vector.extract_strided_slice %30 {offsets = [14, 0], sizes = [2, 128], strides = [1, 1]} : vector<50x128xbf16> to vector<2x128xbf16>
    %c7 = arith.constant 7 : index
    %c0_32 = arith.constant 0 : index
    %c0_33 = arith.constant 0 : index
    %68 = vector.load %arg2[%c7, %c0_32, %c0_33] : memref<25x128x128xbf16, #tpu.memory_space<vmem>>, vector<1x128x128xbf16>
    %69 = vector.shape_cast %68 : vector<1x128x128xbf16> to vector<128x128xbf16>
    %cst_34 = arith.constant dense<0.000000e+00> : vector<2x128xf32>
    %70 = tpu.matmul %67, %69, %cst_34 {dimension_numbers = #tpu.dot_dimension_numbers<[1], [0], [0], [1], [0, 0, 1, 1], [], []>} : vector<2x128xbf16>, vector<128x128xbf16>, vector<2x128xf32> -> vector<2x128xf32>
    %71 = arith.addf %66, %70 : vector<2x128xf32>
    %72 = vector.extract_strided_slice %30 {offsets = [16, 0], sizes = [2, 128], strides = [1, 1]} : vector<50x128xbf16> to vector<2x128xbf16>
    %c8 = arith.constant 8 : index
    %c0_35 = arith.constant 0 : index
    %c0_36 = arith.constant 0 : index
    %73 = vector.load %arg2[%c8, %c0_35, %c0_36] : memref<25x128x128xbf16, #tpu.memory_space<vmem>>, vector<1x128x128xbf16>
    %74 = vector.shape_cast %73 : vector<1x128x128xbf16> to vector<128x128xbf16>
    %cst_37 = arith.constant dense<0.000000e+00> : vector<2x128xf32>
    %75 = tpu.matmul %72, %74, %cst_37 {dimension_numbers = #tpu.dot_dimension_numbers<[1], [0], [0], [1], [0, 0, 1, 1], [], []>} : vector<2x128xbf16>, vector<128x128xbf16>, vector<2x128xf32> -> vector<2x128xf32>
    %76 = arith.addf %71, %75 : vector<2x128xf32>
    %77 = vector.extract_strided_slice %30 {offsets = [18, 0], sizes = [2, 128], strides = [1, 1]} : vector<50x128xbf16> to vector<2x128xbf16>
    %c9 = arith.constant 9 : index
    %c0_38 = arith.constant 0 : index
    %c0_39 = arith.constant 0 : index
    %78 = vector.load %arg2[%c9, %c0_38, %c0_39] : memref<25x128x128xbf16, #tpu.memory_space<vmem>>, vector<1x128x128xbf16>
    %79 = vector.shape_cast %78 : vector<1x128x128xbf16> to vector<128x128xbf16>
    %cst_40 = arith.constant dense<0.000000e+00> : vector<2x128xf32>
    %80 = tpu.matmul %77, %79, %cst_40 {dimension_numbers = #tpu.dot_dimension_numbers<[1], [0], [0], [1], [0, 0, 1, 1], [], []>} : vector<2x128xbf16>, vector<128x128xbf16>, vector<2x128xf32> -> vector<2x128xf32>
    %81 = arith.addf %76, %80 : vector<2x128xf32>
    %82 = vector.extract_strided_slice %30 {offsets = [20, 0], sizes = [2, 128], strides = [1, 1]} : vector<50x128xbf16> to vector<2x128xbf16>
    %c10 = arith.constant 10 : index
    %c0_41 = arith.constant 0 : index
    %c0_42 = arith.constant 0 : index
    %83 = vector.load %arg2[%c10, %c0_41, %c0_42] : memref<25x128x128xbf16, #tpu.memory_space<vmem>>, vector<1x128x128xbf16>
    %84 = vector.shape_cast %83 : vector<1x128x128xbf16> to vector<128x128xbf16>
    %cst_43 = arith.constant dense<0.000000e+00> : vector<2x128xf32>
    %85 = tpu.matmul %82, %84, %cst_43 {dimension_numbers = #tpu.dot_dimension_numbers<[1], [0], [0], [1], [0, 0, 1, 1], [], []>} : vector<2x128xbf16>, vector<128x128xbf16>, vector<2x128xf32> -> vector<2x128xf32>
    %86 = arith.addf %81, %85 : vector<2x128xf32>
    %87 = vector.extract_strided_slice %30 {offsets = [22, 0], sizes = [2, 128], strides = [1, 1]} : vector<50x128xbf16> to vector<2x128xbf16>
    %c11 = arith.constant 11 : index
    %c0_44 = arith.constant 0 : index
    %c0_45 = arith.constant 0 : index
    %88 = vector.load %arg2[%c11, %c0_44, %c0_45] : memref<25x128x128xbf16, #tpu.memory_space<vmem>>, vector<1x128x128xbf16>
    %89 = vector.shape_cast %88 : vector<1x128x128xbf16> to vector<128x128xbf16>
    %cst_46 = arith.constant dense<0.000000e+00> : vector<2x128xf32>
    %90 = tpu.matmul %87, %89, %cst_46 {dimension_numbers = #tpu.dot_dimension_numbers<[1], [0], [0], [1], [0, 0, 1, 1], [], []>} : vector<2x128xbf16>, vector<128x128xbf16>, vector<2x128xf32> -> vector<2x128xf32>
    %91 = arith.addf %86, %90 : vector<2x128xf32>
    %92 = vector.extract_strided_slice %30 {offsets = [24, 0], sizes = [2, 128], strides = [1, 1]} : vector<50x128xbf16> to vector<2x128xbf16>
    %c12 = arith.constant 12 : index
    %c0_47 = arith.constant 0 : index
    %c0_48 = arith.constant 0 : index
    %93 = vector.load %arg2[%c12, %c0_47, %c0_48] : memref<25x128x128xbf16, #tpu.memory_space<vmem>>, vector<1x128x128xbf16>
    %94 = vector.shape_cast %93 : vector<1x128x128xbf16> to vector<128x128xbf16>
    %cst_49 = arith.constant dense<0.000000e+00> : vector<2x128xf32>
    %95 = tpu.matmul %92, %94, %cst_49 {dimension_numbers = #tpu.dot_dimension_numbers<[1], [0], [0], [1], [0, 0, 1, 1], [], []>} : vector<2x128xbf16>, vector<128x128xbf16>, vector<2x128xf32> -> vector<2x128xf32>
    %96 = arith.addf %91, %95 : vector<2x128xf32>
    %97 = vector.extract_strided_slice %30 {offsets = [26, 0], sizes = [2, 128], strides = [1, 1]} : vector<50x128xbf16> to vector<2x128xbf16>
    %c13 = arith.constant 13 : index
    %c0_50 = arith.constant 0 : index
    %c0_51 = arith.constant 0 : index
    %98 = vector.load %arg2[%c13, %c0_50, %c0_51] : memref<25x128x128xbf16, #tpu.memory_space<vmem>>, vector<1x128x128xbf16>
    %99 = vector.shape_cast %98 : vector<1x128x128xbf16> to vector<128x128xbf16>
    %cst_52 = arith.constant dense<0.000000e+00> : vector<2x128xf32>
    %100 = tpu.matmul %97, %99, %cst_52 {dimension_numbers = #tpu.dot_dimension_numbers<[1], [0], [0], [1], [0, 0, 1, 1], [], []>} : vector<2x128xbf16>, vector<128x128xbf16>, vector<2x128xf32> -> vector<2x128xf32>
    %101 = arith.addf %96, %100 : vector<2x128xf32>
    %102 = vector.extract_strided_slice %30 {offsets = [28, 0], sizes = [2, 128], strides = [1, 1]} : vector<50x128xbf16> to vector<2x128xbf16>
    %c14 = arith.constant 14 : index
    %c0_53 = arith.constant 0 : index
    %c0_54 = arith.constant 0 : index
    %103 = vector.load %arg2[%c14, %c0_53, %c0_54] : memref<25x128x128xbf16, #tpu.memory_space<vmem>>, vector<1x128x128xbf16>
    %104 = vector.shape_cast %103 : vector<1x128x128xbf16> to vector<128x128xbf16>
    %cst_55 = arith.constant dense<0.000000e+00> : vector<2x128xf32>
    %105 = tpu.matmul %102, %104, %cst_55 {dimension_numbers = #tpu.dot_dimension_numbers<[1], [0], [0], [1], [0, 0, 1, 1], [], []>} : vector<2x128xbf16>, vector<128x128xbf16>, vector<2x128xf32> -> vector<2x128xf32>
    %106 = arith.addf %101, %105 : vector<2x128xf32>
    %107 = vector.extract_strided_slice %30 {offsets = [30, 0], sizes = [2, 128], strides = [1, 1]} : vector<50x128xbf16> to vector<2x128xbf16>
    %c15 = arith.constant 15 : index
    %c0_56 = arith.constant 0 : index
    %c0_57 = arith.constant 0 : index
    %108 = vector.load %arg2[%c15, %c0_56, %c0_57] : memref<25x128x128xbf16, #tpu.memory_space<vmem>>, vector<1x128x128xbf16>
    %109 = vector.shape_cast %108 : vector<1x128x128xbf16> to vector<128x128xbf16>
    %cst_58 = arith.constant dense<0.000000e+00> : vector<2x128xf32>
    %110 = tpu.matmul %107, %109, %cst_58 {dimension_numbers = #tpu.dot_dimension_numbers<[1], [0], [0], [1], [0, 0, 1, 1], [], []>} : vector<2x128xbf16>, vector<128x128xbf16>, vector<2x128xf32> -> vector<2x128xf32>
    %111 = arith.addf %106, %110 : vector<2x128xf32>
    %112 = vector.extract_strided_slice %30 {offsets = [32, 0], sizes = [2, 128], strides = [1, 1]} : vector<50x128xbf16> to vector<2x128xbf16>
    %c16 = arith.constant 16 : index
    %c0_59 = arith.constant 0 : index
    %c0_60 = arith.constant 0 : index
    %113 = vector.load %arg2[%c16, %c0_59, %c0_60] : memref<25x128x128xbf16, #tpu.memory_space<vmem>>, vector<1x128x128xbf16>
    %114 = vector.shape_cast %113 : vector<1x128x128xbf16> to vector<128x128xbf16>
    %cst_61 = arith.constant dense<0.000000e+00> : vector<2x128xf32>
    %115 = tpu.matmul %112, %114, %cst_61 {dimension_numbers = #tpu.dot_dimension_numbers<[1], [0], [0], [1], [0, 0, 1, 1], [], []>} : vector<2x128xbf16>, vector<128x128xbf16>, vector<2x128xf32> -> vector<2x128xf32>
    %116 = arith.addf %111, %115 : vector<2x128xf32>
    %117 = vector.extract_strided_slice %30 {offsets = [34, 0], sizes = [2, 128], strides = [1, 1]} : vector<50x128xbf16> to vector<2x128xbf16>
    %c17 = arith.constant 17 : index
    %c0_62 = arith.constant 0 : index
    %c0_63 = arith.constant 0 : index
    %118 = vector.load %arg2[%c17, %c0_62, %c0_63] : memref<25x128x128xbf16, #tpu.memory_space<vmem>>, vector<1x128x128xbf16>
    %119 = vector.shape_cast %118 : vector<1x128x128xbf16> to vector<128x128xbf16>
    %cst_64 = arith.constant dense<0.000000e+00> : vector<2x128xf32>
    %120 = tpu.matmul %117, %119, %cst_64 {dimension_numbers = #tpu.dot_dimension_numbers<[1], [0], [0], [1], [0, 0, 1, 1], [], []>} : vector<2x128xbf16>, vector<128x128xbf16>, vector<2x128xf32> -> vector<2x128xf32>
    %121 = arith.addf %116, %120 : vector<2x128xf32>
    %122 = vector.extract_strided_slice %30 {offsets = [36, 0], sizes = [2, 128], strides = [1, 1]} : vector<50x128xbf16> to vector<2x128xbf16>
    %c18 = arith.constant 18 : index
    %c0_65 = arith.constant 0 : index
    %c0_66 = arith.constant 0 : index
    %123 = vector.load %arg2[%c18, %c0_65, %c0_66] : memref<25x128x128xbf16, #tpu.memory_space<vmem>>, vector<1x128x128xbf16>
    %124 = vector.shape_cast %123 : vector<1x128x128xbf16> to vector<128x128xbf16>
    %cst_67 = arith.constant dense<0.000000e+00> : vector<2x128xf32>
    %125 = tpu.matmul %122, %124, %cst_67 {dimension_numbers = #tpu.dot_dimension_numbers<[1], [0], [0], [1], [0, 0, 1, 1], [], []>} : vector<2x128xbf16>, vector<128x128xbf16>, vector<2x128xf32> -> vector<2x128xf32>
    %126 = arith.addf %121, %125 : vector<2x128xf32>
    %127 = vector.extract_strided_slice %30 {offsets = [38, 0], sizes = [2, 128], strides = [1, 1]} : vector<50x128xbf16> to vector<2x128xbf16>
    %c19 = arith.constant 19 : index
    %c0_68 = arith.constant 0 : index
    %c0_69 = arith.constant 0 : index
    %128 = vector.load %arg2[%c19, %c0_68, %c0_69] : memref<25x128x128xbf16, #tpu.memory_space<vmem>>, vector<1x128x128xbf16>
    %129 = vector.shape_cast %128 : vector<1x128x128xbf16> to vector<128x128xbf16>
    %cst_70 = arith.constant dense<0.000000e+00> : vector<2x128xf32>
    %130 = tpu.matmul %127, %129, %cst_70 {dimension_numbers = #tpu.dot_dimension_numbers<[1], [0], [0], [1], [0, 0, 1, 1], [], []>} : vector<2x128xbf16>, vector<128x128xbf16>, vector<2x128xf32> -> vector<2x128xf32>
    %131 = arith.addf %126, %130 : vector<2x128xf32>
    %132 = vector.extract_strided_slice %30 {offsets = [40, 0], sizes = [2, 128], strides = [1, 1]} : vector<50x128xbf16> to vector<2x128xbf16>
    %c20 = arith.constant 20 : index
    %c0_71 = arith.constant 0 : index
    %c0_72 = arith.constant 0 : index
    %133 = vector.load %arg2[%c20, %c0_71, %c0_72] : memref<25x128x128xbf16, #tpu.memory_space<vmem>>, vector<1x128x128xbf16>
    %134 = vector.shape_cast %133 : vector<1x128x128xbf16> to vector<128x128xbf16>
    %cst_73 = arith.constant dense<0.000000e+00> : vector<2x128xf32>
    %135 = tpu.matmul %132, %134, %cst_73 {dimension_numbers = #tpu.dot_dimension_numbers<[1], [0], [0], [1], [0, 0, 1, 1], [], []>} : vector<2x128xbf16>, vector<128x128xbf16>, vector<2x128xf32> -> vector<2x128xf32>
    %136 = arith.addf %131, %135 : vector<2x128xf32>
    %137 = vector.extract_strided_slice %30 {offsets = [42, 0], sizes = [2, 128], strides = [1, 1]} : vector<50x128xbf16> to vector<2x128xbf16>
    %c21 = arith.constant 21 : index
    %c0_74 = arith.constant 0 : index
    %c0_75 = arith.constant 0 : index
    %138 = vector.load %arg2[%c21, %c0_74, %c0_75] : memref<25x128x128xbf16, #tpu.memory_space<vmem>>, vector<1x128x128xbf16>
    %139 = vector.shape_cast %138 : vector<1x128x128xbf16> to vector<128x128xbf16>
    %cst_76 = arith.constant dense<0.000000e+00> : vector<2x128xf32>
    %140 = tpu.matmul %137, %139, %cst_76 {dimension_numbers = #tpu.dot_dimension_numbers<[1], [0], [0], [1], [0, 0, 1, 1], [], []>} : vector<2x128xbf16>, vector<128x128xbf16>, vector<2x128xf32> -> vector<2x128xf32>
    %141 = arith.addf %136, %140 : vector<2x128xf32>
    %142 = vector.extract_strided_slice %30 {offsets = [44, 0], sizes = [2, 128], strides = [1, 1]} : vector<50x128xbf16> to vector<2x128xbf16>
    %c22 = arith.constant 22 : index
    %c0_77 = arith.constant 0 : index
    %c0_78 = arith.constant 0 : index
    %143 = vector.load %arg2[%c22, %c0_77, %c0_78] : memref<25x128x128xbf16, #tpu.memory_space<vmem>>, vector<1x128x128xbf16>
    %144 = vector.shape_cast %143 : vector<1x128x128xbf16> to vector<128x128xbf16>
    %cst_79 = arith.constant dense<0.000000e+00> : vector<2x128xf32>
    %145 = tpu.matmul %142, %144, %cst_79 {dimension_numbers = #tpu.dot_dimension_numbers<[1], [0], [0], [1], [0, 0, 1, 1], [], []>} : vector<2x128xbf16>, vector<128x128xbf16>, vector<2x128xf32> -> vector<2x128xf32>
    %146 = arith.addf %141, %145 : vector<2x128xf32>
    %147 = vector.extract_strided_slice %30 {offsets = [46, 0], sizes = [2, 128], strides = [1, 1]} : vector<50x128xbf16> to vector<2x128xbf16>
    %c23 = arith.constant 23 : index
    %c0_80 = arith.constant 0 : index
    %c0_81 = arith.constant 0 : index
    %148 = vector.load %arg2[%c23, %c0_80, %c0_81] : memref<25x128x128xbf16, #tpu.memory_space<vmem>>, vector<1x128x128xbf16>
    %149 = vector.shape_cast %148 : vector<1x128x128xbf16> to vector<128x128xbf16>
    %cst_82 = arith.constant dense<0.000000e+00> : vector<2x128xf32>
    %150 = tpu.matmul %147, %149, %cst_82 {dimension_numbers = #tpu.dot_dimension_numbers<[1], [0], [0], [1], [0, 0, 1, 1], [], []>} : vector<2x128xbf16>, vector<128x128xbf16>, vector<2x128xf32> -> vector<2x128xf32>
    %151 = arith.addf %146, %150 : vector<2x128xf32>
    %152 = vector.extract_strided_slice %30 {offsets = [48, 0], sizes = [2, 128], strides = [1, 1]} : vector<50x128xbf16> to vector<2x128xbf16>
    %c24 = arith.constant 24 : index
    %c0_83 = arith.constant 0 : index
    %c0_84 = arith.constant 0 : index
    %153 = vector.load %arg2[%c24, %c0_83, %c0_84] : memref<25x128x128xbf16, #tpu.memory_space<vmem>>, vector<1x128x128xbf16>
    %154 = vector.shape_cast %153 : vector<1x128x128xbf16> to vector<128x128xbf16>
    %cst_85 = arith.constant dense<0.000000e+00> : vector<2x128xf32>
    %155 = tpu.matmul %152, %154, %cst_85 {dimension_numbers = #tpu.dot_dimension_numbers<[1], [0], [0], [1], [0, 0, 1, 1], [], []>} : vector<2x128xbf16>, vector<128x128xbf16>, vector<2x128xf32> -> vector<2x128xf32>
    %156 = arith.addf %151, %155 : vector<2x128xf32>
    %c0_86 = arith.constant 0 : index
    %c0_87 = arith.constant 0 : index
    %157 = vector.load %arg3[%c0_86, %c0_87] : memref<1x128xf32, #tpu.memory_space<vmem>>, vector<1x128xf32>
    %158 = vector.broadcast %157 : vector<1x128xf32> to vector<2x128xf32>
    %159 = arith.addf %156, %158 : vector<2x128xf32>
    %c0_88 = arith.constant 0 : index
    %c0_89 = arith.constant 0 : index
    %160 = vector.load %arg4[%c0_88, %c0_89] : memref<2x128xf32, #tpu.memory_space<vmem>>, vector<2x128xf32>
    tpu.vector_store %arg4[%c0_88, %c0_89], %159 {strides = array<i32>} : memref<2x128xf32, #tpu.memory_space<vmem>>, vector<2x128xf32>,
    return
  }
}

</mosaic_0001>

<llo_original>
// kernel: student_net9_forward.2
$region0: #{student_net9_forward.2}
  #allocation0 [shape = 'u32[]', space=smem, size = 0x4, offset = 0x4, fixed_abs, tag = 'smem constant byte address 0x4 - core index']
  #allocation1 [shape = 'u32[144,128]{1,0:T(1,128)}', space=vmem, size = 0x12000, scoped, tag = 'internal scratch']
  %s0 = inlined_call_operand.vmem [shape: bf16[1568,252], index: 0, kind: input, shape index: {}]
  %s1 = inlined_call_operand.vmem [shape: bf16[252,128], index: 1, kind: input, shape index: {}]
  %s2 = inlined_call_operand.vmem [shape: bf16[392,128], index: 2, kind: output, shape index: {}]
  %s3 = sld [smem:[#allocation0]]
  $region18: #{student_net9_forward.2} parent=0
    _
  %s5 = ssub.s32 1, %s3
  %s6 = scalar_select 0, %s5, %s3
  // Predicated region
  $region2: #{student_net9_forward.2} parent=0 // pred_check
    _
  $region3: #{student_net9_forward.2} parent=0 // pred_check_branch
    %8 = sbr.rel (0) target = $region5
  $region4: #{student_net9_forward.2} parent=0 // pred_region
    _
  $region5: #{student_net9_forward.2} parent=0 // pred_fallthru
    _
  // Predicated region
  $region6: #{student_net9_forward.2} parent=0 // pred_check
    _
  $region7: #{student_net9_forward.2} parent=0 // pred_check_branch
    %10 = sbr.rel (0) target = $region9
  $region8: #{student_net9_forward.2} parent=0 // pred_region
    _
  $region9: #{student_net9_forward.2} parent=0 // pred_fallthru
    _
  %v12 = vld [vmem:[%s0] sm:$0xff]
  %v13 = vld [vmem:[%s0 + $0x8] sm:$0xff]
  %v14 = vld [vmem:[%s0 + $0x10] sm:$0xff]
  %v15 = vld [vmem:[%s0 + $0x18] sm:$0xff]
  %v16 = vld [vmem:[%s0 + $0x20] sm:$0xff]
  %v17 = vld [vmem:[%s0 + $0x28] sm:$0xff]
  %v18 = vld [vmem:[%s0 + $0x30] sm:$0xff]
  %v19 = vld [vmem:[%s0 + $0x38] sm:$0xff]
  %v20 = vld [vmem:[%s0 + $0x40] sm:$0xff]
  %v21 = vld [vmem:[%s0 + $0x48] sm:$0xff]
  %v22 = vld [vmem:[%s0 + $0x50] sm:$0xff]
  %v23 = vld [vmem:[%s0 + $0x58] sm:$0xff]
  %v24 = vld [vmem:[%s0 + $0x60] sm:$0xff]
  %v25 = vld [vmem:[%s0 + $0x68] sm:$0xff]
  %v26 = vld [vmem:[%s0 + $0x70] sm:$0xff]
  %v27 = vld [vmem:[%s0 + $0x78] sm:$0xff]
  %v28 = vld [vmem:[%s0 + $0x80] sm:$0xff]
  %v29 = vld [vmem:[%s0 + $0x88] sm:$0xff]
  %v30 = vld [vmem:[%s0 + $0x90] sm:$0xff]
  %v31 = vld [vmem:[%s0 + $0x98] sm:$0xff]
  %v32 = vld [vmem:[%s0 + $0xa0] sm:$0xff]
  %v33 = vld [vmem:[%s0 + $0xa8] sm:$0xff]
  %v34 = vld [vmem:[%s0 + $0xb0] sm:$0xff]
  %v35 = vld [vmem:[%s0 + $0xb8] sm:$0xff]
  %v36 = vld [vmem:[%s0 + $0xc0] sm:$0xff]
  %v37 = vld [vmem:[%s0 + $0xc8] sm:$0xff]
  %v38 = vld [vmem:[%s0 + $0xd0] sm:$0xff]
  %v39 = vld [vmem:[%s0 + $0xd8] sm:$0xff]
  %v40 = vld [vmem:[%s0 + $0xe0] sm:$0xff]
  %v41 = vld [vmem:[%s0 + $0xe8] sm:$0xff]
  %v42 = vld [vmem:[%s0 + $0xf0] sm:$0xff]
  %v43 = vld [vmem:[%s0 + $0xf8] sm:$0xff]
  %v44 = vld [vmem:[%s0 + $0x100] sm:$0xff]
  %v45 = vld [vmem:[%s0 + $0x108] sm:$0xff]
  %v46 = vld [vmem:[%s0 + $0x110] sm:$0xff]
  %v47 = vld [vmem:[%s0 + $0x118] sm:$0xff]
  %v48 = vld [vmem:[%s0 + $0x120] sm:$0xff]
  %v49 = vld [vmem:[%s0 + $0x128] sm:$0xff]
  %v50 = vld [vmem:[%s0 + $0x130] sm:$0xff]
  %v51 = vld [vmem:[%s0 + $0x138] sm:$0xff]
  %v52 = vld [vmem:[%s0 + $0x140] sm:$0xff]
  %v53 = vld [vmem:[%s0 + $0x148] sm:$0xff]
  %v54 = vld [vmem:[%s0 + $0x150] sm:$0xff]
  %v55 = vld [vmem:[%s0 + $0x158] sm:$0xff]
  %v56 = vld [vmem:[%s0 + $0x160] sm:$0xff]
  %v57 = vld [vmem:[%s0 + $0x168] sm:$0xff]
  %v58 = vld [vmem:[%s0 + $0x170] sm:$0xff]
  %v59 = vld [vmem:[%s0 + $0x178] sm:$0xff]
  %v60 = vld [vmem:[%s0 + $0x180] sm:$0xff]
  %v61 = vld [vmem:[%s0 + $0x188] sm:$0xff]
  %v62 = vld [vmem:[%s0 + $0x190] sm:$0xff]
  %v63 = vld [vmem:[%s0 + $0x198] sm:$0xff]
  %v64 = vld [vmem:[%s0 + $0x1a0] sm:$0xff]
  %v65 = vld [vmem:[%s0 + $0x1a8] sm:$0xff]
  %v66 = vld [vmem:[%s0 + $0x1b0] sm:$0xff]
  %v67 = vld [vmem:[%s0 + $0x1b8] sm:$0xff]
  %v68 = vld [vmem:[%s0 + $0x1c0] sm:$0xff]
  %v69 = vld [vmem:[%s0 + $0x1c8] sm:$0xff]
  %v70 = vld [vmem:[%s0 + $0x1d0] sm:$0xff]
  %v71 = vld [vmem:[%s0 + $0x1d8] sm:$0xff]
  %v72 = vld [vmem:[%s0 + $0x1e0] sm:$0xff]
  %v73 = vld [vmem:[%s0 + $0x1e8] sm:$0xff]
  %v74 = vld [vmem:[%s0 + $0x1f0] sm:$0xff]
  %v75 = vld [vmem:[%s0 + $0x1f8] sm:$0xff]
  %v76 = vld [vmem:[%s0 + $0x200] sm:$0xff]
  %v77 = vld [vmem:[%s0 + $0x208] sm:$0xff]
  %v78 = vld [vmem:[%s0 + $0x210] sm:$0xff]
  %v79 = vld [vmem:[%s0 + $0x218] sm:$0xff]
  %v80 = vld [vmem:[%s0 + $0x220] sm:$0xff]
  %v81 = vld [vmem:[%s0 + $0x228] sm:$0xff]
  %v82 = vld [vmem:[%s0 + $0x230] sm:$0xff]
  %v83 = vld [vmem:[%s0 + $0x238] sm:$0xff]
  %v84 = vld [vmem:[%s0 + $0x240] sm:$0xff]
  %v85 = vld [vmem:[%s0 + $0x248] sm:$0xff]
  %v86 = vld [vmem:[%s0 + $0x250] sm:$0xff]
  %v87 = vld [vmem:[%s0 + $0x258] sm:$0xff]
  %v88 = vld [vmem:[%s0 + $0x260] sm:$0xff]
  %v89 = vld [vmem:[%s0 + $0x268] sm:$0xff]
  %v90 = vld [vmem:[%s0 + $0x270] sm:$0xff]
  %v91 = vld [vmem:[%s0 + $0x278] sm:$0xff]
  %v92 = vld [vmem:[%s0 + $0x280] sm:$0xff]
  %v93 = vld [vmem:[%s0 + $0x288] sm:$0xff]
  %v94 = vld [vmem:[%s0 + $0x290] sm:$0xff]
  %v95 = vld [vmem:[%s0 + $0x298] sm:$0xff]
  %v96 = vld [vmem:[%s0 + $0x2a0] sm:$0xff]
  %v97 = vld [vmem:[%s0 + $0x2a8] sm:$0xff]
  %v98 = vld [vmem:[%s0 + $0x2b0] sm:$0xff]
  %v99 = vld [vmem:[%s0 + $0x2b8] sm:$0xff]
  %v100 = vld [vmem:[%s0 + $0x2c0] sm:$0xff]
  %v101 = vld [vmem:[%s0 + $0x2c8] sm:$0xff]
  %v102 = vld [vmem:[%s0 + $0x2d0] sm:$0xff]
  %v103 = vld [vmem:[%s0 + $0x2d8] sm:$0xff]
  %v104 = vld [vmem:[%s0 + $0x2e0] sm:$0xff]
  %v105 = vld [vmem:[%s0 + $0x2e8] sm:$0xff]
  %v106 = vld [vmem:[%s0 + $0x2f0] sm:$0xff]
  %v107 = vld [vmem:[%s0 + $0x2f8] sm:$0xff]
  %v108 = vld [vmem:[%s0 + $0x300] sm:$0xff]
  %v109 = vld [vmem:[%s0 + $0x308] sm:$0xff]
  %v110 = vld [vmem:[%s0 + $0x310] sm:$0xff]
  %v111 = vld [vmem:[%s0 + $0x318] sm:$0xff]
  %v112 = vld [vmem:[%s0 + $0x320] sm:$0xff]
  %v113 = vld [vmem:[%s0 + $0x328] sm:$0xff]
  %v114 = vld [vmem:[%s0 + $0x330] sm:$0xff]
  %v115 = vld [vmem:[%s0 + $0x338] sm:$0xff]
  %v116 = vld [vmem:[%s0 + $0x340] sm:$0xff]
  %v117 = vld [vmem:[%s0 + $0x348] sm:$0xff]
  %v118 = vld [vmem:[%s0 + $0x350] sm:$0xff]
  %v119 = vld [vmem:[%s0 + $0x358] sm:$0xff]
  %v120 = vld [vmem:[%s0 + $0x360] sm:$0xff]
  %v121 = vld [vmem:[%s0 + $0x368] sm:$0xff]
  %v122 = vld [vmem:[%s0 + $0x370] sm:$0xff]
  %v123 = vld [vmem:[%s0 + $0x378] sm:$0xff]
  %v124 = vld [vmem:[%s0 + $0x380] sm:$0xff]
  %v125 = vld [vmem:[%s0 + $0x388] sm:$0xff]
  %v126 = vld [vmem:[%s0 + $0x390] sm:$0xff]
  %v127 = vld [vmem:[%s0 + $0x398] sm:$0xff]
  %v128 = vld [vmem:[%s0 + $0x3a0] sm:$0xff]
  %v129 = vld [vmem:[%s0 + $0x3a8] sm:$0xff]
  %v130 = vld [vmem:[%s0 + $0x3b0] sm:$0xff]
  %v131 = vld [vmem:[%s0 + $0x3b8] sm:$0xff]
  %v132 = vld [vmem:[%s0 + $0x3c0] sm:$0xff]
  %v133 = vld [vmem:[%s0 + $0x3c8] sm:$0xff]
  %v134 = vld [vmem:[%s0 + $0x3d0] sm:$0xff]
  %v135 = vld [vmem:[%s0 + $0x3d8] sm:$0xff]
  %v136 = vld [vmem:[%s0 + $0x3e0] sm:$0xff]
  %v137 = vld [vmem:[%s0 + $0x3e8] sm:$0xff]
  %v138 = vld [vmem:[%s0 + $0x3f0] sm:$0xff]
  %v139 = vld [vmem:[%s0 + $0x3f8] sm:$0xff]
  %v140 = vld [vmem:[%s0 + $0x400] sm:$0xff]
  %v141 = vld [vmem:[%s0 + $0x408] sm:$0xff]
  %v142 = vld [vmem:[%s0 + $0x410] sm:$0xff]
  %v143 = vld [vmem:[%s0 + $0x418] sm:$0xff]
  %v144 = vld [vmem:[%s0 + $0x420] sm:$0xff]
  %v145 = vld [vmem:[%s0 + $0x428] sm:$0xff]
  %v146 = vld [vmem:[%s0 + $0x430] sm:$0xff]
  %v147 = vld [vmem:[%s0 + $0x438] sm:$0xff]
  %v148 = vld [vmem:[%s0 + $0x440] sm:$0xff]
  %v149 = vld [vmem:[%s0 + $0x448] sm:$0xff]
  %v150 = vld [vmem:[%s0 + $0x450] sm:$0xff]
  %v151 = vld [vmem:[%s0 + $0x458] sm:$0xff]
  %v152 = vld [vmem:[%s0 + $0x460] sm:$0xff]
  %v153 = vld [vmem:[%s0 + $0x468] sm:$0xff]
  %v154 = vld [vmem:[%s0 + $0x470] sm:$0xff]
  %v155 = vld [vmem:[%s0 + $0x478] sm:$0xff]
  %v156 = vld [vmem:[%s0 + $0x480] sm:$0xff]
  %v157 = vld [vmem:[%s0 + $0x488] sm:$0xff]
  %v158 = vld [vmem:[%s0 + $0x490] sm:$0xff]
  %v159 = vld [vmem:[%s0 + $0x498] sm:$0xff]
  %v160 = vld [vmem:[%s0 + $0x4a0] sm:$0xff]
  %v161 = vld [vmem:[%s0 + $0x4a8] sm:$0xff]
  %v162 = vld [vmem:[%s0 + $0x4b0] sm:$0xff]
  %v163 = vld [vmem:[%s0 + $0x4b8] sm:$0xff]
  %v164 = vld [vmem:[%s0 + $0x4c0] sm:$0xff]
  %v165 = vld [vmem:[%s0 + $0x4c8] sm:$0xff]
  %v166 = vld [vmem:[%s0 + $0x4d0] sm:$0xff]
  %v167 = vld [vmem:[%s0 + $0x4d8] sm:$0xff]
  %v168 = vld [vmem:[%s0 + $0x4e0] sm:$0xff]
  %v169 = vld [vmem:[%s0 + $0x4e8] sm:$0xff]
  %v170 = vld [vmem:[%s0 + $0x4f0] sm:$0xff]
  %v171 = vld [vmem:[%s0 + $0x4f8] sm:$0xff]
  %v172 = vld [vmem:[%s0 + $0x500] sm:$0xff]
  %v173 = vld [vmem:[%s0 + $0x508] sm:$0xff]
  %v174 = vld [vmem:[%s0 + $0x510] sm:$0xff]
  %v175 = vld [vmem:[%s0 + $0x518] sm:$0xff]
  %v176 = vld [vmem:[%s0 + $0x520] sm:$0xff]
  %v177 = vld [vmem:[%s0 + $0x528] sm:$0xff]
  %v178 = vld [vmem:[%s0 + $0x530] sm:$0xff]
  %v179 = vld [vmem:[%s0 + $0x538] sm:$0xff]
  %v180 = vld [vmem:[%s0 + $0x540] sm:$0xff]
  %v181 = vld [vmem:[%s0 + $0x548] sm:$0xff]
  %v182 = vld [vmem:[%s0 + $0x550] sm:$0xff]
  %v183 = vld [vmem:[%s0 + $0x558] sm:$0xff]
  %v184 = vld [vmem:[%s0 + $0x560] sm:$0xff]
  %v185 = vld [vmem:[%s0 + $0x568] sm:$0xff]
  %v186 = vld [vmem:[%s0 + $0x570] sm:$0xff]
  %v187 = vld [vmem:[%s0 + $0x578] sm:$0xff]
  %v188 = vld [vmem:[%s0 + $0x580] sm:$0xff]
  %v189 = vld [vmem:[%s0 + $0x588] sm:$0xff]
  %v190 = vld [vmem:[%s0 + $0x590] sm:$0xff]
  %v191 = vld [vmem:[%s0 + $0x598] sm:$0xff]
  %v192 = vld [vmem:[%s0 + $0x5a0] sm:$0xff]
  %v193 = vld [vmem:[%s0 + $0x5a8] sm:$0xff]
  %v194 = vld [vmem:[%s0 + $0x5b0] sm:$0xff]
  %v195 = vld [vmem:[%s0 + $0x5b8] sm:$0xff]
  %v196 = vld [vmem:[%s0 + $0x5c0] sm:$0xff]
  %v197 = vld [vmem:[%s0 + $0x5c8] sm:$0xff]
  %v198 = vld [vmem:[%s0 + $0x5d0] sm:$0xff]
  %v199 = vld [vmem:[%s0 + $0x5d8] sm:$0xff]
  %v200 = vld [vmem:[%s0 + $0x5e0] sm:$0xff]
  %v201 = vld [vmem:[%s0 + $0x5e8] sm:$0xff]
  %v202 = vld [vmem:[%s0 + $0x5f0] sm:$0xff]
  %v203 = vld [vmem:[%s0 + $0x5f8] sm:$0xff]
  %v204 = vld [vmem:[%s0 + $0x600] sm:$0xff]
  %v205 = vld [vmem:[%s0 + $0x608] sm:$0xff]
  %v206 = vld [vmem:[%s0 + $0x610] sm:$0xff]
  %v207 = vld [vmem:[%s0 + $0x618] sm:$0xff]
  %v208 = vld [vmem:[%s1] sm:$0xf]
  %v209 = vld [vmem:[%s1 + $0x4] sm:$0xf]
  %v210 = vld [vmem:[%s1 + $0x8] sm:$0xf]
  %v211 = vld [vmem:[%s1 + $0xc] sm:$0xf]
  %v212 = vld [vmem:[%s1 + $0x10] sm:$0xf]
  %v213 = vld [vmem:[%s1 + $0x14] sm:$0xf]
  %v214 = vld [vmem:[%s1 + $0x18] sm:$0xf]
  %v215 = vld [vmem:[%s1 + $0x1c] sm:$0xf]
  %v216 = vld [vmem:[%s1 + $0x20] sm:$0xf]
  %v217 = vld [vmem:[%s1 + $0x24] sm:$0xf]
  %v218 = vld [vmem:[%s1 + $0x28] sm:$0xf]
  %v219 = vld [vmem:[%s1 + $0x2c] sm:$0xf]
  %v220 = vld [vmem:[%s1 + $0x30] sm:$0xf]
  %v221 = vld [vmem:[%s1 + $0x34] sm:$0xf]
  %v222 = vld [vmem:[%s1 + $0x38] sm:$0xf]
  %v223 = vld [vmem:[%s1 + $0x3c] sm:$0xf]
  %v224 = vld [vmem:[%s1 + $0x40] sm:$0xf]
  %v225 = vld [vmem:[%s1 + $0x44] sm:$0xf]
  %v226 = vld [vmem:[%s1 + $0x48] sm:$0xf]
  %v227 = vld [vmem:[%s1 + $0x4c] sm:$0xf]
  %v228 = vld [vmem:[%s1 + $0x50] sm:$0xf]
  %v229 = vld [vmem:[%s1 + $0x54] sm:$0xf]
  %v230 = vld [vmem:[%s1 + $0x58] sm:$0xf]
  %v231 = vld [vmem:[%s1 + $0x5c] sm:$0xf]
  %v232 = vld [vmem:[%s1 + $0x60] sm:$0xf]
  %v233 = vld [vmem:[%s1 + $0x64] sm:$0xf]
  %v234 = vld [vmem:[%s1 + $0x68] sm:$0xf]
  %v235 = vld [vmem:[%s1 + $0x6c] sm:$0xf]
  %v236 = vld [vmem:[%s1 + $0x70] sm:$0xf]
  %v237 = vld [vmem:[%s1 + $0x74] sm:$0xf]
  %v238 = vld [vmem:[%s1 + $0x78] sm:$0xf]
  %v239 = vld [vmem:[%s1 + $0x7c] sm:$0x3]
  %v436 = vunpack.c.l.b16 %v12
  %v437 = vunpack.c.h.b16 %v12
  %v438 = vunpack.c.l.b16 %v13
  %v439 = vunpack.c.h.b16 %v13
  %v440 = vunpack.c.l.b16 %v14
  %v441 = vunpack.c.h.b16 %v14
  %v442 = vunpack.c.l.b16 %v15
  %v443 = vunpack.c.h.b16 %v15
  %v444 = vunpack.c.l.b16 %v16
  %v445 = vunpack.c.h.b16 %v16
  %v446 = vunpack.c.l.b16 %v17
  %v447 = vunpack.c.h.b16 %v17
  %v448 = vunpack.c.l.b16 %v18
  %v449 = vunpack.c.h.b16 %v18
  %v450 = vunpack.c.l.b16 %v19
  %v451 = vunpack.c.h.b16 %v19
  %v452 = vunpack.c.l.b16 %v20
  %v453 = vunpack.c.h.b16 %v20
  %v454 = vunpack.c.l.b16 %v21
  %v455 = vunpack.c.h.b16 %v21
  %v456 = vunpack.c.l.b16 %v22
  %v457 = vunpack.c.h.b16 %v22
  %v458 = vunpack.c.l.b16 %v23
  %v459 = vunpack.c.h.b16 %v23
  %v460 = vunpack.c.l.b16 %v24
  %v461 = vunpack.c.h.b16 %v24
  %v462 = vunpack.c.l.b16 %v25
  %v463 = vunpack.c.h.b16 %v25
  %v464 = vunpack.c.l.b16 %v26
  %v465 = vunpack.c.h.b16 %v26
  %v466 = vunpack.c.l.b16 %v27
  %v467 = vunpack.c.h.b16 %v27
  %v468 = vunpack.c.l.b16 %v28
  %v469 = vunpack.c.h.b16 %v28
  %v470 = vunpack.c.l.b16 %v29
  %v471 = vunpack.c.h.b16 %v29
  %v472 = vunpack.c.l.b16 %v30
  %v473 = vunpack.c.h.b16 %v30
  %v474 = vunpack.c.l.b16 %v31
  %v475 = vunpack.c.h.b16 %v31
  %v476 = vunpack.c.l.b16 %v32
  %v477 = vunpack.c.h.b16 %v32
  %v478 = vunpack.c.l.b16 %v33
  %v479 = vunpack.c.h.b16 %v33
  %v480 = vunpack.c.l.b16 %v34
  %v481 = vunpack.c.h.b16 %v34
  %v482 = vunpack.c.l.b16 %v35
  %v483 = vunpack.c.h.b16 %v35
  %v484 = vunpack.c.l.b16 %v36
  %v485 = vunpack.c.h.b16 %v36
  %v486 = vunpack.c.l.b16 %v37
  %v487 = vunpack.c.h.b16 %v37
  %v488 = vunpack.c.l.b16 %v38
  %v489 = vunpack.c.h.b16 %v38
  %v490 = vunpack.c.l.b16 %v39
  %v491 = vunpack.c.h.b16 %v39
  %v492 = vunpack.c.l.b16 %v40
  %v493 = vunpack.c.h.b16 %v40
  %v494 = vunpack.c.l.b16 %v41
  %v495 = vunpack.c.h.b16 %v41
  %v496 = vunpack.c.l.b16 %v42
  %v497 = vunpack.c.h.b16 %v42
  %v498 = vunpack.c.l.b16 %v43
  %v499 = vunpack.c.h.b16 %v43
  %v500 = vunpack.c.l.b16 %v44
  %v501 = vunpack.c.h.b16 %v44
  %v502 = vunpack.c.l.b16 %v45
  %v503 = vunpack.c.h.b16 %v45
  %v504 = vunpack.c.l.b16 %v46
  %v505 = vunpack.c.h.b16 %v46
  %v506 = vunpack.c.l.b16 %v47
  %v507 = vunpack.c.h.b16 %v47
  %v508 = vunpack.c.l.b16 %v48
  %v509 = vunpack.c.h.b16 %v48
  %v510 = vunpack.c.l.b16 %v49
  %v511 = vunpack.c.h.b16 %v49
  %v512 = vunpack.c.l.b16 %v50
  %v513 = vunpack.c.h.b16 %v50
  %v514 = vunpack.c.l.b16 %v51
  %v515 = vunpack.c.h.b16 %v51
  %v516 = vunpack.c.l.b16 %v52
  %v517 = vunpack.c.h.b16 %v52
  %v518 = vunpack.c.l.b16 %v53
  %v519 = vunpack.c.h.b16 %v53
  %v520 = vunpack.c.l.b16 %v54
  %v521 = vunpack.c.h.b16 %v54
  %v522 = vunpack.c.l.b16 %v55
  %v523 = vunpack.c.h.b16 %v55
  %v524 = vunpack.c.l.b16 %v56
  %v525 = vunpack.c.h.b16 %v56
  %v526 = vunpack.c.l.b16 %v57
  %v527 = vunpack.c.h.b16 %v57
  %v528 = vunpack.c.l.b16 %v58
  %v529 = vunpack.c.h.b16 %v58
  %v530 = vunpack.c.l.b16 %v59
  %v531 = vunpack.c.h.b16 %v59
  %v532 = vunpack.c.l.b16 %v60
  %v533 = vunpack.c.h.b16 %v60
  %v534 = vunpack.c.l.b16 %v61
  %v535 = vunpack.c.h.b16 %v61
  %v536 = vunpack.c.l.b16 %v62
  %v537 = vunpack.c.h.b16 %v62
  %v538 = vunpack.c.l.b16 %v63
  %v539 = vunpack.c.h.b16 %v63
  %v540 = vunpack.c.l.b16 %v64
  %v541 = vunpack.c.h.b16 %v64
  %v542 = vunpack.c.l.b16 %v65
  %v543 = vunpack.c.h.b16 %v65
  %v544 = vunpack.c.l.b16 %v66
  %v545 = vunpack.c.h.b16 %v66
  %v546 = vunpack.c.l.b16 %v67
  %v547 = vunpack.c.h.b16 %v67
  %v548 = vunpack.c.l.b16 %v68
  %v549 = vunpack.c.h.b16 %v68
  %v550 = vunpack.c.l.b16 %v69
  %v551 = vunpack.c.h.b16 %v69
  %v552 = vunpack.c.l.b16 %v70
  %v553 = vunpack.c.h.b16 %v70
  %v554 = vunpack.c.l.b16 %v71
  %v555 = vunpack.c.h.b16 %v71
  %v556 = vunpack.c.l.b16 %v72
  %v557 = vunpack.c.h.b16 %v72
  %v558 = vunpack.c.l.b16 %v73
  %v559 = vunpack.c.h.b16 %v73
  %v560 = vunpack.c.l.b16 %v74
  %v561 = vunpack.c.h.b16 %v74
  %v562 = vunpack.c.l.b16 %v75
  %v563 = vunpack.c.h.b16 %v75
  %v564 = vunpack.c.l.b16 %v76
  %v565 = vunpack.c.h.b16 %v76
  %v566 = vunpack.c.l.b16 %v77
  %v567 = vunpack.c.h.b16 %v77
  %v568 = vunpack.c.l.b16 %v78
  %v569 = vunpack.c.h.b16 %v78
  %v570 = vunpack.c.l.b16 %v79
  %v571 = vunpack.c.h.b16 %v79
  %v572 = vunpack.c.l.b16 %v80
  %v573 = vunpack.c.h.b16 %v80
  %v574 = vunpack.c.l.b16 %v81
  %v575 = vunpack.c.h.b16 %v81
  %v576 = vunpack.c.l.b16 %v82
  %v577 = vunpack.c.h.b16 %v82
  %v578 = vunpack.c.l.b16 %v83
  %v579 = vunpack.c.h.b16 %v83
  %v580 = vunpack.c.l.b16 %v84
  %v581 = vunpack.c.h.b16 %v84
  %v582 = vunpack.c.l.b16 %v85
  %v583 = vunpack.c.h.b16 %v85
  %v584 = vunpack.c.l.b16 %v86
  %v585 = vunpack.c.h.b16 %v86
  %v586 = vunpack.c.l.b16 %v87
  %v587 = vunpack.c.h.b16 %v87
  %v588 = vunpack.c.l.b16 %v88
  %v589 = vunpack.c.h.b16 %v88
  %v590 = vunpack.c.l.b16 %v89
  %v591 = vunpack.c.h.b16 %v89
  %v592 = vunpack.c.l.b16 %v90
  %v593 = vunpack.c.h.b16 %v90
  %v594 = vunpack.c.l.b16 %v91
  %v595 = vunpack.c.h.b16 %v91
  %v596 = vunpack.c.l.b16 %v92
  %v597 = vunpack.c.h.b16 %v92
  %v598 = vunpack.c.l.b16 %v93
  %v599 = vunpack.c.h.b16 %v93
  %v600 = vunpack.c.l.b16 %v94
  %v601 = vunpack.c.h.b16 %v94
  %v602 = vunpack.c.l.b16 %v95
  %v603 = vunpack.c.h.b16 %v95
  %v604 = vunpack.c.l.b16 %v96
  %v605 = vunpack.c.h.b16 %v96
  %v606 = vunpack.c.l.b16 %v97
  %v607 = vunpack.c.h.b16 %v97
  %v608 = vunpack.c.l.b16 %v98
  %v609 = vunpack.c.h.b16 %v98
  %v610 = vunpack.c.l.b16 %v99
  %v611 = vunpack.c.h.b16 %v99
  %v612 = vunpack.c.l.b16 %v100
  %v613 = vunpack.c.h.b16 %v100
  %v614 = vunpack.c.l.b16 %v101
  %v615 = vunpack.c.h.b16 %v101
  %v616 = vunpack.c.l.b16 %v102
  %v617 = vunpack.c.h.b16 %v102
  %v618 = vunpack.c.l.b16 %v103
  %v619 = vunpack.c.h.b16 %v103
  %v620 = vunpack.c.l.b16 %v104
  %v621 = vunpack.c.h.b16 %v104
  %v622 = vunpack.c.l.b16 %v105
  %v623 = vunpack.c.h.b16 %v105
  %v624 = vunpack.c.l.b16 %v106
  %v625 = vunpack.c.h.b16 %v106
  %v626 = vunpack.c.l.b16 %v107
  %v627 = vunpack.c.h.b16 %v107
  %v628 = vunpack.c.l.b16 %v108
  %v629 = vunpack.c.h.b16 %v108
  %v630 = vunpack.c.l.b16 %v109
  %v631 = vunpack.c.h.b16 %v109
  %v632 = vunpack.c.l.b16 %v110
  %v633 = vunpack.c.h.b16 %v110
  %v634 = vunpack.c.l.b16 %v111
  %v635 = vunpack.c.h.b16 %v111
  %v636 = vunpack.c.l.b16 %v112
  %v637 = vunpack.c.h.b16 %v112
  %v638 = vunpack.c.l.b16 %v113
  %v639 = vunpack.c.h.b16 %v113
  %v640 = vunpack.c.l.b16 %v114
  %v641 = vunpack.c.h.b16 %v114
  %v642 = vunpack.c.l.b16 %v115
  %v643 = vunpack.c.h.b16 %v115
  %v644 = vunpack.c.l.b16 %v116
  %v645 = vunpack.c.h.b16 %v116
  %v646 = vunpack.c.l.b16 %v117
  %v647 = vunpack.c.h.b16 %v117
  %v648 = vunpack.c.l.b16 %v118
  %v649 = vunpack.c.h.b16 %v118
  %v650 = vunpack.c.l.b16 %v119
  %v651 = vunpack.c.h.b16 %v119
  %v652 = vunpack.c.l.b16 %v120
  %v653 = vunpack.c.h.b16 %v120
  %v654 = vunpack.c.l.b16 %v121
  %v655 = vunpack.c.h.b16 %v121
  %v656 = vunpack.c.l.b16 %v122
  %v657 = vunpack.c.h.b16 %v122
  %v658 = vunpack.c.l.b16 %v123
  %v659 = vunpack.c.h.b16 %v123
  %v660 = vunpack.c.l.b16 %v124
  %v661 = vunpack.c.h.b16 %v124
  %v662 = vunpack.c.l.b16 %v125
  %v663 = vunpack.c.h.b16 %v125
  %v664 = vunpack.c.l.b16 %v126
  %v665 = vunpack.c.h.b16 %v126
  %v666 = vunpack.c.l.b16 %v127
  %v667 = vunpack.c.h.b16 %v127
  %v668 = vunpack.c.l.b16 %v128
  %v669 = vunpack.c.h.b16 %v128
  %v670 = vunpack.c.l.b16 %v129
  %v671 = vunpack.c.h.b16 %v129
  %v672 = vunpack.c.l.b16 %v130
  %v673 = vunpack.c.h.b16 %v130
  %v674 = vunpack.c.l.b16 %v131
  %v675 = vunpack.c.h.b16 %v131
  %v676 = vunpack.c.l.b16 %v132
  %v677 = vunpack.c.h.b16 %v132
  %v678 = vunpack.c.l.b16 %v133
  %v679 = vunpack.c.h.b16 %v133
  %v680 = vunpack.c.l.b16 %v134
  %v681 = vunpack.c.h.b16 %v134
  %v682 = vunpack.c.l.b16 %v135
  %v683 = vunpack.c.h.b16 %v135
  %v684 = vunpack.c.l.b16 %v136
  %v685 = vunpack.c.h.b16 %v136
  %v686 = vunpack.c.l.b16 %v137
  %v687 = vunpack.c.h.b16 %v137
  %v688 = vunpack.c.l.b16 %v138
  %v689 = vunpack.c.h.b16 %v138
  %v690 = vunpack.c.l.b16 %v139
  %v691 = vunpack.c.h.b16 %v139
  %v692 = vunpack.c.l.b16 %v140
  %v693 = vunpack.c.h.b16 %v140
  %v694 = vunpack.c.l.b16 %v141
  %v695 = vunpack.c.h.b16 %v141
  %v696 = vunpack.c.l.b16 %v142
  %v697 = vunpack.c.h.b16 %v142
  %v698 = vunpack.c.l.b16 %v143
  %v699 = vunpack.c.h.b16 %v143
  %v700 = vunpack.c.l.b16 %v144
  %v701 = vunpack.c.h.b16 %v144
  %v702 = vunpack.c.l.b16 %v145
  %v703 = vunpack.c.h.b16 %v145
  %v704 = vunpack.c.l.b16 %v146
  %v705 = vunpack.c.h.b16 %v146
  %v706 = vunpack.c.l.b16 %v147
  %v707 = vunpack.c.h.b16 %v147
  %v708 = vunpack.c.l.b16 %v148
  %v709 = vunpack.c.h.b16 %v148
  %v710 = vunpack.c.l.b16 %v149
  %v711 = vunpack.c.h.b16 %v149
  %v712 = vunpack.c.l.b16 %v150
  %v713 = vunpack.c.h.b16 %v150
  %v714 = vunpack.c.l.b16 %v151
  %v715 = vunpack.c.h.b16 %v151
  %v716 = vunpack.c.l.b16 %v152
  %v717 = vunpack.c.h.b16 %v152
  %v718 = vunpack.c.l.b16 %v153
  %v719 = vunpack.c.h.b16 %v153
  %v720 = vunpack.c.l.b16 %v154
  %v721 = vunpack.c.h.b16 %v154
  %v722 = vunpack.c.l.b16 %v155
  %v723 = vunpack.c.h.b16 %v155
  %v724 = vunpack.c.l.b16 %v156
  %v725 = vunpack.c.h.b16 %v156
  %v726 = vunpack.c.l.b16 %v157
  %v727 = vunpack.c.h.b16 %v157
  %v728 = vunpack.c.l.b16 %v158
  %v729 = vunpack.c.h.b16 %v158
  %v730 = vunpack.c.l.b16 %v159
  %v731 = vunpack.c.h.b16 %v159
  %v732 = vunpack.c.l.b16 %v160
  %v733 = vunpack.c.h.b16 %v160
  %v734 = vunpack.c.l.b16 %v161
  %v735 = vunpack.c.h.b16 %v161
  %v736 = vunpack.c.l.b16 %v162
  %v737 = vunpack.c.h.b16 %v162
  %v738 = vunpack.c.l.b16 %v163
  %v739 = vunpack.c.h.b16 %v163
  %v740 = vunpack.c.l.b16 %v164
  %v741 = vunpack.c.h.b16 %v164
  %v742 = vunpack.c.l.b16 %v165
  %v743 = vunpack.c.h.b16 %v165
  %v744 = vunpack.c.l.b16 %v166
  %v745 = vunpack.c.h.b16 %v166
  %v746 = vunpack.c.l.b16 %v167
  %v747 = vunpack.c.h.b16 %v167
  %v748 = vunpack.c.l.b16 %v168
  %v749 = vunpack.c.h.b16 %v168
  %v750 = vunpack.c.l.b16 %v169
  %v751 = vunpack.c.h.b16 %v169
  %v752 = vunpack.c.l.b16 %v170
  %v753 = vunpack.c.h.b16 %v170
  %v754 = vunpack.c.l.b16 %v171
  %v755 = vunpack.c.h.b16 %v171
  %v756 = vunpack.c.l.b16 %v172
  %v757 = vunpack.c.h.b16 %v172
  %v758 = vunpack.c.l.b16 %v173
  %v759 = vunpack.c.h.b16 %v173
  %v760 = vunpack.c.l.b16 %v174
  %v761 = vunpack.c.h.b16 %v174
  %v762 = vunpack.c.l.b16 %v175
  %v763 = vunpack.c.h.b16 %v175
  %v764 = vunpack.c.l.b16 %v176
  %v765 = vunpack.c.h.b16 %v176
  %v766 = vunpack.c.l.b16 %v177
  %v767 = vunpack.c.h.b16 %v177
  %v768 = vunpack.c.l.b16 %v178
  %v769 = vunpack.c.h.b16 %v178
  %v770 = vunpack.c.l.b16 %v179
  %v771 = vunpack.c.h.b16 %v179
  %v772 = vunpack.c.l.b16 %v180
  %v773 = vunpack.c.h.b16 %v180
  %v774 = vunpack.c.l.b16 %v181
  %v775 = vunpack.c.h.b16 %v181
  %v776 = vunpack.c.l.b16 %v182
  %v777 = vunpack.c.h.b16 %v182
  %v778 = vunpack.c.l.b16 %v183
  %v779 = vunpack.c.h.b16 %v183
  %v780 = vunpack.c.l.b16 %v184
  %v781 = vunpack.c.h.b16 %v184
  %v782 = vunpack.c.l.b16 %v185
  %v783 = vunpack.c.h.b16 %v185
  %v784 = vunpack.c.l.b16 %v186
  %v785 = vunpack.c.h.b16 %v186
  %v786 = vunpack.c.l.b16 %v187
  %v787 = vunpack.c.h.b16 %v187
  %v788 = vunpack.c.l.b16 %v188
  %v789 = vunpack.c.h.b16 %v188
  %v790 = vunpack.c.l.b16 %v189
  %v791 = vunpack.c.h.b16 %v189
  %v792 = vunpack.c.l.b16 %v190
  %v793 = vunpack.c.h.b16 %v190
  %v794 = vunpack.c.l.b16 %v191
  %v795 = vunpack.c.h.b16 %v191
  %v796 = vunpack.c.l.b16 %v192
  %v797 = vunpack.c.h.b16 %v192
  %v798 = vunpack.c.l.b16 %v193
  %v799 = vunpack.c.h.b16 %v193
  %v800 = vunpack.c.l.b16 %v194
  %v801 = vunpack.c.h.b16 %v194
  %v802 = vunpack.c.l.b16 %v195
  %v803 = vunpack.c.h.b16 %v195
  %v804 = vunpack.c.l.b16 %v196
  %v805 = vunpack.c.h.b16 %v196
  %v806 = vunpack.c.l.b16 %v197
  %v807 = vunpack.c.h.b16 %v197
  %v808 = vunpack.c.l.b16 %v198
  %v809 = vunpack.c.h.b16 %v198
  %v810 = vunpack.c.l.b16 %v199
  %v811 = vunpack.c.h.b16 %v199
  %v812 = vunpack.c.l.b16 %v200
  %v813 = vunpack.c.h.b16 %v200
  %v814 = vunpack.c.l.b16 %v201
  %v815 = vunpack.c.h.b16 %v201
  %v816 = vunpack.c.l.b16 %v202
  %v817 = vunpack.c.h.b16 %v202
  %v818 = vunpack.c.l.b16 %v203
  %v819 = vunpack.c.h.b16 %v203
  %v820 = vunpack.c.l.b16 %v204
  %v821 = vunpack.c.h.b16 %v204
  %v822 = vunpack.c.l.b16 %v205
  %v823 = vunpack.c.h.b16 %v205
  %v824 = vunpack.c.l.b16 %v206
  %v825 = vunpack.c.h.b16 %v206
  %v826 = vunpack.c.l.b16 %v207
  %v827 = vunpack.c.h.b16 %v207
  %v828 = vpack.c.b16 %v438, %v436
  %v829 = vpack.c.b16 %v439, %v437
  %v830 = vpack.c.b16 %v442, %v440
  %v831 = vpack.c.b16 %v443, %v441
  %v832 = vpack.c.b16 %v446, %v444
  %v833 = vpack.c.b16 %v447, %v445
  %v834 = vpack.c.b16 %v450, %v448
  %v835 = vpack.c.b16 %v451, %v449
  %v836 = vpack.c.b16 %v454, %v452
  %v837 = vpack.c.b16 %v455, %v453
  %v838 = vpack.c.b16 %v458, %v456
  %v839 = vpack.c.b16 %v459, %v457
  %v840 = vpack.c.b16 %v462, %v460
  %v841 = vpack.c.b16 %v463, %v461
  %v842 = vpack.c.b16 %v466, %v464
  %v843 = vpack.c.b16 %v467, %v465
  %v844 = vpack.c.b16 %v470, %v468
  %v845 = vpack.c.b16 %v471, %v469
  %v846 = vpack.c.b16 %v474, %v472
  %v847 = vpack.c.b16 %v475, %v473
  %v848 = vpack.c.b16 %v478, %v476
  %v849 = vpack.c.b16 %v479, %v477
  %v850 = vpack.c.b16 %v482, %v480
  %v851 = vpack.c.b16 %v483, %v481
  %v852 = vpack.c.b16 %v486, %v484
  %v853 = vpack.c.b16 %v487, %v485
  %v854 = vpack.c.b16 %v490, %v488
  %v855 = vpack.c.b16 %v491, %v489
  %v856 = vpack.c.b16 %v494, %v492
  %v857 = vpack.c.b16 %v495, %v493
  %v858 = vpack.c.b16 %v498, %v496
  %v859 = vpack.c.b16 %v499, %v497
  %v860 = vpack.c.b16 %v502, %v500
  %v861 = vpack.c.b16 %v503, %v501
  %v862 = vpack.c.b16 %v506, %v504
  %v863 = vpack.c.b16 %v507, %v505
  %v864 = vpack.c.b16 %v510, %v508
  %v865 = vpack.c.b16 %v511, %v509
  %v866 = vpack.c.b16 %v514, %v512
  %v867 = vpack.c.b16 %v515, %v513
  %v868 = vpack.c.b16 %v518, %v516
  %v869 = vpack.c.b16 %v519, %v517
  %v870 = vpack.c.b16 %v522, %v520
  %v871 = vpack.c.b16 %v523, %v521
  %v872 = vpack.c.b16 %v526, %v524
  %v873 = vpack.c.b16 %v527, %v525
  %v874 = vpack.c.b16 %v530, %v528
  %v875 = vpack.c.b16 %v531, %v529
  %v876 = vpack.c.b16 %v534, %v532
  %v877 = vpack.c.b16 %v535, %v533
  %v878 = vpack.c.b16 %v538, %v536
  %v879 = vpack.c.b16 %v539, %v537
  %v880 = vpack.c.b16 %v542, %v540
  %v881 = vpack.c.b16 %v543, %v541
  %v882 = vpack.c.b16 %v546, %v544
  %v883 = vpack.c.b16 %v547, %v545
  %v884 = vpack.c.b16 %v550, %v548
  %v885 = vpack.c.b16 %v551, %v549
  %v886 = vpack.c.b16 %v554, %v552
  %v887 = vpack.c.b16 %v555, %v553
  %v888 = vpack.c.b16 %v558, %v556
  %v889 = vpack.c.b16 %v559, %v557
  %v890 = vpack.c.b16 %v562, %v560
  %v891 = vpack.c.b16 %v563, %v561
  %v892 = vpack.c.b16 %v566, %v564
  %v893 = vpack.c.b16 %v567, %v565
  %v894 = vpack.c.b16 %v570, %v568
  %v895 = vpack.c.b16 %v571, %v569
  %v896 = vpack.c.b16 %v574, %v572
  %v897 = vpack.c.b16 %v575, %v573
  %v898 = vpack.c.b16 %v578, %v576
  %v899 = vpack.c.b16 %v579, %v577
  %v900 = vpack.c.b16 %v582, %v580
  %v901 = vpack.c.b16 %v583, %v581
  %v902 = vpack.c.b16 %v586, %v584
  %v903 = vpack.c.b16 %v587, %v585
  %v904 = vpack.c.b16 %v590, %v588
  %v905 = vpack.c.b16 %v591, %v589
  %v906 = vpack.c.b16 %v594, %v592
  %v907 = vpack.c.b16 %v595, %v593
  %v908 = vpack.c.b16 %v598, %v596
  %v909 = vpack.c.b16 %v599, %v597
  %v910 = vpack.c.b16 %v602, %v600
  %v911 = vpack.c.b16 %v603, %v601
  %v912 = vpack.c.b16 %v606, %v604
  %v913 = vpack.c.b16 %v607, %v605
  %v914 = vpack.c.b16 %v610, %v608
  %v915 = vpack.c.b16 %v611, %v609
  %v916 = vpack.c.b16 %v614, %v612
  %v917 = vpack.c.b16 %v615, %v613
  %v918 = vpack.c.b16 %v618, %v616
  %v919 = vpack.c.b16 %v619, %v617
  %v920 = vpack.c.b16 %v622, %v620
  %v921 = vpack.c.b16 %v623, %v621
  %v922 = vpack.c.b16 %v626, %v624
  %v923 = vpack.c.b16 %v627, %v625
  %v924 = vpack.c.b16 %v630, %v628
  %v925 = vpack.c.b16 %v631, %v629
  %v926 = vpack.c.b16 %v634, %v632
  %v927 = vpack.c.b16 %v635, %v633
  %v928 = vpack.c.b16 %v638, %v636
  %v929 = vpack.c.b16 %v639, %v637
  %v930 = vpack.c.b16 %v642, %v640
  %v931 = vpack.c.b16 %v643, %v641
  %v932 = vpack.c.b16 %v646, %v644
  %v933 = vpack.c.b16 %v647, %v645
  %v934 = vpack.c.b16 %v650, %v648
  %v935 = vpack.c.b16 %v651, %v649
  %v936 = vpack.c.b16 %v654, %v652
  %v937 = vpack.c.b16 %v655, %v653
  %v938 = vpack.c.b16 %v658, %v656
  %v939 = vpack.c.b16 %v659, %v657
  %v940 = vpack.c.b16 %v662, %v660
  %v941 = vpack.c.b16 %v663, %v661
  %v942 = vpack.c.b16 %v666, %v664
  %v943 = vpack.c.b16 %v667, %v665
  %v944 = vpack.c.b16 %v670, %v668
  %v945 = vpack.c.b16 %v671, %v669
  %v946 = vpack.c.b16 %v674, %v672
  %v947 = vpack.c.b16 %v675, %v673
  %v948 = vpack.c.b16 %v678, %v676
  %v949 = vpack.c.b16 %v679, %v677
  %v950 = vpack.c.b16 %v682, %v680
  %v951 = vpack.c.b16 %v683, %v681
  %v952 = vpack.c.b16 %v686, %v684
  %v953 = vpack.c.b16 %v687, %v685
  %v954 = vpack.c.b16 %v690, %v688
  %v955 = vpack.c.b16 %v691, %v689
  %v956 = vpack.c.b16 %v694, %v692
  %v957 = vpack.c.b16 %v695, %v693
  %v958 = vpack.c.b16 %v698, %v696
  %v959 = vpack.c.b16 %v699, %v697
  %v960 = vpack.c.b16 %v702, %v700
  %v961 = vpack.c.b16 %v703, %v701
  %v962 = vpack.c.b16 %v706, %v704
  %v963 = vpack.c.b16 %v707, %v705
  %v964 = vpack.c.b16 %v710, %v708
  %v965 = vpack.c.b16 %v711, %v709
  %v966 = vpack.c.b16 %v714, %v712
  %v967 = vpack.c.b16 %v715, %v713
  %v968 = vpack.c.b16 %v718, %v716
  %v969 = vpack.c.b16 %v719, %v717
  %v970 = vpack.c.b16 %v722, %v720
  %v971 = vpack.c.b16 %v723, %v721
  %v972 = vpack.c.b16 %v726, %v724
  %v973 = vpack.c.b16 %v727, %v725
  %v974 = vpack.c.b16 %v730, %v728
  %v975 = vpack.c.b16 %v731, %v729
  %v976 = vpack.c.b16 %v734, %v732
  %v977 = vpack.c.b16 %v735, %v733
  %v978 = vpack.c.b16 %v738, %v736
  %v979 = vpack.c.b16 %v739, %v737
  %v980 = vpack.c.b16 %v742, %v740
  %v981 = vpack.c.b16 %v743, %v741
  %v982 = vpack.c.b16 %v746, %v744
  %v983 = vpack.c.b16 %v747, %v745
  %v984 = vpack.c.b16 %v750, %v748
  %v985 = vpack.c.b16 %v751, %v749
  %v986 = vpack.c.b16 %v754, %v752
  %v987 = vpack.c.b16 %v755, %v753
  %v988 = vpack.c.b16 %v758, %v756
  %v989 = vpack.c.b16 %v759, %v757
  %v990 = vpack.c.b16 %v762, %v760
  %v991 = vpack.c.b16 %v763, %v761
  %v992 = vpack.c.b16 %v766, %v764
  %v993 = vpack.c.b16 %v767, %v765
  %v994 = vpack.c.b16 %v770, %v768
  %v995 = vpack.c.b16 %v771, %v769
  %v996 = vpack.c.b16 %v774, %v772
  %v997 = vpack.c.b16 %v775, %v773
  %v998 = vpack.c.b16 %v778, %v776
  %v999 = vpack.c.b16 %v779, %v777
  %v1000 = vpack.c.b16 %v782, %v780
  %v1001 = vpack.c.b16 %v783, %v781
  %v1002 = vpack.c.b16 %v786, %v784
  %v1003 = vpack.c.b16 %v787, %v785
  %v1004 = vpack.c.b16 %v790, %v788
  %v1005 = vpack.c.b16 %v791, %v789
  %v1006 = vpack.c.b16 %v794, %v792
  %v1007 = vpack.c.b16 %v795, %v793
  %v1008 = vpack.c.b16 %v798, %v796
  %v1009 = vpack.c.b16 %v799, %v797
  %v1010 = vpack.c.b16 %v802, %v800
  %v1011 = vpack.c.b16 %v803, %v801
  %v1012 = vpack.c.b16 %v806, %v804
  %v1013 = vpack.c.b16 %v807, %v805
  %v1014 = vpack.c.b16 %v810, %v808
  %v1015 = vpack.c.b16 %v811, %v809
  %v1016 = vpack.c.b16 %v814, %v812
  %v1017 = vpack.c.b16 %v815, %v813
  %v1018 = vpack.c.b16 %v818, %v816
  %v1019 = vpack.c.b16 %v819, %v817
  %v1020 = vpack.c.b16 %v822, %v820
  %v1021 = vpack.c.b16 %v823, %v821
  %v1022 = vpack.c.b16 %v826, %v824
  %v1023 = vpack.c.b16 %v827, %v825
  %v1154 = vunpack.c.l.b16 %v208
  %v1155 = vunpack.c.l.b16 %v209
  %v1156 = vunpack.c.l.b16 %v210
  %v1157 = vunpack.c.l.b16 %v211
  %v1158 = vunpack.c.l.b16 %v212
  %v1159 = vunpack.c.l.b16 %v213
  %v1160 = vunpack.c.l.b16 %v214
  %v1161 = vunpack.c.l.b16 %v215
  %v1162 = vunpack.c.l.b16 %v216
  %v1163 = vunpack.c.l.b16 %v217
  %v1164 = vunpack.c.l.b16 %v218
  %v1165 = vunpack.c.l.b16 %v219
  %v1166 = vunpack.c.l.b16 %v220
  %v1167 = vunpack.c.l.b16 %v221
  %v1168 = vunpack.c.l.b16 %v222
  %v1169 = vunpack.c.l.b16 %v223
  %v1170 = vunpack.c.l.b16 %v224
  %v1171 = vunpack.c.l.b16 %v225
  %v1172 = vunpack.c.l.b16 %v226
  %v1173 = vunpack.c.l.b16 %v227
  %v1174 = vunpack.c.l.b16 %v228
  %v1175 = vunpack.c.l.b16 %v229
  %v1176 = vunpack.c.l.b16 %v230
  %v1177 = vunpack.c.l.b16 %v231
  %v1178 = vunpack.c.l.b16 %v232
  %v1179 = vunpack.c.l.b16 %v233
  %v1180 = vunpack.c.l.b16 %v234
  %v1181 = vunpack.c.l.b16 %v235
  %v1182 = vunpack.c.l.b16 %v236
  %v1183 = vunpack.c.l.b16 %v237
  %v1184 = vunpack.c.l.b16 %v238
  %v1185 = vunpack.c.l.b16 %v239
  %v1186 = vpack.c.b16 %v1155, %v1154
  %v1187 = vpack.c.b16 %v1157, %v1156
  %v1188 = vpack.c.b16 %v1159, %v1158
  %v1189 = vpack.c.b16 %v1161, %v1160
  %v1190 = vpack.c.b16 %v1163, %v1162
  %v1191 = vpack.c.b16 %v1165, %v1164
  %v1192 = vpack.c.b16 %v1167, %v1166
  %v1193 = vpack.c.b16 %v1169, %v1168
  %v1194 = vpack.c.b16 %v1171, %v1170
  %v1195 = vpack.c.b16 %v1173, %v1172
  %v1196 = vpack.c.b16 %v1175, %v1174
  %v1197 = vpack.c.b16 %v1177, %v1176
  %v1198 = vpack.c.b16 %v1179, %v1178
  %v1199 = vpack.c.b16 %v1181, %v1180
  %v1200 = vpack.c.b16 %v1183, %v1182
  %v1201 = vpack.c.b16 %v1185, %v1184
  %vm1217 = vcmask 1014784
  %v1219 = vsel %vm1217, %v829, 0
  %v1222 = vsel %vm1217, %v831, 0
  %v1225 = vsel %vm1217, %v833, 0
  %v1228 = vsel %vm1217, %v835, 0
  %v1231 = vsel %vm1217, %v837, 0
  %v1234 = vsel %vm1217, %v839, 0
  %v1237 = vsel %vm1217, %v841, 0
  %v1240 = vsel %vm1217, %v843, 0
  %v1243 = vsel %vm1217, %v845, 0
  %v1246 = vsel %vm1217, %v847, 0
  %v1249 = vsel %vm1217, %v849, 0
  %v1252 = vsel %vm1217, %v851, 0
  %v1255 = vsel %vm1217, %v853, 0
  %v1258 = vsel %vm1217, %v855, 0
  %v1261 = vsel %vm1217, %v857, 0
  %v1264 = vsel %vm1217, %v859, 0
  %v1267 = vsel %vm1217, %v861, 0
  %v1270 = vsel %vm1217, %v863, 0
  %v1273 = vsel %vm1217, %v865, 0
  %v1276 = vsel %vm1217, %v867, 0
  %v1279 = vsel %vm1217, %v869, 0
  %v1282 = vsel %vm1217, %v871, 0
  %v1285 = vsel %vm1217, %v873, 0
  %v1288 = vsel %vm1217, %v875, 0
  %v1291 = vsel %vm1217, %v877, 0
  %v1294 = vsel %vm1217, %v879, 0
  %v1297 = vsel %vm1217, %v881, 0
  %v1300 = vsel %vm1217, %v883, 0
  %v1303 = vsel %vm1217, %v885, 0
  %v1306 = vsel %vm1217, %v887, 0
  %v1309 = vsel %vm1217, %v889, 0
  %v1312 = vsel %vm1217, %v891, 0
  %v1315 = vsel %vm1217, %v893, 0
  %v1318 = vsel %vm1217, %v895, 0
  %v1321 = vsel %vm1217, %v897, 0
  %v1324 = vsel %vm1217, %v899, 0
  %v1327 = vsel %vm1217, %v901, 0
  %v1330 = vsel %vm1217, %v903, 0
  %v1333 = vsel %vm1217, %v905, 0
  %v1336 = vsel %vm1217, %v907, 0
  %v1339 = vsel %vm1217, %v909, 0
  %v1342 = vsel %vm1217, %v911, 0
  %v1345 = vsel %vm1217, %v913, 0
  %v1348 = vsel %vm1217, %v915, 0
  %v1351 = vsel %vm1217, %v917, 0
  %v1354 = vsel %vm1217, %v919, 0
  %v1357 = vsel %vm1217, %v921, 0
  %v1360 = vsel %vm1217, %v923, 0
  %v1363 = vsel %vm1217, %v925, 0
  %v1366 = vsel %vm1217, %v927, 0
  %v1369 = vsel %vm1217, %v929, 0
  %v1372 = vsel %vm1217, %v931, 0
  %v1375 = vsel %vm1217, %v933, 0
  %v1378 = vsel %vm1217, %v935, 0
  %v1381 = vsel %vm1217, %v937, 0
  %v1384 = vsel %vm1217, %v939, 0
  %v1387 = vsel %vm1217, %v941, 0
  %v1390 = vsel %vm1217, %v943, 0
  %v1393 = vsel %vm1217, %v945, 0
  %v1396 = vsel %vm1217, %v947, 0
  %v1399 = vsel %vm1217, %v949, 0
  %v1402 = vsel %vm1217, %v951, 0
  %v1405 = vsel %vm1217, %v953, 0
  %v1408 = vsel %vm1217, %v955, 0
  %v1411 = vsel %vm1217, %v957, 0
  %v1414 = vsel %vm1217, %v959, 0
  %v1417 = vsel %vm1217, %v961, 0
  %v1420 = vsel %vm1217, %v963, 0
  %v1423 = vsel %vm1217, %v965, 0
  %v1426 = vsel %vm1217, %v967, 0
  %v1429 = vsel %vm1217, %v969, 0
  %v1432 = vsel %vm1217, %v971, 0
  %v1435 = vsel %vm1217, %v973, 0
  %v1438 = vsel %vm1217, %v975, 0
  %v1441 = vsel %vm1217, %v977, 0
  %v1444 = vsel %vm1217, %v979, 0
  %v1447 = vsel %vm1217, %v981, 0
  %v1450 = vsel %vm1217, %v983, 0
  %v1453 = vsel %vm1217, %v985, 0
  %v1456 = vsel %vm1217, %v987, 0
  %v1459 = vsel %vm1217, %v989, 0
  %v1462 = vsel %vm1217, %v991, 0
  %v1465 = vsel %vm1217, %v993, 0
  %v1468 = vsel %vm1217, %v995, 0
  %v1471 = vsel %vm1217, %v997, 0
  %v1474 = vsel %vm1217, %v999, 0
  %v1477 = vsel %vm1217, %v1001, 0
  %v1480 = vsel %vm1217, %v1003, 0
  %v1483 = vsel %vm1217, %v1005, 0
  %v1486 = vsel %vm1217, %v1007, 0
  %v1489 = vsel %vm1217, %v1009, 0
  %v1492 = vsel %vm1217, %v1011, 0
  %v1495 = vsel %vm1217, %v1013, 0
  %v1498 = vsel %vm1217, %v1015, 0
  %v1501 = vsel %vm1217, %v1017, 0
  %v1504 = vsel %vm1217, %v1019, 0
  %v1507 = vsel %vm1217, %v1021, 0
  %v1510 = vsel %vm1217, %v1023, 0
  %vm1512 = vcmask 1045504
  %v1514 = vsel %vm1512, %v1201, 0
  %1516 = vmatprep.subr.bf16.mxu0 0
  %1517 = vmatpush1.bf16.msra.mxu0 %v1193
  %1518 = vmatprep.subr.bf16.mxu0 0
  %1519 = vmatpush1.bf16.msra.mxu0 %v1192
  %1520 = vmatprep.subr.bf16.mxu0 0
  %1521 = vmatpush1.bf16.msra.mxu0 %v1191
  %1522 = vmatprep.subr.bf16.mxu0 0
  %1523 = vmatpush1.bf16.msra.mxu0 %v1190
  %1524 = vmatprep.subr.bf16.mxu0 0
  %1525 = vmatpush1.bf16.msra.mxu0 %v1189
  %1526 = vmatprep.subr.bf16.mxu0 0
  %1527 = vmatpush1.bf16.msra.mxu0 %v1188
  %1528 = vmatprep.subr.bf16.mxu0 0
  %1529 = vmatpush1.bf16.msra.mxu0 %v1187
  %1530 = vmatprep.subr.bf16.mxu0 0
  %1531 = vmatpush1.bf16.msra.mxu0 %v1186
  %1532 = vmatprep.subr.bf16.mxu0 0
  %1533 = vmatpush2.bf16.msra.mxu0 %v1514
  %1534 = vmatprep.subr.bf16.mxu0 0
  %1535 = vmatpush2.bf16.msra.mxu0 %v1200
  %1536 = vmatprep.subr.bf16.mxu0 0
  %1537 = vmatpush2.bf16.msra.mxu0 %v1199
  %1538 = vmatprep.subr.bf16.mxu0 0
  %1539 = vmatpush2.bf16.msra.mxu0 %v1198
  %1540 = vmatprep.subr.bf16.mxu0 0
  %1541 = vmatpush2.bf16.msra.mxu0 %v1197
  %1542 = vmatprep.subr.bf16.mxu0 0
  %1543 = vmatpush2.bf16.msra.mxu0 %v1196
  %1544 = vmatprep.subr.bf16.mxu0 0
  %1545 = vmatpush2.bf16.msra.mxu0 %v1195
  %1546 = vmatprep.subr.bf16.mxu0 0
  %1547 = vmatpush2.bf16.msra.mxu0 %v1194
  %1548 = vmatprep.mubr.bf16.mxu0 %v1219
  %1549 = vmatmul.mubr.bf16.gmra.mxu0 %v828
  %v1550 = vpop.f32.mrf.mxu0
  %v1551 = vadd.f32 0.0, %v1550
  %v1552 = vpop.f32.mrf.mxu0
  %v1553 = vpop.f32.mrf.mxu0
  %v1554 = vadd.f32 0.0, %v1553
  %v1555 = vpop.f32.mrf.mxu0
  %1556 = vmatprep.mubr.bf16.mxu0 %v1222
  %1557 = vmatmul.mubr.bf16.gmra.mxu0 %v830
  %v1558 = vpop.f32.mrf.mxu0
  %v1559 = vadd.f32 0.0, %v1558
  %v1560 = vpop.f32.mrf.mxu0
  %v1561 = vpop.f32.mrf.mxu0
  %v1562 = vadd.f32 0.0, %v1561
  %v1563 = vpop.f32.mrf.mxu0
  %1564 = vmatprep.mubr.bf16.mxu0 %v1225
  %1565 = vmatmul.mubr.bf16.gmra.mxu0 %v832
  %v1566 = vpop.f32.mrf.mxu0
  %v1567 = vadd.f32 0.0, %v1566
  %v1568 = vpop.f32.mrf.mxu0
  %v1569 = vpop.f32.mrf.mxu0
  %v1570 = vadd.f32 0.0, %v1569
  %v1571 = vpop.f32.mrf.mxu0
  %1572 = vmatprep.mubr.bf16.mxu0 %v1228
  %1573 = vmatmul.mubr.bf16.gmra.mxu0 %v834
  %v1574 = vpop.f32.mrf.mxu0
  %v1575 = vadd.f32 0.0, %v1574
  %v1576 = vpop.f32.mrf.mxu0
  %v1577 = vpop.f32.mrf.mxu0
  %v1578 = vadd.f32 0.0, %v1577
  %v1579 = vpop.f32.mrf.mxu0
  %1580 = vmatprep.mubr.bf16.mxu0 %v1231
  %1581 = vmatmul.mubr.bf16.gmra.mxu0 %v836
  %v1582 = vpop.f32.mrf.mxu0
  %v1583 = vadd.f32 0.0, %v1582
  %v1584 = vpop.f32.mrf.mxu0
  %v1585 = vpop.f32.mrf.mxu0
  %v1586 = vadd.f32 0.0, %v1585
  %v1587 = vpop.f32.mrf.mxu0
  %1588 = vmatprep.mubr.bf16.mxu0 %v1234
  %1589 = vmatmul.mubr.bf16.gmra.mxu0 %v838
  %v1590 = vpop.f32.mrf.mxu0
  %v1591 = vadd.f32 0.0, %v1590
  %v1592 = vpop.f32.mrf.mxu0
  %v1593 = vpop.f32.mrf.mxu0
  %v1594 = vadd.f32 0.0, %v1593
  %v1595 = vpop.f32.mrf.mxu0
  %1596 = vmatprep.mubr.bf16.mxu0 %v1237
  %1597 = vmatmul.mubr.bf16.gmra.mxu0 %v840
  %v1598 = vpop.f32.mrf.mxu0
  %v1599 = vadd.f32 0.0, %v1598
  %v1600 = vpop.f32.mrf.mxu0
  %v1601 = vpop.f32.mrf.mxu0
  %v1602 = vadd.f32 0.0, %v1601
  %v1603 = vpop.f32.mrf.mxu0
  %1604 = vmatprep.mubr.bf16.mxu0 %v1240
  %1605 = vmatmul.mubr.bf16.gmra.mxu0 %v842
  %v1606 = vpop.f32.mrf.mxu0
  %v1607 = vadd.f32 0.0, %v1606
  %v1608 = vpop.f32.mrf.mxu0
  %v1609 = vpop.f32.mrf.mxu0
  %v1610 = vadd.f32 0.0, %v1609
  %v1611 = vpop.f32.mrf.mxu0
  %1612 = vmatprep.mubr.bf16.mxu0 %v1243
  %1613 = vmatmul.mubr.bf16.gmra.mxu0 %v844
  %v1614 = vpop.f32.mrf.mxu0
  %v1615 = vadd.f32 0.0, %v1614
  %v1616 = vpop.f32.mrf.mxu0
  %v1617 = vpop.f32.mrf.mxu0
  %v1618 = vadd.f32 0.0, %v1617
  %v1619 = vpop.f32.mrf.mxu0
  %1620 = vmatprep.mubr.bf16.mxu0 %v1246
  %1621 = vmatmul.mubr.bf16.gmra.mxu0 %v846
  %v1622 = vpop.f32.mrf.mxu0
  %v1623 = vadd.f32 0.0, %v1622
  %v1624 = vpop.f32.mrf.mxu0
  %v1625 = vpop.f32.mrf.mxu0
  %v1626 = vadd.f32 0.0, %v1625
  %v1627 = vpop.f32.mrf.mxu0
  %1628 = vmatprep.mubr.bf16.mxu0 %v1249
  %1629 = vmatmul.mubr.bf16.gmra.mxu0 %v848
  %v1630 = vpop.f32.mrf.mxu0
  %v1631 = vadd.f32 0.0, %v1630
  %v1632 = vpop.f32.mrf.mxu0
  %v1633 = vpop.f32.mrf.mxu0
  %v1634 = vadd.f32 0.0, %v1633
  %v1635 = vpop.f32.mrf.mxu0
  %1636 = vmatprep.mubr.bf16.mxu0 %v1252
  %1637 = vmatmul.mubr.bf16.gmra.mxu0 %v850
  %v1638 = vpop.f32.mrf.mxu0
  %v1639 = vadd.f32 0.0, %v1638
  %v1640 = vpop.f32.mrf.mxu0
  %v1641 = vpop.f32.mrf.mxu0
  %v1642 = vadd.f32 0.0, %v1641
  %v1643 = vpop.f32.mrf.mxu0
  %1644 = vmatprep.mubr.bf16.mxu0 %v1255
  %1645 = vmatmul.mubr.bf16.gmra.mxu0 %v852
  %v1646 = vpop.f32.mrf.mxu0
  %v1647 = vadd.f32 0.0, %v1646
  %v1648 = vpop.f32.mrf.mxu0
  %v1649 = vpop.f32.mrf.mxu0
  %v1650 = vadd.f32 0.0, %v1649
  %v1651 = vpop.f32.mrf.mxu0
  %1652 = vmatprep.mubr.bf16.mxu0 %v1258
  %1653 = vmatmul.mubr.bf16.gmra.mxu0 %v854
  %v1654 = vpop.f32.mrf.mxu0
  %v1655 = vadd.f32 0.0, %v1654
  %v1656 = vpop.f32.mrf.mxu0
  %v1657 = vpop.f32.mrf.mxu0
  %v1658 = vadd.f32 0.0, %v1657
  %v1659 = vpop.f32.mrf.mxu0
  %1660 = vmatprep.mubr.bf16.mxu0 %v1261
  %1661 = vmatmul.mubr.bf16.gmra.mxu0 %v856
  %v1662 = vpop.f32.mrf.mxu0
  %v1663 = vadd.f32 0.0, %v1662
  %v1664 = vpop.f32.mrf.mxu0
  %v1665 = vpop.f32.mrf.mxu0
  %v1666 = vadd.f32 0.0, %v1665
  %v1667 = vpop.f32.mrf.mxu0
  %1668 = vmatprep.mubr.bf16.mxu0 %v1264
  %1669 = vmatmul.mubr.bf16.gmra.mxu0 %v858
  %v1670 = vpop.f32.mrf.mxu0
  %v1671 = vadd.f32 0.0, %v1670
  %v1672 = vpop.f32.mrf.mxu0
  %v1673 = vpop.f32.mrf.mxu0
  %v1674 = vadd.f32 0.0, %v1673
  %v1675 = vpop.f32.mrf.mxu0
  %1676 = vmatprep.mubr.bf16.mxu0 %v1267
  %1677 = vmatmul.mubr.bf16.gmra.mxu0 %v860
  %v1678 = vpop.f32.mrf.mxu0
  %v1679 = vadd.f32 0.0, %v1678
  %v1680 = vpop.f32.mrf.mxu0
  %v1681 = vpop.f32.mrf.mxu0
  %v1682 = vadd.f32 0.0, %v1681
  %v1683 = vpop.f32.mrf.mxu0
  %1684 = vmatprep.mubr.bf16.mxu0 %v1270
  %1685 = vmatmul.mubr.bf16.gmra.mxu0 %v862
  %v1686 = vpop.f32.mrf.mxu0
  %v1687 = vadd.f32 0.0, %v1686
  %v1688 = vpop.f32.mrf.mxu0
  %v1689 = vpop.f32.mrf.mxu0
  %v1690 = vadd.f32 0.0, %v1689
  %v1691 = vpop.f32.mrf.mxu0
  %1692 = vmatprep.mubr.bf16.mxu0 %v1273
  %1693 = vmatmul.mubr.bf16.gmra.mxu0 %v864
  %v1694 = vpop.f32.mrf.mxu0
  %v1695 = vadd.f32 0.0, %v1694
  %v1696 = vpop.f32.mrf.mxu0
  %v1697 = vpop.f32.mrf.mxu0
  %v1698 = vadd.f32 0.0, %v1697
  %v1699 = vpop.f32.mrf.mxu0
  %1700 = vmatprep.mubr.bf16.mxu0 %v1276
  %1701 = vmatmul.mubr.bf16.gmra.mxu0 %v866
  %v1702 = vpop.f32.mrf.mxu0
  %v1703 = vadd.f32 0.0, %v1702
  %v1704 = vpop.f32.mrf.mxu0
  %v1705 = vpop.f32.mrf.mxu0
  %v1706 = vadd.f32 0.0, %v1705
  %v1707 = vpop.f32.mrf.mxu0
  %1708 = vmatprep.mubr.bf16.mxu0 %v1279
  %1709 = vmatmul.mubr.bf16.gmra.mxu0 %v868
  %v1710 = vpop.f32.mrf.mxu0
  %v1711 = vadd.f32 0.0, %v1710
  %v1712 = vpop.f32.mrf.mxu0
  %v1713 = vpop.f32.mrf.mxu0
  %v1714 = vadd.f32 0.0, %v1713
  %v1715 = vpop.f32.mrf.mxu0
  %1716 = vmatprep.mubr.bf16.mxu0 %v1282
  %1717 = vmatmul.mubr.bf16.gmra.mxu0 %v870
  %v1718 = vpop.f32.mrf.mxu0
  %v1719 = vadd.f32 0.0, %v1718
  %v1720 = vpop.f32.mrf.mxu0
  %v1721 = vpop.f32.mrf.mxu0
  %v1722 = vadd.f32 0.0, %v1721
  %v1723 = vpop.f32.mrf.mxu0
  %1724 = vmatprep.mubr.bf16.mxu0 %v1285
  %1725 = vmatmul.mubr.bf16.gmra.mxu0 %v872
  %v1726 = vpop.f32.mrf.mxu0
  %v1727 = vadd.f32 0.0, %v1726
  %v1728 = vpop.f32.mrf.mxu0
  %v1729 = vpop.f32.mrf.mxu0
  %v1730 = vadd.f32 0.0, %v1729
  %v1731 = vpop.f32.mrf.mxu0
  %1732 = vmatprep.mubr.bf16.mxu0 %v1288
  %1733 = vmatmul.mubr.bf16.gmra.mxu0 %v874
  %v1734 = vpop.f32.mrf.mxu0
  %v1735 = vadd.f32 0.0, %v1734
  %v1736 = vpop.f32.mrf.mxu0
  %v1737 = vpop.f32.mrf.mxu0
  %v1738 = vadd.f32 0.0, %v1737
  %v1739 = vpop.f32.mrf.mxu0
  %1740 = vmatprep.mubr.bf16.mxu0 %v1291
  %1741 = vmatmul.mubr.bf16.gmra.mxu0 %v876
  %v1742 = vpop.f32.mrf.mxu0
  %v1743 = vadd.f32 0.0, %v1742
  %v1744 = vpop.f32.mrf.mxu0
  %v1745 = vpop.f32.mrf.mxu0
  %v1746 = vadd.f32 0.0, %v1745
  %v1747 = vpop.f32.mrf.mxu0
  %1748 = vmatprep.mubr.bf16.mxu0 %v1294
  %1749 = vmatmul.mubr.bf16.gmra.mxu0 %v878
  %v1750 = vpop.f32.mrf.mxu0
  %v1751 = vadd.f32 0.0, %v1750
  %v1752 = vpop.f32.mrf.mxu0
  %v1753 = vpop.f32.mrf.mxu0
  %v1754 = vadd.f32 0.0, %v1753
  %v1755 = vpop.f32.mrf.mxu0
  %1756 = vmatprep.mubr.bf16.mxu0 %v1297
  %1757 = vmatmul.mubr.bf16.gmra.mxu0 %v880
  %v1758 = vpop.f32.mrf.mxu0
  %v1759 = vadd.f32 0.0, %v1758
  %v1760 = vpop.f32.mrf.mxu0
  %v1761 = vpop.f32.mrf.mxu0
  %v1762 = vadd.f32 0.0, %v1761
  %v1763 = vpop.f32.mrf.mxu0
  %1764 = vmatprep.mubr.bf16.mxu0 %v1300
  %1765 = vmatmul.mubr.bf16.gmra.mxu0 %v882
  %v1766 = vpop.f32.mrf.mxu0
  %v1767 = vadd.f32 0.0, %v1766
  %v1768 = vpop.f32.mrf.mxu0
  %v1769 = vpop.f32.mrf.mxu0
  %v1770 = vadd.f32 0.0, %v1769
  %v1771 = vpop.f32.mrf.mxu0
  %1772 = vmatprep.mubr.bf16.mxu0 %v1303
  %1773 = vmatmul.mubr.bf16.gmra.mxu0 %v884
  %v1774 = vpop.f32.mrf.mxu0
  %v1775 = vadd.f32 0.0, %v1774
  %v1776 = vpop.f32.mrf.mxu0
  %v1777 = vpop.f32.mrf.mxu0
  %v1778 = vadd.f32 0.0, %v1777
  %v1779 = vpop.f32.mrf.mxu0
  %1780 = vmatprep.mubr.bf16.mxu0 %v1306
  %1781 = vmatmul.mubr.bf16.gmra.mxu0 %v886
  %v1782 = vpop.f32.mrf.mxu0
  %v1783 = vadd.f32 0.0, %v1782
  %v1784 = vpop.f32.mrf.mxu0
  %v1785 = vpop.f32.mrf.mxu0
  %v1786 = vadd.f32 0.0, %v1785
  %v1787 = vpop.f32.mrf.mxu0
  %1788 = vmatprep.mubr.bf16.mxu0 %v1309
  %1789 = vmatmul.mubr.bf16.gmra.mxu0 %v888
  %v1790 = vpop.f32.mrf.mxu0
  %v1791 = vadd.f32 0.0, %v1790
  %v1792 = vpop.f32.mrf.mxu0
  %v1793 = vpop.f32.mrf.mxu0
  %v1794 = vadd.f32 0.0, %v1793
  %v1795 = vpop.f32.mrf.mxu0
  %1796 = vmatprep.mubr.bf16.mxu0 %v1312
  %1797 = vmatmul.mubr.bf16.gmra.mxu0 %v890
  %v1798 = vpop.f32.mrf.mxu0
  %v1799 = vadd.f32 0.0, %v1798
  %v1800 = vpop.f32.mrf.mxu0
  %v1801 = vpop.f32.mrf.mxu0
  %v1802 = vadd.f32 0.0, %v1801
  %v1803 = vpop.f32.mrf.mxu0
  %1804 = vmatprep.mubr.bf16.mxu0 %v1315
  %1805 = vmatmul.mubr.bf16.gmra.mxu0 %v892
  %v1806 = vpop.f32.mrf.mxu0
  %v1807 = vadd.f32 0.0, %v1806
  %v1808 = vpop.f32.mrf.mxu0
  %v1809 = vpop.f32.mrf.mxu0
  %v1810 = vadd.f32 0.0, %v1809
  %v1811 = vpop.f32.mrf.mxu0
  %1812 = vmatprep.mubr.bf16.mxu0 %v1318
  %1813 = vmatmul.mubr.bf16.gmra.mxu0 %v894
  %v1814 = vpop.f32.mrf.mxu0
  %v1815 = vadd.f32 0.0, %v1814
  %v1816 = vpop.f32.mrf.mxu0
  %v1817 = vpop.f32.mrf.mxu0
  %v1818 = vadd.f32 0.0, %v1817
  %v1819 = vpop.f32.mrf.mxu0
  %1820 = vmatprep.mubr.bf16.mxu0 %v1321
  %1821 = vmatmul.mubr.bf16.gmra.mxu0 %v896
  %v1822 = vpop.f32.mrf.mxu0
  %v1823 = vadd.f32 0.0, %v1822
  %v1824 = vpop.f32.mrf.mxu0
  %v1825 = vpop.f32.mrf.mxu0
  %v1826 = vadd.f32 0.0, %v1825
  %v1827 = vpop.f32.mrf.mxu0
  %1828 = vmatprep.mubr.bf16.mxu0 %v1324
  %1829 = vmatmul.mubr.bf16.gmra.mxu0 %v898
  %v1830 = vpop.f32.mrf.mxu0
  %v1831 = vadd.f32 0.0, %v1830
  %v1832 = vpop.f32.mrf.mxu0
  %v1833 = vpop.f32.mrf.mxu0
  %v1834 = vadd.f32 0.0, %v1833
  %v1835 = vpop.f32.mrf.mxu0
  %1836 = vmatprep.mubr.bf16.mxu0 %v1327
  %1837 = vmatmul.mubr.bf16.gmra.mxu0 %v900
  %v1838 = vpop.f32.mrf.mxu0
  %v1839 = vadd.f32 0.0, %v1838
  %v1840 = vpop.f32.mrf.mxu0
  %v1841 = vpop.f32.mrf.mxu0
  %v1842 = vadd.f32 0.0, %v1841
  %v1843 = vpop.f32.mrf.mxu0
  %1844 = vmatprep.mubr.bf16.mxu0 %v1330
  %1845 = vmatmul.mubr.bf16.gmra.mxu0 %v902
  %v1846 = vpop.f32.mrf.mxu0
  %v1847 = vadd.f32 0.0, %v1846
  %v1848 = vpop.f32.mrf.mxu0
  %v1849 = vpop.f32.mrf.mxu0
  %v1850 = vadd.f32 0.0, %v1849
  %v1851 = vpop.f32.mrf.mxu0
  %1852 = vmatprep.mubr.bf16.mxu0 %v1333
  %1853 = vmatmul.mubr.bf16.gmra.mxu0 %v904
  %v1854 = vpop.f32.mrf.mxu0
  %v1855 = vadd.f32 0.0, %v1854
  %v1856 = vpop.f32.mrf.mxu0
  %v1857 = vpop.f32.mrf.mxu0
  %v1858 = vadd.f32 0.0, %v1857
  %v1859 = vpop.f32.mrf.mxu0
  %1860 = vmatprep.mubr.bf16.mxu0 %v1336
  %1861 = vmatmul.mubr.bf16.gmra.mxu0 %v906
  %v1862 = vpop.f32.mrf.mxu0
  %v1863 = vadd.f32 0.0, %v1862
  %v1864 = vpop.f32.mrf.mxu0
  %v1865 = vpop.f32.mrf.mxu0
  %v1866 = vadd.f32 0.0, %v1865
  %v1867 = vpop.f32.mrf.mxu0
  %1868 = vmatprep.mubr.bf16.mxu0 %v1339
  %1869 = vmatmul.mubr.bf16.gmra.mxu0 %v908
  %v1870 = vpop.f32.mrf.mxu0
  %v1871 = vadd.f32 0.0, %v1870
  %v1872 = vpop.f32.mrf.mxu0
  %v1873 = vpop.f32.mrf.mxu0
  %v1874 = vadd.f32 0.0, %v1873
  %v1875 = vpop.f32.mrf.mxu0
  %1876 = vmatprep.mubr.bf16.mxu0 %v1342
  %1877 = vmatmul.mubr.bf16.gmra.mxu0 %v910
  %v1878 = vpop.f32.mrf.mxu0
  %v1879 = vadd.f32 0.0, %v1878
  %v1880 = vpop.f32.mrf.mxu0
  %v1881 = vpop.f32.mrf.mxu0
  %v1882 = vadd.f32 0.0, %v1881
  %v1883 = vpop.f32.mrf.mxu0
  %1884 = vmatprep.mubr.bf16.mxu0 %v1345
  %1885 = vmatmul.mubr.bf16.gmra.mxu0 %v912
  %v1886 = vpop.f32.mrf.mxu0
  %v1887 = vadd.f32 0.0, %v1886
  %v1888 = vpop.f32.mrf.mxu0
  %v1889 = vpop.f32.mrf.mxu0
  %v1890 = vadd.f32 0.0, %v1889
  %v1891 = vpop.f32.mrf.mxu0
  %1892 = vmatprep.mubr.bf16.mxu0 %v1348
  %1893 = vmatmul.mubr.bf16.gmra.mxu0 %v914
  %v1894 = vpop.f32.mrf.mxu0
  %v1895 = vadd.f32 0.0, %v1894
  %v1896 = vpop.f32.mrf.mxu0
  %v1897 = vpop.f32.mrf.mxu0
  %v1898 = vadd.f32 0.0, %v1897
  %v1899 = vpop.f32.mrf.mxu0
  %1900 = vmatprep.mubr.bf16.mxu0 %v1351
  %1901 = vmatmul.mubr.bf16.gmra.mxu0 %v916
  %v1902 = vpop.f32.mrf.mxu0
  %v1903 = vadd.f32 0.0, %v1902
  %v1904 = vpop.f32.mrf.mxu0
  %v1905 = vpop.f32.mrf.mxu0
  %v1906 = vadd.f32 0.0, %v1905
  %v1907 = vpop.f32.mrf.mxu0
  %1908 = vmatprep.mubr.bf16.mxu0 %v1354
  %1909 = vmatmul.mubr.bf16.gmra.mxu0 %v918
  %v1910 = vpop.f32.mrf.mxu0
  %v1911 = vadd.f32 0.0, %v1910
  %v1912 = vpop.f32.mrf.mxu0
  %v1913 = vpop.f32.mrf.mxu0
  %v1914 = vadd.f32 0.0, %v1913
  %v1915 = vpop.f32.mrf.mxu0
  %1916 = vmatprep.mubr.bf16.mxu0 %v1357
  %1917 = vmatmul.mubr.bf16.gmra.mxu0 %v920
  %v1918 = vpop.f32.mrf.mxu0
  %v1919 = vadd.f32 0.0, %v1918
  %v1920 = vpop.f32.mrf.mxu0
  %v1921 = vpop.f32.mrf.mxu0
  %v1922 = vadd.f32 0.0, %v1921
  %v1923 = vpop.f32.mrf.mxu0
  %1924 = vmatprep.mubr.bf16.mxu0 %v1360
  %1925 = vmatmul.mubr.bf16.gmra.mxu0 %v922
  %v1926 = vpop.f32.mrf.mxu0
  %v1927 = vadd.f32 0.0, %v1926
  %v1928 = vpop.f32.mrf.mxu0
  %v1929 = vpop.f32.mrf.mxu0
  %v1930 = vadd.f32 0.0, %v1929
  %v1931 = vpop.f32.mrf.mxu0
  %1932 = vmatprep.mubr.bf16.mxu0 %v1363
  %1933 = vmatmul.mubr.bf16.gmra.mxu0 %v924
  %v1934 = vpop.f32.mrf.mxu0
  %v1935 = vadd.f32 0.0, %v1934
  %v1936 = vpop.f32.mrf.mxu0
  %v1937 = vpop.f32.mrf.mxu0
  %v1938 = vadd.f32 0.0, %v1937
  %v1939 = vpop.f32.mrf.mxu0
  %1940 = vmatprep.mubr.bf16.mxu0 %v1366
  %1941 = vmatmul.mubr.bf16.gmra.mxu0 %v926
  %v1942 = vpop.f32.mrf.mxu0
  %v1943 = vadd.f32 0.0, %v1942
  %v1944 = vpop.f32.mrf.mxu0
  %v1945 = vpop.f32.mrf.mxu0
  %v1946 = vadd.f32 0.0, %v1945
  %v1947 = vpop.f32.mrf.mxu0
  %1948 = vmatprep.mubr.bf16.mxu0 %v1369
  %1949 = vmatmul.mubr.bf16.gmra.mxu0 %v928
  %v1950 = vpop.f32.mrf.mxu0
  %v1951 = vadd.f32 0.0, %v1950
  %v1952 = vpop.f32.mrf.mxu0
  %v1953 = vpop.f32.mrf.mxu0
  %v1954 = vadd.f32 0.0, %v1953
  %v1955 = vpop.f32.mrf.mxu0
  %1956 = vmatprep.mubr.bf16.mxu0 %v1372
  %1957 = vmatmul.mubr.bf16.gmra.mxu0 %v930
  %v1958 = vpop.f32.mrf.mxu0
  %v1959 = vadd.f32 0.0, %v1958
  %v1960 = vpop.f32.mrf.mxu0
  %v1961 = vpop.f32.mrf.mxu0
  %v1962 = vadd.f32 0.0, %v1961
  %v1963 = vpop.f32.mrf.mxu0
  %1964 = vmatprep.mubr.bf16.mxu0 %v1375
  %1965 = vmatmul.mubr.bf16.gmra.mxu0 %v932
  %v1966 = vpop.f32.mrf.mxu0
  %v1967 = vadd.f32 0.0, %v1966
  %v1968 = vpop.f32.mrf.mxu0
  %v1969 = vpop.f32.mrf.mxu0
  %v1970 = vadd.f32 0.0, %v1969
  %v1971 = vpop.f32.mrf.mxu0
  %1972 = vmatprep.mubr.bf16.mxu0 %v1378
  %1973 = vmatmul.mubr.bf16.gmra.mxu0 %v934
  %v1974 = vpop.f32.mrf.mxu0
  %v1975 = vadd.f32 0.0, %v1974
  %v1976 = vpop.f32.mrf.mxu0
  %v1977 = vpop.f32.mrf.mxu0
  %v1978 = vadd.f32 0.0, %v1977
  %v1979 = vpop.f32.mrf.mxu0
  %1980 = vmatprep.mubr.bf16.mxu0 %v1381
  %1981 = vmatmul.mubr.bf16.gmra.mxu0 %v936
  %v1982 = vpop.f32.mrf.mxu0
  %v1983 = vadd.f32 0.0, %v1982
  %v1984 = vpop.f32.mrf.mxu0
  %v1985 = vpop.f32.mrf.mxu0
  %v1986 = vadd.f32 0.0, %v1985
  %v1987 = vpop.f32.mrf.mxu0
  %1988 = vmatprep.mubr.bf16.mxu0 %v1384
  %1989 = vmatmul.mubr.bf16.gmra.mxu0 %v938
  %v1990 = vpop.f32.mrf.mxu0
  %v1991 = vadd.f32 0.0, %v1990
  %v1992 = vpop.f32.mrf.mxu0
  %v1993 = vpop.f32.mrf.mxu0
  %v1994 = vadd.f32 0.0, %v1993
  %v1995 = vpop.f32.mrf.mxu0
  %1996 = vmatprep.mubr.bf16.mxu0 %v1387
  %1997 = vmatmul.mubr.bf16.gmra.mxu0 %v940
  %v1998 = vpop.f32.mrf.mxu0
  %v1999 = vadd.f32 0.0, %v1998
  %v2000 = vpop.f32.mrf.mxu0
  %v2001 = vpop.f32.mrf.mxu0
  %v2002 = vadd.f32 0.0, %v2001
  %v2003 = vpop.f32.mrf.mxu0
  %2004 = vmatprep.mubr.bf16.mxu0 %v1390
  %2005 = vmatmul.mubr.bf16.gmra.mxu0 %v942
  %v2006 = vpop.f32.mrf.mxu0
  %v2007 = vadd.f32 0.0, %v2006
  %v2008 = vpop.f32.mrf.mxu0
  %v2009 = vpop.f32.mrf.mxu0
  %v2010 = vadd.f32 0.0, %v2009
  %v2011 = vpop.f32.mrf.mxu0
  %2012 = vmatprep.mubr.bf16.mxu0 %v1393
  %2013 = vmatmul.mubr.bf16.gmra.mxu0 %v944
  %v2014 = vpop.f32.mrf.mxu0
  %v2015 = vadd.f32 0.0, %v2014
  %v2016 = vpop.f32.mrf.mxu0
  %v2017 = vpop.f32.mrf.mxu0
  %v2018 = vadd.f32 0.0, %v2017
  %v2019 = vpop.f32.mrf.mxu0
  %2020 = vmatprep.mubr.bf16.mxu0 %v1396
  %2021 = vmatmul.mubr.bf16.gmra.mxu0 %v946
  %v2022 = vpop.f32.mrf.mxu0
  %v2023 = vadd.f32 0.0, %v2022
  %v2024 = vpop.f32.mrf.mxu0
  %v2025 = vpop.f32.mrf.mxu0
  %v2026 = vadd.f32 0.0, %v2025
  %v2027 = vpop.f32.mrf.mxu0
  %2028 = vmatprep.mubr.bf16.mxu0 %v1399
  %2029 = vmatmul.mubr.bf16.gmra.mxu0 %v948
  %v2030 = vpop.f32.mrf.mxu0
  %v2031 = vadd.f32 0.0, %v2030
  %v2032 = vpop.f32.mrf.mxu0
  %v2033 = vpop.f32.mrf.mxu0
  %v2034 = vadd.f32 0.0, %v2033
  %v2035 = vpop.f32.mrf.mxu0
  %2036 = vmatprep.mubr.bf16.mxu0 %v1402
  %2037 = vmatmul.mubr.bf16.gmra.mxu0 %v950
  %v2038 = vpop.f32.mrf.mxu0
  %v2039 = vadd.f32 0.0, %v2038
  %v2040 = vpop.f32.mrf.mxu0
  %v2041 = vpop.f32.mrf.mxu0
  %v2042 = vadd.f32 0.0, %v2041
  %v2043 = vpop.f32.mrf.mxu0
  %2044 = vmatprep.mubr.bf16.mxu0 %v1405
  %2045 = vmatmul.mubr.bf16.gmra.mxu0 %v952
  %v2046 = vpop.f32.mrf.mxu0
  %v2047 = vadd.f32 0.0, %v2046
  %v2048 = vpop.f32.mrf.mxu0
  %v2049 = vpop.f32.mrf.mxu0
  %v2050 = vadd.f32 0.0, %v2049
  %v2051 = vpop.f32.mrf.mxu0
  %2052 = vmatprep.mubr.bf16.mxu0 %v1408
  %2053 = vmatmul.mubr.bf16.gmra.mxu0 %v954
  %v2054 = vpop.f32.mrf.mxu0
  %v2055 = vadd.f32 0.0, %v2054
  %v2056 = vpop.f32.mrf.mxu0
  %v2057 = vpop.f32.mrf.mxu0
  %v2058 = vadd.f32 0.0, %v2057
  %v2059 = vpop.f32.mrf.mxu0
  %2060 = vmatprep.mubr.bf16.mxu0 %v1411
  %2061 = vmatmul.mubr.bf16.gmra.mxu0 %v956
  %v2062 = vpop.f32.mrf.mxu0
  %v2063 = vadd.f32 0.0, %v2062
  %v2064 = vpop.f32.mrf.mxu0
  %v2065 = vpop.f32.mrf.mxu0
  %v2066 = vadd.f32 0.0, %v2065
  %v2067 = vpop.f32.mrf.mxu0
  %2068 = vmatprep.mubr.bf16.mxu0 %v1414
  %2069 = vmatmul.mubr.bf16.gmra.mxu0 %v958
  %v2070 = vpop.f32.mrf.mxu0
  %v2071 = vadd.f32 0.0, %v2070
  %v2072 = vpop.f32.mrf.mxu0
  %v2073 = vpop.f32.mrf.mxu0
  %v2074 = vadd.f32 0.0, %v2073
  %v2075 = vpop.f32.mrf.mxu0
  %2076 = vmatprep.mubr.bf16.mxu0 %v1417
  %2077 = vmatmul.mubr.bf16.gmra.mxu0 %v960
  %v2078 = vpop.f32.mrf.mxu0
  %v2079 = vadd.f32 0.0, %v2078
  %v2080 = vpop.f32.mrf.mxu0
  %v2081 = vpop.f32.mrf.mxu0
  %v2082 = vadd.f32 0.0, %v2081
  %v2083 = vpop.f32.mrf.mxu0
  %2084 = vmatprep.mubr.bf16.mxu0 %v1420
  %2085 = vmatmul.mubr.bf16.gmra.mxu0 %v962
  %v2086 = vpop.f32.mrf.mxu0
  %v2087 = vadd.f32 0.0, %v2086
  %v2088 = vpop.f32.mrf.mxu0
  %v2089 = vpop.f32.mrf.mxu0
  %v2090 = vadd.f32 0.0, %v2089
  %v2091 = vpop.f32.mrf.mxu0
  %2092 = vmatprep.mubr.bf16.mxu0 %v1423
  %2093 = vmatmul.mubr.bf16.gmra.mxu0 %v964
  %v2094 = vpop.f32.mrf.mxu0
  %v2095 = vadd.f32 0.0, %v2094
  %v2096 = vpop.f32.mrf.mxu0
  %v2097 = vpop.f32.mrf.mxu0
  %v2098 = vadd.f32 0.0, %v2097
  %v2099 = vpop.f32.mrf.mxu0
  %2100 = vmatprep.mubr.bf16.mxu0 %v1426
  %2101 = vmatmul.mubr.bf16.gmra.mxu0 %v966
  %v2102 = vpop.f32.mrf.mxu0
  %v2103 = vadd.f32 0.0, %v2102
  %v2104 = vpop.f32.mrf.mxu0
  %v2105 = vpop.f32.mrf.mxu0
  %v2106 = vadd.f32 0.0, %v2105
  %v2107 = vpop.f32.mrf.mxu0
  %2108 = vmatprep.mubr.bf16.mxu0 %v1429
  %2109 = vmatmul.mubr.bf16.gmra.mxu0 %v968
  %v2110 = vpop.f32.mrf.mxu0
  %v2111 = vadd.f32 0.0, %v2110
  %v2112 = vpop.f32.mrf.mxu0
  %v2113 = vpop.f32.mrf.mxu0
  %v2114 = vadd.f32 0.0, %v2113
  %v2115 = vpop.f32.mrf.mxu0
  %2116 = vmatprep.mubr.bf16.mxu0 %v1432
  %2117 = vmatmul.mubr.bf16.gmra.mxu0 %v970
  %v2118 = vpop.f32.mrf.mxu0
  %v2119 = vadd.f32 0.0, %v2118
  %v2120 = vpop.f32.mrf.mxu0
  %v2121 = vpop.f32.mrf.mxu0
  %v2122 = vadd.f32 0.0, %v2121
  %v2123 = vpop.f32.mrf.mxu0
  %2124 = vmatprep.mubr.bf16.mxu0 %v1435
  %2125 = vmatmul.mubr.bf16.gmra.mxu0 %v972
  %v2126 = vpop.f32.mrf.mxu0
  %v2127 = vadd.f32 0.0, %v2126
  %v2128 = vpop.f32.mrf.mxu0
  %v2129 = vpop.f32.mrf.mxu0
  %v2130 = vadd.f32 0.0, %v2129
  %v2131 = vpop.f32.mrf.mxu0
  %2132 = vmatprep.mubr.bf16.mxu0 %v1438
  %2133 = vmatmul.mubr.bf16.gmra.mxu0 %v974
  %v2134 = vpop.f32.mrf.mxu0
  %v2135 = vadd.f32 0.0, %v2134
  %v2136 = vpop.f32.mrf.mxu0
  %v2137 = vpop.f32.mrf.mxu0
  %v2138 = vadd.f32 0.0, %v2137
  %v2139 = vpop.f32.mrf.mxu0
  %2140 = vmatprep.mubr.bf16.mxu0 %v1441
  %2141 = vmatmul.mubr.bf16.gmra.mxu0 %v976
  %v2142 = vpop.f32.mrf.mxu0
  %v2143 = vadd.f32 0.0, %v2142
  %v2144 = vpop.f32.mrf.mxu0
  %v2145 = vpop.f32.mrf.mxu0
  %v2146 = vadd.f32 0.0, %v2145
  %v2147 = vpop.f32.mrf.mxu0
  %2148 = vmatprep.mubr.bf16.mxu0 %v1444
  %2149 = vmatmul.mubr.bf16.gmra.mxu0 %v978
  %v2150 = vpop.f32.mrf.mxu0
  %v2151 = vadd.f32 0.0, %v2150
  %v2152 = vpop.f32.mrf.mxu0
  %v2153 = vpop.f32.mrf.mxu0
  %v2154 = vadd.f32 0.0, %v2153
  %v2155 = vpop.f32.mrf.mxu0
  %2156 = vmatprep.mubr.bf16.mxu0 %v1447
  %2157 = vmatmul.mubr.bf16.gmra.mxu0 %v980
  %v2158 = vpop.f32.mrf.mxu0
  %v2159 = vadd.f32 0.0, %v2158
  %v2160 = vpop.f32.mrf.mxu0
  %v2161 = vpop.f32.mrf.mxu0
  %v2162 = vadd.f32 0.0, %v2161
  %v2163 = vpop.f32.mrf.mxu0
  %2164 = vmatprep.mubr.bf16.mxu0 %v1450
  %2165 = vmatmul.mubr.bf16.gmra.mxu0 %v982
  %v2166 = vpop.f32.mrf.mxu0
  %v2167 = vadd.f32 0.0, %v2166
  %v2168 = vpop.f32.mrf.mxu0
  %v2169 = vpop.f32.mrf.mxu0
  %v2170 = vadd.f32 0.0, %v2169
  %v2171 = vpop.f32.mrf.mxu0
  %2172 = vmatprep.mubr.bf16.mxu0 %v1453
  %2173 = vmatmul.mubr.bf16.gmra.mxu0 %v984
  %v2174 = vpop.f32.mrf.mxu0
  %v2175 = vadd.f32 0.0, %v2174
  %v2176 = vpop.f32.mrf.mxu0
  %v2177 = vpop.f32.mrf.mxu0
  %v2178 = vadd.f32 0.0, %v2177
  %v2179 = vpop.f32.mrf.mxu0
  %2180 = vmatprep.mubr.bf16.mxu0 %v1456
  %2181 = vmatmul.mubr.bf16.gmra.mxu0 %v986
  %v2182 = vpop.f32.mrf.mxu0
  %v2183 = vadd.f32 0.0, %v2182
  %v2184 = vpop.f32.mrf.mxu0
  %v2185 = vpop.f32.mrf.mxu0
  %v2186 = vadd.f32 0.0, %v2185
  %v2187 = vpop.f32.mrf.mxu0
  %2188 = vmatprep.mubr.bf16.mxu0 %v1459
  %2189 = vmatmul.mubr.bf16.gmra.mxu0 %v988
  %v2190 = vpop.f32.mrf.mxu0
  %v2191 = vadd.f32 0.0, %v2190
  %v2192 = vpop.f32.mrf.mxu0
  %v2193 = vpop.f32.mrf.mxu0
  %v2194 = vadd.f32 0.0, %v2193
  %v2195 = vpop.f32.mrf.mxu0
  %2196 = vmatprep.mubr.bf16.mxu0 %v1462
  %2197 = vmatmul.mubr.bf16.gmra.mxu0 %v990
  %v2198 = vpop.f32.mrf.mxu0
  %v2199 = vadd.f32 0.0, %v2198
  %v2200 = vpop.f32.mrf.mxu0
  %v2201 = vpop.f32.mrf.mxu0
  %v2202 = vadd.f32 0.0, %v2201
  %v2203 = vpop.f32.mrf.mxu0
  %2204 = vmatprep.mubr.bf16.mxu0 %v1465
  %2205 = vmatmul.mubr.bf16.gmra.mxu0 %v992
  %v2206 = vpop.f32.mrf.mxu0
  %v2207 = vadd.f32 0.0, %v2206
  %v2208 = vpop.f32.mrf.mxu0
  %v2209 = vpop.f32.mrf.mxu0
  %v2210 = vadd.f32 0.0, %v2209
  %v2211 = vpop.f32.mrf.mxu0
  %2212 = vmatprep.mubr.bf16.mxu0 %v1468
  %2213 = vmatmul.mubr.bf16.gmra.mxu0 %v994
  %v2214 = vpop.f32.mrf.mxu0
  %v2215 = vadd.f32 0.0, %v2214
  %v2216 = vpop.f32.mrf.mxu0
  %v2217 = vpop.f32.mrf.mxu0
  %v2218 = vadd.f32 0.0, %v2217
  %v2219 = vpop.f32.mrf.mxu0
  %2220 = vmatprep.mubr.bf16.mxu0 %v1471
  %2221 = vmatmul.mubr.bf16.gmra.mxu0 %v996
  %v2222 = vpop.f32.mrf.mxu0
  %v2223 = vadd.f32 0.0, %v2222
  %v2224 = vpop.f32.mrf.mxu0
  %v2225 = vpop.f32.mrf.mxu0
  %v2226 = vadd.f32 0.0, %v2225
  %v2227 = vpop.f32.mrf.mxu0
  %2228 = vmatprep.mubr.bf16.mxu0 %v1474
  %2229 = vmatmul.mubr.bf16.gmra.mxu0 %v998
  %v2230 = vpop.f32.mrf.mxu0
  %v2231 = vadd.f32 0.0, %v2230
  %v2232 = vpop.f32.mrf.mxu0
  %v2233 = vpop.f32.mrf.mxu0
  %v2234 = vadd.f32 0.0, %v2233
  %v2235 = vpop.f32.mrf.mxu0
  %2236 = vmatprep.mubr.bf16.mxu0 %v1477
  %2237 = vmatmul.mubr.bf16.gmra.mxu0 %v1000
  %v2238 = vpop.f32.mrf.mxu0
  %v2239 = vadd.f32 0.0, %v2238
  %v2240 = vpop.f32.mrf.mxu0
  %v2241 = vpop.f32.mrf.mxu0
  %v2242 = vadd.f32 0.0, %v2241
  %v2243 = vpop.f32.mrf.mxu0
  %2244 = vmatprep.mubr.bf16.mxu0 %v1480
  %2245 = vmatmul.mubr.bf16.gmra.mxu0 %v1002
  %v2246 = vpop.f32.mrf.mxu0
  %v2247 = vadd.f32 0.0, %v2246
  %v2248 = vpop.f32.mrf.mxu0
  %v2249 = vpop.f32.mrf.mxu0
  %v2250 = vadd.f32 0.0, %v2249
  %v2251 = vpop.f32.mrf.mxu0
  %2252 = vmatprep.mubr.bf16.mxu0 %v1483
  %2253 = vmatmul.mubr.bf16.gmra.mxu0 %v1004
  %v2254 = vpop.f32.mrf.mxu0
  %v2255 = vadd.f32 0.0, %v2254
  %v2256 = vpop.f32.mrf.mxu0
  %v2257 = vpop.f32.mrf.mxu0
  %v2258 = vadd.f32 0.0, %v2257
  %v2259 = vpop.f32.mrf.mxu0
  %2260 = vmatprep.mubr.bf16.mxu0 %v1486
  %2261 = vmatmul.mubr.bf16.gmra.mxu0 %v1006
  %v2262 = vpop.f32.mrf.mxu0
  %v2263 = vadd.f32 0.0, %v2262
  %v2264 = vpop.f32.mrf.mxu0
  %v2265 = vpop.f32.mrf.mxu0
  %v2266 = vadd.f32 0.0, %v2265
  %v2267 = vpop.f32.mrf.mxu0
  %2268 = vmatprep.mubr.bf16.mxu0 %v1489
  %2269 = vmatmul.mubr.bf16.gmra.mxu0 %v1008
  %v2270 = vpop.f32.mrf.mxu0
  %v2271 = vadd.f32 0.0, %v2270
  %v2272 = vpop.f32.mrf.mxu0
  %v2273 = vpop.f32.mrf.mxu0
  %v2274 = vadd.f32 0.0, %v2273
  %v2275 = vpop.f32.mrf.mxu0
  %2276 = vmatprep.mubr.bf16.mxu0 %v1492
  %2277 = vmatmul.mubr.bf16.gmra.mxu0 %v1010
  %v2278 = vpop.f32.mrf.mxu0
  %v2279 = vadd.f32 0.0, %v2278
  %v2280 = vpop.f32.mrf.mxu0
  %v2281 = vpop.f32.mrf.mxu0
  %v2282 = vadd.f32 0.0, %v2281
  %v2283 = vpop.f32.mrf.mxu0
  %2284 = vmatprep.mubr.bf16.mxu0 %v1495
  %2285 = vmatmul.mubr.bf16.gmra.mxu0 %v1012
  %v2286 = vpop.f32.mrf.mxu0
  %v2287 = vadd.f32 0.0, %v2286
  %v2288 = vpop.f32.mrf.mxu0
  %v2289 = vpop.f32.mrf.mxu0
  %v2290 = vadd.f32 0.0, %v2289
  %v2291 = vpop.f32.mrf.mxu0
  %2292 = vmatprep.mubr.bf16.mxu0 %v1498
  %2293 = vmatmul.mubr.bf16.gmra.mxu0 %v1014
  %v2294 = vpop.f32.mrf.mxu0
  %v2295 = vadd.f32 0.0, %v2294
  %v2296 = vpop.f32.mrf.mxu0
  %v2297 = vpop.f32.mrf.mxu0
  %v2298 = vadd.f32 0.0, %v2297
  %v2299 = vpop.f32.mrf.mxu0
  %2300 = vmatprep.mubr.bf16.mxu0 %v1501
  %2301 = vmatmul.mubr.bf16.gmra.mxu0 %v1016
  %v2302 = vpop.f32.mrf.mxu0
  %v2303 = vadd.f32 0.0, %v2302
  %v2304 = vpop.f32.mrf.mxu0
  %v2305 = vpop.f32.mrf.mxu0
  %v2306 = vadd.f32 0.0, %v2305
  %v2307 = vpop.f32.mrf.mxu0
  %2308 = vmatprep.mubr.bf16.mxu0 %v1504
  %2309 = vmatmul.mubr.bf16.gmra.mxu0 %v1018
  %v2310 = vpop.f32.mrf.mxu0
  %v2311 = vadd.f32 0.0, %v2310
  %v2312 = vpop.f32.mrf.mxu0
  %v2313 = vpop.f32.mrf.mxu0
  %v2314 = vadd.f32 0.0, %v2313
  %v2315 = vpop.f32.mrf.mxu0
  %2316 = vmatprep.mubr.bf16.mxu0 %v1507
  %2317 = vmatmul.mubr.bf16.gmra.mxu0 %v1020
  %v2318 = vpop.f32.mrf.mxu0
  %v2319 = vadd.f32 0.0, %v2318
  %v2320 = vpop.f32.mrf.mxu0
  %v2321 = vpop.f32.mrf.mxu0
  %v2322 = vadd.f32 0.0, %v2321
  %v2323 = vpop.f32.mrf.mxu0
  %2324 = vmatprep.mubr.bf16.mxu0 %v1510
  %2325 = vmatmul.mubr.bf16.gmra.mxu0 %v1022
  %v2326 = vpop.f32.mrf.mxu0
  %v2327 = vadd.f32 0.0, %v2326
  %v2328 = vpop.f32.mrf.mxu0
  %v2329 = vpop.f32.mrf.mxu0
  %v2330 = vadd.f32 0.0, %v2329
  %v2331 = vpop.f32.mrf.mxu0
  %2332 = vdwg.mxu0
  %v2333 = vadd.f32 %v1551, %v1554
  %v2334 = vadd.f32 %v2333, %v1559
  %v2335 = vadd.f32 %v2334, %v1562
  %v2336 = vadd.f32 %v2335, %v1567
  %v2337 = vadd.f32 %v2336, %v1570
  %v2338 = vadd.f32 %v2337, %v1575
  %v2339 = vadd.f32 %v2338, %v1578
  %v2340 = vadd.f32 %v2339, %v1583
  %v2341 = vadd.f32 %v2340, %v1586
  %v2342 = vadd.f32 %v2341, %v1591
  %v2343 = vadd.f32 %v2342, %v1594
  %v2344 = vadd.f32 %v2343, %v1599
  %v2345 = vadd.f32 %v2344, %v1602
  %v2346 = vadd.f32 %v2345, %v1607
  %v2347 = vadd.f32 %v2346, %v1610
  %v2348 = vadd.f32 %v2347, %v1615
  %v2349 = vadd.f32 %v2348, %v1618
  %v2350 = vadd.f32 %v2349, %v1623
  %v2351 = vadd.f32 %v2350, %v1626
  %v2352 = vadd.f32 %v2351, %v1631
  %v2353 = vadd.f32 %v2352, %v1634
  %v2354 = vadd.f32 %v2353, %v1639
  %v2355 = vadd.f32 %v2354, %v1642
  %v2356 = vadd.f32 %v2355, %v1647
  %v2357 = vadd.f32 %v2356, %v1650
  %v2358 = vadd.f32 %v2357, %v1655
  %v2359 = vadd.f32 %v2358, %v1658
  %v2360 = vadd.f32 %v2359, %v1663
  %v2361 = vadd.f32 %v2360, %v1666
  %v2362 = vadd.f32 %v2361, %v1671
  %v2363 = vadd.f32 %v2362, %v1674
  %v2364 = vadd.f32 %v2363, %v1679
  %v2365 = vadd.f32 %v2364, %v1682
  %v2366 = vadd.f32 %v2365, %v1687
  %v2367 = vadd.f32 %v2366, %v1690
  %v2368 = vadd.f32 %v2367, %v1695
  %v2369 = vadd.f32 %v2368, %v1698
  %v2370 = vadd.f32 %v2369, %v1703
  %v2371 = vadd.f32 %v2370, %v1706
  %v2372 = vadd.f32 %v2371, %v1711
  %v2373 = vadd.f32 %v2372, %v1714
  %v2374 = vadd.f32 %v2373, %v1719
  %v2375 = vadd.f32 %v2374, %v1722
  %v2376 = vadd.f32 %v2375, %v1727
  %v2377 = vadd.f32 %v2376, %v1730
  %v2378 = vadd.f32 %v2377, %v1735
  %v2379 = vadd.f32 %v2378, %v1738
  %v2380 = vadd.f32 %v2379, %v1743
  %v2381 = vadd.f32 %v2380, %v1746
  %v2382 = vadd.f32 %v2381, %v1751
  %v2383 = vadd.f32 %v2382, %v1754
  %v2384 = vadd.f32 %v2383, %v1759
  %v2385 = vadd.f32 %v2384, %v1762
  %v2386 = vadd.f32 %v2385, %v1767
  %v2387 = vadd.f32 %v2386, %v1770
  %v2388 = vadd.f32 %v2387, %v1775
  %v2389 = vadd.f32 %v2388, %v1778
  %v2390 = vadd.f32 %v2389, %v1783
  %v2391 = vadd.f32 %v2390, %v1786
  %v2392 = vadd.f32 %v2391, %v1791
  %v2393 = vadd.f32 %v2392, %v1794
  %v2394 = vadd.f32 %v2393, %v1799
  %v2395 = vadd.f32 %v2394, %v1802
  %v2396 = vadd.f32 %v2395, %v1807
  %v2397 = vadd.f32 %v2396, %v1810
  %v2398 = vadd.f32 %v2397, %v1815
  %v2399 = vadd.f32 %v2398, %v1818
  %v2400 = vadd.f32 %v2399, %v1823
  %v2401 = vadd.f32 %v2400, %v1826
  %v2402 = vadd.f32 %v2401, %v1831
  %v2403 = vadd.f32 %v2402, %v1834
  %v2404 = vadd.f32 %v2403, %v1839
  %v2405 = vadd.f32 %v2404, %v1842
  %v2406 = vadd.f32 %v2405, %v1847
  %v2407 = vadd.f32 %v2406, %v1850
  %v2408 = vadd.f32 %v2407, %v1855
  %v2409 = vadd.f32 %v2408, %v1858
  %v2410 = vadd.f32 %v2409, %v1863
  %v2411 = vadd.f32 %v2410, %v1866
  %v2412 = vadd.f32 %v2411, %v1871
  %v2413 = vadd.f32 %v2412, %v1874
  %v2414 = vadd.f32 %v2413, %v1879
  %v2415 = vadd.f32 %v2414, %v1882
  %v2416 = vadd.f32 %v2415, %v1887
  %v2417 = vadd.f32 %v2416, %v1890
  %v2418 = vadd.f32 %v2417, %v1895
  %v2419 = vadd.f32 %v2418, %v1898
  %v2420 = vadd.f32 %v2419, %v1903
  %v2421 = vadd.f32 %v2420, %v1906
  %v2422 = vadd.f32 %v2421, %v1911
  %v2423 = vadd.f32 %v2422, %v1914
  %v2424 = vadd.f32 %v2423, %v1919
  %v2425 = vadd.f32 %v2424, %v1922
  %v2426 = vadd.f32 %v2425, %v1927
  %v2427 = vadd.f32 %v2426, %v1930
  %v2428 = vadd.f32 %v2427, %v1935
  %v2429 = vadd.f32 %v2428, %v1938
  %v2430 = vadd.f32 %v2429, %v1943
  %v2431 = vadd.f32 %v2430, %v1946
  %v2432 = vadd.f32 %v2431, %v1951
  %v2433 = vadd.f32 %v2432, %v1954
  %v2434 = vadd.f32 %v2433, %v1959
  %v2435 = vadd.f32 %v2434, %v1962
  %v2436 = vadd.f32 %v2435, %v1967
  %v2437 = vadd.f32 %v2436, %v1970
  %v2438 = vadd.f32 %v2437, %v1975
  %v2439 = vadd.f32 %v2438, %v1978
  %v2440 = vadd.f32 %v2439, %v1983
  %v2441 = vadd.f32 %v2440, %v1986
  %v2442 = vadd.f32 %v2441, %v1991
  %v2443 = vadd.f32 %v2442, %v1994
  %v2444 = vadd.f32 %v2443, %v1999
  %v2445 = vadd.f32 %v2444, %v2002
  %v2446 = vadd.f32 %v2445, %v2007
  %v2447 = vadd.f32 %v2446, %v2010
  %v2448 = vadd.f32 %v2447, %v2015
  %v2449 = vadd.f32 %v2448, %v2018
  %v2450 = vadd.f32 %v2449, %v2023
  %v2451 = vadd.f32 %v2450, %v2026
  %v2452 = vadd.f32 %v2451, %v2031
  %v2453 = vadd.f32 %v2452, %v2034
  %v2454 = vadd.f32 %v2453, %v2039
  %v2455 = vadd.f32 %v2454, %v2042
  %v2456 = vadd.f32 %v2455, %v2047
  %v2457 = vadd.f32 %v2456, %v2050
  %v2458 = vadd.f32 %v2457, %v2055
  %v2459 = vadd.f32 %v2458, %v2058
  %v2460 = vadd.f32 %v2459, %v2063
  %v2461 = vadd.f32 %v2460, %v2066
  %v2462 = vadd.f32 %v2461, %v2071
  %v2463 = vadd.f32 %v2462, %v2074
  %v2464 = vadd.f32 %v2463, %v2079
  %v2465 = vadd.f32 %v2464, %v2082
  %v2466 = vadd.f32 %v2465, %v2087
  %v2467 = vadd.f32 %v2466, %v2090
  %v2468 = vadd.f32 %v2467, %v2095
  %v2469 = vadd.f32 %v2468, %v2098
  %v2470 = vadd.f32 %v2469, %v2103
  %v2471 = vadd.f32 %v2470, %v2106
  %v2472 = vadd.f32 %v2471, %v2111
  %v2473 = vadd.f32 %v2472, %v2114
  %v2474 = vadd.f32 %v2473, %v2119
  %v2475 = vadd.f32 %v2474, %v2122
  %v2476 = vadd.f32 %v2475, %v2127
  %v2477 = vadd.f32 %v2476, %v2130
  %v2478 = vadd.f32 %v2477, %v2135
  %v2479 = vadd.f32 %v2478, %v2138
  %v2480 = vadd.f32 %v2479, %v2143
  %v2481 = vadd.f32 %v2480, %v2146
  %v2482 = vadd.f32 %v2481, %v2151
  %v2483 = vadd.f32 %v2482, %v2154
  %v2484 = vadd.f32 %v2483, %v2159
  %v2485 = vadd.f32 %v2484, %v2162
  %v2486 = vadd.f32 %v2485, %v2167
  %v2487 = vadd.f32 %v2486, %v2170
  %v2488 = vadd.f32 %v2487, %v2175
  %v2489 = vadd.f32 %v2488, %v2178
  %v2490 = vadd.f32 %v2489, %v2183
  %v2491 = vadd.f32 %v2490, %v2186
  %v2492 = vadd.f32 %v2491, %v2191
  %v2493 = vadd.f32 %v2492, %v2194
  %v2494 = vadd.f32 %v2493, %v2199
  %v2495 = vadd.f32 %v2494, %v2202
  %v2496 = vadd.f32 %v2495, %v2207
  %v2497 = vadd.f32 %v2496, %v2210
  %v2498 = vadd.f32 %v2497, %v2215
  %v2499 = vadd.f32 %v2498, %v2218
  %v2500 = vadd.f32 %v2499, %v2223
  %v2501 = vadd.f32 %v2500, %v2226
  %v2502 = vadd.f32 %v2501, %v2231
  %v2503 = vadd.f32 %v2502, %v2234
  %v2504 = vadd.f32 %v2503, %v2239
  %v2505 = vadd.f32 %v2504, %v2242
  %v2506 = vadd.f32 %v2505, %v2247
  %v2507 = vadd.f32 %v2506, %v2250
  %v2508 = vadd.f32 %v2507, %v2255
  %v2509 = vadd.f32 %v2508, %v2258
  %v2510 = vadd.f32 %v2509, %v2263
  %v2511 = vadd.f32 %v2510, %v2266
  %v2512 = vadd.f32 %v2511, %v2271
  %v2513 = vadd.f32 %v2512, %v2274
  %v2514 = vadd.f32 %v2513, %v2279
  %v2515 = vadd.f32 %v2514, %v2282
  %v2516 = vadd.f32 %v2515, %v2287
  %v2517 = vadd.f32 %v2516, %v2290
  %v2518 = vadd.f32 %v2517, %v2295
  %v2519 = vadd.f32 %v2518, %v2298
  %v2520 = vadd.f32 %v2519, %v2303
  %v2521 = vadd.f32 %v2520, %v2306
  %v2522 = vadd.f32 %v2521, %v2311
  %v2523 = vadd.f32 %v2522, %v2314
  %v2524 = vadd.f32 %v2523, %v2319
  %v2525 = vadd.f32 %v2524, %v2322
  %v2526 = vadd.f32 %v2525, %v2327
  %v2527 = vadd.f32 %v2526, %v2330
  %v2528 = vrot.slane %v2527, 4
  %v2529 = vadd.f32 %v2527, %v2528
  %v2530 = vrot.slane %v2529, 2
  %v2531 = vadd.f32 %v2529, %v2530
  %v2532 = vrot.slane %v2531, 1
  %v2533 = vadd.f32 %v2531, %v2532
  %v2534 = vrcp.pop 1568.0
  %v2535 = vmul.f32 %v2533, %v2534
  %v2536 = vsub.f32 %v1551, %v2535
  %v2537 = vsub.f32 %v1554, %v2535
  %v2538 = vsub.f32 %v1559, %v2535
  %v2539 = vsub.f32 %v1562, %v2535
  %v2540 = vsub.f32 %v1567, %v2535
  %v2541 = vsub.f32 %v1570, %v2535
  %v2542 = vsub.f32 %v1575, %v2535
  %v2543 = vsub.f32 %v1578, %v2535
  %v2544 = vsub.f32 %v1583, %v2535
  %v2545 = vsub.f32 %v1586, %v2535
  %v2546 = vsub.f32 %v1591, %v2535
  %v2547 = vsub.f32 %v1594, %v2535
  %v2548 = vsub.f32 %v1599, %v2535
  %v2549 = vsub.f32 %v1602, %v2535
  %v2550 = vsub.f32 %v1607, %v2535
  %v2551 = vsub.f32 %v1610, %v2535
  %v2552 = vsub.f32 %v1615, %v2535
  %v2553 = vsub.f32 %v1618, %v2535
  %v2554 = vsub.f32 %v1623, %v2535
  %v2555 = vsub.f32 %v1626, %v2535
  %v2556 = vsub.f32 %v1631, %v2535
  %v2557 = vsub.f32 %v1634, %v2535
  %v2558 = vsub.f32 %v1639, %v2535
  %v2559 = vsub.f32 %v1642, %v2535
  %v2560 = vsub.f32 %v1647, %v2535
  %v2561 = vsub.f32 %v1650, %v2535
  %v2562 = vsub.f32 %v1655, %v2535
  %v2563 = vsub.f32 %v1658, %v2535
  %v2564 = vsub.f32 %v1663, %v2535
  %v2565 = vsub.f32 %v1666, %v2535
  %v2566 = vsub.f32 %v1671, %v2535
  %v2567 = vsub.f32 %v1674, %v2535
  %v2568 = vsub.f32 %v1679, %v2535
  %v2569 = vsub.f32 %v1682, %v2535
  %v2570 = vsub.f32 %v1687, %v2535
  %v2571 = vsub.f32 %v1690, %v2535
  %v2572 = vsub.f32 %v1695, %v2535
  %v2573 = vsub.f32 %v1698, %v2535
  %v2574 = vsub.f32 %v1703, %v2535
  %v2575 = vsub.f32 %v1706, %v2535
  %v2576 = vsub.f32 %v1711, %v2535
  %v2577 = vsub.f32 %v1714, %v2535
  %v2578 = vsub.f32 %v1719, %v2535
  %v2579 = vsub.f32 %v1722, %v2535
  %v2580 = vsub.f32 %v1727, %v2535
  %v2581 = vsub.f32 %v1730, %v2535
  %v2582 = vsub.f32 %v1735, %v2535
  %v2583 = vsub.f32 %v1738, %v2535
  %v2584 = vsub.f32 %v1743, %v2535
  %v2585 = vsub.f32 %v1746, %v2535
  %v2586 = vsub.f32 %v1751, %v2535
  %v2587 = vsub.f32 %v1754, %v2535
  %v2588 = vsub.f32 %v1759, %v2535
  %v2589 = vsub.f32 %v1762, %v2535
  %v2590 = vsub.f32 %v1767, %v2535
  %v2591 = vsub.f32 %v1770, %v2535
  %v2592 = vsub.f32 %v1775, %v2535
  %v2593 = vsub.f32 %v1778, %v2535
  %v2594 = vsub.f32 %v1783, %v2535
  %v2595 = vsub.f32 %v1786, %v2535
  %v2596 = vsub.f32 %v1791, %v2535
  %v2597 = vsub.f32 %v1794, %v2535
  %v2598 = vsub.f32 %v1799, %v2535
  %v2599 = vsub.f32 %v1802, %v2535
  %v2600 = vsub.f32 %v1807, %v2535
  %v2601 = vsub.f32 %v1810, %v2535
  %v2602 = vsub.f32 %v1815, %v2535
  %v2603 = vsub.f32 %v1818, %v2535
  %v2604 = vsub.f32 %v1823, %v2535
  %v2605 = vsub.f32 %v1826, %v2535
  %v2606 = vsub.f32 %v1831, %v2535
  %v2607 = vsub.f32 %v1834, %v2535
  %v2608 = vsub.f32 %v1839, %v2535
  %v2609 = vsub.f32 %v1842, %v2535
  %v2610 = vsub.f32 %v1847, %v2535
  %v2611 = vsub.f32 %v1850, %v2535
  %v2612 = vsub.f32 %v1855, %v2535
  %v2613 = vsub.f32 %v1858, %v2535
  %v2614 = vsub.f32 %v1863, %v2535
  %v2615 = vsub.f32 %v1866, %v2535
  %v2616 = vsub.f32 %v1871, %v2535
  %v2617 = vsub.f32 %v1874, %v2535
  %v2618 = vsub.f32 %v1879, %v2535
  %v2619 = vsub.f32 %v1882, %v2535
  %v2620 = vsub.f32 %v1887, %v2535
  %v2621 = vsub.f32 %v1890, %v2535
  %v2622 = vsub.f32 %v1895, %v2535
  %v2623 = vsub.f32 %v1898, %v2535
  %v2624 = vsub.f32 %v1903, %v2535
  %v2625 = vsub.f32 %v1906, %v2535
  %v2626 = vsub.f32 %v1911, %v2535
  %v2627 = vsub.f32 %v1914, %v2535
  %v2628 = vsub.f32 %v1919, %v2535
  %v2629 = vsub.f32 %v1922, %v2535
  %v2630 = vsub.f32 %v1927, %v2535
  %v2631 = vsub.f32 %v1930, %v2535
  %v2632 = vsub.f32 %v1935, %v2535
  %v2633 = vsub.f32 %v1938, %v2535
  %v2634 = vsub.f32 %v1943, %v2535
  %v2635 = vsub.f32 %v1946, %v2535
  %v2636 = vsub.f32 %v1951, %v2535
  %v2637 = vsub.f32 %v1954, %v2535
  %v2638 = vsub.f32 %v1959, %v2535
  %v2639 = vsub.f32 %v1962, %v2535
  %v2640 = vsub.f32 %v1967, %v2535
  %v2641 = vsub.f32 %v1970, %v2535
  %v2642 = vsub.f32 %v1975, %v2535
  %v2643 = vsub.f32 %v1978, %v2535
  %v2644 = vsub.f32 %v1983, %v2535
  %v2645 = vsub.f32 %v1986, %v2535
  %v2646 = vsub.f32 %v1991, %v2535
  %v2647 = vsub.f32 %v1994, %v2535
  %v2648 = vsub.f32 %v1999, %v2535
  %v2649 = vsub.f32 %v2002, %v2535
  %v2650 = vsub.f32 %v2007, %v2535
  %v2651 = vsub.f32 %v2010, %v2535
  %v2652 = vsub.f32 %v2015, %v2535
  %v2653 = vsub.f32 %v2018, %v2535
  %v2654 = vsub.f32 %v2023, %v2535
  %v2655 = vsub.f32 %v2026, %v2535
  %v2656 = vsub.f32 %v2031, %v2535
  %v2657 = vsub.f32 %v2034, %v2535
  %v2658 = vsub.f32 %v2039, %v2535
  %v2659 = vsub.f32 %v2042, %v2535
  %v2660 = vsub.f32 %v2047, %v2535
  %v2661 = vsub.f32 %v2050, %v2535
  %v2662 = vsub.f32 %v2055, %v2535
  %v2663 = vsub.f32 %v2058, %v2535
  %v2664 = vsub.f32 %v2063, %v2535
  %v2665 = vsub.f32 %v2066, %v2535
  %v2666 = vsub.f32 %v2071, %v2535
  %v2667 = vsub.f32 %v2074, %v2535
  %v2668 = vsub.f32 %v2079, %v2535
  %v2669 = vsub.f32 %v2082, %v2535
  %v2670 = vsub.f32 %v2087, %v2535
  %v2671 = vsub.f32 %v2090, %v2535
  %v2672 = vsub.f32 %v2095, %v2535
  %v2673 = vsub.f32 %v2098, %v2535
  %v2674 = vsub.f32 %v2103, %v2535
  %v2675 = vsub.f32 %v2106, %v2535
  %v2676 = vsub.f32 %v2111, %v2535
  %v2677 = vsub.f32 %v2114, %v2535
  %v2678 = vsub.f32 %v2119, %v2535
  %v2679 = vsub.f32 %v2122, %v2535
  %v2680 = vsub.f32 %v2127, %v2535
  %v2681 = vsub.f32 %v2130, %v2535
  %v2682 = vsub.f32 %v2135, %v2535
  %v2683 = vsub.f32 %v2138, %v2535
  %v2684 = vsub.f32 %v2143, %v2535
  %v2685 = vsub.f32 %v2146, %v2535
  %v2686 = vsub.f32 %v2151, %v2535
  %v2687 = vsub.f32 %v2154, %v2535
  %v2688 = vsub.f32 %v2159, %v2535
  %v2689 = vsub.f32 %v2162, %v2535
  %v2690 = vsub.f32 %v2167, %v2535
  %v2691 = vsub.f32 %v2170, %v2535
  %v2692 = vsub.f32 %v2175, %v2535
  %v2693 = vsub.f32 %v2178, %v2535
  %v2694 = vsub.f32 %v2183, %v2535
  %v2695 = vsub.f32 %v2186, %v2535
  %v2696 = vsub.f32 %v2191, %v2535
  %v2697 = vsub.f32 %v2194, %v2535
  %v2698 = vsub.f32 %v2199, %v2535
  %v2699 = vsub.f32 %v2202, %v2535
  %v2700 = vsub.f32 %v2207, %v2535
  %v2701 = vsub.f32 %v2210, %v2535
  %v2702 = vsub.f32 %v2215, %v2535
  %v2703 = vsub.f32 %v2218, %v2535
  %v2704 = vsub.f32 %v2223, %v2535
  %v2705 = vsub.f32 %v2226, %v2535
  %v2706 = vsub.f32 %v2231, %v2535
  %v2707 = vsub.f32 %v2234, %v2535
  %v2708 = vsub.f32 %v2239, %v2535
  %v2709 = vsub.f32 %v2242, %v2535
  %v2710 = vsub.f32 %v2247, %v2535
  %v2711 = vsub.f32 %v2250, %v2535
  %v2712 = vsub.f32 %v2255, %v2535
  %v2713 = vsub.f32 %v2258, %v2535
  %v2714 = vsub.f32 %v2263, %v2535
  %v2715 = vsub.f32 %v2266, %v2535
  %v2716 = vsub.f32 %v2271, %v2535
  %v2717 = vsub.f32 %v2274, %v2535
  %v2718 = vsub.f32 %v2279, %v2535
  %v2719 = vsub.f32 %v2282, %v2535
  %v2720 = vsub.f32 %v2287, %v2535
  %v2721 = vsub.f32 %v2290, %v2535
  %v2722 = vsub.f32 %v2295, %v2535
  %v2723 = vsub.f32 %v2298, %v2535
  %v2724 = vsub.f32 %v2303, %v2535
  %v2725 = vsub.f32 %v2306, %v2535
  %v2726 = vsub.f32 %v2311, %v2535
  %v2727 = vsub.f32 %v2314, %v2535
  %v2728 = vsub.f32 %v2319, %v2535
  %v2729 = vsub.f32 %v2322, %v2535
  %v2730 = vsub.f32 %v2327, %v2535
  %v2731 = vsub.f32 %v2330, %v2535
  %v2732 = vmul.f32 %v2536, %v2536
  %v2733 = vmul.f32 %v2537, %v2537
  %v2734 = vmul.f32 %v2538, %v2538
  %v2735 = vmul.f32 %v2539, %v2539
  %v2736 = vmul.f32 %v2540, %v2540
  %v2737 = vmul.f32 %v2541, %v2541
  %v2738 = vmul.f32 %v2542, %v2542
  %v2739 = vmul.f32 %v2543, %v2543
  %v2740 = vmul.f32 %v2544, %v2544
  %v2741 = vmul.f32 %v2545, %v2545
  %v2742 = vmul.f32 %v2546, %v2546
  %v2743 = vmul.f32 %v2547, %v2547
  %v2744 = vmul.f32 %v2548, %v2548
  %v2745 = vmul.f32 %v2549, %v2549
  %v2746 = vmul.f32 %v2550, %v2550
  %v2747 = vmul.f32 %v2551, %v2551
  %v2748 = vmul.f32 %v2552, %v2552
  %v2749 = vmul.f32 %v2553, %v2553
  %v2750 = vmul.f32 %v2554, %v2554
  %v2751 = vmul.f32 %v2555, %v2555
  %v2752 = vmul.f32 %v2556, %v2556
  %v2753 = vmul.f32 %v2557, %v2557
  %v2754 = vmul.f32 %v2558, %v2558
  %v2755 = vmul.f32 %v2559, %v2559
  %v2756 = vmul.f32 %v2560, %v2560
  %v2757 = vmul.f32 %v2561, %v2561
  %v2758 = vmul.f32 %v2562, %v2562
  %v2759 = vmul.f32 %v2563, %v2563
  %v2760 = vmul.f32 %v2564, %v2564
  %v2761 = vmul.f32 %v2565, %v2565
  %v2762 = vmul.f32 %v2566, %v2566
  %v2763 = vmul.f32 %v2567, %v2567
  %v2764 = vmul.f32 %v2568, %v2568
  %v2765 = vmul.f32 %v2569, %v2569
  %v2766 = vmul.f32 %v2570, %v2570
  %v2767 = vmul.f32 %v2571, %v2571
  %v2768 = vmul.f32 %v2572, %v2572
  %v2769 = vmul.f32 %v2573, %v2573
  %v2770 = vmul.f32 %v2574, %v2574
  %v2771 = vmul.f32 %v2575, %v2575
  %v2772 = vmul.f32 %v2576, %v2576
  %v2773 = vmul.f32 %v2577, %v2577
  %v2774 = vmul.f32 %v2578, %v2578
  %v2775 = vmul.f32 %v2579, %v2579
  %v2776 = vmul.f32 %v2580, %v2580
  %v2777 = vmul.f32 %v2581, %v2581
  %v2778 = vmul.f32 %v2582, %v2582
  %v2779 = vmul.f32 %v2583, %v2583
  %v2780 = vmul.f32 %v2584, %v2584
  %v2781 = vmul.f32 %v2585, %v2585
  %v2782 = vmul.f32 %v2586, %v2586
  %v2783 = vmul.f32 %v2587, %v2587
  %v2784 = vmul.f32 %v2588, %v2588
  %v2785 = vmul.f32 %v2589, %v2589
  %v2786 = vmul.f32 %v2590, %v2590
  %v2787 = vmul.f32 %v2591, %v2591
  %v2788 = vmul.f32 %v2592, %v2592
  %v2789 = vmul.f32 %v2593, %v2593
  %v2790 = vmul.f32 %v2594, %v2594
  %v2791 = vmul.f32 %v2595, %v2595
  %v2792 = vmul.f32 %v2596, %v2596
  %v2793 = vmul.f32 %v2597, %v2597
  %v2794 = vmul.f32 %v2598, %v2598
  %v2795 = vmul.f32 %v2599, %v2599
  %v2796 = vmul.f32 %v2600, %v2600
  %v2797 = vmul.f32 %v2601, %v2601
  %v2798 = vmul.f32 %v2602, %v2602
  %v2799 = vmul.f32 %v2603, %v2603
  %v2800 = vmul.f32 %v2604, %v2604
  %v2801 = vmul.f32 %v2605, %v2605
  %v2802 = vmul.f32 %v2606, %v2606
  %v2803 = vmul.f32 %v2607, %v2607
  %v2804 = vmul.f32 %v2608, %v2608
  %v2805 = vmul.f32 %v2609, %v2609
  %v2806 = vmul.f32 %v2610, %v2610
  %v2807 = vmul.f32 %v2611, %v2611
  %v2808 = vmul.f32 %v2612, %v2612
  %v2809 = vmul.f32 %v2613, %v2613
  %v2810 = vmul.f32 %v2614, %v2614
  %v2811 = vmul.f32 %v2615, %v2615
  %v2812 = vmul.f32 %v2616, %v2616
  %v2813 = vmul.f32 %v2617, %v2617
  %v2814 = vmul.f32 %v2618, %v2618
  %v2815 = vmul.f32 %v2619, %v2619
  %v2816 = vmul.f32 %v2620, %v2620
  %v2817 = vmul.f32 %v2621, %v2621
  %v2818 = vmul.f32 %v2622, %v2622
  %v2819 = vmul.f32 %v2623, %v2623
  %v2820 = vmul.f32 %v2624, %v2624
  %v2821 = vmul.f32 %v2625, %v2625
  %v2822 = vmul.f32 %v2626, %v2626
  %v2823 = vmul.f32 %v2627, %v2627
  %v2824 = vmul.f32 %v2628, %v2628
  %v2825 = vmul.f32 %v2629, %v2629
  %v2826 = vmul.f32 %v2630, %v2630
  %v2827 = vmul.f32 %v2631, %v2631
  %v2828 = vmul.f32 %v2632, %v2632
  %v2829 = vmul.f32 %v2633, %v2633
  %v2830 = vmul.f32 %v2634, %v2634
  %v2831 = vmul.f32 %v2635, %v2635
  %v2832 = vmul.f32 %v2636, %v2636
  %v2833 = vmul.f32 %v2637, %v2637
  %v2834 = vmul.f32 %v2638, %v2638
  %v2835 = vmul.f32 %v2639, %v2639
  %v2836 = vmul.f32 %v2640, %v2640
  %v2837 = vmul.f32 %v2641, %v2641
  %v2838 = vmul.f32 %v2642, %v2642
  %v2839 = vmul.f32 %v2643, %v2643
  %v2840 = vmul.f32 %v2644, %v2644
  %v2841 = vmul.f32 %v2645, %v2645
  %v2842 = vmul.f32 %v2646, %v2646
  %v2843 = vmul.f32 %v2647, %v2647
  %v2844 = vmul.f32 %v2648, %v2648
  %v2845 = vmul.f32 %v2649, %v2649
  %v2846 = vmul.f32 %v2650, %v2650
  %v2847 = vmul.f32 %v2651, %v2651
  %v2848 = vmul.f32 %v2652, %v2652
  %v2849 = vmul.f32 %v2653, %v2653
  %v2850 = vmul.f32 %v2654, %v2654
  %v2851 = vmul.f32 %v2655, %v2655
  %v2852 = vmul.f32 %v2656, %v2656
  %v2853 = vmul.f32 %v2657, %v2657
  %v2854 = vmul.f32 %v2658, %v2658
  %v2855 = vmul.f32 %v2659, %v2659
  %v2856 = vmul.f32 %v2660, %v2660
  %v2857 = vmul.f32 %v2661, %v2661
  %v2858 = vmul.f32 %v2662, %v2662
  %v2859 = vmul.f32 %v2663, %v2663
  %v2860 = vmul.f32 %v2664, %v2664
  %v2861 = vmul.f32 %v2665, %v2665
  %v2862 = vmul.f32 %v2666, %v2666
  %v2863 = vmul.f32 %v2667, %v2667
  %v2864 = vmul.f32 %v2668, %v2668
  %v2865 = vmul.f32 %v2669, %v2669
  %v2866 = vmul.f32 %v2670, %v2670
  %v2867 = vmul.f32 %v2671, %v2671
  %v2868 = vmul.f32 %v2672, %v2672
  %v2869 = vmul.f32 %v2673, %v2673
  %v2870 = vmul.f32 %v2674, %v2674
  %v2871 = vmul.f32 %v2675, %v2675
  %v2872 = vmul.f32 %v2676, %v2676
  %v2873 = vmul.f32 %v2677, %v2677
  %v2874 = vmul.f32 %v2678, %v2678
  %v2875 = vmul.f32 %v2679, %v2679
  %v2876 = vmul.f32 %v2680, %v2680
  %v2877 = vmul.f32 %v2681, %v2681
  %v2878 = vmul.f32 %v2682, %v2682
  %v2879 = vmul.f32 %v2683, %v2683
  %v2880 = vmul.f32 %v2684, %v2684
  %v2881 = vmul.f32 %v2685, %v2685
  %v2882 = vmul.f32 %v2686, %v2686
  %v2883 = vmul.f32 %v2687, %v2687
  %v2884 = vmul.f32 %v2688, %v2688
  %v2885 = vmul.f32 %v2689, %v2689
  %v2886 = vmul.f32 %v2690, %v2690
  %v2887 = vmul.f32 %v2691, %v2691
  %v2888 = vmul.f32 %v2692, %v2692
  %v2889 = vmul.f32 %v2693, %v2693
  %v2890 = vmul.f32 %v2694, %v2694
  %v2891 = vmul.f32 %v2695, %v2695
  %v2892 = vmul.f32 %v2696, %v2696
  %v2893 = vmul.f32 %v2697, %v2697
  %v2894 = vmul.f32 %v2698, %v2698
  %v2895 = vmul.f32 %v2699, %v2699
  %v2896 = vmul.f32 %v2700, %v2700
  %v2897 = vmul.f32 %v2701, %v2701
  %v2898 = vmul.f32 %v2702, %v2702
  %v2899 = vmul.f32 %v2703, %v2703
  %v2900 = vmul.f32 %v2704, %v2704
  %v2901 = vmul.f32 %v2705, %v2705
  %v2902 = vmul.f32 %v2706, %v2706
  %v2903 = vmul.f32 %v2707, %v2707
  %v2904 = vmul.f32 %v2708, %v2708
  %v2905 = vmul.f32 %v2709, %v2709
  %v2906 = vmul.f32 %v2710, %v2710
  %v2907 = vmul.f32 %v2711, %v2711
  %v2908 = vmul.f32 %v2712, %v2712
  %v2909 = vmul.f32 %v2713, %v2713
  %v2910 = vmul.f32 %v2714, %v2714
  %v2911 = vmul.f32 %v2715, %v2715
  %v2912 = vmul.f32 %v2716, %v2716
  %v2913 = vmul.f32 %v2717, %v2717
  %v2914 = vmul.f32 %v2718, %v2718
  %v2915 = vmul.f32 %v2719, %v2719
  %v2916 = vmul.f32 %v2720, %v2720
  %v2917 = vmul.f32 %v2721, %v2721
  %v2918 = vmul.f32 %v2722, %v2722
  %v2919 = vmul.f32 %v2723, %v2723
  %v2920 = vmul.f32 %v2724, %v2724
  %v2921 = vmul.f32 %v2725, %v2725
  %v2922 = vmul.f32 %v2726, %v2726
  %v2923 = vmul.f32 %v2727, %v2727
  %v2924 = vmul.f32 %v2728, %v2728
  %v2925 = vmul.f32 %v2729, %v2729
  %v2926 = vmul.f32 %v2730, %v2730
  %v2927 = vmul.f32 %v2731, %v2731
  %v2928 = vadd.f32 %v2732, %v2733
  %v2929 = vadd.f32 %v2928, %v2734
  %v2930 = vadd.f32 %v2929, %v2735
  %v2931 = vadd.f32 %v2930, %v2736
  %v2932 = vadd.f32 %v2931, %v2737
  %v2933 = vadd.f32 %v2932, %v2738
  %v2934 = vadd.f32 %v2933, %v2739
  %v2935 = vadd.f32 %v2934, %v2740
  %v2936 = vadd.f32 %v2935, %v2741
  %v2937 = vadd.f32 %v2936, %v2742
  %v2938 = vadd.f32 %v2937, %v2743
  %v2939 = vadd.f32 %v2938, %v2744
  %v2940 = vadd.f32 %v2939, %v2745
  %v2941 = vadd.f32 %v2940, %v2746
  %v2942 = vadd.f32 %v2941, %v2747
  %v2943 = vadd.f32 %v2942, %v2748
  %v2944 = vadd.f32 %v2943, %v2749
  %v2945 = vadd.f32 %v2944, %v2750
  %v2946 = vadd.f32 %v2945, %v2751
  %v2947 = vadd.f32 %v2946, %v2752
  %v2948 = vadd.f32 %v2947, %v2753
  %v2949 = vadd.f32 %v2948, %v2754
  %v2950 = vadd.f32 %v2949, %v2755
  %v2951 = vadd.f32 %v2950, %v2756
  %v2952 = vadd.f32 %v2951, %v2757
  %v2953 = vadd.f32 %v2952, %v2758
  %v2954 = vadd.f32 %v2953, %v2759
  %v2955 = vadd.f32 %v2954, %v2760
  %v2956 = vadd.f32 %v2955, %v2761
  %v2957 = vadd.f32 %v2956, %v2762
  %v2958 = vadd.f32 %v2957, %v2763
  %v2959 = vadd.f32 %v2958, %v2764
  %v2960 = vadd.f32 %v2959, %v2765
  %v2961 = vadd.f32 %v2960, %v2766
  %v2962 = vadd.f32 %v2961, %v2767
  %v2963 = vadd.f32 %v2962, %v2768
  %v2964 = vadd.f32 %v2963, %v2769
  %v2965 = vadd.f32 %v2964, %v2770
  %v2966 = vadd.f32 %v2965, %v2771
  %v2967 = vadd.f32 %v2966, %v2772
  %v2968 = vadd.f32 %v2967, %v2773
  %v2969 = vadd.f32 %v2968, %v2774
  %v2970 = vadd.f32 %v2969, %v2775
  %v2971 = vadd.f32 %v2970, %v2776
  %v2972 = vadd.f32 %v2971, %v2777
  %v2973 = vadd.f32 %v2972, %v2778
  %v2974 = vadd.f32 %v2973, %v2779
  %v2975 = vadd.f32 %v2974, %v2780
  %v2976 = vadd.f32 %v2975, %v2781
  %v2977 = vadd.f32 %v2976, %v2782
  %v2978 = vadd.f32 %v2977, %v2783
  %v2979 = vadd.f32 %v2978, %v2784
  %v2980 = vadd.f32 %v2979, %v2785
  %v2981 = vadd.f32 %v2980, %v2786
  %v2982 = vadd.f32 %v2981, %v2787
  %v2983 = vadd.f32 %v2982, %v2788
  %v2984 = vadd.f32 %v2983, %v2789
  %v2985 = vadd.f32 %v2984, %v2790
  %v2986 = vadd.f32 %v2985, %v2791
  %v2987 = vadd.f32 %v2986, %v2792
  %v2988 = vadd.f32 %v2987, %v2793
  %v2989 = vadd.f32 %v2988, %v2794
  %v2990 = vadd.f32 %v2989, %v2795
  %v2991 = vadd.f32 %v2990, %v2796
  %v2992 = vadd.f32 %v2991, %v2797
  %v2993 = vadd.f32 %v2992, %v2798
  %v2994 = vadd.f32 %v2993, %v2799
  %v2995 = vadd.f32 %v2994, %v2800
  %v2996 = vadd.f32 %v2995, %v2801
  %v2997 = vadd.f32 %v2996, %v2802
  %v2998 = vadd.f32 %v2997, %v2803
  %v2999 = vadd.f32 %v2998, %v2804
  %v3000 = vadd.f32 %v2999, %v2805
  %v3001 = vadd.f32 %v3000, %v2806
  %v3002 = vadd.f32 %v3001, %v2807
  %v3003 = vadd.f32 %v3002, %v2808
  %v3004 = vadd.f32 %v3003, %v2809
  %v3005 = vadd.f32 %v3004, %v2810
  %v3006 = vadd.f32 %v3005, %v2811
  %v3007 = vadd.f32 %v3006, %v2812
  %v3008 = vadd.f32 %v3007, %v2813
  %v3009 = vadd.f32 %v3008, %v2814
  %v3010 = vadd.f32 %v3009, %v2815
  %v3011 = vadd.f32 %v3010, %v2816
  %v3012 = vadd.f32 %v3011, %v2817
  %v3013 = vadd.f32 %v3012, %v2818
  %v3014 = vadd.f32 %v3013, %v2819
  %v3015 = vadd.f32 %v3014, %v2820
  %v3016 = vadd.f32 %v3015, %v2821
  %v3017 = vadd.f32 %v3016, %v2822
  %v3018 = vadd.f32 %v3017, %v2823
  %v3019 = vadd.f32 %v3018, %v2824
  %v3020 = vadd.f32 %v3019, %v2825
  %v3021 = vadd.f32 %v3020, %v2826
  %v3022 = vadd.f32 %v3021, %v2827
  %v3023 = vadd.f32 %v3022, %v2828
  %v3024 = vadd.f32 %v3023, %v2829
  %v3025 = vadd.f32 %v3024, %v2830
  %v3026 = vadd.f32 %v3025, %v2831
  %v3027 = vadd.f32 %v3026, %v2832
  %v3028 = vadd.f32 %v3027, %v2833
  %v3029 = vadd.f32 %v3028, %v2834
  %v3030 = vadd.f32 %v3029, %v2835
  %v3031 = vadd.f32 %v3030, %v2836
  %v3032 = vadd.f32 %v3031, %v2837
  %v3033 = vadd.f32 %v3032, %v2838
  %v3034 = vadd.f32 %v3033, %v2839
  %v3035 = vadd.f32 %v3034, %v2840
  %v3036 = vadd.f32 %v3035, %v2841
  %v3037 = vadd.f32 %v3036, %v2842
  %v3038 = vadd.f32 %v3037, %v2843
  %v3039 = vadd.f32 %v3038, %v2844
  %v3040 = vadd.f32 %v3039, %v2845
  %v3041 = vadd.f32 %v3040, %v2846
  %v3042 = vadd.f32 %v3041, %v2847
  %v3043 = vadd.f32 %v3042, %v2848
  %v3044 = vadd.f32 %v3043, %v2849
  %v3045 = vadd.f32 %v3044, %v2850
  %v3046 = vadd.f32 %v3045, %v2851
  %v3047 = vadd.f32 %v3046, %v2852
  %v3048 = vadd.f32 %v3047, %v2853
  %v3049 = vadd.f32 %v3048, %v2854
  %v3050 = vadd.f32 %v3049, %v2855
  %v3051 = vadd.f32 %v3050, %v2856
  %v3052 = vadd.f32 %v3051, %v2857
  %v3053 = vadd.f32 %v3052, %v2858
  %v3054 = vadd.f32 %v3053, %v2859
  %v3055 = vadd.f32 %v3054, %v2860
  %v3056 = vadd.f32 %v3055, %v2861
  %v3057 = vadd.f32 %v3056, %v2862
  %v3058 = vadd.f32 %v3057, %v2863
  %v3059 = vadd.f32 %v3058, %v2864
  %v3060 = vadd.f32 %v3059, %v2865
  %v3061 = vadd.f32 %v3060, %v2866
  %v3062 = vadd.f32 %v3061, %v2867
  %v3063 = vadd.f32 %v3062, %v2868
  %v3064 = vadd.f32 %v3063, %v2869
  %v3065 = vadd.f32 %v3064, %v2870
  %v3066 = vadd.f32 %v3065, %v2871
  %v3067 = vadd.f32 %v3066, %v2872
  %v3068 = vadd.f32 %v3067, %v2873
  %v3069 = vadd.f32 %v3068, %v2874
  %v3070 = vadd.f32 %v3069, %v2875
  %v3071 = vadd.f32 %v3070, %v2876
  %v3072 = vadd.f32 %v3071, %v2877
  %v3073 = vadd.f32 %v3072, %v2878
  %v3074 = vadd.f32 %v3073, %v2879
  %v3075 = vadd.f32 %v3074, %v2880
  %v3076 = vadd.f32 %v3075, %v2881
  %v3077 = vadd.f32 %v3076, %v2882
  %v3078 = vadd.f32 %v3077, %v2883
  %v3079 = vadd.f32 %v3078, %v2884
  %v3080 = vadd.f32 %v3079, %v2885
  %v3081 = vadd.f32 %v3080, %v2886
  %v3082 = vadd.f32 %v3081, %v2887
  %v3083 = vadd.f32 %v3082, %v2888
  %v3084 = vadd.f32 %v3083, %v2889
  %v3085 = vadd.f32 %v3084, %v2890
  %v3086 = vadd.f32 %v3085, %v2891
  %v3087 = vadd.f32 %v3086, %v2892
  %v3088 = vadd.f32 %v3087, %v2893
  %v3089 = vadd.f32 %v3088, %v2894
  %v3090 = vadd.f32 %v3089, %v2895
  %v3091 = vadd.f32 %v3090, %v2896
  %v3092 = vadd.f32 %v3091, %v2897
  %v3093 = vadd.f32 %v3092, %v2898
  %v3094 = vadd.f32 %v3093, %v2899
  %v3095 = vadd.f32 %v3094, %v2900
  %v3096 = vadd.f32 %v3095, %v2901
  %v3097 = vadd.f32 %v3096, %v2902
  %v3098 = vadd.f32 %v3097, %v2903
  %v3099 = vadd.f32 %v3098, %v2904
  %v3100 = vadd.f32 %v3099, %v2905
  %v3101 = vadd.f32 %v3100, %v2906
  %v3102 = vadd.f32 %v3101, %v2907
  %v3103 = vadd.f32 %v3102, %v2908
  %v3104 = vadd.f32 %v3103, %v2909
  %v3105 = vadd.f32 %v3104, %v2910
  %v3106 = vadd.f32 %v3105, %v2911
  %v3107 = vadd.f32 %v3106, %v2912
  %v3108 = vadd.f32 %v3107, %v2913
  %v3109 = vadd.f32 %v3108, %v2914
  %v3110 = vadd.f32 %v3109, %v2915
  %v3111 = vadd.f32 %v3110, %v2916
  %v3112 = vadd.f32 %v3111, %v2917
  %v3113 = vadd.f32 %v3112, %v2918
  %v3114 = vadd.f32 %v3113, %v2919
  %v3115 = vadd.f32 %v3114, %v2920
  %v3116 = vadd.f32 %v3115, %v2921
  %v3117 = vadd.f32 %v3116, %v2922
  %v3118 = vadd.f32 %v3117, %v2923
  %v3119 = vadd.f32 %v3118, %v2924
  %v3120 = vadd.f32 %v3119, %v2925
  %v3121 = vadd.f32 %v3120, %v2926
  %v3122 = vadd.f32 %v3121, %v2927
  %v3123 = vrot.slane %v3122, 4
  %v3124 = vadd.f32 %v3122, %v3123
  %v3125 = vrot.slane %v3124, 2
  %v3126 = vadd.f32 %v3124, %v3125
  %v3127 = vrot.slane %v3126, 1
  %v3128 = vadd.f32 %v3126, %v3127
  %v3129 = vmul.f32 %v3128, %v2534
  %v3130 = vadd.f32 %v3129, 1e-05
  %v3131 = vrsqrt.pop %v3130
  %v3132 = vmul.f32 %v2536, %v3131
  %v3133 = vmul.f32 %v2537, %v3131
  %v3134 = vmul.f32 %v2538, %v3131
  %v3135 = vmul.f32 %v2539, %v3131
  %v3136 = vmul.f32 %v2540, %v3131
  %v3137 = vmul.f32 %v2541, %v3131
  %v3138 = vmul.f32 %v2542, %v3131
  %v3139 = vmul.f32 %v2543, %v3131
  %v3140 = vmul.f32 %v2544, %v3131
  %v3141 = vmul.f32 %v2545, %v3131
  %v3142 = vmul.f32 %v2546, %v3131
  %v3143 = vmul.f32 %v2547, %v3131
  %v3144 = vmul.f32 %v2548, %v3131
  %v3145 = vmul.f32 %v2549, %v3131
  %v3146 = vmul.f32 %v2550, %v3131
  %v3147 = vmul.f32 %v2551, %v3131
  %v3148 = vmul.f32 %v2552, %v3131
  %v3149 = vmul.f32 %v2553, %v3131
  %v3150 = vmul.f32 %v2554, %v3131
  %v3151 = vmul.f32 %v2555, %v3131
  %v3152 = vmul.f32 %v2556, %v3131
  %v3153 = vmul.f32 %v2557, %v3131
  %v3154 = vmul.f32 %v2558, %v3131
  %v3155 = vmul.f32 %v2559, %v3131
  %v3156 = vmul.f32 %v2560, %v3131
  %v3157 = vmul.f32 %v2561, %v3131
  %v3158 = vmul.f32 %v2562, %v3131
  %v3159 = vmul.f32 %v2563, %v3131
  %v3160 = vmul.f32 %v2564, %v3131
  %v3161 = vmul.f32 %v2565, %v3131
  %v3162 = vmul.f32 %v2566, %v3131
  %v3163 = vmul.f32 %v2567, %v3131
  %v3164 = vmul.f32 %v2568, %v3131
  %v3165 = vmul.f32 %v2569, %v3131
  %v3166 = vmul.f32 %v2570, %v3131
  %v3167 = vmul.f32 %v2571, %v3131
  %v3168 = vmul.f32 %v2572, %v3131
  %v3169 = vmul.f32 %v2573, %v3131
  %v3170 = vmul.f32 %v2574, %v3131
  %v3171 = vmul.f32 %v2575, %v3131
  %v3172 = vmul.f32 %v2576, %v3131
  %v3173 = vmul.f32 %v2577, %v3131
  %v3174 = vmul.f32 %v2578, %v3131
  %v3175 = vmul.f32 %v2579, %v3131
  %v3176 = vmul.f32 %v2580, %v3131
  %v3177 = vmul.f32 %v2581, %v3131
  %v3178 = vmul.f32 %v2582, %v3131
  %v3179 = vmul.f32 %v2583, %v3131
  %v3180 = vmul.f32 %v2584, %v3131
  %v3181 = vmul.f32 %v2585, %v3131
  %v3182 = vmul.f32 %v2586, %v3131
  %v3183 = vmul.f32 %v2587, %v3131
  %v3184 = vmul.f32 %v2588, %v3131
  %v3185 = vmul.f32 %v2589, %v3131
  %v3186 = vmul.f32 %v2590, %v3131
  %v3187 = vmul.f32 %v2591, %v3131
  %v3188 = vmul.f32 %v2592, %v3131
  %v3189 = vmul.f32 %v2593, %v3131
  %v3190 = vmul.f32 %v2594, %v3131
  %v3191 = vmul.f32 %v2595, %v3131
  %v3192 = vmul.f32 %v2596, %v3131
  %v3193 = vmul.f32 %v2597, %v3131
  %v3194 = vmul.f32 %v2598, %v3131
  %v3195 = vmul.f32 %v2599, %v3131
  %v3196 = vmul.f32 %v2600, %v3131
  %v3197 = vmul.f32 %v2601, %v3131
  %v3198 = vmul.f32 %v2602, %v3131
  %v3199 = vmul.f32 %v2603, %v3131
  %v3200 = vmul.f32 %v2604, %v3131
  %v3201 = vmul.f32 %v2605, %v3131
  %v3202 = vmul.f32 %v2606, %v3131
  %v3203 = vmul.f32 %v2607, %v3131
  %v3204 = vmul.f32 %v2608, %v3131
  %v3205 = vmul.f32 %v2609, %v3131
  %v3206 = vmul.f32 %v2610, %v3131
  %v3207 = vmul.f32 %v2611, %v3131
  %v3208 = vmul.f32 %v2612, %v3131
  %v3209 = vmul.f32 %v2613, %v3131
  %v3210 = vmul.f32 %v2614, %v3131
  %v3211 = vmul.f32 %v2615, %v3131
  %v3212 = vmul.f32 %v2616, %v3131
  %v3213 = vmul.f32 %v2617, %v3131
  %v3214 = vmul.f32 %v2618, %v3131
  %v3215 = vmul.f32 %v2619, %v3131
  %v3216 = vmul.f32 %v2620, %v3131
  %v3217 = vmul.f32 %v2621, %v3131
  %v3218 = vmul.f32 %v2622, %v3131
  %v3219 = vmul.f32 %v2623, %v3131
  %v3220 = vmul.f32 %v2624, %v3131
  %v3221 = vmul.f32 %v2625, %v3131
  %v3222 = vmul.f32 %v2626, %v3131
  %v3223 = vmul.f32 %v2627, %v3131
  %v3224 = vmul.f32 %v2628, %v3131
  %v3225 = vmul.f32 %v2629, %v3131
  %v3226 = vmul.f32 %v2630, %v3131
  %v3227 = vmul.f32 %v2631, %v3131
  %v3228 = vmul.f32 %v2632, %v3131
  %v3229 = vmul.f32 %v2633, %v3131
  %v3230 = vmul.f32 %v2634, %v3131
  %v3231 = vmul.f32 %v2635, %v3131
  %v3232 = vmul.f32 %v2636, %v3131
  %v3233 = vmul.f32 %v2637, %v3131
  %v3234 = vmul.f32 %v2638, %v3131
  %v3235 = vmul.f32 %v2639, %v3131
  %v3236 = vmul.f32 %v2640, %v3131
  %v3237 = vmul.f32 %v2641, %v3131
  %v3238 = vmul.f32 %v2642, %v3131
  %v3239 = vmul.f32 %v2643, %v3131
  %v3240 = vmul.f32 %v2644, %v3131
  %v3241 = vmul.f32 %v2645, %v3131
  %v3242 = vmul.f32 %v2646, %v3131
  %v3243 = vmul.f32 %v2647, %v3131
  %v3244 = vmul.f32 %v2648, %v3131
  %v3245 = vmul.f32 %v2649, %v3131
  %v3246 = vmul.f32 %v2650, %v3131
  %v3247 = vmul.f32 %v2651, %v3131
  %v3248 = vmul.f32 %v2652, %v3131
  %v3249 = vmul.f32 %v2653, %v3131
  %v3250 = vmul.f32 %v2654, %v3131
  %v3251 = vmul.f32 %v2655, %v3131
  %v3252 = vmul.f32 %v2656, %v3131
  %v3253 = vmul.f32 %v2657, %v3131
  %v3254 = vmul.f32 %v2658, %v3131
  %v3255 = vmul.f32 %v2659, %v3131
  %v3256 = vmul.f32 %v2660, %v3131
  %v3257 = vmul.f32 %v2661, %v3131
  %v3258 = vmul.f32 %v2662, %v3131
  %v3259 = vmul.f32 %v2663, %v3131
  %v3260 = vmul.f32 %v2664, %v3131
  %v3261 = vmul.f32 %v2665, %v3131
  %v3262 = vmul.f32 %v2666, %v3131
  %v3263 = vmul.f32 %v2667, %v3131
  %v3264 = vmul.f32 %v2668, %v3131
  %v3265 = vmul.f32 %v2669, %v3131
  %v3266 = vmul.f32 %v2670, %v3131
  %v3267 = vmul.f32 %v2671, %v3131
  %v3268 = vmul.f32 %v2672, %v3131
  %v3269 = vmul.f32 %v2673, %v3131
  %v3270 = vmul.f32 %v2674, %v3131
  %v3271 = vmul.f32 %v2675, %v3131
  %v3272 = vmul.f32 %v2676, %v3131
  %v3273 = vmul.f32 %v2677, %v3131
  %v3274 = vmul.f32 %v2678, %v3131
  %v3275 = vmul.f32 %v2679, %v3131
  %v3276 = vmul.f32 %v2680, %v3131
  %v3277 = vmul.f32 %v2681, %v3131
  %v3278 = vmul.f32 %v2682, %v3131
  %v3279 = vmul.f32 %v2683, %v3131
  %v3280 = vmul.f32 %v2684, %v3131
  %v3281 = vmul.f32 %v2685, %v3131
  %v3282 = vmul.f32 %v2686, %v3131
  %v3283 = vmul.f32 %v2687, %v3131
  %v3284 = vmul.f32 %v2688, %v3131
  %v3285 = vmul.f32 %v2689, %v3131
  %v3286 = vmul.f32 %v2690, %v3131
  %v3287 = vmul.f32 %v2691, %v3131
  %v3288 = vmul.f32 %v2692, %v3131
  %v3289 = vmul.f32 %v2693, %v3131
  %v3290 = vmul.f32 %v2694, %v3131
  %v3291 = vmul.f32 %v2695, %v3131
  %v3292 = vmul.f32 %v2696, %v3131
  %v3293 = vmul.f32 %v2697, %v3131
  %v3294 = vmul.f32 %v2698, %v3131
  %v3295 = vmul.f32 %v2699, %v3131
  %v3296 = vmul.f32 %v2700, %v3131
  %v3297 = vmul.f32 %v2701, %v3131
  %v3298 = vmul.f32 %v2702, %v3131
  %v3299 = vmul.f32 %v2703, %v3131
  %v3300 = vmul.f32 %v2704, %v3131
  %v3301 = vmul.f32 %v2705, %v3131
  %v3302 = vmul.f32 %v2706, %v3131
  %v3303 = vmul.f32 %v2707, %v3131
  %v3304 = vmul.f32 %v2708, %v3131
  %v3305 = vmul.f32 %v2709, %v3131
  %v3306 = vmul.f32 %v2710, %v3131
  %v3307 = vmul.f32 %v2711, %v3131
  %v3308 = vmul.f32 %v2712, %v3131
  %v3309 = vmul.f32 %v2713, %v3131
  %v3310 = vmul.f32 %v2714, %v3131
  %v3311 = vmul.f32 %v2715, %v3131
  %v3312 = vmul.f32 %v2716, %v3131
  %v3313 = vmul.f32 %v2717, %v3131
  %v3314 = vmul.f32 %v2718, %v3131
  %v3315 = vmul.f32 %v2719, %v3131
  %v3316 = vmul.f32 %v2720, %v3131
  %v3317 = vmul.f32 %v2721, %v3131
  %v3318 = vmul.f32 %v2722, %v3131
  %v3319 = vmul.f32 %v2723, %v3131
  %v3320 = vmul.f32 %v2724, %v3131
  %v3321 = vmul.f32 %v2725, %v3131
  %v3322 = vmul.f32 %v2726, %v3131
  %v3323 = vmul.f32 %v2727, %v3131
  %v3324 = vmul.f32 %v2728, %v3131
  %v3325 = vmul.f32 %v2729, %v3131
  %v3326 = vmul.f32 %v2730, %v3131
  %v3327 = vmul.f32 %v2731, %v3131
  %v3328 = vmax.f32 %v3132, 0.0
  %v3329 = vmax.f32 %v3133, 0.0
  %v3330 = vmax.f32 %v3134, 0.0
  %v3331 = vmax.f32 %v3135, 0.0
  %v3332 = vmax.f32 %v3136, 0.0
  %v3333 = vmax.f32 %v3137, 0.0
  %v3334 = vmax.f32 %v3138, 0.0
  %v3335 = vmax.f32 %v3139, 0.0
  %v3336 = vmax.f32 %v3140, 0.0
  %v3337 = vmax.f32 %v3141, 0.0
  %v3338 = vmax.f32 %v3142, 0.0
  %v3339 = vmax.f32 %v3143, 0.0
  %v3340 = vmax.f32 %v3144, 0.0
  %v3341 = vmax.f32 %v3145, 0.0
  %v3342 = vmax.f32 %v3146, 0.0
  %v3343 = vmax.f32 %v3147, 0.0
  %v3344 = vmax.f32 %v3148, 0.0
  %v3345 = vmax.f32 %v3149, 0.0
  %v3346 = vmax.f32 %v3150, 0.0
  %v3347 = vmax.f32 %v3151, 0.0
  %v3348 = vmax.f32 %v3152, 0.0
  %v3349 = vmax.f32 %v3153, 0.0
  %v3350 = vmax.f32 %v3154, 0.0
  %v3351 = vmax.f32 %v3155, 0.0
  %v3352 = vmax.f32 %v3156, 0.0
  %v3353 = vmax.f32 %v3157, 0.0
  %v3354 = vmax.f32 %v3158, 0.0
  %v3355 = vmax.f32 %v3159, 0.0
  %v3356 = vmax.f32 %v3160, 0.0
  %v3357 = vmax.f32 %v3161, 0.0
  %v3358 = vmax.f32 %v3162, 0.0
  %v3359 = vmax.f32 %v3163, 0.0
  %v3360 = vmax.f32 %v3164, 0.0
  %v3361 = vmax.f32 %v3165, 0.0
  %v3362 = vmax.f32 %v3166, 0.0
  %v3363 = vmax.f32 %v3167, 0.0
  %v3364 = vmax.f32 %v3168, 0.0
  %v3365 = vmax.f32 %v3169, 0.0
  %v3366 = vmax.f32 %v3170, 0.0
  %v3367 = vmax.f32 %v3171, 0.0
  %v3368 = vmax.f32 %v3172, 0.0
  %v3369 = vmax.f32 %v3173, 0.0
  %v3370 = vmax.f32 %v3174, 0.0
  %v3371 = vmax.f32 %v3175, 0.0
  %v3372 = vmax.f32 %v3176, 0.0
  %v3373 = vmax.f32 %v3177, 0.0
  %v3374 = vmax.f32 %v3178, 0.0
  %v3375 = vmax.f32 %v3179, 0.0
  %v3376 = vmax.f32 %v3180, 0.0
  %v3377 = vmax.f32 %v3181, 0.0
  %v3378 = vmax.f32 %v3182, 0.0
  %v3379 = vmax.f32 %v3183, 0.0
  %v3380 = vmax.f32 %v3184, 0.0
  %v3381 = vmax.f32 %v3185, 0.0
  %v3382 = vmax.f32 %v3186, 0.0
  %v3383 = vmax.f32 %v3187, 0.0
  %v3384 = vmax.f32 %v3188, 0.0
  %v3385 = vmax.f32 %v3189, 0.0
  %v3386 = vmax.f32 %v3190, 0.0
  %v3387 = vmax.f32 %v3191, 0.0
  %v3388 = vmax.f32 %v3192, 0.0
  %v3389 = vmax.f32 %v3193, 0.0
  %v3390 = vmax.f32 %v3194, 0.0
  %v3391 = vmax.f32 %v3195, 0.0
  %v3392 = vmax.f32 %v3196, 0.0
  %v3393 = vmax.f32 %v3197, 0.0
  %v3394 = vmax.f32 %v3198, 0.0
  %v3395 = vmax.f32 %v3199, 0.0
  %v3396 = vmax.f32 %v3200, 0.0
  %v3397 = vmax.f32 %v3201, 0.0
  %v3398 = vmax.f32 %v3202, 0.0
  %v3399 = vmax.f32 %v3203, 0.0
  %v3400 = vmax.f32 %v3204, 0.0
  %v3401 = vmax.f32 %v3205, 0.0
  %v3402 = vmax.f32 %v3206, 0.0
  %v3403 = vmax.f32 %v3207, 0.0
  %v3404 = vmax.f32 %v3208, 0.0
  %v3405 = vmax.f32 %v3209, 0.0
  %v3406 = vmax.f32 %v3210, 0.0
  %v3407 = vmax.f32 %v3211, 0.0
  %v3408 = vmax.f32 %v3212, 0.0
  %v3409 = vmax.f32 %v3213, 0.0
  %v3410 = vmax.f32 %v3214, 0.0
  %v3411 = vmax.f32 %v3215, 0.0
  %v3412 = vmax.f32 %v3216, 0.0
  %v3413 = vmax.f32 %v3217, 0.0
  %v3414 = vmax.f32 %v3218, 0.0
  %v3415 = vmax.f32 %v3219, 0.0
  %v3416 = vmax.f32 %v3220, 0.0
  %v3417 = vmax.f32 %v3221, 0.0
  %v3418 = vmax.f32 %v3222, 0.0
  %v3419 = vmax.f32 %v3223, 0.0
  %v3420 = vmax.f32 %v3224, 0.0
  %v3421 = vmax.f32 %v3225, 0.0
  %v3422 = vmax.f32 %v3226, 0.0
  %v3423 = vmax.f32 %v3227, 0.0
  %v3424 = vmax.f32 %v3228, 0.0
  %v3425 = vmax.f32 %v3229, 0.0
  %v3426 = vmax.f32 %v3230, 0.0
  %v3427 = vmax.f32 %v3231, 0.0
  %v3428 = vmax.f32 %v3232, 0.0
  %v3429 = vmax.f32 %v3233, 0.0
  %v3430 = vmax.f32 %v3234, 0.0
  %v3431 = vmax.f32 %v3235, 0.0
  %v3432 = vmax.f32 %v3236, 0.0
  %v3433 = vmax.f32 %v3237, 0.0
  %v3434 = vmax.f32 %v3238, 0.0
  %v3435 = vmax.f32 %v3239, 0.0
  %v3436 = vmax.f32 %v3240, 0.0
  %v3437 = vmax.f32 %v3241, 0.0
  %v3438 = vmax.f32 %v3242, 0.0
  %v3439 = vmax.f32 %v3243, 0.0
  %v3440 = vmax.f32 %v3244, 0.0
  %v3441 = vmax.f32 %v3245, 0.0
  %v3442 = vmax.f32 %v3246, 0.0
  %v3443 = vmax.f32 %v3247, 0.0
  %v3444 = vmax.f32 %v3248, 0.0
  %v3445 = vmax.f32 %v3249, 0.0
  %v3446 = vmax.f32 %v3250, 0.0
  %v3447 = vmax.f32 %v3251, 0.0
  %v3448 = vmax.f32 %v3252, 0.0
  %v3449 = vmax.f32 %v3253, 0.0
  %v3450 = vmax.f32 %v3254, 0.0
  %v3451 = vmax.f32 %v3255, 0.0
  %v3452 = vmax.f32 %v3256, 0.0
  %v3453 = vmax.f32 %v3257, 0.0
  %v3454 = vmax.f32 %v3258, 0.0
  %v3455 = vmax.f32 %v3259, 0.0
  %v3456 = vmax.f32 %v3260, 0.0
  %v3457 = vmax.f32 %v3261, 0.0
  %v3458 = vmax.f32 %v3262, 0.0
  %v3459 = vmax.f32 %v3263, 0.0
  %v3460 = vmax.f32 %v3264, 0.0
  %v3461 = vmax.f32 %v3265, 0.0
  %v3462 = vmax.f32 %v3266, 0.0
  %v3463 = vmax.f32 %v3267, 0.0
  %v3464 = vmax.f32 %v3268, 0.0
  %v3465 = vmax.f32 %v3269, 0.0
  %v3466 = vmax.f32 %v3270, 0.0
  %v3467 = vmax.f32 %v3271, 0.0
  %v3468 = vmax.f32 %v3272, 0.0
  %v3469 = vmax.f32 %v3273, 0.0
  %v3470 = vmax.f32 %v3274, 0.0
  %v3471 = vmax.f32 %v3275, 0.0
  %v3472 = vmax.f32 %v3276, 0.0
  %v3473 = vmax.f32 %v3277, 0.0
  %v3474 = vmax.f32 %v3278, 0.0
  %v3475 = vmax.f32 %v3279, 0.0
  %v3476 = vmax.f32 %v3280, 0.0
  %v3477 = vmax.f32 %v3281, 0.0
  %v3478 = vmax.f32 %v3282, 0.0
  %v3479 = vmax.f32 %v3283, 0.0
  %v3480 = vmax.f32 %v3284, 0.0
  %v3481 = vmax.f32 %v3285, 0.0
  %v3482 = vmax.f32 %v3286, 0.0
  %v3483 = vmax.f32 %v3287, 0.0
  %v3484 = vmax.f32 %v3288, 0.0
  %v3485 = vmax.f32 %v3289, 0.0
  %v3486 = vmax.f32 %v3290, 0.0
  %v3487 = vmax.f32 %v3291, 0.0
  %v3488 = vmax.f32 %v3292, 0.0
  %v3489 = vmax.f32 %v3293, 0.0
  %v3490 = vmax.f32 %v3294, 0.0
  %v3491 = vmax.f32 %v3295, 0.0
  %v3492 = vmax.f32 %v3296, 0.0
  %v3493 = vmax.f32 %v3297, 0.0
  %v3494 = vmax.f32 %v3298, 0.0
  %v3495 = vmax.f32 %v3299, 0.0
  %v3496 = vmax.f32 %v3300, 0.0
  %v3497 = vmax.f32 %v3301, 0.0
  %v3498 = vmax.f32 %v3302, 0.0
  %v3499 = vmax.f32 %v3303, 0.0
  %v3500 = vmax.f32 %v3304, 0.0
  %v3501 = vmax.f32 %v3305, 0.0
  %v3502 = vmax.f32 %v3306, 0.0
  %v3503 = vmax.f32 %v3307, 0.0
  %v3504 = vmax.f32 %v3308, 0.0
  %v3505 = vmax.f32 %v3309, 0.0
  %v3506 = vmax.f32 %v3310, 0.0
  %v3507 = vmax.f32 %v3311, 0.0
  %v3508 = vmax.f32 %v3312, 0.0
  %v3509 = vmax.f32 %v3313, 0.0
  %v3510 = vmax.f32 %v3314, 0.0
  %v3511 = vmax.f32 %v3315, 0.0
  %v3512 = vmax.f32 %v3316, 0.0
  %v3513 = vmax.f32 %v3317, 0.0
  %v3514 = vmax.f32 %v3318, 0.0
  %v3515 = vmax.f32 %v3319, 0.0
  %v3516 = vmax.f32 %v3320, 0.0
  %v3517 = vmax.f32 %v3321, 0.0
  %v3518 = vmax.f32 %v3322, 0.0
  %v3519 = vmax.f32 %v3323, 0.0
  %v3520 = vmax.f32 %v3324, 0.0
  %v3521 = vmax.f32 %v3325, 0.0
  %v3522 = vmax.f32 %v3326, 0.0
  %v3523 = vmax.f32 %v3327, 0.0
  %v3524 = vmax.f32 %v3328, %v3377
  %v3525 = vmax.f32 %v3329, %v3378
  %v3526 = vmax.f32 %v3330, %v3379
  %v3527 = vmax.f32 %v3331, %v3380
  %v3528 = vmax.f32 %v3332, %v3381
  %v3529 = vmax.f32 %v3333, %v3382
  %v3530 = vmax.f32 %v3334, %v3383
  %v3531 = vmax.f32 %v3335, %v3384
  %v3532 = vmax.f32 %v3336, %v3385
  %v3533 = vmax.f32 %v3337, %v3386
  %v3534 = vmax.f32 %v3338, %v3387
  %v3535 = vmax.f32 %v3339, %v3388
  %v3536 = vmax.f32 %v3340, %v3389
  %v3537 = vmax.f32 %v3341, %v3390
  %v3538 = vmax.f32 %v3342, %v3391
  %v3539 = vmax.f32 %v3343, %v3392
  %v3540 = vmax.f32 %v3344, %v3393
  %v3541 = vmax.f32 %v3345, %v3394
  %v3542 = vmax.f32 %v3346, %v3395
  %v3543 = vmax.f32 %v3347, %v3396
  %v3544 = vmax.f32 %v3348, %v3397
  %v3545 = vmax.f32 %v3349, %v3398
  %v3546 = vmax.f32 %v3350, %v3399
  %v3547 = vmax.f32 %v3351, %v3400
  %v3548 = vmax.f32 %v3352, %v3401
  %v3549 = vmax.f32 %v3353, %v3402
  %v3550 = vmax.f32 %v3354, %v3403
  %v3551 = vmax.f32 %v3355, %v3404
  %v3552 = vmax.f32 %v3356, %v3405
  %v3553 = vmax.f32 %v3357, %v3406
  %v3554 = vmax.f32 %v3358, %v3407
  %v3555 = vmax.f32 %v3359, %v3408
  %v3556 = vmax.f32 %v3360, %v3409
  %v3557 = vmax.f32 %v3361, %v3410
  %v3558 = vmax.f32 %v3362, %v3411
  %v3559 = vmax.f32 %v3363, %v3412
  %v3560 = vmax.f32 %v3364, %v3413
  %v3561 = vmax.f32 %v3365, %v3414
  %v3562 = vmax.f32 %v3366, %v3415
  %v3563 = vmax.f32 %v3367, %v3416
  %v3564 = vmax.f32 %v3368, %v3417
  %v3565 = vmax.f32 %v3369, %v3418
  %v3566 = vmax.f32 %v3370, %v3419
  %v3567 = vmax.f32 %v3371, %v3420
  %v3568 = vmax.f32 %v3372, %v3421
  %v3569 = vmax.f32 %v3373, %v3422
  %v3570 = vmax.f32 %v3374, %v3423
  %v3571 = vmax.f32 %v3375, %v3424
  %v3572 = vmax.f32 %v3376, %v3425
  %v3573 = vmax.f32 %v3426, %v3475
  %v3574 = vmax.f32 %v3427, %v3476
  %v3575 = vmax.f32 %v3428, %v3477
  %v3576 = vmax.f32 %v3429, %v3478
  %v3577 = vmax.f32 %v3430, %v3479
  %v3578 = vmax.f32 %v3431, %v3480
  %v3579 = vmax.f32 %v3432, %v3481
  %v3580 = vmax.f32 %v3433, %v3482
  %v3581 = vmax.f32 %v3434, %v3483
  %v3582 = vmax.f32 %v3435, %v3484
  %v3583 = vmax.f32 %v3436, %v3485
  %v3584 = vmax.f32 %v3437, %v3486
  %v3585 = vmax.f32 %v3438, %v3487
  %v3586 = vmax.f32 %v3439, %v3488
  %v3587 = vmax.f32 %v3440, %v3489
  %v3588 = vmax.f32 %v3441, %v3490
  %v3589 = vmax.f32 %v3442, %v3491
  %v3590 = vmax.f32 %v3443, %v3492
  %v3591 = vmax.f32 %v3444, %v3493
  %v3592 = vmax.f32 %v3445, %v3494
  %v3593 = vmax.f32 %v3446, %v3495
  %v3594 = vmax.f32 %v3447, %v3496
  %v3595 = vmax.f32 %v3448, %v3497
  %v3596 = vmax.f32 %v3449, %v3498
  %v3597 = vmax.f32 %v3450, %v3499
  %v3598 = vmax.f32 %v3451, %v3500
  %v3599 = vmax.f32 %v3452, %v3501
  %v3600 = vmax.f32 %v3453, %v3502
  %v3601 = vmax.f32 %v3454, %v3503
  %v3602 = vmax.f32 %v3455, %v3504
  %v3603 = vmax.f32 %v3456, %v3505
  %v3604 = vmax.f32 %v3457, %v3506
  %v3605 = vmax.f32 %v3458, %v3507
  %v3606 = vmax.f32 %v3459, %v3508
  %v3607 = vmax.f32 %v3460, %v3509
  %v3608 = vmax.f32 %v3461, %v3510
  %v3609 = vmax.f32 %v3462, %v3511
  %v3610 = vmax.f32 %v3463, %v3512
  %v3611 = vmax.f32 %v3464, %v3513
  %v3612 = vmax.f32 %v3465, %v3514
  %v3613 = vmax.f32 %v3466, %v3515
  %v3614 = vmax.f32 %v3467, %v3516
  %v3615 = vmax.f32 %v3468, %v3517
  %v3616 = vmax.f32 %v3469, %v3518
  %v3617 = vmax.f32 %v3470, %v3519
  %v3618 = vmax.f32 %v3471, %v3520
  %v3619 = vmax.f32 %v3472, %v3521
  %v3620 = vmax.f32 %v3473, %v3522
  %v3621 = vmax.f32 %v3474, %v3523
  %v3622 = vmax.f32 %v3524, %v3573
  %v3623 = vmax.f32 %v3525, %v3574
  %v3624 = vmax.f32 %v3526, %v3575
  %v3625 = vmax.f32 %v3527, %v3576
  %v3626 = vmax.f32 %v3528, %v3577
  %v3627 = vmax.f32 %v3529, %v3578
  %v3628 = vmax.f32 %v3530, %v3579
  %v3629 = vmax.f32 %v3531, %v3580
  %v3630 = vmax.f32 %v3532, %v3581
  %v3631 = vmax.f32 %v3533, %v3582
  %v3632 = vmax.f32 %v3534, %v3583
  %v3633 = vmax.f32 %v3535, %v3584
  %v3634 = vmax.f32 %v3536, %v3585
  %v3635 = vmax.f32 %v3537, %v3586
  %v3636 = vmax.f32 %v3538, %v3587
  %v3637 = vmax.f32 %v3539, %v3588
  %v3638 = vmax.f32 %v3540, %v3589
  %v3639 = vmax.f32 %v3541, %v3590
  %v3640 = vmax.f32 %v3542, %v3591
  %v3641 = vmax.f32 %v3543, %v3592
  %v3642 = vmax.f32 %v3544, %v3593
  %v3643 = vmax.f32 %v3545, %v3594
  %v3644 = vmax.f32 %v3546, %v3595
  %v3645 = vmax.f32 %v3547, %v3596
  %v3646 = vmax.f32 %v3548, %v3597
  %v3647 = vmax.f32 %v3549, %v3598
  %v3648 = vmax.f32 %v3550, %v3599
  %v3649 = vmax.f32 %v3551, %v3600
  %v3650 = vmax.f32 %v3552, %v3601
  %v3651 = vmax.f32 %v3553, %v3602
  %v3652 = vmax.f32 %v3554, %v3603
  %v3653 = vmax.f32 %v3555, %v3604
  %v3654 = vmax.f32 %v3556, %v3605
  %v3655 = vmax.f32 %v3557, %v3606
  %v3656 = vmax.f32 %v3558, %v3607
  %v3657 = vmax.f32 %v3559, %v3608
  %v3658 = vmax.f32 %v3560, %v3609
  %v3659 = vmax.f32 %v3561, %v3610
  %v3660 = vmax.f32 %v3562, %v3611
  %v3661 = vmax.f32 %v3563, %v3612
  %v3662 = vmax.f32 %v3564, %v3613
  %v3663 = vmax.f32 %v3565, %v3614
  %v3664 = vmax.f32 %v3566, %v3615
  %v3665 = vmax.f32 %v3567, %v3616
  %v3666 = vmax.f32 %v3568, %v3617
  %v3667 = vmax.f32 %v3569, %v3618
  %v3668 = vmax.f32 %v3570, %v3619
  %v3669 = vmax.f32 %v3571, %v3620
  %v3670 = vmax.f32 %v3572, %v3621
  %v3671 = vpack.c.bf16 %v3623, %v3622
  %v3672 = vpack.c.bf16 %v3625, %v3624
  %v3673 = vpack.c.bf16 %v3627, %v3626
  %v3674 = vpack.c.bf16 %v3629, %v3628
  %v3675 = vpack.c.bf16 %v3631, %v3630
  %v3676 = vpack.c.bf16 %v3633, %v3632
  %v3677 = vpack.c.bf16 %v3635, %v3634
  %v3678 = vpack.c.bf16 %v3637, %v3636
  %v3679 = vpack.c.bf16 %v3639, %v3638
  %v3680 = vpack.c.bf16 %v3641, %v3640
  %v3681 = vpack.c.bf16 %v3643, %v3642
  %v3682 = vpack.c.bf16 %v3645, %v3644
  %v3683 = vpack.c.bf16 %v3647, %v3646
  %v3684 = vpack.c.bf16 %v3649, %v3648
  %v3685 = vpack.c.bf16 %v3651, %v3650
  %v3686 = vpack.c.bf16 %v3653, %v3652
  %v3687 = vpack.c.bf16 %v3655, %v3654
  %v3688 = vpack.c.bf16 %v3657, %v3656
  %v3689 = vpack.c.bf16 %v3659, %v3658
  %v3690 = vpack.c.bf16 %v3661, %v3660
  %v3691 = vpack.c.bf16 %v3663, %v3662
  %v3692 = vpack.c.bf16 %v3665, %v3664
  %v3693 = vpack.c.bf16 %v3667, %v3666
  %v3694 = vpack.c.bf16 %v3669, %v3668
  %v3695 = vpack.c.bf16 %v3670, %v3670
  %v3721 = vunpack.c.l.b16 %v3671
  %v3722 = vunpack.c.h.b16 %v3671
  %v3723 = vunpack.c.l.b16 %v3672
  %v3724 = vunpack.c.h.b16 %v3672
  %v3725 = vunpack.c.l.b16 %v3673
  %v3726 = vunpack.c.h.b16 %v3673
  %v3727 = vunpack.c.l.b16 %v3674
  %v3728 = vunpack.c.h.b16 %v3674
  %v3729 = vunpack.c.l.b16 %v3675
  %v3730 = vunpack.c.h.b16 %v3675
  %v3731 = vunpack.c.l.b16 %v3676
  %v3732 = vunpack.c.h.b16 %v3676
  %v3733 = vunpack.c.l.b16 %v3677
  %v3734 = vunpack.c.h.b16 %v3677
  %v3735 = vunpack.c.l.b16 %v3678
  %v3736 = vunpack.c.h.b16 %v3678
  %v3737 = vunpack.c.l.b16 %v3679
  %v3738 = vunpack.c.h.b16 %v3679
  %v3739 = vunpack.c.l.b16 %v3680
  %v3740 = vunpack.c.h.b16 %v3680
  %v3741 = vunpack.c.l.b16 %v3681
  %v3742 = vunpack.c.h.b16 %v3681
  %v3743 = vunpack.c.l.b16 %v3682
  %v3744 = vunpack.c.h.b16 %v3682
  %v3745 = vunpack.c.l.b16 %v3683
  %v3746 = vunpack.c.h.b16 %v3683
  %v3747 = vunpack.c.l.b16 %v3684
  %v3748 = vunpack.c.h.b16 %v3684
  %v3749 = vunpack.c.l.b16 %v3685
  %v3750 = vunpack.c.h.b16 %v3685
  %v3751 = vunpack.c.l.b16 %v3686
  %v3752 = vunpack.c.h.b16 %v3686
  %v3753 = vunpack.c.l.b16 %v3687
  %v3754 = vunpack.c.h.b16 %v3687
  %v3755 = vunpack.c.l.b16 %v3688
  %v3756 = vunpack.c.h.b16 %v3688
  %v3757 = vunpack.c.l.b16 %v3689
  %v3758 = vunpack.c.h.b16 %v3689
  %v3759 = vunpack.c.l.b16 %v3690
  %v3760 = vunpack.c.h.b16 %v3690
  %v3761 = vunpack.c.l.b16 %v3691
  %v3762 = vunpack.c.h.b16 %v3691
  %v3763 = vunpack.c.l.b16 %v3692
  %v3764 = vunpack.c.h.b16 %v3692
  %v3765 = vunpack.c.l.b16 %v3693
  %v3766 = vunpack.c.h.b16 %v3693
  %v3767 = vunpack.c.l.b16 %v3694
  %v3768 = vunpack.c.h.b16 %v3694
  %v3769 = vunpack.c.l.b16 %v3695
  %v3770 = vpack.c.b16 %v3721, %v3721
  %v3771 = vpack.c.b16 %v3722, %v3722
  %v3772 = vpack.c.b16 %v3723, %v3723
  %v3773 = vpack.c.b16 %v3724, %v3724
  %v3774 = vpack.c.b16 %v3725, %v3725
  %v3775 = vpack.c.b16 %v3726, %v3726
  %v3776 = vpack.c.b16 %v3727, %v3727
  %v3777 = vpack.c.b16 %v3728, %v3728
  %v3778 = vpack.c.b16 %v3729, %v3729
  %v3779 = vpack.c.b16 %v3730, %v3730
  %v3780 = vpack.c.b16 %v3731, %v3731
  %v3781 = vpack.c.b16 %v3732, %v3732
  %v3782 = vpack.c.b16 %v3733, %v3733
  %v3783 = vpack.c.b16 %v3734, %v3734
  %v3784 = vpack.c.b16 %v3735, %v3735
  %v3785 = vpack.c.b16 %v3736, %v3736
  %v3786 = vpack.c.b16 %v3737, %v3737
  %v3787 = vpack.c.b16 %v3738, %v3738
  %v3788 = vpack.c.b16 %v3739, %v3739
  %v3789 = vpack.c.b16 %v3740, %v3740
  %v3790 = vpack.c.b16 %v3741, %v3741
  %v3791 = vpack.c.b16 %v3742, %v3742
  %v3792 = vpack.c.b16 %v3743, %v3743
  %v3793 = vpack.c.b16 %v3744, %v3744
  %v3794 = vpack.c.b16 %v3745, %v3745
  %v3795 = vpack.c.b16 %v3746, %v3746
  %v3796 = vpack.c.b16 %v3747, %v3747
  %v3797 = vpack.c.b16 %v3748, %v3748
  %v3798 = vpack.c.b16 %v3749, %v3749
  %v3799 = vpack.c.b16 %v3750, %v3750
  %v3800 = vpack.c.b16 %v3751, %v3751
  %v3801 = vpack.c.b16 %v3752, %v3752
  %v3802 = vpack.c.b16 %v3753, %v3753
  %v3803 = vpack.c.b16 %v3754, %v3754
  %v3804 = vpack.c.b16 %v3755, %v3755
  %v3805 = vpack.c.b16 %v3756, %v3756
  %v3806 = vpack.c.b16 %v3757, %v3757
  %v3807 = vpack.c.b16 %v3758, %v3758
  %v3808 = vpack.c.b16 %v3759, %v3759
  %v3809 = vpack.c.b16 %v3760, %v3760
  %v3810 = vpack.c.b16 %v3761, %v3761
  %v3811 = vpack.c.b16 %v3762, %v3762
  %v3812 = vpack.c.b16 %v3763, %v3763
  %v3813 = vpack.c.b16 %v3764, %v3764
  %v3814 = vpack.c.b16 %v3765, %v3765
  %v3815 = vpack.c.b16 %v3766, %v3766
  %v3816 = vpack.c.b16 %v3767, %v3767
  %v3817 = vpack.c.b16 %v3768, %v3768
  %v3818 = vpack.c.b16 %v3769, %v3769
  %3868 = vst [vmem:[%s2] sm:$0xf] %v3770
  %3869 = vst [vmem:[%s2 + $0x4] sm:$0xf] %v3771
  %3870 = vst [vmem:[%s2 + $0x8] sm:$0xf] %v3772
  %3871 = vst [vmem:[%s2 + $0xc] sm:$0xf] %v3773
  %3872 = vst [vmem:[%s2 + $0x10] sm:$0xf] %v3774
  %3873 = vst [vmem:[%s2 + $0x14] sm:$0xf] %v3775
  %3874 = vst [vmem:[%s2 + $0x18] sm:$0xf] %v3776
  %3875 = vst [vmem:[%s2 + $0x1c] sm:$0xf] %v3777
  %3876 = vst [vmem:[%s2 + $0x20] sm:$0xf] %v3778
  %3877 = vst [vmem:[%s2 + $0x24] sm:$0xf] %v3779
  %3878 = vst [vmem:[%s2 + $0x28] sm:$0xf] %v3780
  %3879 = vst [vmem:[%s2 + $0x2c] sm:$0xf] %v3781
  %3880 = vst [vmem:[%s2 + $0x30] sm:$0xf] %v3782
  %3881 = vst [vmem:[%s2 + $0x34] sm:$0xf] %v3783
  %3882 = vst [vmem:[%s2 + $0x38] sm:$0xf] %v3784
  %3883 = vst [vmem:[%s2 + $0x3c] sm:$0xf] %v3785
  %3884 = vst [vmem:[%s2 + $0x40] sm:$0xf] %v3786
  %3885 = vst [vmem:[%s2 + $0x44] sm:$0xf] %v3787
  %3886 = vst [vmem:[%s2 + $0x48] sm:$0xf] %v3788
  %3887 = vst [vmem:[%s2 + $0x4c] sm:$0xf] %v3789
  %3888 = vst [vmem:[%s2 + $0x50] sm:$0xf] %v3790
  %3889 = vst [vmem:[%s2 + $0x54] sm:$0xf] %v3791
  %3890 = vst [vmem:[%s2 + $0x58] sm:$0xf] %v3792
  %3891 = vst [vmem:[%s2 + $0x5c] sm:$0xf] %v3793
  %3892 = vst [vmem:[%s2 + $0x60] sm:$0xf] %v3794
  %3893 = vst [vmem:[%s2 + $0x64] sm:$0xf] %v3795
  %3894 = vst [vmem:[%s2 + $0x68] sm:$0xf] %v3796
  %3895 = vst [vmem:[%s2 + $0x6c] sm:$0xf] %v3797
  %3896 = vst [vmem:[%s2 + $0x70] sm:$0xf] %v3798
  %3897 = vst [vmem:[%s2 + $0x74] sm:$0xf] %v3799
  %3898 = vst [vmem:[%s2 + $0x78] sm:$0xf] %v3800
  %3899 = vst [vmem:[%s2 + $0x7c] sm:$0xf] %v3801
  %3900 = vst [vmem:[%s2 + $0x80] sm:$0xf] %v3802
  %3901 = vst [vmem:[%s2 + $0x84] sm:$0xf] %v3803
  %3902 = vst [vmem:[%s2 + $0x88] sm:$0xf] %v3804
  %3903 = vst [vmem:[%s2 + $0x8c] sm:$0xf] %v3805
  %3904 = vst [vmem:[%s2 + $0x90] sm:$0xf] %v3806
  %3905 = vst [vmem:[%s2 + $0x94] sm:$0xf] %v3807
  %3906 = vst [vmem:[%s2 + $0x98] sm:$0xf] %v3808
  %3907 = vst [vmem:[%s2 + $0x9c] sm:$0xf] %v3809
  %3908 = vst [vmem:[%s2 + $0xa0] sm:$0xf] %v3810
  %3909 = vst [vmem:[%s2 + $0xa4] sm:$0xf] %v3811
  %3910 = vst [vmem:[%s2 + $0xa8] sm:$0xf] %v3812
  %3911 = vst [vmem:[%s2 + $0xac] sm:$0xf] %v3813
  %3912 = vst [vmem:[%s2 + $0xb0] sm:$0xf] %v3814
  %3913 = vst [vmem:[%s2 + $0xb4] sm:$0xf] %v3815
  %3914 = vst [vmem:[%s2 + $0xb8] sm:$0xf] %v3816
  %3915 = vst [vmem:[%s2 + $0xbc] sm:$0xf] %v3817
  %3916 = vst [vmem:[%s2 + $0xc0] sm:$0xf] %v3818
  // Predicated region
  $region10: #{student_net9_forward.2} parent=0 // pred_check
    _
  $region11: #{student_net9_forward.2} parent=0 // pred_check_branch
    %3918 = sbr.rel (0) target = $region13
  $region12: #{student_net9_forward.2} parent=0 // pred_region
    _
  $region13: #{student_net9_forward.2} parent=0 // pred_fallthru
    _
  // Predicated region
  $region14: #{student_net9_forward.2} parent=0 // pred_check
    _
  $region15: #{student_net9_forward.2} parent=0 // pred_check_branch
    %3920 = sbr.rel (0) target = $region17
  $region16: #{student_net9_forward.2} parent=0 // pred_region
    _
  $region17: #{student_net9_forward.2} parent=0 // pred_fallthru
    _

// kernel: student_net9_forward.3
$region0: #{student_net9_forward.3}
  #allocation0 [shape = 'u32[]', space=smem, size = 0x4, offset = 0x4, fixed_abs, tag = 'smem constant byte address 0x4 - core index']
  #allocation1 [shape = 'u32[144,128]{1,0:T(1,128)}', space=vmem, size = 0x12000, scoped, tag = 'internal scratch']
  %s0 = inlined_call_operand.vmem [shape: bf16[200,1008], index: 0, kind: input, shape index: {}]
  %s1 = inlined_call_operand.vmem [shape: bf16[1008,128], index: 1, kind: input, shape index: {}]
  %s2 = inlined_call_operand.vmem [shape: bf16[25,128,128], index: 2, kind: input, shape index: {}]
  %s3 = inlined_call_operand.vmem [shape: f32[1,128], index: 3, kind: input, shape index: {}]
  %s4 = inlined_call_operand.hbm [shape: f32[2,128], index: 4, kind: output, shape index: {}]
  %s5 = sld [smem:[#allocation0]]
  $region26: #{student_net9_forward.3} parent=0
    _
  %s7 = ssub.s32 1, %s5
  %s8 = scalar_select 0, %s7, %s5
  $region1: #{student_net9_forward.3} parent=0
    #allocation2 [shape = 'u8[1024]{0}', space=vmem, size = 0x400, scoped, tag = 'output window, operand 0, single buffered']
    #allocation3 [shape = 's32[1]{0}', space=sflag, size = 0x4, scoped, tag = 'scoped memory for student_net9_forward.3']
    %9 = vsyncpa [#allocation3], 0
    // Predicated region
    $region2: #{student_net9_forward.3} parent=1 // pred_check
      _
    $region3: #{student_net9_forward.3} parent=1 // pred_check_branch
      %11 = sbr.rel (0) target = $region5
    $region4: #{student_net9_forward.3} parent=1 // pred_region
      _
    $region5: #{student_net9_forward.3} parent=1 // pred_fallthru
      _
    // Predicated region
    $region6: #{student_net9_forward.3} parent=1 // pred_check
      _
    $region7: #{student_net9_forward.3} parent=1 // pred_check_branch
      %13 = sbr.rel (0) target = $region9
    $region8: #{student_net9_forward.3} parent=1 // pred_region
      _
    $region9: #{student_net9_forward.3} parent=1 // pred_fallthru
      _
    // Predicated region
    $region10: #{student_net9_forward.3} parent=1 // pred_check
      _
    $region11: #{student_net9_forward.3} parent=1 // pred_check_branch
      %15 = sbr.rel (0) target = $region13
    $region12: #{student_net9_forward.3} parent=1 // pred_region
      _
    $region13: #{student_net9_forward.3} parent=1 // pred_fallthru
      _
    // Predicated region
    $region14: #{student_net9_forward.3} parent=1 // pred_check
      _
    $region15: #{student_net9_forward.3} parent=1 // pred_check_branch
      %17 = sbr.rel (0) target = $region17
    $region16: #{student_net9_forward.3} parent=1 // pred_region
      _
    $region17: #{student_net9_forward.3} parent=1 // pred_fallthru
      _
    %v19 = vld [vmem:[%s0] sm:$0xff]
    %v20 = vld [vmem:[%s0 + $0x8] sm:$0xff]
    %v21 = vld [vmem:[%s0 + $0x10] sm:$0xff]
    %v22 = vld [vmem:[%s0 + $0x18] sm:$0xff]
    %v23 = vld [vmem:[%s0 + $0x20] sm:$0xff]
    %v24 = vld [vmem:[%s0 + $0x28] sm:$0xff]
    %v25 = vld [vmem:[%s0 + $0x30] sm:$0xff]
    %v26 = vld [vmem:[%s0 + $0x38] sm:$0xff]
    %v27 = vld [vmem:[%s0 + $0x40] sm:$0xff]
    %v28 = vld [vmem:[%s0 + $0x48] sm:$0xff]
    %v29 = vld [vmem:[%s0 + $0x50] sm:$0xff]
    %v30 = vld [vmem:[%s0 + $0x58] sm:$0xff]
    %v31 = vld [vmem:[%s0 + $0x60] sm:$0xff]
    %v32 = vld [vmem:[%s0 + $0x68] sm:$0xff]
    %v33 = vld [vmem:[%s0 + $0x70] sm:$0xff]
    %v34 = vld [vmem:[%s0 + $0x78] sm:$0xff]
    %v35 = vld [vmem:[%s0 + $0x80] sm:$0xff]
    %v36 = vld [vmem:[%s0 + $0x88] sm:$0xff]
    %v37 = vld [vmem:[%s0 + $0x90] sm:$0xff]
    %v38 = vld [vmem:[%s0 + $0x98] sm:$0xff]
    %v39 = vld [vmem:[%s0 + $0xa0] sm:$0xff]
    %v40 = vld [vmem:[%s0 + $0xa8] sm:$0xff]
    %v41 = vld [vmem:[%s0 + $0xb0] sm:$0xff]
    %v42 = vld [vmem:[%s0 + $0xb8] sm:$0xff]
    %v43 = vld [vmem:[%s0 + $0xc0] sm:$0xff]
    %v44 = vld [vmem:[%s0 + $0xc8] sm:$0xff]
    %v45 = vld [vmem:[%s0 + $0xd0] sm:$0xff]
    %v46 = vld [vmem:[%s0 + $0xd8] sm:$0xff]
    %v47 = vld [vmem:[%s0 + $0xe0] sm:$0xff]
    %v48 = vld [vmem:[%s0 + $0xe8] sm:$0xff]
    %v49 = vld [vmem:[%s0 + $0xf0] sm:$0xff]
    %v50 = vld [vmem:[%s0 + $0xf8] sm:$0xff]
    %v51 = vld [vmem:[%s0 + $0x100] sm:$0xff]
    %v52 = vld [vmem:[%s0 + $0x108] sm:$0xff]
    %v53 = vld [vmem:[%s0 + $0x110] sm:$0xff]
    %v54 = vld [vmem:[%s0 + $0x118] sm:$0xff]
    %v55 = vld [vmem:[%s0 + $0x120] sm:$0xff]
    %v56 = vld [vmem:[%s0 + $0x128] sm:$0xff]
    %v57 = vld [vmem:[%s0 + $0x130] sm:$0xff]
    %v58 = vld [vmem:[%s0 + $0x138] sm:$0xff]
    %v59 = vld [vmem:[%s0 + $0x140] sm:$0xff]
    %v60 = vld [vmem:[%s0 + $0x148] sm:$0xff]
    %v61 = vld [vmem:[%s0 + $0x150] sm:$0xff]
    %v62 = vld [vmem:[%s0 + $0x158] sm:$0xff]
    %v63 = vld [vmem:[%s0 + $0x160] sm:$0xff]
    %v64 = vld [vmem:[%s0 + $0x168] sm:$0xff]
    %v65 = vld [vmem:[%s0 + $0x170] sm:$0xff]
    %v66 = vld [vmem:[%s0 + $0x178] sm:$0xff]
    %v67 = vld [vmem:[%s0 + $0x180] sm:$0xff]
    %v68 = vld [vmem:[%s0 + $0x188] sm:$0xff]
    %v69 = vld [vmem:[%s0 + $0x190] sm:$0xff]
    %v70 = vld [vmem:[%s0 + $0x198] sm:$0xff]
    %v71 = vld [vmem:[%s0 + $0x1a0] sm:$0xff]
    %v72 = vld [vmem:[%s0 + $0x1a8] sm:$0xff]
    %v73 = vld [vmem:[%s0 + $0x1b0] sm:$0xff]
    %v74 = vld [vmem:[%s0 + $0x1b8] sm:$0xff]
    %v75 = vld [vmem:[%s0 + $0x1c0] sm:$0xff]
    %v76 = vld [vmem:[%s0 + $0x1c8] sm:$0xff]
    %v77 = vld [vmem:[%s0 + $0x1d0] sm:$0xff]
    %v78 = vld [vmem:[%s0 + $0x1d8] sm:$0xff]
    %v79 = vld [vmem:[%s0 + $0x1e0] sm:$0xff]
    %v80 = vld [vmem:[%s0 + $0x1e8] sm:$0xff]
    %v81 = vld [vmem:[%s0 + $0x1f0] sm:$0xff]
    %v82 = vld [vmem:[%s0 + $0x1f8] sm:$0xff]
    %v83 = vld [vmem:[%s0 + $0x200] sm:$0xff]
    %v84 = vld [vmem:[%s0 + $0x208] sm:$0xff]
    %v85 = vld [vmem:[%s0 + $0x210] sm:$0xff]
    %v86 = vld [vmem:[%s0 + $0x218] sm:$0xff]
    %v87 = vld [vmem:[%s0 + $0x220] sm:$0xff]
    %v88 = vld [vmem:[%s0 + $0x228] sm:$0xff]
    %v89 = vld [vmem:[%s0 + $0x230] sm:$0xff]
    %v90 = vld [vmem:[%s0 + $0x238] sm:$0xff]
    %v91 = vld [vmem:[%s0 + $0x240] sm:$0xff]
    %v92 = vld [vmem:[%s0 + $0x248] sm:$0xff]
    %v93 = vld [vmem:[%s0 + $0x250] sm:$0xff]
    %v94 = vld [vmem:[%s0 + $0x258] sm:$0xff]
    %v95 = vld [vmem:[%s0 + $0x260] sm:$0xff]
    %v96 = vld [vmem:[%s0 + $0x268] sm:$0xff]
    %v97 = vld [vmem:[%s0 + $0x270] sm:$0xff]
    %v98 = vld [vmem:[%s0 + $0x278] sm:$0xff]
    %v99 = vld [vmem:[%s0 + $0x280] sm:$0xff]
    %v100 = vld [vmem:[%s0 + $0x288] sm:$0xff]
    %v101 = vld [vmem:[%s0 + $0x290] sm:$0xff]
    %v102 = vld [vmem:[%s0 + $0x298] sm:$0xff]
    %v103 = vld [vmem:[%s0 + $0x2a0] sm:$0xff]
    %v104 = vld [vmem:[%s0 + $0x2a8] sm:$0xff]
    %v105 = vld [vmem:[%s0 + $0x2b0] sm:$0xff]
    %v106 = vld [vmem:[%s0 + $0x2b8] sm:$0xff]
    %v107 = vld [vmem:[%s0 + $0x2c0] sm:$0xff]
    %v108 = vld [vmem:[%s0 + $0x2c8] sm:$0xff]
    %v109 = vld [vmem:[%s0 + $0x2d0] sm:$0xff]
    %v110 = vld [vmem:[%s0 + $0x2d8] sm:$0xff]
    %v111 = vld [vmem:[%s0 + $0x2e0] sm:$0xff]
    %v112 = vld [vmem:[%s0 + $0x2e8] sm:$0xff]
    %v113 = vld [vmem:[%s0 + $0x2f0] sm:$0xff]
    %v114 = vld [vmem:[%s0 + $0x2f8] sm:$0xff]
    %v115 = vld [vmem:[%s0 + $0x300] sm:$0xff]
    %v116 = vld [vmem:[%s0 + $0x308] sm:$0xff]
    %v117 = vld [vmem:[%s0 + $0x310] sm:$0xff]
    %v118 = vld [vmem:[%s0 + $0x318] sm:$0xff]
    %v119 = vld [vmem:[%s1] sm:$0xf]
    %v120 = vld [vmem:[%s1 + $0x4] sm:$0xf]
    %v121 = vld [vmem:[%s1 + $0x8] sm:$0xf]
    %v122 = vld [vmem:[%s1 + $0xc] sm:$0xf]
    %v123 = vld [vmem:[%s1 + $0x10] sm:$0xf]
    %v124 = vld [vmem:[%s1 + $0x14] sm:$0xf]
    %v125 = vld [vmem:[%s1 + $0x18] sm:$0xf]
    %v126 = vld [vmem:[%s1 + $0x1c] sm:$0xf]
    %v127 = vld [vmem:[%s1 + $0x20] sm:$0xf]
    %v128 = vld [vmem:[%s1 + $0x24] sm:$0xf]
    %v129 = vld [vmem:[%s1 + $0x28] sm:$0xf]
    %v130 = vld [vmem:[%s1 + $0x2c] sm:$0xf]
    %v131 = vld [vmem:[%s1 + $0x30] sm:$0xf]
    %v132 = vld [vmem:[%s1 + $0x34] sm:$0xf]
    %v133 = vld [vmem:[%s1 + $0x38] sm:$0xf]
    %v134 = vld [vmem:[%s1 + $0x3c] sm:$0xf]
    %v135 = vld [vmem:[%s1 + $0x40] sm:$0xf]
    %v136 = vld [vmem:[%s1 + $0x44] sm:$0xf]
    %v137 = vld [vmem:[%s1 + $0x48] sm:$0xf]
    %v138 = vld [vmem:[%s1 + $0x4c] sm:$0xf]
    %v139 = vld [vmem:[%s1 + $0x50] sm:$0xf]
    %v140 = vld [vmem:[%s1 + $0x54] sm:$0xf]
    %v141 = vld [vmem:[%s1 + $0x58] sm:$0xf]
    %v142 = vld [vmem:[%s1 + $0x5c] sm:$0xf]
    %v143 = vld [vmem:[%s1 + $0x60] sm:$0xf]
    %v144 = vld [vmem:[%s1 + $0x64] sm:$0xf]
    %v145 = vld [vmem:[%s1 + $0x68] sm:$0xf]
    %v146 = vld [vmem:[%s1 + $0x6c] sm:$0xf]
    %v147 = vld [vmem:[%s1 + $0x70] sm:$0xf]
    %v148 = vld [vmem:[%s1 + $0x74] sm:$0xf]
    %v149 = vld [vmem:[%s1 + $0x78] sm:$0xf]
    %v150 = vld [vmem:[%s1 + $0x7c] sm:$0xf]
    %v151 = vld [vmem:[%s1 + $0x80] sm:$0xf]
    %v152 = vld [vmem:[%s1 + $0x84] sm:$0xf]
    %v153 = vld [vmem:[%s1 + $0x88] sm:$0xf]
    %v154 = vld [vmem:[%s1 + $0x8c] sm:$0xf]
    %v155 = vld [vmem:[%s1 + $0x90] sm:$0xf]
    %v156 = vld [vmem:[%s1 + $0x94] sm:$0xf]
    %v157 = vld [vmem:[%s1 + $0x98] sm:$0xf]
    %v158 = vld [vmem:[%s1 + $0x9c] sm:$0xf]
    %v159 = vld [vmem:[%s1 + $0xa0] sm:$0xf]
    %v160 = vld [vmem:[%s1 + $0xa4] sm:$0xf]
    %v161 = vld [vmem:[%s1 + $0xa8] sm:$0xf]
    %v162 = vld [vmem:[%s1 + $0xac] sm:$0xf]
    %v163 = vld [vmem:[%s1 + $0xb0] sm:$0xf]
    %v164 = vld [vmem:[%s1 + $0xb4] sm:$0xf]
    %v165 = vld [vmem:[%s1 + $0xb8] sm:$0xf]
    %v166 = vld [vmem:[%s1 + $0xbc] sm:$0xf]
    %v167 = vld [vmem:[%s1 + $0xc0] sm:$0xf]
    %v168 = vld [vmem:[%s1 + $0xc4] sm:$0xf]
    %v169 = vld [vmem:[%s1 + $0xc8] sm:$0xf]
    %v170 = vld [vmem:[%s1 + $0xcc] sm:$0xf]
    %v171 = vld [vmem:[%s1 + $0xd0] sm:$0xf]
    %v172 = vld [vmem:[%s1 + $0xd4] sm:$0xf]
    %v173 = vld [vmem:[%s1 + $0xd8] sm:$0xf]
    %v174 = vld [vmem:[%s1 + $0xdc] sm:$0xf]
    %v175 = vld [vmem:[%s1 + $0xe0] sm:$0xf]
    %v176 = vld [vmem:[%s1 + $0xe4] sm:$0xf]
    %v177 = vld [vmem:[%s1 + $0xe8] sm:$0xf]
    %v178 = vld [vmem:[%s1 + $0xec] sm:$0xf]
    %v179 = vld [vmem:[%s1 + $0xf0] sm:$0xf]
    %v180 = vld [vmem:[%s1 + $0xf4] sm:$0xf]
    %v181 = vld [vmem:[%s1 + $0xf8] sm:$0xf]
    %v182 = vld [vmem:[%s1 + $0xfc] sm:$0xf]
    %v183 = vld [vmem:[%s1 + $0x100] sm:$0xf]
    %v184 = vld [vmem:[%s1 + $0x104] sm:$0xf]
    %v185 = vld [vmem:[%s1 + $0x108] sm:$0xf]
    %v186 = vld [vmem:[%s1 + $0x10c] sm:$0xf]
    %v187 = vld [vmem:[%s1 + $0x110] sm:$0xf]
    %v188 = vld [vmem:[%s1 + $0x114] sm:$0xf]
    %v189 = vld [vmem:[%s1 + $0x118] sm:$0xf]
    %v190 = vld [vmem:[%s1 + $0x11c] sm:$0xf]
    %v191 = vld [vmem:[%s1 + $0x120] sm:$0xf]
    %v192 = vld [vmem:[%s1 + $0x124] sm:$0xf]
    %v193 = vld [vmem:[%s1 + $0x128] sm:$0xf]
    %v194 = vld [vmem:[%s1 + $0x12c] sm:$0xf]
    %v195 = vld [vmem:[%s1 + $0x130] sm:$0xf]
    %v196 = vld [vmem:[%s1 + $0x134] sm:$0xf]
    %v197 = vld [vmem:[%s1 + $0x138] sm:$0xf]
    %v198 = vld [vmem:[%s1 + $0x13c] sm:$0xf]
    %v199 = vld [vmem:[%s1 + $0x140] sm:$0xf]
    %v200 = vld [vmem:[%s1 + $0x144] sm:$0xf]
    %v201 = vld [vmem:[%s1 + $0x148] sm:$0xf]
    %v202 = vld [vmem:[%s1 + $0x14c] sm:$0xf]
    %v203 = vld [vmem:[%s1 + $0x150] sm:$0xf]
    %v204 = vld [vmem:[%s1 + $0x154] sm:$0xf]
    %v205 = vld [vmem:[%s1 + $0x158] sm:$0xf]
    %v206 = vld [vmem:[%s1 + $0x15c] sm:$0xf]
    %v207 = vld [vmem:[%s1 + $0x160] sm:$0xf]
    %v208 = vld [vmem:[%s1 + $0x164] sm:$0xf]
    %v209 = vld [vmem:[%s1 + $0x168] sm:$0xf]
    %v210 = vld [vmem:[%s1 + $0x16c] sm:$0xf]
    %v211 = vld [vmem:[%s1 + $0x170] sm:$0xf]
    %v212 = vld [vmem:[%s1 + $0x174] sm:$0xf]
    %v213 = vld [vmem:[%s1 + $0x178] sm:$0xf]
    %v214 = vld [vmem:[%s1 + $0x17c] sm:$0xf]
    %v215 = vld [vmem:[%s1 + $0x180] sm:$0xf]
    %v216 = vld [vmem:[%s1 + $0x184] sm:$0xf]
    %v217 = vld [vmem:[%s1 + $0x188] sm:$0xf]
    %v218 = vld [vmem:[%s1 + $0x18c] sm:$0xf]
    %v219 = vld [vmem:[%s1 + $0x190] sm:$0xf]
    %v220 = vld [vmem:[%s1 + $0x194] sm:$0xf]
    %v221 = vld [vmem:[%s1 + $0x198] sm:$0xf]
    %v222 = vld [vmem:[%s1 + $0x19c] sm:$0xf]
    %v223 = vld [vmem:[%s1 + $0x1a0] sm:$0xf]
    %v224 = vld [vmem:[%s1 + $0x1a4] sm:$0xf]
    %v225 = vld [vmem:[%s1 + $0x1a8] sm:$0xf]
    %v226 = vld [vmem:[%s1 + $0x1ac] sm:$0xf]
    %v227 = vld [vmem:[%s1 + $0x1b0] sm:$0xf]
    %v228 = vld [vmem:[%s1 + $0x1b4] sm:$0xf]
    %v229 = vld [vmem:[%s1 + $0x1b8] sm:$0xf]
    %v230 = vld [vmem:[%s1 + $0x1bc] sm:$0xf]
    %v231 = vld [vmem:[%s1 + $0x1c0] sm:$0xf]
    %v232 = vld [vmem:[%s1 + $0x1c4] sm:$0xf]
    %v233 = vld [vmem:[%s1 + $0x1c8] sm:$0xf]
    %v234 = vld [vmem:[%s1 + $0x1cc] sm:$0xf]
    %v235 = vld [vmem:[%s1 + $0x1d0] sm:$0xf]
    %v236 = vld [vmem:[%s1 + $0x1d4] sm:$0xf]
    %v237 = vld [vmem:[%s1 + $0x1d8] sm:$0xf]
    %v238 = vld [vmem:[%s1 + $0x1dc] sm:$0xf]
    %v239 = vld [vmem:[%s1 + $0x1e0] sm:$0xf]
    %v240 = vld [vmem:[%s1 + $0x1e4] sm:$0xf]
    %v241 = vld [vmem:[%s1 + $0x1e8] sm:$0xf]
    %v242 = vld [vmem:[%s1 + $0x1ec] sm:$0xf]
    %v243 = vld [vmem:[%s1 + $0x1f0] sm:$0xf]
    %v244 = vld [vmem:[%s1 + $0x1f4] sm:$0xf]
    %v345 = vunpack.c.l.b16 %v19
    %v346 = vunpack.c.h.b16 %v19
    %v347 = vunpack.c.l.b16 %v20
    %v348 = vunpack.c.h.b16 %v20
    %v349 = vunpack.c.l.b16 %v21
    %v350 = vunpack.c.h.b16 %v21
    %v351 = vunpack.c.l.b16 %v22
    %v352 = vunpack.c.h.b16 %v22
    %v353 = vunpack.c.l.b16 %v23
    %v354 = vunpack.c.h.b16 %v23
    %v355 = vunpack.c.l.b16 %v24
    %v356 = vunpack.c.h.b16 %v24
    %v357 = vunpack.c.l.b16 %v25
    %v358 = vunpack.c.h.b16 %v25
    %v359 = vunpack.c.l.b16 %v26
    %v360 = vunpack.c.h.b16 %v26
    %v361 = vunpack.c.l.b16 %v27
    %v362 = vunpack.c.h.b16 %v27
    %v363 = vunpack.c.l.b16 %v28
    %v364 = vunpack.c.h.b16 %v28
    %v365 = vunpack.c.l.b16 %v29
    %v366 = vunpack.c.h.b16 %v29
    %v367 = vunpack.c.l.b16 %v30
    %v368 = vunpack.c.h.b16 %v30
    %v369 = vunpack.c.l.b16 %v31
    %v370 = vunpack.c.h.b16 %v31
    %v371 = vunpack.c.l.b16 %v32
    %v372 = vunpack.c.h.b16 %v32
    %v373 = vunpack.c.l.b16 %v33
    %v374 = vunpack.c.h.b16 %v33
    %v375 = vunpack.c.l.b16 %v34
    %v376 = vunpack.c.h.b16 %v34
    %v377 = vunpack.c.l.b16 %v35
    %v378 = vunpack.c.h.b16 %v35
    %v379 = vunpack.c.l.b16 %v36
    %v380 = vunpack.c.h.b16 %v36
    %v381 = vunpack.c.l.b16 %v37
    %v382 = vunpack.c.h.b16 %v37
    %v383 = vunpack.c.l.b16 %v38
    %v384 = vunpack.c.h.b16 %v38
    %v385 = vunpack.c.l.b16 %v39
    %v386 = vunpack.c.h.b16 %v39
    %v387 = vunpack.c.l.b16 %v40
    %v388 = vunpack.c.h.b16 %v40
    %v389 = vunpack.c.l.b16 %v41
    %v390 = vunpack.c.h.b16 %v41
    %v391 = vunpack.c.l.b16 %v42
    %v392 = vunpack.c.h.b16 %v42
    %v393 = vunpack.c.l.b16 %v43
    %v394 = vunpack.c.h.b16 %v43
    %v395 = vunpack.c.l.b16 %v44
    %v396 = vunpack.c.h.b16 %v44
    %v397 = vunpack.c.l.b16 %v45
    %v398 = vunpack.c.h.b16 %v45
    %v399 = vunpack.c.l.b16 %v46
    %v400 = vunpack.c.h.b16 %v46
    %v401 = vunpack.c.l.b16 %v47
    %v402 = vunpack.c.h.b16 %v47
    %v403 = vunpack.c.l.b16 %v48
    %v404 = vunpack.c.h.b16 %v48
    %v405 = vunpack.c.l.b16 %v49
    %v406 = vunpack.c.h.b16 %v49
    %v407 = vunpack.c.l.b16 %v50
    %v408 = vunpack.c.h.b16 %v50
    %v409 = vunpack.c.l.b16 %v51
    %v410 = vunpack.c.h.b16 %v51
    %v411 = vunpack.c.l.b16 %v52
    %v412 = vunpack.c.h.b16 %v52
    %v413 = vunpack.c.l.b16 %v53
    %v414 = vunpack.c.h.b16 %v53
    %v415 = vunpack.c.l.b16 %v54
    %v416 = vunpack.c.h.b16 %v54
    %v417 = vunpack.c.l.b16 %v55
    %v418 = vunpack.c.h.b16 %v55
    %v419 = vunpack.c.l.b16 %v56
    %v420 = vunpack.c.h.b16 %v56
    %v421 = vunpack.c.l.b16 %v57
    %v422 = vunpack.c.h.b16 %v57
    %v423 = vunpack.c.l.b16 %v58
    %v424 = vunpack.c.h.b16 %v58
    %v425 = vunpack.c.l.b16 %v59
    %v426 = vunpack.c.h.b16 %v59
    %v427 = vunpack.c.l.b16 %v60
    %v428 = vunpack.c.h.b16 %v60
    %v429 = vunpack.c.l.b16 %v61
    %v430 = vunpack.c.h.b16 %v61
    %v431 = vunpack.c.l.b16 %v62
    %v432 = vunpack.c.h.b16 %v62
    %v433 = vunpack.c.l.b16 %v63
    %v434 = vunpack.c.h.b16 %v63
    %v435 = vunpack.c.l.b16 %v64
    %v436 = vunpack.c.h.b16 %v64
    %v437 = vunpack.c.l.b16 %v65
    %v438 = vunpack.c.h.b16 %v65
    %v439 = vunpack.c.l.b16 %v66
    %v440 = vunpack.c.h.b16 %v66
    %v441 = vunpack.c.l.b16 %v67
    %v442 = vunpack.c.h.b16 %v67
    %v443 = vunpack.c.l.b16 %v68
    %v444 = vunpack.c.h.b16 %v68
    %v445 = vunpack.c.l.b16 %v69
    %v446 = vunpack.c.h.b16 %v69
    %v447 = vunpack.c.l.b16 %v70
    %v448 = vunpack.c.h.b16 %v70
    %v449 = vunpack.c.l.b16 %v71
    %v450 = vunpack.c.h.b16 %v71
    %v451 = vunpack.c.l.b16 %v72
    %v452 = vunpack.c.h.b16 %v72
    %v453 = vunpack.c.l.b16 %v73
    %v454 = vunpack.c.h.b16 %v73
    %v455 = vunpack.c.l.b16 %v74
    %v456 = vunpack.c.h.b16 %v74
    %v457 = vunpack.c.l.b16 %v75
    %v458 = vunpack.c.h.b16 %v75
    %v459 = vunpack.c.l.b16 %v76
    %v460 = vunpack.c.h.b16 %v76
    %v461 = vunpack.c.l.b16 %v77
    %v462 = vunpack.c.h.b16 %v77
    %v463 = vunpack.c.l.b16 %v78
    %v464 = vunpack.c.h.b16 %v78
    %v465 = vunpack.c.l.b16 %v79
    %v466 = vunpack.c.h.b16 %v79
    %v467 = vunpack.c.l.b16 %v80
    %v468 = vunpack.c.h.b16 %v80
    %v469 = vunpack.c.l.b16 %v81
    %v470 = vunpack.c.h.b16 %v81
    %v471 = vunpack.c.l.b16 %v82
    %v472 = vunpack.c.h.b16 %v82
    %v473 = vunpack.c.l.b16 %v83
    %v474 = vunpack.c.h.b16 %v83
    %v475 = vunpack.c.l.b16 %v84
    %v476 = vunpack.c.h.b16 %v84
    %v477 = vunpack.c.l.b16 %v85
    %v478 = vunpack.c.h.b16 %v85
    %v479 = vunpack.c.l.b16 %v86
    %v480 = vunpack.c.h.b16 %v86
    %v481 = vunpack.c.l.b16 %v87
    %v482 = vunpack.c.h.b16 %v87
    %v483 = vunpack.c.l.b16 %v88
    %v484 = vunpack.c.h.b16 %v88
    %v485 = vunpack.c.l.b16 %v89
    %v486 = vunpack.c.h.b16 %v89
    %v487 = vunpack.c.l.b16 %v90
    %v488 = vunpack.c.h.b16 %v90
    %v489 = vunpack.c.l.b16 %v91
    %v490 = vunpack.c.h.b16 %v91
    %v491 = vunpack.c.l.b16 %v92
    %v492 = vunpack.c.h.b16 %v92
    %v493 = vunpack.c.l.b16 %v93
    %v494 = vunpack.c.h.b16 %v93
    %v495 = vunpack.c.l.b16 %v94
    %v496 = vunpack.c.h.b16 %v94
    %v497 = vunpack.c.l.b16 %v95
    %v498 = vunpack.c.h.b16 %v95
    %v499 = vunpack.c.l.b16 %v96
    %v500 = vunpack.c.h.b16 %v96
    %v501 = vunpack.c.l.b16 %v97
    %v502 = vunpack.c.h.b16 %v97
    %v503 = vunpack.c.l.b16 %v98
    %v504 = vunpack.c.h.b16 %v98
    %v505 = vunpack.c.l.b16 %v99
    %v506 = vunpack.c.h.b16 %v99
    %v507 = vunpack.c.l.b16 %v100
    %v508 = vunpack.c.h.b16 %v100
    %v509 = vunpack.c.l.b16 %v101
    %v510 = vunpack.c.h.b16 %v101
    %v511 = vunpack.c.l.b16 %v102
    %v512 = vunpack.c.h.b16 %v102
    %v513 = vunpack.c.l.b16 %v103
    %v514 = vunpack.c.h.b16 %v103
    %v515 = vunpack.c.l.b16 %v104
    %v516 = vunpack.c.h.b16 %v104
    %v517 = vunpack.c.l.b16 %v105
    %v518 = vunpack.c.h.b16 %v105
    %v519 = vunpack.c.l.b16 %v106
    %v520 = vunpack.c.h.b16 %v106
    %v521 = vunpack.c.l.b16 %v107
    %v522 = vunpack.c.h.b16 %v107
    %v523 = vunpack.c.l.b16 %v108
    %v524 = vunpack.c.h.b16 %v108
    %v525 = vunpack.c.l.b16 %v109
    %v526 = vunpack.c.h.b16 %v109
    %v527 = vunpack.c.l.b16 %v110
    %v528 = vunpack.c.h.b16 %v110
    %v529 = vunpack.c.l.b16 %v111
    %v530 = vunpack.c.h.b16 %v111
    %v531 = vunpack.c.l.b16 %v112
    %v532 = vunpack.c.h.b16 %v112
    %v533 = vunpack.c.l.b16 %v113
    %v534 = vunpack.c.h.b16 %v113
    %v535 = vunpack.c.l.b16 %v114
    %v536 = vunpack.c.h.b16 %v114
    %v537 = vunpack.c.l.b16 %v115
    %v538 = vunpack.c.h.b16 %v115
    %v539 = vunpack.c.l.b16 %v116
    %v540 = vunpack.c.h.b16 %v116
    %v541 = vunpack.c.l.b16 %v117
    %v542 = vunpack.c.h.b16 %v117
    %v543 = vunpack.c.l.b16 %v118
    %v544 = vunpack.c.h.b16 %v118
    %v545 = vpack.c.b16 %v353, %v345
    %v546 = vpack.c.b16 %v354, %v346
    %v547 = vpack.c.b16 %v355, %v347
    %v548 = vpack.c.b16 %v356, %v348
    %v549 = vpack.c.b16 %v357, %v349
    %v550 = vpack.c.b16 %v358, %v350
    %v551 = vpack.c.b16 %v359, %v351
    %v552 = vpack.c.b16 %v360, %v352
    %v553 = vpack.c.b16 %v369, %v361
    %v554 = vpack.c.b16 %v370, %v362
    %v555 = vpack.c.b16 %v371, %v363
    %v556 = vpack.c.b16 %v372, %v364
    %v557 = vpack.c.b16 %v373, %v365
    %v558 = vpack.c.b16 %v374, %v366
    %v559 = vpack.c.b16 %v375, %v367
    %v560 = vpack.c.b16 %v376, %v368
    %v561 = vpack.c.b16 %v385, %v377
    %v562 = vpack.c.b16 %v386, %v378
    %v563 = vpack.c.b16 %v387, %v379
    %v564 = vpack.c.b16 %v388, %v380
    %v565 = vpack.c.b16 %v389, %v381
    %v566 = vpack.c.b16 %v390, %v382
    %v567 = vpack.c.b16 %v391, %v383
    %v568 = vpack.c.b16 %v392, %v384
    %v569 = vpack.c.b16 %v401, %v393
    %v570 = vpack.c.b16 %v402, %v394
    %v571 = vpack.c.b16 %v403, %v395
    %v572 = vpack.c.b16 %v404, %v396
    %v573 = vpack.c.b16 %v405, %v397
    %v574 = vpack.c.b16 %v406, %v398
    %v575 = vpack.c.b16 %v407, %v399
    %v576 = vpack.c.b16 %v408, %v400
    %v577 = vpack.c.b16 %v417, %v409
    %v578 = vpack.c.b16 %v418, %v410
    %v579 = vpack.c.b16 %v419, %v411
    %v580 = vpack.c.b16 %v420, %v412
    %v581 = vpack.c.b16 %v421, %v413
    %v582 = vpack.c.b16 %v422, %v414
    %v583 = vpack.c.b16 %v423, %v415
    %v584 = vpack.c.b16 %v424, %v416
    %v585 = vpack.c.b16 %v433, %v425
    %v586 = vpack.c.b16 %v434, %v426
    %v587 = vpack.c.b16 %v435, %v427
    %v588 = vpack.c.b16 %v436, %v428
    %v589 = vpack.c.b16 %v437, %v429
    %v590 = vpack.c.b16 %v438, %v430
    %v591 = vpack.c.b16 %v439, %v431
    %v592 = vpack.c.b16 %v440, %v432
    %v593 = vpack.c.b16 %v449, %v441
    %v594 = vpack.c.b16 %v450, %v442
    %v595 = vpack.c.b16 %v451, %v443
    %v596 = vpack.c.b16 %v452, %v444
    %v597 = vpack.c.b16 %v453, %v445
    %v598 = vpack.c.b16 %v454, %v446
    %v599 = vpack.c.b16 %v455, %v447
    %v600 = vpack.c.b16 %v456, %v448
    %v601 = vpack.c.b16 %v465, %v457
    %v602 = vpack.c.b16 %v466, %v458
    %v603 = vpack.c.b16 %v467, %v459
    %v604 = vpack.c.b16 %v468, %v460
    %v605 = vpack.c.b16 %v469, %v461
    %v606 = vpack.c.b16 %v470, %v462
    %v607 = vpack.c.b16 %v471, %v463
    %v608 = vpack.c.b16 %v472, %v464
    %v609 = vpack.c.b16 %v481, %v473
    %v610 = vpack.c.b16 %v482, %v474
    %v611 = vpack.c.b16 %v483, %v475
    %v612 = vpack.c.b16 %v484, %v476
    %v613 = vpack.c.b16 %v485, %v477
    %v614 = vpack.c.b16 %v486, %v478
    %v615 = vpack.c.b16 %v487, %v479
    %v616 = vpack.c.b16 %v488, %v480
    %v617 = vpack.c.b16 %v497, %v489
    %v618 = vpack.c.b16 %v498, %v490
    %v619 = vpack.c.b16 %v499, %v491
    %v620 = vpack.c.b16 %v500, %v492
    %v621 = vpack.c.b16 %v501, %v493
    %v622 = vpack.c.b16 %v502, %v494
    %v623 = vpack.c.b16 %v503, %v495
    %v624 = vpack.c.b16 %v504, %v496
    %v625 = vpack.c.b16 %v513, %v505
    %v626 = vpack.c.b16 %v514, %v506
    %v627 = vpack.c.b16 %v515, %v507
    %v628 = vpack.c.b16 %v516, %v508
    %v629 = vpack.c.b16 %v517, %v509
    %v630 = vpack.c.b16 %v518, %v510
    %v631 = vpack.c.b16 %v519, %v511
    %v632 = vpack.c.b16 %v520, %v512
    %v633 = vpack.c.b16 %v529, %v521
    %v634 = vpack.c.b16 %v530, %v522
    %v635 = vpack.c.b16 %v531, %v523
    %v636 = vpack.c.b16 %v532, %v524
    %v637 = vpack.c.b16 %v533, %v525
    %v638 = vpack.c.b16 %v534, %v526
    %v639 = vpack.c.b16 %v535, %v527
    %v640 = vpack.c.b16 %v536, %v528
    %v641 = vpack.c.b16 %v537, %v537
    %v642 = vpack.c.b16 %v538, %v538
    %v643 = vpack.c.b16 %v539, %v539
    %v644 = vpack.c.b16 %v540, %v540
    %v645 = vpack.c.b16 %v541, %v541
    %v646 = vpack.c.b16 %v542, %v542
    %v647 = vpack.c.b16 %v543, %v543
    %v648 = vpack.c.b16 %v544, %v544
    %v866 = vunpack.c.l.b16 %v119
    %v867 = vunpack.c.l.b16 %v120
    %v868 = vunpack.c.l.b16 %v121
    %v869 = vunpack.c.l.b16 %v122
    %v870 = vunpack.c.l.b16 %v123
    %v871 = vunpack.c.l.b16 %v124
    %v872 = vunpack.c.l.b16 %v125
    %v873 = vunpack.c.l.b16 %v126
    %v874 = vunpack.c.l.b16 %v127
    %v875 = vunpack.c.l.b16 %v128
    %v876 = vunpack.c.l.b16 %v129
    %v877 = vunpack.c.l.b16 %v130
    %v878 = vunpack.c.l.b16 %v131
    %v879 = vunpack.c.l.b16 %v132
    %v880 = vunpack.c.l.b16 %v133
    %v881 = vunpack.c.l.b16 %v134
    %v882 = vunpack.c.l.b16 %v135
    %v883 = vunpack.c.l.b16 %v136
    %v884 = vunpack.c.l.b16 %v137
    %v885 = vunpack.c.l.b16 %v138
    %v886 = vunpack.c.l.b16 %v139
    %v887 = vunpack.c.l.b16 %v140
    %v888 = vunpack.c.l.b16 %v141
    %v889 = vunpack.c.l.b16 %v142
    %v890 = vunpack.c.l.b16 %v143
    %v891 = vunpack.c.l.b16 %v144
    %v892 = vunpack.c.l.b16 %v145
    %v893 = vunpack.c.l.b16 %v146
    %v894 = vunpack.c.l.b16 %v147
    %v895 = vunpack.c.l.b16 %v148
    %v896 = vunpack.c.l.b16 %v149
    %v897 = vunpack.c.l.b16 %v150
    %v898 = vunpack.c.l.b16 %v151
    %v899 = vunpack.c.l.b16 %v152
    %v900 = vunpack.c.l.b16 %v153
    %v901 = vunpack.c.l.b16 %v154
    %v902 = vunpack.c.l.b16 %v155
    %v903 = vunpack.c.l.b16 %v156
    %v904 = vunpack.c.l.b16 %v157
    %v905 = vunpack.c.l.b16 %v158
    %v906 = vunpack.c.l.b16 %v159
    %v907 = vunpack.c.l.b16 %v160
    %v908 = vunpack.c.l.b16 %v161
    %v909 = vunpack.c.l.b16 %v162
    %v910 = vunpack.c.l.b16 %v163
    %v911 = vunpack.c.l.b16 %v164
    %v912 = vunpack.c.l.b16 %v165
    %v913 = vunpack.c.l.b16 %v166
    %v914 = vunpack.c.l.b16 %v167
    %v915 = vunpack.c.l.b16 %v168
    %v916 = vunpack.c.l.b16 %v169
    %v917 = vunpack.c.l.b16 %v170
    %v918 = vunpack.c.l.b16 %v171
    %v919 = vunpack.c.l.b16 %v172
    %v920 = vunpack.c.l.b16 %v173
    %v921 = vunpack.c.l.b16 %v174
    %v922 = vunpack.c.l.b16 %v175
    %v923 = vunpack.c.l.b16 %v176
    %v924 = vunpack.c.l.b16 %v177
    %v925 = vunpack.c.l.b16 %v178
    %v926 = vunpack.c.l.b16 %v179
    %v927 = vunpack.c.l.b16 %v180
    %v928 = vunpack.c.l.b16 %v181
    %v929 = vunpack.c.l.b16 %v182
    %v930 = vunpack.c.l.b16 %v183
    %v931 = vunpack.c.l.b16 %v184
    %v932 = vunpack.c.l.b16 %v185
    %v933 = vunpack.c.l.b16 %v186
    %v934 = vunpack.c.l.b16 %v187
    %v935 = vunpack.c.l.b16 %v188
    %v936 = vunpack.c.l.b16 %v189
    %v937 = vunpack.c.l.b16 %v190
    %v938 = vunpack.c.l.b16 %v191
    %v939 = vunpack.c.l.b16 %v192
    %v940 = vunpack.c.l.b16 %v193
    %v941 = vunpack.c.l.b16 %v194
    %v942 = vunpack.c.l.b16 %v195
    %v943 = vunpack.c.l.b16 %v196
    %v944 = vunpack.c.l.b16 %v197
    %v945 = vunpack.c.l.b16 %v198
    %v946 = vunpack.c.l.b16 %v199
    %v947 = vunpack.c.l.b16 %v200
    %v948 = vunpack.c.l.b16 %v201
    %v949 = vunpack.c.l.b16 %v202
    %v950 = vunpack.c.l.b16 %v203
    %v951 = vunpack.c.l.b16 %v204
    %v952 = vunpack.c.l.b16 %v205
    %v953 = vunpack.c.l.b16 %v206
    %v954 = vunpack.c.l.b16 %v207
    %v955 = vunpack.c.l.b16 %v208
    %v956 = vunpack.c.l.b16 %v209
    %v957 = vunpack.c.l.b16 %v210
    %v958 = vunpack.c.l.b16 %v211
    %v959 = vunpack.c.l.b16 %v212
    %v960 = vunpack.c.l.b16 %v213
    %v961 = vunpack.c.l.b16 %v214
    %v962 = vunpack.c.l.b16 %v215
    %v963 = vunpack.c.l.b16 %v216
    %v964 = vunpack.c.l.b16 %v217
    %v965 = vunpack.c.l.b16 %v218
    %v966 = vunpack.c.l.b16 %v219
    %v967 = vunpack.c.l.b16 %v220
    %v968 = vunpack.c.l.b16 %v221
    %v969 = vunpack.c.l.b16 %v222
    %v970 = vunpack.c.l.b16 %v223
    %v971 = vunpack.c.l.b16 %v224
    %v972 = vunpack.c.l.b16 %v225
    %v973 = vunpack.c.l.b16 %v226
    %v974 = vunpack.c.l.b16 %v227
    %v975 = vunpack.c.l.b16 %v228
    %v976 = vunpack.c.l.b16 %v229
    %v977 = vunpack.c.l.b16 %v230
    %v978 = vunpack.c.l.b16 %v231
    %v979 = vunpack.c.l.b16 %v232
    %v980 = vunpack.c.l.b16 %v233
    %v981 = vunpack.c.l.b16 %v234
    %v982 = vunpack.c.l.b16 %v235
    %v983 = vunpack.c.l.b16 %v236
    %v984 = vunpack.c.l.b16 %v237
    %v985 = vunpack.c.l.b16 %v238
    %v986 = vunpack.c.l.b16 %v239
    %v987 = vunpack.c.l.b16 %v240
    %v988 = vunpack.c.l.b16 %v241
    %v989 = vunpack.c.l.b16 %v242
    %v990 = vunpack.c.l.b16 %v243
    %v991 = vunpack.c.l.b16 %v244
    %v992 = vpack.c.b16 %v867, %v866
    %v993 = vpack.c.b16 %v869, %v868
    %v994 = vpack.c.b16 %v871, %v870
    %v995 = vpack.c.b16 %v873, %v872
    %v996 = vpack.c.b16 %v875, %v874
    %v997 = vpack.c.b16 %v877, %v876
    %v998 = vpack.c.b16 %v879, %v878
    %v999 = vpack.c.b16 %v881, %v880
    %v1000 = vpack.c.b16 %v883, %v882
    %v1001 = vpack.c.b16 %v885, %v884
    %v1002 = vpack.c.b16 %v887, %v886
    %v1003 = vpack.c.b16 %v889, %v888
    %v1004 = vpack.c.b16 %v891, %v890
    %v1005 = vpack.c.b16 %v893, %v892
    %v1006 = vpack.c.b16 %v895, %v894
    %v1007 = vpack.c.b16 %v897, %v896
    %v1008 = vpack.c.b16 %v899, %v898
    %v1009 = vpack.c.b16 %v901, %v900
    %v1010 = vpack.c.b16 %v903, %v902
    %v1011 = vpack.c.b16 %v905, %v904
    %v1012 = vpack.c.b16 %v907, %v906
    %v1013 = vpack.c.b16 %v909, %v908
    %v1014 = vpack.c.b16 %v911, %v910
    %v1015 = vpack.c.b16 %v913, %v912
    %v1016 = vpack.c.b16 %v915, %v914
    %v1017 = vpack.c.b16 %v917, %v916
    %v1018 = vpack.c.b16 %v919, %v918
    %v1019 = vpack.c.b16 %v921, %v920
    %v1020 = vpack.c.b16 %v923, %v922
    %v1021 = vpack.c.b16 %v925, %v924
    %v1022 = vpack.c.b16 %v927, %v926
    %v1023 = vpack.c.b16 %v929, %v928
    %v1024 = vpack.c.b16 %v931, %v930
    %v1025 = vpack.c.b16 %v933, %v932
    %v1026 = vpack.c.b16 %v935, %v934
    %v1027 = vpack.c.b16 %v937, %v936
    %v1028 = vpack.c.b16 %v939, %v938
    %v1029 = vpack.c.b16 %v941, %v940
    %v1030 = vpack.c.b16 %v943, %v942
    %v1031 = vpack.c.b16 %v945, %v944
    %v1032 = vpack.c.b16 %v947, %v946
    %v1033 = vpack.c.b16 %v949, %v948
    %v1034 = vpack.c.b16 %v951, %v950
    %v1035 = vpack.c.b16 %v953, %v952
    %v1036 = vpack.c.b16 %v955, %v954
    %v1037 = vpack.c.b16 %v957, %v956
    %v1038 = vpack.c.b16 %v959, %v958
    %v1039 = vpack.c.b16 %v961, %v960
    %v1040 = vpack.c.b16 %v963, %v962
    %v1041 = vpack.c.b16 %v965, %v964
    %v1042 = vpack.c.b16 %v967, %v966
    %v1043 = vpack.c.b16 %v969, %v968
    %v1044 = vpack.c.b16 %v971, %v970
    %v1045 = vpack.c.b16 %v973, %v972
    %v1046 = vpack.c.b16 %v975, %v974
    %v1047 = vpack.c.b16 %v977, %v976
    %v1048 = vpack.c.b16 %v979, %v978
    %v1049 = vpack.c.b16 %v981, %v980
    %v1050 = vpack.c.b16 %v983, %v982
    %v1051 = vpack.c.b16 %v985, %v984
    %v1052 = vpack.c.b16 %v987, %v986
    %v1053 = vpack.c.b16 %v989, %v988
    %v1054 = vpack.c.b16 %v991, %v990
    %vm1118 = vcmask 916480
    %v1120 = vsel %vm1118, %v552, 0
    %v1123 = vsel %vm1118, %v560, 0
    %v1126 = vsel %vm1118, %v568, 0
    %v1129 = vsel %vm1118, %v576, 0
    %v1132 = vsel %vm1118, %v584, 0
    %v1135 = vsel %vm1118, %v592, 0
    %v1138 = vsel %vm1118, %v600, 0
    %v1141 = vsel %vm1118, %v608, 0
    %v1144 = vsel %vm1118, %v616, 0
    %v1147 = vsel %vm1118, %v624, 0
    %v1150 = vsel %vm1118, %v632, 0
    %v1153 = vsel %vm1118, %v640, 0
    %v1156 = vsel %vm1118, %v648, 0
    %1158 = vmatprep.subr.bf16.mxu0 0
    %1159 = vmatpush1.bf16.msra.mxu0 %v999
    %1160 = vmatprep.subr.bf16.mxu0 0
    %1161 = vmatpush1.bf16.msra.mxu0 %v998
    %1162 = vmatprep.subr.bf16.mxu0 0
    %1163 = vmatpush1.bf16.msra.mxu0 %v997
    %1164 = vmatprep.subr.bf16.mxu0 0
    %1165 = vmatpush1.bf16.msra.mxu0 %v996
    %1166 = vmatprep.subr.bf16.mxu0 0
    %1167 = vmatpush1.bf16.msra.mxu0 %v995
    %1168 = vmatprep.subr.bf16.mxu0 0
    %1169 = vmatpush1.bf16.msra.mxu0 %v994
    %1170 = vmatprep.subr.bf16.mxu0 0
    %1171 = vmatpush1.bf16.msra.mxu0 %v993
    %1172 = vmatprep.subr.bf16.mxu0 0
    %1173 = vmatpush1.bf16.msra.mxu0 %v992
    %1174 = vmatprep.subr.bf16.mxu0 0
    %1175 = vmatpush2.bf16.msra.mxu0 %v1007
    %1176 = vmatprep.subr.bf16.mxu0 0
    %1177 = vmatpush2.bf16.msra.mxu0 %v1006
    %1178 = vmatprep.subr.bf16.mxu0 0
    %1179 = vmatpush2.bf16.msra.mxu0 %v1005
    %1180 = vmatprep.subr.bf16.mxu0 0
    %1181 = vmatpush2.bf16.msra.mxu0 %v1004
    %1182 = vmatprep.subr.bf16.mxu0 0
    %1183 = vmatpush2.bf16.msra.mxu0 %v1003
    %1184 = vmatprep.subr.bf16.mxu0 0
    %1185 = vmatpush2.bf16.msra.mxu0 %v1002
    %1186 = vmatprep.subr.bf16.mxu0 0
    %1187 = vmatpush2.bf16.msra.mxu0 %v1001
    %1188 = vmatprep.subr.bf16.mxu0 0
    %1189 = vmatpush2.bf16.msra.mxu0 %v1000
    %1190 = vmatprep.mubr.bf16.mxu0 %v546
    %1191 = vmatmul.mubr.bf16.gmra.mxu0 %v545
    %v1192 = vpop.f32.mrf.mxu0
    %v1193 = vadd.f32 0.0, %v1192
    %v1194 = vpop.f32.mrf.mxu0
    %v1195 = vpop.f32.mrf.mxu0
    %v1196 = vadd.f32 0.0, %v1195
    %v1197 = vpop.f32.mrf.mxu0
    %1198 = vmatprep.mubr.bf16.mxu0 %v554
    %1199 = vmatmul.mubr.bf16.gmra.mxu0 %v553
    %v1200 = vpop.f32.mrf.mxu0
    %v1201 = vadd.f32 0.0, %v1200
    %v1202 = vpop.f32.mrf.mxu0
    %v1203 = vpop.f32.mrf.mxu0
    %v1204 = vadd.f32 0.0, %v1203
    %v1205 = vpop.f32.mrf.mxu0
    %1206 = vmatprep.mubr.bf16.mxu0 %v562
    %1207 = vmatmul.mubr.bf16.gmra.mxu0 %v561
    %v1208 = vpop.f32.mrf.mxu0
    %v1209 = vadd.f32 0.0, %v1208
    %v1210 = vpop.f32.mrf.mxu0
    %v1211 = vpop.f32.mrf.mxu0
    %v1212 = vadd.f32 0.0, %v1211
    %v1213 = vpop.f32.mrf.mxu0
    %1214 = vmatprep.mubr.bf16.mxu0 %v570
    %1215 = vmatmul.mubr.bf16.gmra.mxu0 %v569
    %v1216 = vpop.f32.mrf.mxu0
    %v1217 = vadd.f32 0.0, %v1216
    %v1218 = vpop.f32.mrf.mxu0
    %v1219 = vpop.f32.mrf.mxu0
    %v1220 = vadd.f32 0.0, %v1219
    %v1221 = vpop.f32.mrf.mxu0
    %1222 = vmatprep.mubr.bf16.mxu0 %v578
    %1223 = vmatmul.mubr.bf16.gmra.mxu0 %v577
    %v1224 = vpop.f32.mrf.mxu0
    %v1225 = vadd.f32 0.0, %v1224
    %v1226 = vpop.f32.mrf.mxu0
    %v1227 = vpop.f32.mrf.mxu0
    %v1228 = vadd.f32 0.0, %v1227
    %v1229 = vpop.f32.mrf.mxu0
    %1230 = vmatprep.mubr.bf16.mxu0 %v586
    %1231 = vmatmul.mubr.bf16.gmra.mxu0 %v585
    %v1232 = vpop.f32.mrf.mxu0
    %v1233 = vadd.f32 0.0, %v1232
    %v1234 = vpop.f32.mrf.mxu0
    %v1235 = vpop.f32.mrf.mxu0
    %v1236 = vadd.f32 0.0, %v1235
    %v1237 = vpop.f32.mrf.mxu0
    %1238 = vmatprep.mubr.bf16.mxu0 %v594
    %1239 = vmatmul.mubr.bf16.gmra.mxu0 %v593
    %v1240 = vpop.f32.mrf.mxu0
    %v1241 = vadd.f32 0.0, %v1240
    %v1242 = vpop.f32.mrf.mxu0
    %v1243 = vpop.f32.mrf.mxu0
    %v1244 = vadd.f32 0.0, %v1243
    %v1245 = vpop.f32.mrf.mxu0
    %1246 = vmatprep.mubr.bf16.mxu0 %v602
    %1247 = vmatmul.mubr.bf16.gmra.mxu0 %v601
    %v1248 = vpop.f32.mrf.mxu0
    %v1249 = vadd.f32 0.0, %v1248
    %v1250 = vpop.f32.mrf.mxu0
    %v1251 = vpop.f32.mrf.mxu0
    %v1252 = vadd.f32 0.0, %v1251
    %v1253 = vpop.f32.mrf.mxu0
    %1254 = vmatprep.mubr.bf16.mxu0 %v610
    %1255 = vmatmul.mubr.bf16.gmra.mxu0 %v609
    %v1256 = vpop.f32.mrf.mxu0
    %v1257 = vadd.f32 0.0, %v1256
    %v1258 = vpop.f32.mrf.mxu0
    %v1259 = vpop.f32.mrf.mxu0
    %v1260 = vadd.f32 0.0, %v1259
    %v1261 = vpop.f32.mrf.mxu0
    %1262 = vmatprep.mubr.bf16.mxu0 %v618
    %1263 = vmatmul.mubr.bf16.gmra.mxu0 %v617
    %v1264 = vpop.f32.mrf.mxu0
    %v1265 = vadd.f32 0.0, %v1264
    %v1266 = vpop.f32.mrf.mxu0
    %v1267 = vpop.f32.mrf.mxu0
    %v1268 = vadd.f32 0.0, %v1267
    %v1269 = vpop.f32.mrf.mxu0
    %1270 = vmatprep.mubr.bf16.mxu0 %v626
    %1271 = vmatmul.mubr.bf16.gmra.mxu0 %v625
    %v1272 = vpop.f32.mrf.mxu0
    %v1273 = vadd.f32 0.0, %v1272
    %v1274 = vpop.f32.mrf.mxu0
    %v1275 = vpop.f32.mrf.mxu0
    %v1276 = vadd.f32 0.0, %v1275
    %v1277 = vpop.f32.mrf.mxu0
    %1278 = vmatprep.mubr.bf16.mxu0 %v634
    %1279 = vmatmul.mubr.bf16.gmra.mxu0 %v633
    %v1280 = vpop.f32.mrf.mxu0
    %v1281 = vadd.f32 0.0, %v1280
    %v1282 = vpop.f32.mrf.mxu0
    %v1283 = vpop.f32.mrf.mxu0
    %v1284 = vadd.f32 0.0, %v1283
    %v1285 = vpop.f32.mrf.mxu0
    %1286 = vmatprep.mubr.bf16.mxu0 %v642
    %1287 = vmatmul.mubr.bf16.gmra.mxu0 %v641
    %v1288 = vpop.f32.mrf.mxu0
    %v1289 = vadd.f32 0.0, %v1288
    %v1290 = vpop.f32.mrf.mxu0
    %v1291 = vpop.f32.mrf.mxu0
    %v1292 = vpop.f32.mrf.mxu0
    %1293 = vdwg.mxu0
    %1294 = vmatprep.subr.bf16.mxu0 0
    %1295 = vmatpush1.bf16.msra.mxu0 %v1015
    %1296 = vmatprep.subr.bf16.mxu0 0
    %1297 = vmatpush1.bf16.msra.mxu0 %v1014
    %1298 = vmatprep.subr.bf16.mxu0 0
    %1299 = vmatpush1.bf16.msra.mxu0 %v1013
    %1300 = vmatprep.subr.bf16.mxu0 0
    %1301 = vmatpush1.bf16.msra.mxu0 %v1012
    %1302 = vmatprep.subr.bf16.mxu0 0
    %1303 = vmatpush1.bf16.msra.mxu0 %v1011
    %1304 = vmatprep.subr.bf16.mxu0 0
    %1305 = vmatpush1.bf16.msra.mxu0 %v1010
    %1306 = vmatprep.subr.bf16.mxu0 0
    %1307 = vmatpush1.bf16.msra.mxu0 %v1009
    %1308 = vmatprep.subr.bf16.mxu0 0
    %1309 = vmatpush1.bf16.msra.mxu0 %v1008
    %1310 = vmatprep.subr.bf16.mxu0 0
    %1311 = vmatpush2.bf16.msra.mxu0 %v1023
    %1312 = vmatprep.subr.bf16.mxu0 0
    %1313 = vmatpush2.bf16.msra.mxu0 %v1022
    %1314 = vmatprep.subr.bf16.mxu0 0
    %1315 = vmatpush2.bf16.msra.mxu0 %v1021
    %1316 = vmatprep.subr.bf16.mxu0 0
    %1317 = vmatpush2.bf16.msra.mxu0 %v1020
    %1318 = vmatprep.subr.bf16.mxu0 0
    %1319 = vmatpush2.bf16.msra.mxu0 %v1019
    %1320 = vmatprep.subr.bf16.mxu0 0
    %1321 = vmatpush2.bf16.msra.mxu0 %v1018
    %1322 = vmatprep.subr.bf16.mxu0 0
    %1323 = vmatpush2.bf16.msra.mxu0 %v1017
    %1324 = vmatprep.subr.bf16.mxu0 0
    %1325 = vmatpush2.bf16.msra.mxu0 %v1016
    %1326 = vmatprep.mubr.bf16.mxu0 %v548
    %1327 = vmatmul.mubr.bf16.gmra.mxu0 %v547
    %v1328 = vpop.f32.mrf.mxu0
    %v1329 = vadd.f32 %v1193, %v1328
    %v1330 = vpop.f32.mrf.mxu0
    %v1331 = vpop.f32.mrf.mxu0
    %v1332 = vadd.f32 %v1196, %v1331
    %v1333 = vpop.f32.mrf.mxu0
    %1334 = vmatprep.mubr.bf16.mxu0 %v556
    %1335 = vmatmul.mubr.bf16.gmra.mxu0 %v555
    %v1336 = vpop.f32.mrf.mxu0
    %v1337 = vadd.f32 %v1201, %v1336
    %v1338 = vpop.f32.mrf.mxu0
    %v1339 = vpop.f32.mrf.mxu0
    %v1340 = vadd.f32 %v1204, %v1339
    %v1341 = vpop.f32.mrf.mxu0
    %1342 = vmatprep.mubr.bf16.mxu0 %v564
    %1343 = vmatmul.mubr.bf16.gmra.mxu0 %v563
    %v1344 = vpop.f32.mrf.mxu0
    %v1345 = vadd.f32 %v1209, %v1344
    %v1346 = vpop.f32.mrf.mxu0
    %v1347 = vpop.f32.mrf.mxu0
    %v1348 = vadd.f32 %v1212, %v1347
    %v1349 = vpop.f32.mrf.mxu0
    %1350 = vmatprep.mubr.bf16.mxu0 %v572
    %1351 = vmatmul.mubr.bf16.gmra.mxu0 %v571
    %v1352 = vpop.f32.mrf.mxu0
    %v1353 = vadd.f32 %v1217, %v1352
    %v1354 = vpop.f32.mrf.mxu0
    %v1355 = vpop.f32.mrf.mxu0
    %v1356 = vadd.f32 %v1220, %v1355
    %v1357 = vpop.f32.mrf.mxu0
    %1358 = vmatprep.mubr.bf16.mxu0 %v580
    %1359 = vmatmul.mubr.bf16.gmra.mxu0 %v579
    %v1360 = vpop.f32.mrf.mxu0
    %v1361 = vadd.f32 %v1225, %v1360
    %v1362 = vpop.f32.mrf.mxu0
    %v1363 = vpop.f32.mrf.mxu0
    %v1364 = vadd.f32 %v1228, %v1363
    %v1365 = vpop.f32.mrf.mxu0
    %1366 = vmatprep.mubr.bf16.mxu0 %v588
    %1367 = vmatmul.mubr.bf16.gmra.mxu0 %v587
    %v1368 = vpop.f32.mrf.mxu0
    %v1369 = vadd.f32 %v1233, %v1368
    %v1370 = vpop.f32.mrf.mxu0
    %v1371 = vpop.f32.mrf.mxu0
    %v1372 = vadd.f32 %v1236, %v1371
    %v1373 = vpop.f32.mrf.mxu0
    %1374 = vmatprep.mubr.bf16.mxu0 %v596
    %1375 = vmatmul.mubr.bf16.gmra.mxu0 %v595
    %v1376 = vpop.f32.mrf.mxu0
    %v1377 = vadd.f32 %v1241, %v1376
    %v1378 = vpop.f32.mrf.mxu0
    %v1379 = vpop.f32.mrf.mxu0
    %v1380 = vadd.f32 %v1244, %v1379
    %v1381 = vpop.f32.mrf.mxu0
    %1382 = vmatprep.mubr.bf16.mxu0 %v604
    %1383 = vmatmul.mubr.bf16.gmra.mxu0 %v603
    %v1384 = vpop.f32.mrf.mxu0
    %v1385 = vadd.f32 %v1249, %v1384
    %v1386 = vpop.f32.mrf.mxu0
    %v1387 = vpop.f32.mrf.mxu0
    %v1388 = vadd.f32 %v1252, %v1387
    %v1389 = vpop.f32.mrf.mxu0
    %1390 = vmatprep.mubr.bf16.mxu0 %v612
    %1391 = vmatmul.mubr.bf16.gmra.mxu0 %v611
    %v1392 = vpop.f32.mrf.mxu0
    %v1393 = vadd.f32 %v1257, %v1392
    %v1394 = vpop.f32.mrf.mxu0
    %v1395 = vpop.f32.mrf.mxu0
    %v1396 = vadd.f32 %v1260, %v1395
    %v1397 = vpop.f32.mrf.mxu0
    %1398 = vmatprep.mubr.bf16.mxu0 %v620
    %1399 = vmatmul.mubr.bf16.gmra.mxu0 %v619
    %v1400 = vpop.f32.mrf.mxu0
    %v1401 = vadd.f32 %v1265, %v1400
    %v1402 = vpop.f32.mrf.mxu0
    %v1403 = vpop.f32.mrf.mxu0
    %v1404 = vadd.f32 %v1268, %v1403
    %v1405 = vpop.f32.mrf.mxu0
    %1406 = vmatprep.mubr.bf16.mxu0 %v628
    %1407 = vmatmul.mubr.bf16.gmra.mxu0 %v627
    %v1408 = vpop.f32.mrf.mxu0
    %v1409 = vadd.f32 %v1273, %v1408
    %v1410 = vpop.f32.mrf.mxu0
    %v1411 = vpop.f32.mrf.mxu0
    %v1412 = vadd.f32 %v1276, %v1411
    %v1413 = vpop.f32.mrf.mxu0
    %1414 = vmatprep.mubr.bf16.mxu0 %v636
    %1415 = vmatmul.mubr.bf16.gmra.mxu0 %v635
    %v1416 = vpop.f32.mrf.mxu0
    %v1417 = vadd.f32 %v1281, %v1416
    %v1418 = vpop.f32.mrf.mxu0
    %v1419 = vpop.f32.mrf.mxu0
    %v1420 = vadd.f32 %v1284, %v1419
    %v1421 = vpop.f32.mrf.mxu0
    %1422 = vmatprep.mubr.bf16.mxu0 %v644
    %1423 = vmatmul.mubr.bf16.gmra.mxu0 %v643
    %v1424 = vpop.f32.mrf.mxu0
    %v1425 = vadd.f32 %v1289, %v1424
    %v1426 = vpop.f32.mrf.mxu0
    %v1427 = vpop.f32.mrf.mxu0
    %v1428 = vpop.f32.mrf.mxu0
    %1429 = vdwg.mxu0
    %1430 = vmatprep.subr.bf16.mxu0 0
    %1431 = vmatpush1.bf16.msra.mxu0 %v1031
    %1432 = vmatprep.subr.bf16.mxu0 0
    %1433 = vmatpush1.bf16.msra.mxu0 %v1030
    %1434 = vmatprep.subr.bf16.mxu0 0
    %1435 = vmatpush1.bf16.msra.mxu0 %v1029
    %1436 = vmatprep.subr.bf16.mxu0 0
    %1437 = vmatpush1.bf16.msra.mxu0 %v1028
    %1438 = vmatprep.subr.bf16.mxu0 0
    %1439 = vmatpush1.bf16.msra.mxu0 %v1027
    %1440 = vmatprep.subr.bf16.mxu0 0
    %1441 = vmatpush1.bf16.msra.mxu0 %v1026
    %1442 = vmatprep.subr.bf16.mxu0 0
    %1443 = vmatpush1.bf16.msra.mxu0 %v1025
    %1444 = vmatprep.subr.bf16.mxu0 0
    %1445 = vmatpush1.bf16.msra.mxu0 %v1024
    %1446 = vmatprep.subr.bf16.mxu0 0
    %1447 = vmatpush2.bf16.msra.mxu0 %v1039
    %1448 = vmatprep.subr.bf16.mxu0 0
    %1449 = vmatpush2.bf16.msra.mxu0 %v1038
    %1450 = vmatprep.subr.bf16.mxu0 0
    %1451 = vmatpush2.bf16.msra.mxu0 %v1037
    %1452 = vmatprep.subr.bf16.mxu0 0
    %1453 = vmatpush2.bf16.msra.mxu0 %v1036
    %1454 = vmatprep.subr.bf16.mxu0 0
    %1455 = vmatpush2.bf16.msra.mxu0 %v1035
    %1456 = vmatprep.subr.bf16.mxu0 0
    %1457 = vmatpush2.bf16.msra.mxu0 %v1034
    %1458 = vmatprep.subr.bf16.mxu0 0
    %1459 = vmatpush2.bf16.msra.mxu0 %v1033
    %1460 = vmatprep.subr.bf16.mxu0 0
    %1461 = vmatpush2.bf16.msra.mxu0 %v1032
    %1462 = vmatprep.mubr.bf16.mxu0 %v550
    %1463 = vmatmul.mubr.bf16.gmra.mxu0 %v549
    %v1464 = vpop.f32.mrf.mxu0
    %v1465 = vadd.f32 %v1329, %v1464
    %v1466 = vpop.f32.mrf.mxu0
    %v1467 = vpop.f32.mrf.mxu0
    %v1468 = vadd.f32 %v1332, %v1467
    %v1469 = vpop.f32.mrf.mxu0
    %1470 = vmatprep.mubr.bf16.mxu0 %v558
    %1471 = vmatmul.mubr.bf16.gmra.mxu0 %v557
    %v1472 = vpop.f32.mrf.mxu0
    %v1473 = vadd.f32 %v1337, %v1472
    %v1474 = vpop.f32.mrf.mxu0
    %v1475 = vpop.f32.mrf.mxu0
    %v1476 = vadd.f32 %v1340, %v1475
    %v1477 = vpop.f32.mrf.mxu0
    %1478 = vmatprep.mubr.bf16.mxu0 %v566
    %1479 = vmatmul.mubr.bf16.gmra.mxu0 %v565
    %v1480 = vpop.f32.mrf.mxu0
    %v1481 = vadd.f32 %v1345, %v1480
    %v1482 = vpop.f32.mrf.mxu0
    %v1483 = vpop.f32.mrf.mxu0
    %v1484 = vadd.f32 %v1348, %v1483
    %v1485 = vpop.f32.mrf.mxu0
    %1486 = vmatprep.mubr.bf16.mxu0 %v574
    %1487 = vmatmul.mubr.bf16.gmra.mxu0 %v573
    %v1488 = vpop.f32.mrf.mxu0
    %v1489 = vadd.f32 %v1353, %v1488
    %v1490 = vpop.f32.mrf.mxu0
    %v1491 = vpop.f32.mrf.mxu0
    %v1492 = vadd.f32 %v1356, %v1491
    %v1493 = vpop.f32.mrf.mxu0
    %1494 = vmatprep.mubr.bf16.mxu0 %v582
    %1495 = vmatmul.mubr.bf16.gmra.mxu0 %v581
    %v1496 = vpop.f32.mrf.mxu0
    %v1497 = vadd.f32 %v1361, %v1496
    %v1498 = vpop.f32.mrf.mxu0
    %v1499 = vpop.f32.mrf.mxu0
    %v1500 = vadd.f32 %v1364, %v1499
    %v1501 = vpop.f32.mrf.mxu0
    %1502 = vmatprep.mubr.bf16.mxu0 %v590
    %1503 = vmatmul.mubr.bf16.gmra.mxu0 %v589
    %v1504 = vpop.f32.mrf.mxu0
    %v1505 = vadd.f32 %v1369, %v1504
    %v1506 = vpop.f32.mrf.mxu0
    %v1507 = vpop.f32.mrf.mxu0
    %v1508 = vadd.f32 %v1372, %v1507
    %v1509 = vpop.f32.mrf.mxu0
    %1510 = vmatprep.mubr.bf16.mxu0 %v598
    %1511 = vmatmul.mubr.bf16.gmra.mxu0 %v597
    %v1512 = vpop.f32.mrf.mxu0
    %v1513 = vadd.f32 %v1377, %v1512
    %v1514 = vpop.f32.mrf.mxu0
    %v1515 = vpop.f32.mrf.mxu0
    %v1516 = vadd.f32 %v1380, %v1515
    %v1517 = vpop.f32.mrf.mxu0
    %1518 = vmatprep.mubr.bf16.mxu0 %v606
    %1519 = vmatmul.mubr.bf16.gmra.mxu0 %v605
    %v1520 = vpop.f32.mrf.mxu0
    %v1521 = vadd.f32 %v1385, %v1520
    %v1522 = vpop.f32.mrf.mxu0
    %v1523 = vpop.f32.mrf.mxu0
    %v1524 = vadd.f32 %v1388, %v1523
    %v1525 = vpop.f32.mrf.mxu0
    %1526 = vmatprep.mubr.bf16.mxu0 %v614
    %1527 = vmatmul.mubr.bf16.gmra.mxu0 %v613
    %v1528 = vpop.f32.mrf.mxu0
    %v1529 = vadd.f32 %v1393, %v1528
    %v1530 = vpop.f32.mrf.mxu0
    %v1531 = vpop.f32.mrf.mxu0
    %v1532 = vadd.f32 %v1396, %v1531
    %v1533 = vpop.f32.mrf.mxu0
    %1534 = vmatprep.mubr.bf16.mxu0 %v622
    %1535 = vmatmul.mubr.bf16.gmra.mxu0 %v621
    %v1536 = vpop.f32.mrf.mxu0
    %v1537 = vadd.f32 %v1401, %v1536
    %v1538 = vpop.f32.mrf.mxu0
    %v1539 = vpop.f32.mrf.mxu0
    %v1540 = vadd.f32 %v1404, %v1539
    %v1541 = vpop.f32.mrf.mxu0
    %1542 = vmatprep.mubr.bf16.mxu0 %v630
    %1543 = vmatmul.mubr.bf16.gmra.mxu0 %v629
    %v1544 = vpop.f32.mrf.mxu0
    %v1545 = vadd.f32 %v1409, %v1544
    %v1546 = vpop.f32.mrf.mxu0
    %v1547 = vpop.f32.mrf.mxu0
    %v1548 = vadd.f32 %v1412, %v1547
    %v1549 = vpop.f32.mrf.mxu0
    %1550 = vmatprep.mubr.bf16.mxu0 %v638
    %1551 = vmatmul.mubr.bf16.gmra.mxu0 %v637
    %v1552 = vpop.f32.mrf.mxu0
    %v1553 = vadd.f32 %v1417, %v1552
    %v1554 = vpop.f32.mrf.mxu0
    %v1555 = vpop.f32.mrf.mxu0
    %v1556 = vadd.f32 %v1420, %v1555
    %v1557 = vpop.f32.mrf.mxu0
    %1558 = vmatprep.mubr.bf16.mxu0 %v646
    %1559 = vmatmul.mubr.bf16.gmra.mxu0 %v645
    %v1560 = vpop.f32.mrf.mxu0
    %v1561 = vadd.f32 %v1425, %v1560
    %v1562 = vpop.f32.mrf.mxu0
    %v1563 = vpop.f32.mrf.mxu0
    %v1564 = vpop.f32.mrf.mxu0
    %1565 = vdwg.mxu0
    %1566 = vmatprep.subr.bf16.mxu0 0
    %1567 = vmatpush1.bf16.msra.mxu0 %v1047
    %1568 = vmatprep.subr.bf16.mxu0 0
    %1569 = vmatpush1.bf16.msra.mxu0 %v1046
    %1570 = vmatprep.subr.bf16.mxu0 0
    %1571 = vmatpush1.bf16.msra.mxu0 %v1045
    %1572 = vmatprep.subr.bf16.mxu0 0
    %1573 = vmatpush1.bf16.msra.mxu0 %v1044
    %1574 = vmatprep.subr.bf16.mxu0 0
    %1575 = vmatpush1.bf16.msra.mxu0 %v1043
    %1576 = vmatprep.subr.bf16.mxu0 0
    %1577 = vmatpush1.bf16.msra.mxu0 %v1042
    %1578 = vmatprep.subr.bf16.mxu0 0
    %1579 = vmatpush1.bf16.msra.mxu0 %v1041
    %1580 = vmatprep.subr.bf16.mxu0 0
    %1581 = vmatpush1.bf16.msra.mxu0 %v1040
    %1582 = vmatprep.subr.bf16.mxu0 0
    %1583 = vmatpush2.bf16.msra.mxu0 0
    %1584 = vmatprep.subr.bf16.mxu0 0
    %1585 = vmatpush2.bf16.msra.mxu0 %v1054
    %1586 = vmatprep.subr.bf16.mxu0 0
    %1587 = vmatpush2.bf16.msra.mxu0 %v1053
    %1588 = vmatprep.subr.bf16.mxu0 0
    %1589 = vmatpush2.bf16.msra.mxu0 %v1052
    %1590 = vmatprep.subr.bf16.mxu0 0
    %1591 = vmatpush2.bf16.msra.mxu0 %v1051
    %1592 = vmatprep.subr.bf16.mxu0 0
    %1593 = vmatpush2.bf16.msra.mxu0 %v1050
    %1594 = vmatprep.subr.bf16.mxu0 0
    %1595 = vmatpush2.bf16.msra.mxu0 %v1049
    %1596 = vmatprep.subr.bf16.mxu0 0
    %1597 = vmatpush2.bf16.msra.mxu0 %v1048
    %1598 = vmatprep.mubr.bf16.mxu0 %v1120
    %1599 = vmatmul.mubr.bf16.gmra.mxu0 %v551
    %v1600 = vpop.f32.mrf.mxu0
    %v1601 = vadd.f32 %v1465, %v1600
    %v1602 = vpop.f32.mrf.mxu0
    %v1603 = vpop.f32.mrf.mxu0
    %v1604 = vadd.f32 %v1468, %v1603
    %v1605 = vpop.f32.mrf.mxu0
    %1606 = vmatprep.mubr.bf16.mxu0 %v1123
    %1607 = vmatmul.mubr.bf16.gmra.mxu0 %v559
    %v1608 = vpop.f32.mrf.mxu0
    %v1609 = vadd.f32 %v1473, %v1608
    %v1610 = vpop.f32.mrf.mxu0
    %v1611 = vpop.f32.mrf.mxu0
    %v1612 = vadd.f32 %v1476, %v1611
    %v1613 = vpop.f32.mrf.mxu0
    %1614 = vmatprep.mubr.bf16.mxu0 %v1126
    %1615 = vmatmul.mubr.bf16.gmra.mxu0 %v567
    %v1616 = vpop.f32.mrf.mxu0
    %v1617 = vadd.f32 %v1481, %v1616
    %v1618 = vpop.f32.mrf.mxu0
    %v1619 = vpop.f32.mrf.mxu0
    %v1620 = vadd.f32 %v1484, %v1619
    %v1621 = vpop.f32.mrf.mxu0
    %1622 = vmatprep.mubr.bf16.mxu0 %v1129
    %1623 = vmatmul.mubr.bf16.gmra.mxu0 %v575
    %v1624 = vpop.f32.mrf.mxu0
    %v1625 = vadd.f32 %v1489, %v1624
    %v1626 = vpop.f32.mrf.mxu0
    %v1627 = vpop.f32.mrf.mxu0
    %v1628 = vadd.f32 %v1492, %v1627
    %v1629 = vpop.f32.mrf.mxu0
    %1630 = vmatprep.mubr.bf16.mxu0 %v1132
    %1631 = vmatmul.mubr.bf16.gmra.mxu0 %v583
    %v1632 = vpop.f32.mrf.mxu0
    %v1633 = vadd.f32 %v1497, %v1632
    %v1634 = vpop.f32.mrf.mxu0
    %v1635 = vpop.f32.mrf.mxu0
    %v1636 = vadd.f32 %v1500, %v1635
    %v1637 = vpop.f32.mrf.mxu0
    %1638 = vmatprep.mubr.bf16.mxu0 %v1135
    %1639 = vmatmul.mubr.bf16.gmra.mxu0 %v591
    %v1640 = vpop.f32.mrf.mxu0
    %v1641 = vadd.f32 %v1505, %v1640
    %v1642 = vpop.f32.mrf.mxu0
    %v1643 = vpop.f32.mrf.mxu0
    %v1644 = vadd.f32 %v1508, %v1643
    %v1645 = vpop.f32.mrf.mxu0
    %1646 = vmatprep.mubr.bf16.mxu0 %v1138
    %1647 = vmatmul.mubr.bf16.gmra.mxu0 %v599
    %v1648 = vpop.f32.mrf.mxu0
    %v1649 = vadd.f32 %v1513, %v1648
    %v1650 = vpop.f32.mrf.mxu0
    %v1651 = vpop.f32.mrf.mxu0
    %v1652 = vadd.f32 %v1516, %v1651
    %v1653 = vpop.f32.mrf.mxu0
    %1654 = vmatprep.mubr.bf16.mxu0 %v1141
    %1655 = vmatmul.mubr.bf16.gmra.mxu0 %v607
    %v1656 = vpop.f32.mrf.mxu0
    %v1657 = vadd.f32 %v1521, %v1656
    %v1658 = vpop.f32.mrf.mxu0
    %v1659 = vpop.f32.mrf.mxu0
    %v1660 = vadd.f32 %v1524, %v1659
    %v1661 = vpop.f32.mrf.mxu0
    %1662 = vmatprep.mubr.bf16.mxu0 %v1144
    %1663 = vmatmul.mubr.bf16.gmra.mxu0 %v615
    %v1664 = vpop.f32.mrf.mxu0
    %v1665 = vadd.f32 %v1529, %v1664
    %v1666 = vpop.f32.mrf.mxu0
    %v1667 = vpop.f32.mrf.mxu0
    %v1668 = vadd.f32 %v1532, %v1667
    %v1669 = vpop.f32.mrf.mxu0
    %1670 = vmatprep.mubr.bf16.mxu0 %v1147
    %1671 = vmatmul.mubr.bf16.gmra.mxu0 %v623
    %v1672 = vpop.f32.mrf.mxu0
    %v1673 = vadd.f32 %v1537, %v1672
    %v1674 = vpop.f32.mrf.mxu0
    %v1675 = vpop.f32.mrf.mxu0
    %v1676 = vadd.f32 %v1540, %v1675
    %v1677 = vpop.f32.mrf.mxu0
    %1678 = vmatprep.mubr.bf16.mxu0 %v1150
    %1679 = vmatmul.mubr.bf16.gmra.mxu0 %v631
    %v1680 = vpop.f32.mrf.mxu0
    %v1681 = vadd.f32 %v1545, %v1680
    %v1682 = vpop.f32.mrf.mxu0
    %v1683 = vpop.f32.mrf.mxu0
    %v1684 = vadd.f32 %v1548, %v1683
    %v1685 = vpop.f32.mrf.mxu0
    %1686 = vmatprep.mubr.bf16.mxu0 %v1153
    %1687 = vmatmul.mubr.bf16.gmra.mxu0 %v639
    %v1688 = vpop.f32.mrf.mxu0
    %v1689 = vadd.f32 %v1553, %v1688
    %v1690 = vpop.f32.mrf.mxu0
    %v1691 = vpop.f32.mrf.mxu0
    %v1692 = vadd.f32 %v1556, %v1691
    %v1693 = vpop.f32.mrf.mxu0
    %1694 = vmatprep.mubr.bf16.mxu0 %v1156
    %1695 = vmatmul.mubr.bf16.gmra.mxu0 %v647
    %v1696 = vpop.f32.mrf.mxu0
    %v1697 = vadd.f32 %v1561, %v1696
    %v1698 = vpop.f32.mrf.mxu0
    %v1699 = vpop.f32.mrf.mxu0
    %v1700 = vpop.f32.mrf.mxu0
    %1701 = vdwg.mxu0
    %v1702 = vadd.f32 %v1601, %v1604
    %v1703 = vadd.f32 %v1702, %v1609
    %v1704 = vadd.f32 %v1703, %v1612
    %v1705 = vadd.f32 %v1704, %v1617
    %v1706 = vadd.f32 %v1705, %v1620
    %v1707 = vadd.f32 %v1706, %v1625
    %v1708 = vadd.f32 %v1707, %v1628
    %v1709 = vadd.f32 %v1708, %v1633
    %v1710 = vadd.f32 %v1709, %v1636
    %v1711 = vadd.f32 %v1710, %v1641
    %v1712 = vadd.f32 %v1711, %v1644
    %v1713 = vadd.f32 %v1712, %v1649
    %v1714 = vadd.f32 %v1713, %v1652
    %v1715 = vadd.f32 %v1714, %v1657
    %v1716 = vadd.f32 %v1715, %v1660
    %v1717 = vadd.f32 %v1716, %v1665
    %v1718 = vadd.f32 %v1717, %v1668
    %v1719 = vadd.f32 %v1718, %v1673
    %v1720 = vadd.f32 %v1719, %v1676
    %v1721 = vadd.f32 %v1720, %v1681
    %v1722 = vadd.f32 %v1721, %v1684
    %v1723 = vadd.f32 %v1722, %v1689
    %v1724 = vadd.f32 %v1723, %v1692
    %v1725 = vadd.f32 %v1724, %v1697
    %v1726 = vrot.slane %v1725, 4
    %v1727 = vadd.f32 %v1725, %v1726
    %v1728 = vrot.slane %v1727, 2
    %v1729 = vadd.f32 %v1727, %v1728
    %v1730 = vrot.slane %v1729, 1
    %v1731 = vadd.f32 %v1729, %v1730
    %v1732 = vrcp.pop 200.0
    %v1733 = vmul.f32 %v1731, %v1732
    %v1734 = vsub.f32 %v1601, %v1733
    %v1735 = vsub.f32 %v1604, %v1733
    %v1736 = vsub.f32 %v1609, %v1733
    %v1737 = vsub.f32 %v1612, %v1733
    %v1738 = vsub.f32 %v1617, %v1733
    %v1739 = vsub.f32 %v1620, %v1733
    %v1740 = vsub.f32 %v1625, %v1733
    %v1741 = vsub.f32 %v1628, %v1733
    %v1742 = vsub.f32 %v1633, %v1733
    %v1743 = vsub.f32 %v1636, %v1733
    %v1744 = vsub.f32 %v1641, %v1733
    %v1745 = vsub.f32 %v1644, %v1733
    %v1746 = vsub.f32 %v1649, %v1733
    %v1747 = vsub.f32 %v1652, %v1733
    %v1748 = vsub.f32 %v1657, %v1733
    %v1749 = vsub.f32 %v1660, %v1733
    %v1750 = vsub.f32 %v1665, %v1733
    %v1751 = vsub.f32 %v1668, %v1733
    %v1752 = vsub.f32 %v1673, %v1733
    %v1753 = vsub.f32 %v1676, %v1733
    %v1754 = vsub.f32 %v1681, %v1733
    %v1755 = vsub.f32 %v1684, %v1733
    %v1756 = vsub.f32 %v1689, %v1733
    %v1757 = vsub.f32 %v1692, %v1733
    %v1758 = vsub.f32 %v1697, %v1733
    %v1759 = vmul.f32 %v1734, %v1734
    %v1760 = vmul.f32 %v1735, %v1735
    %v1761 = vmul.f32 %v1736, %v1736
    %v1762 = vmul.f32 %v1737, %v1737
    %v1763 = vmul.f32 %v1738, %v1738
    %v1764 = vmul.f32 %v1739, %v1739
    %v1765 = vmul.f32 %v1740, %v1740
    %v1766 = vmul.f32 %v1741, %v1741
    %v1767 = vmul.f32 %v1742, %v1742
    %v1768 = vmul.f32 %v1743, %v1743
    %v1769 = vmul.f32 %v1744, %v1744
    %v1770 = vmul.f32 %v1745, %v1745
    %v1771 = vmul.f32 %v1746, %v1746
    %v1772 = vmul.f32 %v1747, %v1747
    %v1773 = vmul.f32 %v1748, %v1748
    %v1774 = vmul.f32 %v1749, %v1749
    %v1775 = vmul.f32 %v1750, %v1750
    %v1776 = vmul.f32 %v1751, %v1751
    %v1777 = vmul.f32 %v1752, %v1752
    %v1778 = vmul.f32 %v1753, %v1753
    %v1779 = vmul.f32 %v1754, %v1754
    %v1780 = vmul.f32 %v1755, %v1755
    %v1781 = vmul.f32 %v1756, %v1756
    %v1782 = vmul.f32 %v1757, %v1757
    %v1783 = vmul.f32 %v1758, %v1758
    %v1784 = vadd.f32 %v1759, %v1760
    %v1785 = vadd.f32 %v1784, %v1761
    %v1786 = vadd.f32 %v1785, %v1762
    %v1787 = vadd.f32 %v1786, %v1763
    %v1788 = vadd.f32 %v1787, %v1764
    %v1789 = vadd.f32 %v1788, %v1765
    %v1790 = vadd.f32 %v1789, %v1766
    %v1791 = vadd.f32 %v1790, %v1767
    %v1792 = vadd.f32 %v1791, %v1768
    %v1793 = vadd.f32 %v1792, %v1769
    %v1794 = vadd.f32 %v1793, %v1770
    %v1795 = vadd.f32 %v1794, %v1771
    %v1796 = vadd.f32 %v1795, %v1772
    %v1797 = vadd.f32 %v1796, %v1773
    %v1798 = vadd.f32 %v1797, %v1774
    %v1799 = vadd.f32 %v1798, %v1775
    %v1800 = vadd.f32 %v1799, %v1776
    %v1801 = vadd.f32 %v1800, %v1777
    %v1802 = vadd.f32 %v1801, %v1778
    %v1803 = vadd.f32 %v1802, %v1779
    %v1804 = vadd.f32 %v1803, %v1780
    %v1805 = vadd.f32 %v1804, %v1781
    %v1806 = vadd.f32 %v1805, %v1782
    %v1807 = vadd.f32 %v1806, %v1783
    %v1808 = vrot.slane %v1807, 4
    %v1809 = vadd.f32 %v1807, %v1808
    %v1810 = vrot.slane %v1809, 2
    %v1811 = vadd.f32 %v1809, %v1810
    %v1812 = vrot.slane %v1811, 1
    %v1813 = vadd.f32 %v1811, %v1812
    %v1814 = vmul.f32 %v1813, %v1732
    %v1815 = vadd.f32 %v1814, 1e-05
    %v1816 = vrsqrt.pop %v1815
    %v1817 = vmul.f32 %v1734, %v1816
    %v1818 = vmul.f32 %v1735, %v1816
    %v1819 = vmul.f32 %v1736, %v1816
    %v1820 = vmul.f32 %v1737, %v1816
    %v1821 = vmul.f32 %v1738, %v1816
    %v1822 = vmul.f32 %v1739, %v1816
    %v1823 = vmul.f32 %v1740, %v1816
    %v1824 = vmul.f32 %v1741, %v1816
    %v1825 = vmul.f32 %v1742, %v1816
    %v1826 = vmul.f32 %v1743, %v1816
    %v1827 = vmul.f32 %v1744, %v1816
    %v1828 = vmul.f32 %v1745, %v1816
    %v1829 = vmul.f32 %v1746, %v1816
    %v1830 = vmul.f32 %v1747, %v1816
    %v1831 = vmul.f32 %v1748, %v1816
    %v1832 = vmul.f32 %v1749, %v1816
    %v1833 = vmul.f32 %v1750, %v1816
    %v1834 = vmul.f32 %v1751, %v1816
    %v1835 = vmul.f32 %v1752, %v1816
    %v1836 = vmul.f32 %v1753, %v1816
    %v1837 = vmul.f32 %v1754, %v1816
    %v1838 = vmul.f32 %v1755, %v1816
    %v1839 = vmul.f32 %v1756, %v1816
    %v1840 = vmul.f32 %v1757, %v1816
    %v1841 = vmul.f32 %v1758, %v1816
    %v1842 = vmax.f32 %v1817, 0.0
    %v1843 = vmax.f32 %v1818, 0.0
    %v1844 = vmax.f32 %v1819, 0.0
    %v1845 = vmax.f32 %v1820, 0.0
    %v1846 = vmax.f32 %v1821, 0.0
    %v1847 = vmax.f32 %v1822, 0.0
    %v1848 = vmax.f32 %v1823, 0.0
    %v1849 = vmax.f32 %v1824, 0.0
    %v1850 = vmax.f32 %v1825, 0.0
    %v1851 = vmax.f32 %v1826, 0.0
    %v1852 = vmax.f32 %v1827, 0.0
    %v1853 = vmax.f32 %v1828, 0.0
    %v1854 = vmax.f32 %v1829, 0.0
    %v1855 = vmax.f32 %v1830, 0.0
    %v1856 = vmax.f32 %v1831, 0.0
    %v1857 = vmax.f32 %v1832, 0.0
    %v1858 = vmax.f32 %v1833, 0.0
    %v1859 = vmax.f32 %v1834, 0.0
    %v1860 = vmax.f32 %v1835, 0.0
    %v1861 = vmax.f32 %v1836, 0.0
    %v1862 = vmax.f32 %v1837, 0.0
    %v1863 = vmax.f32 %v1838, 0.0
    %v1864 = vmax.f32 %v1839, 0.0
    %v1865 = vmax.f32 %v1840, 0.0
    %v1866 = vmax.f32 %v1841, 0.0
    %vm1874 = vcmask 1045504
    %v1875 = vrot.slane %v1848, 2
    %v1876 = vrot.slane %v1849, 2
    %v1877 = vsel %vm1874, %v1875, %v1876
    %v1878 = vrot.slane %v1850, 2
    %v1879 = vsel %vm1874, %v1876, %v1878
    %v1880 = vrot.slane %v1851, 2
    %v1881 = vsel %vm1874, %v1878, %v1880
    %v1882 = vrot.slane %v1852, 2
    %v1883 = vsel %vm1874, %v1880, %v1882
    %v1884 = vrot.slane %v1853, 2
    %v1885 = vsel %vm1874, %v1882, %v1884
    %v1886 = vrot.slane %v1854, 2
    %v1887 = vsel %vm1874, %v1884, %v1886
    %v1895 = vmax.f32 %v1842, %v1877
    %v1896 = vmax.f32 %v1843, %v1879
    %v1897 = vmax.f32 %v1844, %v1881
    %v1898 = vmax.f32 %v1845, %v1883
    %v1899 = vmax.f32 %v1846, %v1885
    %v1900 = vmax.f32 %v1847, %v1887
    %v1901 = vmax.f32 %v1848, %v1886
    %v1909 = vrot.slane %v1860, 2
    %v1910 = vrot.slane %v1861, 2
    %v1911 = vsel %vm1874, %v1909, %v1910
    %v1912 = vrot.slane %v1862, 2
    %v1913 = vsel %vm1874, %v1910, %v1912
    %v1914 = vrot.slane %v1863, 2
    %v1915 = vsel %vm1874, %v1912, %v1914
    %v1916 = vrot.slane %v1864, 2
    %v1917 = vsel %vm1874, %v1914, %v1916
    %v1918 = vrot.slane %v1865, 2
    %v1919 = vsel %vm1874, %v1916, %v1918
    %v1920 = vrot.slane %v1866, 2
    %v1921 = vsel %vm1874, %v1918, %v1920
    %v1929 = vmax.f32 %v1854, %v1911
    %v1930 = vmax.f32 %v1855, %v1913
    %v1931 = vmax.f32 %v1856, %v1915
    %v1932 = vmax.f32 %v1857, %v1917
    %v1933 = vmax.f32 %v1858, %v1919
    %v1934 = vmax.f32 %v1859, %v1921
    %v1935 = vmax.f32 %v1860, %v1920
    %vm1943 = vcmask 1043456
    %v1944 = vrot.slane %v1929, 4
    %v1945 = vrot.slane %v1930, 4
    %v1946 = vsel %vm1943, %v1944, %v1945
    %v1947 = vrot.slane %v1931, 4
    %v1948 = vsel %vm1943, %v1945, %v1947
    %v1949 = vrot.slane %v1932, 4
    %v1950 = vsel %vm1943, %v1947, %v1949
    %v1951 = vrot.slane %v1933, 4
    %v1952 = vsel %vm1943, %v1949, %v1951
    %v1953 = vrot.slane %v1934, 4
    %v1954 = vsel %vm1943, %v1951, %v1953
    %v1955 = vrot.slane %v1935, 4
    %v1956 = vsel %vm1943, %v1953, %v1955
    %v1964 = vmax.f32 %v1895, %v1946
    %v1965 = vmax.f32 %v1896, %v1948
    %v1966 = vmax.f32 %v1897, %v1950
    %v1967 = vmax.f32 %v1898, %v1952
    %v1968 = vmax.f32 %v1899, %v1954
    %v1969 = vmax.f32 %v1900, %v1956
    %v1970 = vmax.f32 %v1901, %v1955
    %v1971 = vpack.c.bf16 %v1965, %v1964
    %v1972 = vpack.c.bf16 %v1967, %v1966
    %v1973 = vpack.c.bf16 %v1969, %v1968
    %v1974 = vpack.c.bf16 %v1970, %v1970
    %v1975 = vld [vmem:[%s2] sm:$0xf]
    %v1976 = vld [vmem:[%s2 + $0x4] sm:$0xf]
    %v1977 = vld [vmem:[%s2 + $0x8] sm:$0xf]
    %v1978 = vld [vmem:[%s2 + $0xc] sm:$0xf]
    %v1979 = vld [vmem:[%s2 + $0x10] sm:$0xf]
    %v1980 = vld [vmem:[%s2 + $0x14] sm:$0xf]
    %v1981 = vld [vmem:[%s2 + $0x18] sm:$0xf]
    %v1982 = vld [vmem:[%s2 + $0x1c] sm:$0xf]
    %v1983 = vld [vmem:[%s2 + $0x20] sm:$0xf]
    %v1984 = vld [vmem:[%s2 + $0x24] sm:$0xf]
    %v1985 = vld [vmem:[%s2 + $0x28] sm:$0xf]
    %v1986 = vld [vmem:[%s2 + $0x2c] sm:$0xf]
    %v1987 = vld [vmem:[%s2 + $0x30] sm:$0xf]
    %v1988 = vld [vmem:[%s2 + $0x34] sm:$0xf]
    %v1989 = vld [vmem:[%s2 + $0x38] sm:$0xf]
    %v1990 = vld [vmem:[%s2 + $0x3c] sm:$0xf]
    %s1991 = scalar_lea.vmem %s2, 64
    %v1992 = vld [vmem:[%s1991] sm:$0xf]
    %v1993 = vld [vmem:[%s1991 + $0x4] sm:$0xf]
    %v1994 = vld [vmem:[%s1991 + $0x8] sm:$0xf]
    %v1995 = vld [vmem:[%s1991 + $0xc] sm:$0xf]
    %v1996 = vld [vmem:[%s1991 + $0x10] sm:$0xf]
    %v1997 = vld [vmem:[%s1991 + $0x14] sm:$0xf]
    %v1998 = vld [vmem:[%s1991 + $0x18] sm:$0xf]
    %v1999 = vld [vmem:[%s1991 + $0x1c] sm:$0xf]
    %v2000 = vld [vmem:[%s1991 + $0x20] sm:$0xf]
    %v2001 = vld [vmem:[%s1991 + $0x24] sm:$0xf]
    %v2002 = vld [vmem:[%s1991 + $0x28] sm:$0xf]
    %v2003 = vld [vmem:[%s1991 + $0x2c] sm:$0xf]
    %v2004 = vld [vmem:[%s1991 + $0x30] sm:$0xf]
    %v2005 = vld [vmem:[%s1991 + $0x34] sm:$0xf]
    %v2006 = vld [vmem:[%s1991 + $0x38] sm:$0xf]
    %v2007 = vld [vmem:[%s1991 + $0x3c] sm:$0xf]
    %v2009 = vrot.slane %v1971, 1
    %v2027 = vunpack.c.l.b16 %v1992
    %v2028 = vunpack.c.l.b16 %v1993
    %v2029 = vunpack.c.l.b16 %v1994
    %v2030 = vunpack.c.l.b16 %v1995
    %v2031 = vunpack.c.l.b16 %v1996
    %v2032 = vunpack.c.l.b16 %v1997
    %v2033 = vunpack.c.l.b16 %v1998
    %v2034 = vunpack.c.l.b16 %v1999
    %v2035 = vunpack.c.l.b16 %v2000
    %v2036 = vunpack.c.l.b16 %v2001
    %v2037 = vunpack.c.l.b16 %v2002
    %v2038 = vunpack.c.l.b16 %v2003
    %v2039 = vunpack.c.l.b16 %v2004
    %v2040 = vunpack.c.l.b16 %v2005
    %v2041 = vunpack.c.l.b16 %v2006
    %v2042 = vunpack.c.l.b16 %v2007
    %v2043 = vpack.c.b16 %v2028, %v2027
    %v2044 = vpack.c.b16 %v2030, %v2029
    %v2045 = vpack.c.b16 %v2032, %v2031
    %v2046 = vpack.c.b16 %v2034, %v2033
    %v2047 = vpack.c.b16 %v2036, %v2035
    %v2048 = vpack.c.b16 %v2038, %v2037
    %v2049 = vpack.c.b16 %v2040, %v2039
    %v2050 = vpack.c.b16 %v2042, %v2041
    %2059 = vmatprep.subr.bf16.mxu0 0
    %2060 = vmatpush1.bf16.msra.mxu0 %v2050
    %2061 = vmatprep.subr.bf16.mxu0 0
    %2062 = vmatpush1.bf16.msra.mxu0 %v2049
    %2063 = vmatprep.subr.bf16.mxu0 0
    %2064 = vmatpush1.bf16.msra.mxu0 %v2048
    %2065 = vmatprep.subr.bf16.mxu0 0
    %2066 = vmatpush1.bf16.msra.mxu0 %v2047
    %2067 = vmatprep.subr.bf16.mxu0 0
    %2068 = vmatpush1.bf16.msra.mxu0 %v2046
    %2069 = vmatprep.subr.bf16.mxu0 0
    %2070 = vmatpush1.bf16.msra.mxu0 %v2045
    %2071 = vmatprep.subr.bf16.mxu0 0
    %2072 = vmatpush1.bf16.msra.mxu0 %v2044
    %2073 = vmatprep.subr.bf16.mxu0 0
    %2074 = vmatpush1.bf16.msra.mxu0 %v2043
    %2075 = vmatprep.subr.bf16.mxu0 0
    %2076 = vmatpush2.bf16.msra.mxu0 0
    %2077 = vmatprep.subr.bf16.mxu0 0
    %2078 = vmatpush2.bf16.msra.mxu0 0
    %2079 = vmatprep.subr.bf16.mxu0 0
    %2080 = vmatpush2.bf16.msra.mxu0 0
    %2081 = vmatprep.subr.bf16.mxu0 0
    %2082 = vmatpush2.bf16.msra.mxu0 0
    %2083 = vmatprep.subr.bf16.mxu0 0
    %2084 = vmatpush2.bf16.msra.mxu0 0
    %2085 = vmatprep.subr.bf16.mxu0 0
    %2086 = vmatpush2.bf16.msra.mxu0 0
    %2087 = vmatprep.subr.bf16.mxu0 0
    %2088 = vmatpush2.bf16.msra.mxu0 0
    %2089 = vmatprep.subr.bf16.mxu0 0
    %2090 = vmatpush2.bf16.msra.mxu0 0
    %2091 = vmatprep.mubr.bf16.mxu0 0
    %2092 = vmatmul.mubr.bf16.gmra.mxu0 %v2009
    %v2093 = vpop.f32.mrf.mxu0
    %v2094 = vadd.f32 0.0, %v2093
    %v2095 = vpop.f32.mrf.mxu0
    %v2096 = vpop.f32.mrf.mxu0
    %v2097 = vpop.f32.mrf.mxu0
    %2098 = vdwg.mxu0
    %v2115 = vunpack.c.l.b16 %v1975
    %v2116 = vunpack.c.l.b16 %v1976
    %v2117 = vunpack.c.l.b16 %v1977
    %v2118 = vunpack.c.l.b16 %v1978
    %v2119 = vunpack.c.l.b16 %v1979
    %v2120 = vunpack.c.l.b16 %v1980
    %v2121 = vunpack.c.l.b16 %v1981
    %v2122 = vunpack.c.l.b16 %v1982
    %v2123 = vunpack.c.l.b16 %v1983
    %v2124 = vunpack.c.l.b16 %v1984
    %v2125 = vunpack.c.l.b16 %v1985
    %v2126 = vunpack.c.l.b16 %v1986
    %v2127 = vunpack.c.l.b16 %v1987
    %v2128 = vunpack.c.l.b16 %v1988
    %v2129 = vunpack.c.l.b16 %v1989
    %v2130 = vunpack.c.l.b16 %v1990
    %v2131 = vpack.c.b16 %v2116, %v2115
    %v2132 = vpack.c.b16 %v2118, %v2117
    %v2133 = vpack.c.b16 %v2120, %v2119
    %v2134 = vpack.c.b16 %v2122, %v2121
    %v2135 = vpack.c.b16 %v2124, %v2123
    %v2136 = vpack.c.b16 %v2126, %v2125
    %v2137 = vpack.c.b16 %v2128, %v2127
    %v2138 = vpack.c.b16 %v2130, %v2129
    %2147 = vmatprep.subr.bf16.mxu0 0
    %2148 = vmatpush1.bf16.msra.mxu0 %v2138
    %2149 = vmatprep.subr.bf16.mxu0 0
    %2150 = vmatpush1.bf16.msra.mxu0 %v2137
    %2151 = vmatprep.subr.bf16.mxu0 0
    %2152 = vmatpush1.bf16.msra.mxu0 %v2136
    %2153 = vmatprep.subr.bf16.mxu0 0
    %2154 = vmatpush1.bf16.msra.mxu0 %v2135
    %2155 = vmatprep.subr.bf16.mxu0 0
    %2156 = vmatpush1.bf16.msra.mxu0 %v2134
    %2157 = vmatprep.subr.bf16.mxu0 0
    %2158 = vmatpush1.bf16.msra.mxu0 %v2133
    %2159 = vmatprep.subr.bf16.mxu0 0
    %2160 = vmatpush1.bf16.msra.mxu0 %v2132
    %2161 = vmatprep.subr.bf16.mxu0 0
    %2162 = vmatpush1.bf16.msra.mxu0 %v2131
    %2163 = vmatprep.subr.bf16.mxu0 0
    %2164 = vmatpush2.bf16.msra.mxu0 0
    %2165 = vmatprep.subr.bf16.mxu0 0
    %2166 = vmatpush2.bf16.msra.mxu0 0
    %2167 = vmatprep.subr.bf16.mxu0 0
    %2168 = vmatpush2.bf16.msra.mxu0 0
    %2169 = vmatprep.subr.bf16.mxu0 0
    %2170 = vmatpush2.bf16.msra.mxu0 0
    %2171 = vmatprep.subr.bf16.mxu0 0
    %2172 = vmatpush2.bf16.msra.mxu0 0
    %2173 = vmatprep.subr.bf16.mxu0 0
    %2174 = vmatpush2.bf16.msra.mxu0 0
    %2175 = vmatprep.subr.bf16.mxu0 0
    %2176 = vmatpush2.bf16.msra.mxu0 0
    %2177 = vmatprep.subr.bf16.mxu0 0
    %2178 = vmatpush2.bf16.msra.mxu0 0
    %2179 = vmatprep.mubr.bf16.mxu0 0
    %2180 = vmatmul.mubr.bf16.gmra.mxu0 %v1971
    %v2181 = vpop.f32.mrf.mxu0
    %v2182 = vadd.f32 %v2094, %v2181
    %v2183 = vpop.f32.mrf.mxu0
    %v2184 = vpop.f32.mrf.mxu0
    %v2185 = vpop.f32.mrf.mxu0
    %2186 = vdwg.mxu0
    %s2187 = scalar_lea.vmem %s2, 128
    %v2188 = vld [vmem:[%s2187] sm:$0xf]
    %v2189 = vld [vmem:[%s2187 + $0x4] sm:$0xf]
    %v2190 = vld [vmem:[%s2187 + $0x8] sm:$0xf]
    %v2191 = vld [vmem:[%s2187 + $0xc] sm:$0xf]
    %v2192 = vld [vmem:[%s2187 + $0x10] sm:$0xf]
    %v2193 = vld [vmem:[%s2187 + $0x14] sm:$0xf]
    %v2194 = vld [vmem:[%s2187 + $0x18] sm:$0xf]
    %v2195 = vld [vmem:[%s2187 + $0x1c] sm:$0xf]
    %v2196 = vld [vmem:[%s2187 + $0x20] sm:$0xf]
    %v2197 = vld [vmem:[%s2187 + $0x24] sm:$0xf]
    %v2198 = vld [vmem:[%s2187 + $0x28] sm:$0xf]
    %v2199 = vld [vmem:[%s2187 + $0x2c] sm:$0xf]
    %v2200 = vld [vmem:[%s2187 + $0x30] sm:$0xf]
    %v2201 = vld [vmem:[%s2187 + $0x34] sm:$0xf]
    %v2202 = vld [vmem:[%s2187 + $0x38] sm:$0xf]
    %v2203 = vld [vmem:[%s2187 + $0x3c] sm:$0xf]
    %v2204 = vrot.slane %v1971, 2
    %v2222 = vunpack.c.l.b16 %v2188
    %v2223 = vunpack.c.l.b16 %v2189
    %v2224 = vunpack.c.l.b16 %v2190
    %v2225 = vunpack.c.l.b16 %v2191
    %v2226 = vunpack.c.l.b16 %v2192
    %v2227 = vunpack.c.l.b16 %v2193
    %v2228 = vunpack.c.l.b16 %v2194
    %v2229 = vunpack.c.l.b16 %v2195
    %v2230 = vunpack.c.l.b16 %v2196
    %v2231 = vunpack.c.l.b16 %v2197
    %v2232 = vunpack.c.l.b16 %v2198
    %v2233 = vunpack.c.l.b16 %v2199
    %v2234 = vunpack.c.l.b16 %v2200
    %v2235 = vunpack.c.l.b16 %v2201
    %v2236 = vunpack.c.l.b16 %v2202
    %v2237 = vunpack.c.l.b16 %v2203
    %v2238 = vpack.c.b16 %v2223, %v2222
    %v2239 = vpack.c.b16 %v2225, %v2224
    %v2240 = vpack.c.b16 %v2227, %v2226
    %v2241 = vpack.c.b16 %v2229, %v2228
    %v2242 = vpack.c.b16 %v2231, %v2230
    %v2243 = vpack.c.b16 %v2233, %v2232
    %v2244 = vpack.c.b16 %v2235, %v2234
    %v2245 = vpack.c.b16 %v2237, %v2236
    %2254 = vmatprep.subr.bf16.mxu0 0
    %2255 = vmatpush1.bf16.msra.mxu0 %v2245
    %2256 = vmatprep.subr.bf16.mxu0 0
    %2257 = vmatpush1.bf16.msra.mxu0 %v2244
    %2258 = vmatprep.subr.bf16.mxu0 0
    %2259 = vmatpush1.bf16.msra.mxu0 %v2243
    %2260 = vmatprep.subr.bf16.mxu0 0
    %2261 = vmatpush1.bf16.msra.mxu0 %v2242
    %2262 = vmatprep.subr.bf16.mxu0 0
    %2263 = vmatpush1.bf16.msra.mxu0 %v2241
    %2264 = vmatprep.subr.bf16.mxu0 0
    %2265 = vmatpush1.bf16.msra.mxu0 %v2240
    %2266 = vmatprep.subr.bf16.mxu0 0
    %2267 = vmatpush1.bf16.msra.mxu0 %v2239
    %2268 = vmatprep.subr.bf16.mxu0 0
    %2269 = vmatpush1.bf16.msra.mxu0 %v2238
    %2270 = vmatprep.subr.bf16.mxu0 0
    %2271 = vmatpush2.bf16.msra.mxu0 0
    %2272 = vmatprep.subr.bf16.mxu0 0
    %2273 = vmatpush2.bf16.msra.mxu0 0
    %2274 = vmatprep.subr.bf16.mxu0 0
    %2275 = vmatpush2.bf16.msra.mxu0 0
    %2276 = vmatprep.subr.bf16.mxu0 0
    %2277 = vmatpush2.bf16.msra.mxu0 0
    %2278 = vmatprep.subr.bf16.mxu0 0
    %2279 = vmatpush2.bf16.msra.mxu0 0
    %2280 = vmatprep.subr.bf16.mxu0 0
    %2281 = vmatpush2.bf16.msra.mxu0 0
    %2282 = vmatprep.subr.bf16.mxu0 0
    %2283 = vmatpush2.bf16.msra.mxu0 0
    %2284 = vmatprep.subr.bf16.mxu0 0
    %2285 = vmatpush2.bf16.msra.mxu0 0
    %2286 = vmatprep.mubr.bf16.mxu0 0
    %2287 = vmatmul.mubr.bf16.gmra.mxu0 %v2204
    %v2288 = vpop.f32.mrf.mxu0
    %v2289 = vadd.f32 0.0, %v2288
    %v2290 = vpop.f32.mrf.mxu0
    %v2291 = vpop.f32.mrf.mxu0
    %v2292 = vpop.f32.mrf.mxu0
    %2293 = vdwg.mxu0
    %v2294 = vadd.f32 %v2182, %v2289
    %s2295 = scalar_lea.vmem %s2, 192
    %v2296 = vld [vmem:[%s2295] sm:$0xf]
    %v2297 = vld [vmem:[%s2295 + $0x4] sm:$0xf]
    %v2298 = vld [vmem:[%s2295 + $0x8] sm:$0xf]
    %v2299 = vld [vmem:[%s2295 + $0xc] sm:$0xf]
    %v2300 = vld [vmem:[%s2295 + $0x10] sm:$0xf]
    %v2301 = vld [vmem:[%s2295 + $0x14] sm:$0xf]
    %v2302 = vld [vmem:[%s2295 + $0x18] sm:$0xf]
    %v2303 = vld [vmem:[%s2295 + $0x1c] sm:$0xf]
    %v2304 = vld [vmem:[%s2295 + $0x20] sm:$0xf]
    %v2305 = vld [vmem:[%s2295 + $0x24] sm:$0xf]
    %v2306 = vld [vmem:[%s2295 + $0x28] sm:$0xf]
    %v2307 = vld [vmem:[%s2295 + $0x2c] sm:$0xf]
    %v2308 = vld [vmem:[%s2295 + $0x30] sm:$0xf]
    %v2309 = vld [vmem:[%s2295 + $0x34] sm:$0xf]
    %v2310 = vld [vmem:[%s2295 + $0x38] sm:$0xf]
    %v2311 = vld [vmem:[%s2295 + $0x3c] sm:$0xf]
    %v2312 = vrot.slane %v1971, 3
    %v2330 = vunpack.c.l.b16 %v2296
    %v2331 = vunpack.c.l.b16 %v2297
    %v2332 = vunpack.c.l.b16 %v2298
    %v2333 = vunpack.c.l.b16 %v2299
    %v2334 = vunpack.c.l.b16 %v2300
    %v2335 = vunpack.c.l.b16 %v2301
    %v2336 = vunpack.c.l.b16 %v2302
    %v2337 = vunpack.c.l.b16 %v2303
    %v2338 = vunpack.c.l.b16 %v2304
    %v2339 = vunpack.c.l.b16 %v2305
    %v2340 = vunpack.c.l.b16 %v2306
    %v2341 = vunpack.c.l.b16 %v2307
    %v2342 = vunpack.c.l.b16 %v2308
    %v2343 = vunpack.c.l.b16 %v2309
    %v2344 = vunpack.c.l.b16 %v2310
    %v2345 = vunpack.c.l.b16 %v2311
    %v2346 = vpack.c.b16 %v2331, %v2330
    %v2347 = vpack.c.b16 %v2333, %v2332
    %v2348 = vpack.c.b16 %v2335, %v2334
    %v2349 = vpack.c.b16 %v2337, %v2336
    %v2350 = vpack.c.b16 %v2339, %v2338
    %v2351 = vpack.c.b16 %v2341, %v2340
    %v2352 = vpack.c.b16 %v2343, %v2342
    %v2353 = vpack.c.b16 %v2345, %v2344
    %2362 = vmatprep.subr.bf16.mxu0 0
    %2363 = vmatpush1.bf16.msra.mxu0 %v2353
    %2364 = vmatprep.subr.bf16.mxu0 0
    %2365 = vmatpush1.bf16.msra.mxu0 %v2352
    %2366 = vmatprep.subr.bf16.mxu0 0
    %2367 = vmatpush1.bf16.msra.mxu0 %v2351
    %2368 = vmatprep.subr.bf16.mxu0 0
    %2369 = vmatpush1.bf16.msra.mxu0 %v2350
    %2370 = vmatprep.subr.bf16.mxu0 0
    %2371 = vmatpush1.bf16.msra.mxu0 %v2349
    %2372 = vmatprep.subr.bf16.mxu0 0
    %2373 = vmatpush1.bf16.msra.mxu0 %v2348
    %2374 = vmatprep.subr.bf16.mxu0 0
    %2375 = vmatpush1.bf16.msra.mxu0 %v2347
    %2376 = vmatprep.subr.bf16.mxu0 0
    %2377 = vmatpush1.bf16.msra.mxu0 %v2346
    %2378 = vmatprep.subr.bf16.mxu0 0
    %2379 = vmatpush2.bf16.msra.mxu0 0
    %2380 = vmatprep.subr.bf16.mxu0 0
    %2381 = vmatpush2.bf16.msra.mxu0 0
    %2382 = vmatprep.subr.bf16.mxu0 0
    %2383 = vmatpush2.bf16.msra.mxu0 0
    %2384 = vmatprep.subr.bf16.mxu0 0
    %2385 = vmatpush2.bf16.msra.mxu0 0
    %2386 = vmatprep.subr.bf16.mxu0 0
    %2387 = vmatpush2.bf16.msra.mxu0 0
    %2388 = vmatprep.subr.bf16.mxu0 0
    %2389 = vmatpush2.bf16.msra.mxu0 0
    %2390 = vmatprep.subr.bf16.mxu0 0
    %2391 = vmatpush2.bf16.msra.mxu0 0
    %2392 = vmatprep.subr.bf16.mxu0 0
    %2393 = vmatpush2.bf16.msra.mxu0 0
    %2394 = vmatprep.mubr.bf16.mxu0 0
    %2395 = vmatmul.mubr.bf16.gmra.mxu0 %v2312
    %v2396 = vpop.f32.mrf.mxu0
    %v2397 = vadd.f32 0.0, %v2396
    %v2398 = vpop.f32.mrf.mxu0
    %v2399 = vpop.f32.mrf.mxu0
    %v2400 = vpop.f32.mrf.mxu0
    %2401 = vdwg.mxu0
    %v2402 = vadd.f32 %v2294, %v2397
    %s2403 = scalar_lea.vmem %s2, 256
    %v2404 = vld [vmem:[%s2403] sm:$0xf]
    %v2405 = vld [vmem:[%s2403 + $0x4] sm:$0xf]
    %v2406 = vld [vmem:[%s2403 + $0x8] sm:$0xf]
    %v2407 = vld [vmem:[%s2403 + $0xc] sm:$0xf]
    %v2408 = vld [vmem:[%s2403 + $0x10] sm:$0xf]
    %v2409 = vld [vmem:[%s2403 + $0x14] sm:$0xf]
    %v2410 = vld [vmem:[%s2403 + $0x18] sm:$0xf]
    %v2411 = vld [vmem:[%s2403 + $0x1c] sm:$0xf]
    %v2412 = vld [vmem:[%s2403 + $0x20] sm:$0xf]
    %v2413 = vld [vmem:[%s2403 + $0x24] sm:$0xf]
    %v2414 = vld [vmem:[%s2403 + $0x28] sm:$0xf]
    %v2415 = vld [vmem:[%s2403 + $0x2c] sm:$0xf]
    %v2416 = vld [vmem:[%s2403 + $0x30] sm:$0xf]
    %v2417 = vld [vmem:[%s2403 + $0x34] sm:$0xf]
    %v2418 = vld [vmem:[%s2403 + $0x38] sm:$0xf]
    %v2419 = vld [vmem:[%s2403 + $0x3c] sm:$0xf]
    %v2420 = vrot.slane %v1971, 4
    %v2438 = vunpack.c.l.b16 %v2404
    %v2439 = vunpack.c.l.b16 %v2405
    %v2440 = vunpack.c.l.b16 %v2406
    %v2441 = vunpack.c.l.b16 %v2407
    %v2442 = vunpack.c.l.b16 %v2408
    %v2443 = vunpack.c.l.b16 %v2409
    %v2444 = vunpack.c.l.b16 %v2410
    %v2445 = vunpack.c.l.b16 %v2411
    %v2446 = vunpack.c.l.b16 %v2412
    %v2447 = vunpack.c.l.b16 %v2413
    %v2448 = vunpack.c.l.b16 %v2414
    %v2449 = vunpack.c.l.b16 %v2415
    %v2450 = vunpack.c.l.b16 %v2416
    %v2451 = vunpack.c.l.b16 %v2417
    %v2452 = vunpack.c.l.b16 %v2418
    %v2453 = vunpack.c.l.b16 %v2419
    %v2454 = vpack.c.b16 %v2439, %v2438
    %v2455 = vpack.c.b16 %v2441, %v2440
    %v2456 = vpack.c.b16 %v2443, %v2442
    %v2457 = vpack.c.b16 %v2445, %v2444
    %v2458 = vpack.c.b16 %v2447, %v2446
    %v2459 = vpack.c.b16 %v2449, %v2448
    %v2460 = vpack.c.b16 %v2451, %v2450
    %v2461 = vpack.c.b16 %v2453, %v2452
    %2470 = vmatprep.subr.bf16.mxu0 0
    %2471 = vmatpush1.bf16.msra.mxu0 %v2461
    %2472 = vmatprep.subr.bf16.mxu0 0
    %2473 = vmatpush1.bf16.msra.mxu0 %v2460
    %2474 = vmatprep.subr.bf16.mxu0 0
    %2475 = vmatpush1.bf16.msra.mxu0 %v2459
    %2476 = vmatprep.subr.bf16.mxu0 0
    %2477 = vmatpush1.bf16.msra.mxu0 %v2458
    %2478 = vmatprep.subr.bf16.mxu0 0
    %2479 = vmatpush1.bf16.msra.mxu0 %v2457
    %2480 = vmatprep.subr.bf16.mxu0 0
    %2481 = vmatpush1.bf16.msra.mxu0 %v2456
    %2482 = vmatprep.subr.bf16.mxu0 0
    %2483 = vmatpush1.bf16.msra.mxu0 %v2455
    %2484 = vmatprep.subr.bf16.mxu0 0
    %2485 = vmatpush1.bf16.msra.mxu0 %v2454
    %2486 = vmatprep.subr.bf16.mxu0 0
    %2487 = vmatpush2.bf16.msra.mxu0 0
    %2488 = vmatprep.subr.bf16.mxu0 0
    %2489 = vmatpush2.bf16.msra.mxu0 0
    %2490 = vmatprep.subr.bf16.mxu0 0
    %2491 = vmatpush2.bf16.msra.mxu0 0
    %2492 = vmatprep.subr.bf16.mxu0 0
    %2493 = vmatpush2.bf16.msra.mxu0 0
    %2494 = vmatprep.subr.bf16.mxu0 0
    %2495 = vmatpush2.bf16.msra.mxu0 0
    %2496 = vmatprep.subr.bf16.mxu0 0
    %2497 = vmatpush2.bf16.msra.mxu0 0
    %2498 = vmatprep.subr.bf16.mxu0 0
    %2499 = vmatpush2.bf16.msra.mxu0 0
    %2500 = vmatprep.subr.bf16.mxu0 0
    %2501 = vmatpush2.bf16.msra.mxu0 0
    %2502 = vmatprep.mubr.bf16.mxu0 0
    %2503 = vmatmul.mubr.bf16.gmra.mxu0 %v2420
    %v2504 = vpop.f32.mrf.mxu0
    %v2505 = vadd.f32 0.0, %v2504
    %v2506 = vpop.f32.mrf.mxu0
    %v2507 = vpop.f32.mrf.mxu0
    %v2508 = vpop.f32.mrf.mxu0
    %2509 = vdwg.mxu0
    %v2510 = vadd.f32 %v2402, %v2505
    %s2511 = scalar_lea.vmem %s2, 320
    %v2512 = vld [vmem:[%s2511] sm:$0xf]
    %v2513 = vld [vmem:[%s2511 + $0x4] sm:$0xf]
    %v2514 = vld [vmem:[%s2511 + $0x8] sm:$0xf]
    %v2515 = vld [vmem:[%s2511 + $0xc] sm:$0xf]
    %v2516 = vld [vmem:[%s2511 + $0x10] sm:$0xf]
    %v2517 = vld [vmem:[%s2511 + $0x14] sm:$0xf]
    %v2518 = vld [vmem:[%s2511 + $0x18] sm:$0xf]
    %v2519 = vld [vmem:[%s2511 + $0x1c] sm:$0xf]
    %v2520 = vld [vmem:[%s2511 + $0x20] sm:$0xf]
    %v2521 = vld [vmem:[%s2511 + $0x24] sm:$0xf]
    %v2522 = vld [vmem:[%s2511 + $0x28] sm:$0xf]
    %v2523 = vld [vmem:[%s2511 + $0x2c] sm:$0xf]
    %v2524 = vld [vmem:[%s2511 + $0x30] sm:$0xf]
    %v2525 = vld [vmem:[%s2511 + $0x34] sm:$0xf]
    %v2526 = vld [vmem:[%s2511 + $0x38] sm:$0xf]
    %v2527 = vld [vmem:[%s2511 + $0x3c] sm:$0xf]
    %v2528 = vrot.slane %v1971, 5
    %v2546 = vunpack.c.l.b16 %v2512
    %v2547 = vunpack.c.l.b16 %v2513
    %v2548 = vunpack.c.l.b16 %v2514
    %v2549 = vunpack.c.l.b16 %v2515
    %v2550 = vunpack.c.l.b16 %v2516
    %v2551 = vunpack.c.l.b16 %v2517
    %v2552 = vunpack.c.l.b16 %v2518
    %v2553 = vunpack.c.l.b16 %v2519
    %v2554 = vunpack.c.l.b16 %v2520
    %v2555 = vunpack.c.l.b16 %v2521
    %v2556 = vunpack.c.l.b16 %v2522
    %v2557 = vunpack.c.l.b16 %v2523
    %v2558 = vunpack.c.l.b16 %v2524
    %v2559 = vunpack.c.l.b16 %v2525
    %v2560 = vunpack.c.l.b16 %v2526
    %v2561 = vunpack.c.l.b16 %v2527
    %v2562 = vpack.c.b16 %v2547, %v2546
    %v2563 = vpack.c.b16 %v2549, %v2548
    %v2564 = vpack.c.b16 %v2551, %v2550
    %v2565 = vpack.c.b16 %v2553, %v2552
    %v2566 = vpack.c.b16 %v2555, %v2554
    %v2567 = vpack.c.b16 %v2557, %v2556
    %v2568 = vpack.c.b16 %v2559, %v2558
    %v2569 = vpack.c.b16 %v2561, %v2560
    %2578 = vmatprep.subr.bf16.mxu0 0
    %2579 = vmatpush1.bf16.msra.mxu0 %v2569
    %2580 = vmatprep.subr.bf16.mxu0 0
    %2581 = vmatpush1.bf16.msra.mxu0 %v2568
    %2582 = vmatprep.subr.bf16.mxu0 0
    %2583 = vmatpush1.bf16.msra.mxu0 %v2567
    %2584 = vmatprep.subr.bf16.mxu0 0
    %2585 = vmatpush1.bf16.msra.mxu0 %v2566
    %2586 = vmatprep.subr.bf16.mxu0 0
    %2587 = vmatpush1.bf16.msra.mxu0 %v2565
    %2588 = vmatprep.subr.bf16.mxu0 0
    %2589 = vmatpush1.bf16.msra.mxu0 %v2564
    %2590 = vmatprep.subr.bf16.mxu0 0
    %2591 = vmatpush1.bf16.msra.mxu0 %v2563
    %2592 = vmatprep.subr.bf16.mxu0 0
    %2593 = vmatpush1.bf16.msra.mxu0 %v2562
    %2594 = vmatprep.subr.bf16.mxu0 0
    %2595 = vmatpush2.bf16.msra.mxu0 0
    %2596 = vmatprep.subr.bf16.mxu0 0
    %2597 = vmatpush2.bf16.msra.mxu0 0
    %2598 = vmatprep.subr.bf16.mxu0 0
    %2599 = vmatpush2.bf16.msra.mxu0 0
    %2600 = vmatprep.subr.bf16.mxu0 0
    %2601 = vmatpush2.bf16.msra.mxu0 0
    %2602 = vmatprep.subr.bf16.mxu0 0
    %2603 = vmatpush2.bf16.msra.mxu0 0
    %2604 = vmatprep.subr.bf16.mxu0 0
    %2605 = vmatpush2.bf16.msra.mxu0 0
    %2606 = vmatprep.subr.bf16.mxu0 0
    %2607 = vmatpush2.bf16.msra.mxu0 0
    %2608 = vmatprep.subr.bf16.mxu0 0
    %2609 = vmatpush2.bf16.msra.mxu0 0
    %2610 = vmatprep.mubr.bf16.mxu0 0
    %2611 = vmatmul.mubr.bf16.gmra.mxu0 %v2528
    %v2612 = vpop.f32.mrf.mxu0
    %v2613 = vadd.f32 0.0, %v2612
    %v2614 = vpop.f32.mrf.mxu0
    %v2615 = vpop.f32.mrf.mxu0
    %v2616 = vpop.f32.mrf.mxu0
    %2617 = vdwg.mxu0
    %v2618 = vadd.f32 %v2510, %v2613
    %s2619 = scalar_lea.vmem %s2, 384
    %v2620 = vld [vmem:[%s2619] sm:$0xf]
    %v2621 = vld [vmem:[%s2619 + $0x4] sm:$0xf]
    %v2622 = vld [vmem:[%s2619 + $0x8] sm:$0xf]
    %v2623 = vld [vmem:[%s2619 + $0xc] sm:$0xf]
    %v2624 = vld [vmem:[%s2619 + $0x10] sm:$0xf]
    %v2625 = vld [vmem:[%s2619 + $0x14] sm:$0xf]
    %v2626 = vld [vmem:[%s2619 + $0x18] sm:$0xf]
    %v2627 = vld [vmem:[%s2619 + $0x1c] sm:$0xf]
    %v2628 = vld [vmem:[%s2619 + $0x20] sm:$0xf]
    %v2629 = vld [vmem:[%s2619 + $0x24] sm:$0xf]
    %v2630 = vld [vmem:[%s2619 + $0x28] sm:$0xf]
    %v2631 = vld [vmem:[%s2619 + $0x2c] sm:$0xf]
    %v2632 = vld [vmem:[%s2619 + $0x30] sm:$0xf]
    %v2633 = vld [vmem:[%s2619 + $0x34] sm:$0xf]
    %v2634 = vld [vmem:[%s2619 + $0x38] sm:$0xf]
    %v2635 = vld [vmem:[%s2619 + $0x3c] sm:$0xf]
    %v2636 = vrot.slane %v1971, 6
    %v2654 = vunpack.c.l.b16 %v2620
    %v2655 = vunpack.c.l.b16 %v2621
    %v2656 = vunpack.c.l.b16 %v2622
    %v2657 = vunpack.c.l.b16 %v2623
    %v2658 = vunpack.c.l.b16 %v2624
    %v2659 = vunpack.c.l.b16 %v2625
    %v2660 = vunpack.c.l.b16 %v2626
    %v2661 = vunpack.c.l.b16 %v2627
    %v2662 = vunpack.c.l.b16 %v2628
    %v2663 = vunpack.c.l.b16 %v2629
    %v2664 = vunpack.c.l.b16 %v2630
    %v2665 = vunpack.c.l.b16 %v2631
    %v2666 = vunpack.c.l.b16 %v2632
    %v2667 = vunpack.c.l.b16 %v2633
    %v2668 = vunpack.c.l.b16 %v2634
    %v2669 = vunpack.c.l.b16 %v2635
    %v2670 = vpack.c.b16 %v2655, %v2654
    %v2671 = vpack.c.b16 %v2657, %v2656
    %v2672 = vpack.c.b16 %v2659, %v2658
    %v2673 = vpack.c.b16 %v2661, %v2660
    %v2674 = vpack.c.b16 %v2663, %v2662
    %v2675 = vpack.c.b16 %v2665, %v2664
    %v2676 = vpack.c.b16 %v2667, %v2666
    %v2677 = vpack.c.b16 %v2669, %v2668
    %2686 = vmatprep.subr.bf16.mxu0 0
    %2687 = vmatpush1.bf16.msra.mxu0 %v2677
    %2688 = vmatprep.subr.bf16.mxu0 0
    %2689 = vmatpush1.bf16.msra.mxu0 %v2676
    %2690 = vmatprep.subr.bf16.mxu0 0
    %2691 = vmatpush1.bf16.msra.mxu0 %v2675
    %2692 = vmatprep.subr.bf16.mxu0 0
    %2693 = vmatpush1.bf16.msra.mxu0 %v2674
    %2694 = vmatprep.subr.bf16.mxu0 0
    %2695 = vmatpush1.bf16.msra.mxu0 %v2673
    %2696 = vmatprep.subr.bf16.mxu0 0
    %2697 = vmatpush1.bf16.msra.mxu0 %v2672
    %2698 = vmatprep.subr.bf16.mxu0 0
    %2699 = vmatpush1.bf16.msra.mxu0 %v2671
    %2700 = vmatprep.subr.bf16.mxu0 0
    %2701 = vmatpush1.bf16.msra.mxu0 %v2670
    %2702 = vmatprep.subr.bf16.mxu0 0
    %2703 = vmatpush2.bf16.msra.mxu0 0
    %2704 = vmatprep.subr.bf16.mxu0 0
    %2705 = vmatpush2.bf16.msra.mxu0 0
    %2706 = vmatprep.subr.bf16.mxu0 0
    %2707 = vmatpush2.bf16.msra.mxu0 0
    %2708 = vmatprep.subr.bf16.mxu0 0
    %2709 = vmatpush2.bf16.msra.mxu0 0
    %2710 = vmatprep.subr.bf16.mxu0 0
    %2711 = vmatpush2.bf16.msra.mxu0 0
    %2712 = vmatprep.subr.bf16.mxu0 0
    %2713 = vmatpush2.bf16.msra.mxu0 0
    %2714 = vmatprep.subr.bf16.mxu0 0
    %2715 = vmatpush2.bf16.msra.mxu0 0
    %2716 = vmatprep.subr.bf16.mxu0 0
    %2717 = vmatpush2.bf16.msra.mxu0 0
    %2718 = vmatprep.mubr.bf16.mxu0 0
    %2719 = vmatmul.mubr.bf16.gmra.mxu0 %v2636
    %v2720 = vpop.f32.mrf.mxu0
    %v2721 = vadd.f32 0.0, %v2720
    %v2722 = vpop.f32.mrf.mxu0
    %v2723 = vpop.f32.mrf.mxu0
    %v2724 = vpop.f32.mrf.mxu0
    %2725 = vdwg.mxu0
    %v2726 = vadd.f32 %v2618, %v2721
    %s2727 = scalar_lea.vmem %s2, 448
    %v2728 = vld [vmem:[%s2727] sm:$0xf]
    %v2729 = vld [vmem:[%s2727 + $0x4] sm:$0xf]
    %v2730 = vld [vmem:[%s2727 + $0x8] sm:$0xf]
    %v2731 = vld [vmem:[%s2727 + $0xc] sm:$0xf]
    %v2732 = vld [vmem:[%s2727 + $0x10] sm:$0xf]
    %v2733 = vld [vmem:[%s2727 + $0x14] sm:$0xf]
    %v2734 = vld [vmem:[%s2727 + $0x18] sm:$0xf]
    %v2735 = vld [vmem:[%s2727 + $0x1c] sm:$0xf]
    %v2736 = vld [vmem:[%s2727 + $0x20] sm:$0xf]
    %v2737 = vld [vmem:[%s2727 + $0x24] sm:$0xf]
    %v2738 = vld [vmem:[%s2727 + $0x28] sm:$0xf]
    %v2739 = vld [vmem:[%s2727 + $0x2c] sm:$0xf]
    %v2740 = vld [vmem:[%s2727 + $0x30] sm:$0xf]
    %v2741 = vld [vmem:[%s2727 + $0x34] sm:$0xf]
    %v2742 = vld [vmem:[%s2727 + $0x38] sm:$0xf]
    %v2743 = vld [vmem:[%s2727 + $0x3c] sm:$0xf]
    %v2744 = vrot.slane %v1971, 7
    %v2762 = vunpack.c.l.b16 %v2728
    %v2763 = vunpack.c.l.b16 %v2729
    %v2764 = vunpack.c.l.b16 %v2730
    %v2765 = vunpack.c.l.b16 %v2731
    %v2766 = vunpack.c.l.b16 %v2732
    %v2767 = vunpack.c.l.b16 %v2733
    %v2768 = vunpack.c.l.b16 %v2734
    %v2769 = vunpack.c.l.b16 %v2735
    %v2770 = vunpack.c.l.b16 %v2736
    %v2771 = vunpack.c.l.b16 %v2737
    %v2772 = vunpack.c.l.b16 %v2738
    %v2773 = vunpack.c.l.b16 %v2739
    %v2774 = vunpack.c.l.b16 %v2740
    %v2775 = vunpack.c.l.b16 %v2741
    %v2776 = vunpack.c.l.b16 %v2742
    %v2777 = vunpack.c.l.b16 %v2743
    %v2778 = vpack.c.b16 %v2763, %v2762
    %v2779 = vpack.c.b16 %v2765, %v2764
    %v2780 = vpack.c.b16 %v2767, %v2766
    %v2781 = vpack.c.b16 %v2769, %v2768
    %v2782 = vpack.c.b16 %v2771, %v2770
    %v2783 = vpack.c.b16 %v2773, %v2772
    %v2784 = vpack.c.b16 %v2775, %v2774
    %v2785 = vpack.c.b16 %v2777, %v2776
    %2794 = vmatprep.subr.bf16.mxu0 0
    %2795 = vmatpush1.bf16.msra.mxu0 %v2785
    %2796 = vmatprep.subr.bf16.mxu0 0
    %2797 = vmatpush1.bf16.msra.mxu0 %v2784
    %2798 = vmatprep.subr.bf16.mxu0 0
    %2799 = vmatpush1.bf16.msra.mxu0 %v2783
    %2800 = vmatprep.subr.bf16.mxu0 0
    %2801 = vmatpush1.bf16.msra.mxu0 %v2782
    %2802 = vmatprep.subr.bf16.mxu0 0
    %2803 = vmatpush1.bf16.msra.mxu0 %v2781
    %2804 = vmatprep.subr.bf16.mxu0 0
    %2805 = vmatpush1.bf16.msra.mxu0 %v2780
    %2806 = vmatprep.subr.bf16.mxu0 0
    %2807 = vmatpush1.bf16.msra.mxu0 %v2779
    %2808 = vmatprep.subr.bf16.mxu0 0
    %2809 = vmatpush1.bf16.msra.mxu0 %v2778
    %2810 = vmatprep.subr.bf16.mxu0 0
    %2811 = vmatpush2.bf16.msra.mxu0 0
    %2812 = vmatprep.subr.bf16.mxu0 0
    %2813 = vmatpush2.bf16.msra.mxu0 0
    %2814 = vmatprep.subr.bf16.mxu0 0
    %2815 = vmatpush2.bf16.msra.mxu0 0
    %2816 = vmatprep.subr.bf16.mxu0 0
    %2817 = vmatpush2.bf16.msra.mxu0 0
    %2818 = vmatprep.subr.bf16.mxu0 0
    %2819 = vmatpush2.bf16.msra.mxu0 0
    %2820 = vmatprep.subr.bf16.mxu0 0
    %2821 = vmatpush2.bf16.msra.mxu0 0
    %2822 = vmatprep.subr.bf16.mxu0 0
    %2823 = vmatpush2.bf16.msra.mxu0 0
    %2824 = vmatprep.subr.bf16.mxu0 0
    %2825 = vmatpush2.bf16.msra.mxu0 0
    %2826 = vmatprep.mubr.bf16.mxu0 0
    %2827 = vmatmul.mubr.bf16.gmra.mxu0 %v2744
    %v2828 = vpop.f32.mrf.mxu0
    %v2829 = vadd.f32 0.0, %v2828
    %v2830 = vpop.f32.mrf.mxu0
    %v2831 = vpop.f32.mrf.mxu0
    %v2832 = vpop.f32.mrf.mxu0
    %2833 = vdwg.mxu0
    %v2834 = vadd.f32 %v2726, %v2829
    %s2835 = scalar_lea.vmem %s2, 512
    %v2836 = vld [vmem:[%s2835] sm:$0xf]
    %v2837 = vld [vmem:[%s2835 + $0x4] sm:$0xf]
    %v2838 = vld [vmem:[%s2835 + $0x8] sm:$0xf]
    %v2839 = vld [vmem:[%s2835 + $0xc] sm:$0xf]
    %v2840 = vld [vmem:[%s2835 + $0x10] sm:$0xf]
    %v2841 = vld [vmem:[%s2835 + $0x14] sm:$0xf]
    %v2842 = vld [vmem:[%s2835 + $0x18] sm:$0xf]
    %v2843 = vld [vmem:[%s2835 + $0x1c] sm:$0xf]
    %v2844 = vld [vmem:[%s2835 + $0x20] sm:$0xf]
    %v2845 = vld [vmem:[%s2835 + $0x24] sm:$0xf]
    %v2846 = vld [vmem:[%s2835 + $0x28] sm:$0xf]
    %v2847 = vld [vmem:[%s2835 + $0x2c] sm:$0xf]
    %v2848 = vld [vmem:[%s2835 + $0x30] sm:$0xf]
    %v2849 = vld [vmem:[%s2835 + $0x34] sm:$0xf]
    %v2850 = vld [vmem:[%s2835 + $0x38] sm:$0xf]
    %v2851 = vld [vmem:[%s2835 + $0x3c] sm:$0xf]
    %v2868 = vunpack.c.l.b16 %v2836
    %v2869 = vunpack.c.l.b16 %v2837
    %v2870 = vunpack.c.l.b16 %v2838
    %v2871 = vunpack.c.l.b16 %v2839
    %v2872 = vunpack.c.l.b16 %v2840
    %v2873 = vunpack.c.l.b16 %v2841
    %v2874 = vunpack.c.l.b16 %v2842
    %v2875 = vunpack.c.l.b16 %v2843
    %v2876 = vunpack.c.l.b16 %v2844
    %v2877 = vunpack.c.l.b16 %v2845
    %v2878 = vunpack.c.l.b16 %v2846
    %v2879 = vunpack.c.l.b16 %v2847
    %v2880 = vunpack.c.l.b16 %v2848
    %v2881 = vunpack.c.l.b16 %v2849
    %v2882 = vunpack.c.l.b16 %v2850
    %v2883 = vunpack.c.l.b16 %v2851
    %v2884 = vpack.c.b16 %v2869, %v2868
    %v2885 = vpack.c.b16 %v2871, %v2870
    %v2886 = vpack.c.b16 %v2873, %v2872
    %v2887 = vpack.c.b16 %v2875, %v2874
    %v2888 = vpack.c.b16 %v2877, %v2876
    %v2889 = vpack.c.b16 %v2879, %v2878
    %v2890 = vpack.c.b16 %v2881, %v2880
    %v2891 = vpack.c.b16 %v2883, %v2882
    %2900 = vmatprep.subr.bf16.mxu0 0
    %2901 = vmatpush1.bf16.msra.mxu0 %v2891
    %2902 = vmatprep.subr.bf16.mxu0 0
    %2903 = vmatpush1.bf16.msra.mxu0 %v2890
    %2904 = vmatprep.subr.bf16.mxu0 0
    %2905 = vmatpush1.bf16.msra.mxu0 %v2889
    %2906 = vmatprep.subr.bf16.mxu0 0
    %2907 = vmatpush1.bf16.msra.mxu0 %v2888
    %2908 = vmatprep.subr.bf16.mxu0 0
    %2909 = vmatpush1.bf16.msra.mxu0 %v2887
    %2910 = vmatprep.subr.bf16.mxu0 0
    %2911 = vmatpush1.bf16.msra.mxu0 %v2886
    %2912 = vmatprep.subr.bf16.mxu0 0
    %2913 = vmatpush1.bf16.msra.mxu0 %v2885
    %2914 = vmatprep.subr.bf16.mxu0 0
    %2915 = vmatpush1.bf16.msra.mxu0 %v2884
    %2916 = vmatprep.subr.bf16.mxu0 0
    %2917 = vmatpush2.bf16.msra.mxu0 0
    %2918 = vmatprep.subr.bf16.mxu0 0
    %2919 = vmatpush2.bf16.msra.mxu0 0
    %2920 = vmatprep.subr.bf16.mxu0 0
    %2921 = vmatpush2.bf16.msra.mxu0 0
    %2922 = vmatprep.subr.bf16.mxu0 0
    %2923 = vmatpush2.bf16.msra.mxu0 0
    %2924 = vmatprep.subr.bf16.mxu0 0
    %2925 = vmatpush2.bf16.msra.mxu0 0
    %2926 = vmatprep.subr.bf16.mxu0 0
    %2927 = vmatpush2.bf16.msra.mxu0 0
    %2928 = vmatprep.subr.bf16.mxu0 0
    %2929 = vmatpush2.bf16.msra.mxu0 0
    %2930 = vmatprep.subr.bf16.mxu0 0
    %2931 = vmatpush2.bf16.msra.mxu0 0
    %2932 = vmatprep.mubr.bf16.mxu0 0
    %2933 = vmatmul.mubr.bf16.gmra.mxu0 %v1972
    %v2934 = vpop.f32.mrf.mxu0
    %v2935 = vadd.f32 0.0, %v2934
    %v2936 = vpop.f32.mrf.mxu0
    %v2937 = vpop.f32.mrf.mxu0
    %v2938 = vpop.f32.mrf.mxu0
    %2939 = vdwg.mxu0
    %v2940 = vadd.f32 %v2834, %v2935
    %s2941 = scalar_lea.vmem %s2, 576
    %v2942 = vld [vmem:[%s2941] sm:$0xf]
    %v2943 = vld [vmem:[%s2941 + $0x4] sm:$0xf]
    %v2944 = vld [vmem:[%s2941 + $0x8] sm:$0xf]
    %v2945 = vld [vmem:[%s2941 + $0xc] sm:$0xf]
    %v2946 = vld [vmem:[%s2941 + $0x10] sm:$0xf]
    %v2947 = vld [vmem:[%s2941 + $0x14] sm:$0xf]
    %v2948 = vld [vmem:[%s2941 + $0x18] sm:$0xf]
    %v2949 = vld [vmem:[%s2941 + $0x1c] sm:$0xf]
    %v2950 = vld [vmem:[%s2941 + $0x20] sm:$0xf]
    %v2951 = vld [vmem:[%s2941 + $0x24] sm:$0xf]
    %v2952 = vld [vmem:[%s2941 + $0x28] sm:$0xf]
    %v2953 = vld [vmem:[%s2941 + $0x2c] sm:$0xf]
    %v2954 = vld [vmem:[%s2941 + $0x30] sm:$0xf]
    %v2955 = vld [vmem:[%s2941 + $0x34] sm:$0xf]
    %v2956 = vld [vmem:[%s2941 + $0x38] sm:$0xf]
    %v2957 = vld [vmem:[%s2941 + $0x3c] sm:$0xf]
    %v2959 = vrot.slane %v1972, 1
    %v2977 = vunpack.c.l.b16 %v2942
    %v2978 = vunpack.c.l.b16 %v2943
    %v2979 = vunpack.c.l.b16 %v2944
    %v2980 = vunpack.c.l.b16 %v2945
    %v2981 = vunpack.c.l.b16 %v2946
    %v2982 = vunpack.c.l.b16 %v2947
    %v2983 = vunpack.c.l.b16 %v2948
    %v2984 = vunpack.c.l.b16 %v2949
    %v2985 = vunpack.c.l.b16 %v2950
    %v2986 = vunpack.c.l.b16 %v2951
    %v2987 = vunpack.c.l.b16 %v2952
    %v2988 = vunpack.c.l.b16 %v2953
    %v2989 = vunpack.c.l.b16 %v2954
    %v2990 = vunpack.c.l.b16 %v2955
    %v2991 = vunpack.c.l.b16 %v2956
    %v2992 = vunpack.c.l.b16 %v2957
    %v2993 = vpack.c.b16 %v2978, %v2977
    %v2994 = vpack.c.b16 %v2980, %v2979
    %v2995 = vpack.c.b16 %v2982, %v2981
    %v2996 = vpack.c.b16 %v2984, %v2983
    %v2997 = vpack.c.b16 %v2986, %v2985
    %v2998 = vpack.c.b16 %v2988, %v2987
    %v2999 = vpack.c.b16 %v2990, %v2989
    %v3000 = vpack.c.b16 %v2992, %v2991
    %3009 = vmatprep.subr.bf16.mxu0 0
    %3010 = vmatpush1.bf16.msra.mxu0 %v3000
    %3011 = vmatprep.subr.bf16.mxu0 0
    %3012 = vmatpush1.bf16.msra.mxu0 %v2999
    %3013 = vmatprep.subr.bf16.mxu0 0
    %3014 = vmatpush1.bf16.msra.mxu0 %v2998
    %3015 = vmatprep.subr.bf16.mxu0 0
    %3016 = vmatpush1.bf16.msra.mxu0 %v2997
    %3017 = vmatprep.subr.bf16.mxu0 0
    %3018 = vmatpush1.bf16.msra.mxu0 %v2996
    %3019 = vmatprep.subr.bf16.mxu0 0
    %3020 = vmatpush1.bf16.msra.mxu0 %v2995
    %3021 = vmatprep.subr.bf16.mxu0 0
    %3022 = vmatpush1.bf16.msra.mxu0 %v2994
    %3023 = vmatprep.subr.bf16.mxu0 0
    %3024 = vmatpush1.bf16.msra.mxu0 %v2993
    %3025 = vmatprep.subr.bf16.mxu0 0
    %3026 = vmatpush2.bf16.msra.mxu0 0
    %3027 = vmatprep.subr.bf16.mxu0 0
    %3028 = vmatpush2.bf16.msra.mxu0 0
    %3029 = vmatprep.subr.bf16.mxu0 0
    %3030 = vmatpush2.bf16.msra.mxu0 0
    %3031 = vmatprep.subr.bf16.mxu0 0
    %3032 = vmatpush2.bf16.msra.mxu0 0
    %3033 = vmatprep.subr.bf16.mxu0 0
    %3034 = vmatpush2.bf16.msra.mxu0 0
    %3035 = vmatprep.subr.bf16.mxu0 0
    %3036 = vmatpush2.bf16.msra.mxu0 0
    %3037 = vmatprep.subr.bf16.mxu0 0
    %3038 = vmatpush2.bf16.msra.mxu0 0
    %3039 = vmatprep.subr.bf16.mxu0 0
    %3040 = vmatpush2.bf16.msra.mxu0 0
    %3041 = vmatprep.mubr.bf16.mxu0 0
    %3042 = vmatmul.mubr.bf16.gmra.mxu0 %v2959
    %v3043 = vpop.f32.mrf.mxu0
    %v3044 = vadd.f32 0.0, %v3043
    %v3045 = vpop.f32.mrf.mxu0
    %v3046 = vpop.f32.mrf.mxu0
    %v3047 = vpop.f32.mrf.mxu0
    %3048 = vdwg.mxu0
    %v3049 = vadd.f32 %v2940, %v3044
    %s3050 = scalar_lea.vmem %s2, 640
    %v3051 = vld [vmem:[%s3050] sm:$0xf]
    %v3052 = vld [vmem:[%s3050 + $0x4] sm:$0xf]
    %v3053 = vld [vmem:[%s3050 + $0x8] sm:$0xf]
    %v3054 = vld [vmem:[%s3050 + $0xc] sm:$0xf]
    %v3055 = vld [vmem:[%s3050 + $0x10] sm:$0xf]
    %v3056 = vld [vmem:[%s3050 + $0x14] sm:$0xf]
    %v3057 = vld [vmem:[%s3050 + $0x18] sm:$0xf]
    %v3058 = vld [vmem:[%s3050 + $0x1c] sm:$0xf]
    %v3059 = vld [vmem:[%s3050 + $0x20] sm:$0xf]
    %v3060 = vld [vmem:[%s3050 + $0x24] sm:$0xf]
    %v3061 = vld [vmem:[%s3050 + $0x28] sm:$0xf]
    %v3062 = vld [vmem:[%s3050 + $0x2c] sm:$0xf]
    %v3063 = vld [vmem:[%s3050 + $0x30] sm:$0xf]
    %v3064 = vld [vmem:[%s3050 + $0x34] sm:$0xf]
    %v3065 = vld [vmem:[%s3050 + $0x38] sm:$0xf]
    %v3066 = vld [vmem:[%s3050 + $0x3c] sm:$0xf]
    %v3067 = vrot.slane %v1972, 2
    %v3085 = vunpack.c.l.b16 %v3051
    %v3086 = vunpack.c.l.b16 %v3052
    %v3087 = vunpack.c.l.b16 %v3053
    %v3088 = vunpack.c.l.b16 %v3054
    %v3089 = vunpack.c.l.b16 %v3055
    %v3090 = vunpack.c.l.b16 %v3056
    %v3091 = vunpack.c.l.b16 %v3057
    %v3092 = vunpack.c.l.b16 %v3058
    %v3093 = vunpack.c.l.b16 %v3059
    %v3094 = vunpack.c.l.b16 %v3060
    %v3095 = vunpack.c.l.b16 %v3061
    %v3096 = vunpack.c.l.b16 %v3062
    %v3097 = vunpack.c.l.b16 %v3063
    %v3098 = vunpack.c.l.b16 %v3064
    %v3099 = vunpack.c.l.b16 %v3065
    %v3100 = vunpack.c.l.b16 %v3066
    %v3101 = vpack.c.b16 %v3086, %v3085
    %v3102 = vpack.c.b16 %v3088, %v3087
    %v3103 = vpack.c.b16 %v3090, %v3089
    %v3104 = vpack.c.b16 %v3092, %v3091
    %v3105 = vpack.c.b16 %v3094, %v3093
    %v3106 = vpack.c.b16 %v3096, %v3095
    %v3107 = vpack.c.b16 %v3098, %v3097
    %v3108 = vpack.c.b16 %v3100, %v3099
    %3117 = vmatprep.subr.bf16.mxu0 0
    %3118 = vmatpush1.bf16.msra.mxu0 %v3108
    %3119 = vmatprep.subr.bf16.mxu0 0
    %3120 = vmatpush1.bf16.msra.mxu0 %v3107
    %3121 = vmatprep.subr.bf16.mxu0 0
    %3122 = vmatpush1.bf16.msra.mxu0 %v3106
    %3123 = vmatprep.subr.bf16.mxu0 0
    %3124 = vmatpush1.bf16.msra.mxu0 %v3105
    %3125 = vmatprep.subr.bf16.mxu0 0
    %3126 = vmatpush1.bf16.msra.mxu0 %v3104
    %3127 = vmatprep.subr.bf16.mxu0 0
    %3128 = vmatpush1.bf16.msra.mxu0 %v3103
    %3129 = vmatprep.subr.bf16.mxu0 0
    %3130 = vmatpush1.bf16.msra.mxu0 %v3102
    %3131 = vmatprep.subr.bf16.mxu0 0
    %3132 = vmatpush1.bf16.msra.mxu0 %v3101
    %3133 = vmatprep.subr.bf16.mxu0 0
    %3134 = vmatpush2.bf16.msra.mxu0 0
    %3135 = vmatprep.subr.bf16.mxu0 0
    %3136 = vmatpush2.bf16.msra.mxu0 0
    %3137 = vmatprep.subr.bf16.mxu0 0
    %3138 = vmatpush2.bf16.msra.mxu0 0
    %3139 = vmatprep.subr.bf16.mxu0 0
    %3140 = vmatpush2.bf16.msra.mxu0 0
    %3141 = vmatprep.subr.bf16.mxu0 0
    %3142 = vmatpush2.bf16.msra.mxu0 0
    %3143 = vmatprep.subr.bf16.mxu0 0
    %3144 = vmatpush2.bf16.msra.mxu0 0
    %3145 = vmatprep.subr.bf16.mxu0 0
    %3146 = vmatpush2.bf16.msra.mxu0 0
    %3147 = vmatprep.subr.bf16.mxu0 0
    %3148 = vmatpush2.bf16.msra.mxu0 0
    %3149 = vmatprep.mubr.bf16.mxu0 0
    %3150 = vmatmul.mubr.bf16.gmra.mxu0 %v3067
    %v3151 = vpop.f32.mrf.mxu0
    %v3152 = vadd.f32 0.0, %v3151
    %v3153 = vpop.f32.mrf.mxu0
    %v3154 = vpop.f32.mrf.mxu0
    %v3155 = vpop.f32.mrf.mxu0
    %3156 = vdwg.mxu0
    %v3157 = vadd.f32 %v3049, %v3152
    %s3158 = scalar_lea.vmem %s2, 704
    %v3159 = vld [vmem:[%s3158] sm:$0xf]
    %v3160 = vld [vmem:[%s3158 + $0x4] sm:$0xf]
    %v3161 = vld [vmem:[%s3158 + $0x8] sm:$0xf]
    %v3162 = vld [vmem:[%s3158 + $0xc] sm:$0xf]
    %v3163 = vld [vmem:[%s3158 + $0x10] sm:$0xf]
    %v3164 = vld [vmem:[%s3158 + $0x14] sm:$0xf]
    %v3165 = vld [vmem:[%s3158 + $0x18] sm:$0xf]
    %v3166 = vld [vmem:[%s3158 + $0x1c] sm:$0xf]
    %v3167 = vld [vmem:[%s3158 + $0x20] sm:$0xf]
    %v3168 = vld [vmem:[%s3158 + $0x24] sm:$0xf]
    %v3169 = vld [vmem:[%s3158 + $0x28] sm:$0xf]
    %v3170 = vld [vmem:[%s3158 + $0x2c] sm:$0xf]
    %v3171 = vld [vmem:[%s3158 + $0x30] sm:$0xf]
    %v3172 = vld [vmem:[%s3158 + $0x34] sm:$0xf]
    %v3173 = vld [vmem:[%s3158 + $0x38] sm:$0xf]
    %v3174 = vld [vmem:[%s3158 + $0x3c] sm:$0xf]
    %v3175 = vrot.slane %v1972, 3
    %v3193 = vunpack.c.l.b16 %v3159
    %v3194 = vunpack.c.l.b16 %v3160
    %v3195 = vunpack.c.l.b16 %v3161
    %v3196 = vunpack.c.l.b16 %v3162
    %v3197 = vunpack.c.l.b16 %v3163
    %v3198 = vunpack.c.l.b16 %v3164
    %v3199 = vunpack.c.l.b16 %v3165
    %v3200 = vunpack.c.l.b16 %v3166
    %v3201 = vunpack.c.l.b16 %v3167
    %v3202 = vunpack.c.l.b16 %v3168
    %v3203 = vunpack.c.l.b16 %v3169
    %v3204 = vunpack.c.l.b16 %v3170
    %v3205 = vunpack.c.l.b16 %v3171
    %v3206 = vunpack.c.l.b16 %v3172
    %v3207 = vunpack.c.l.b16 %v3173
    %v3208 = vunpack.c.l.b16 %v3174
    %v3209 = vpack.c.b16 %v3194, %v3193
    %v3210 = vpack.c.b16 %v3196, %v3195
    %v3211 = vpack.c.b16 %v3198, %v3197
    %v3212 = vpack.c.b16 %v3200, %v3199
    %v3213 = vpack.c.b16 %v3202, %v3201
    %v3214 = vpack.c.b16 %v3204, %v3203
    %v3215 = vpack.c.b16 %v3206, %v3205
    %v3216 = vpack.c.b16 %v3208, %v3207
    %3225 = vmatprep.subr.bf16.mxu0 0
    %3226 = vmatpush1.bf16.msra.mxu0 %v3216
    %3227 = vmatprep.subr.bf16.mxu0 0
    %3228 = vmatpush1.bf16.msra.mxu0 %v3215
    %3229 = vmatprep.subr.bf16.mxu0 0
    %3230 = vmatpush1.bf16.msra.mxu0 %v3214
    %3231 = vmatprep.subr.bf16.mxu0 0
    %3232 = vmatpush1.bf16.msra.mxu0 %v3213
    %3233 = vmatprep.subr.bf16.mxu0 0
    %3234 = vmatpush1.bf16.msra.mxu0 %v3212
    %3235 = vmatprep.subr.bf16.mxu0 0
    %3236 = vmatpush1.bf16.msra.mxu0 %v3211
    %3237 = vmatprep.subr.bf16.mxu0 0
    %3238 = vmatpush1.bf16.msra.mxu0 %v3210
    %3239 = vmatprep.subr.bf16.mxu0 0
    %3240 = vmatpush1.bf16.msra.mxu0 %v3209
    %3241 = vmatprep.subr.bf16.mxu0 0
    %3242 = vmatpush2.bf16.msra.mxu0 0
    %3243 = vmatprep.subr.bf16.mxu0 0
    %3244 = vmatpush2.bf16.msra.mxu0 0
    %3245 = vmatprep.subr.bf16.mxu0 0
    %3246 = vmatpush2.bf16.msra.mxu0 0
    %3247 = vmatprep.subr.bf16.mxu0 0
    %3248 = vmatpush2.bf16.msra.mxu0 0
    %3249 = vmatprep.subr.bf16.mxu0 0
    %3250 = vmatpush2.bf16.msra.mxu0 0
    %3251 = vmatprep.subr.bf16.mxu0 0
    %3252 = vmatpush2.bf16.msra.mxu0 0
    %3253 = vmatprep.subr.bf16.mxu0 0
    %3254 = vmatpush2.bf16.msra.mxu0 0
    %3255 = vmatprep.subr.bf16.mxu0 0
    %3256 = vmatpush2.bf16.msra.mxu0 0
    %3257 = vmatprep.mubr.bf16.mxu0 0
    %3258 = vmatmul.mubr.bf16.gmra.mxu0 %v3175
    %v3259 = vpop.f32.mrf.mxu0
    %v3260 = vadd.f32 0.0, %v3259
    %v3261 = vpop.f32.mrf.mxu0
    %v3262 = vpop.f32.mrf.mxu0
    %v3263 = vpop.f32.mrf.mxu0
    %3264 = vdwg.mxu0
    %v3265 = vadd.f32 %v3157, %v3260
    %s3266 = scalar_lea.vmem %s2, 768
    %v3267 = vld [vmem:[%s3266] sm:$0xf]
    %v3268 = vld [vmem:[%s3266 + $0x4] sm:$0xf]
    %v3269 = vld [vmem:[%s3266 + $0x8] sm:$0xf]
    %v3270 = vld [vmem:[%s3266 + $0xc] sm:$0xf]
    %v3271 = vld [vmem:[%s3266 + $0x10] sm:$0xf]
    %v3272 = vld [vmem:[%s3266 + $0x14] sm:$0xf]
    %v3273 = vld [vmem:[%s3266 + $0x18] sm:$0xf]
    %v3274 = vld [vmem:[%s3266 + $0x1c] sm:$0xf]
    %v3275 = vld [vmem:[%s3266 + $0x20] sm:$0xf]
    %v3276 = vld [vmem:[%s3266 + $0x24] sm:$0xf]
    %v3277 = vld [vmem:[%s3266 + $0x28] sm:$0xf]
    %v3278 = vld [vmem:[%s3266 + $0x2c] sm:$0xf]
    %v3279 = vld [vmem:[%s3266 + $0x30] sm:$0xf]
    %v3280 = vld [vmem:[%s3266 + $0x34] sm:$0xf]
    %v3281 = vld [vmem:[%s3266 + $0x38] sm:$0xf]
    %v3282 = vld [vmem:[%s3266 + $0x3c] sm:$0xf]
    %v3283 = vrot.slane %v1972, 4
    %v3301 = vunpack.c.l.b16 %v3267
    %v3302 = vunpack.c.l.b16 %v3268
    %v3303 = vunpack.c.l.b16 %v3269
    %v3304 = vunpack.c.l.b16 %v3270
    %v3305 = vunpack.c.l.b16 %v3271
    %v3306 = vunpack.c.l.b16 %v3272
    %v3307 = vunpack.c.l.b16 %v3273
    %v3308 = vunpack.c.l.b16 %v3274
    %v3309 = vunpack.c.l.b16 %v3275
    %v3310 = vunpack.c.l.b16 %v3276
    %v3311 = vunpack.c.l.b16 %v3277
    %v3312 = vunpack.c.l.b16 %v3278
    %v3313 = vunpack.c.l.b16 %v3279
    %v3314 = vunpack.c.l.b16 %v3280
    %v3315 = vunpack.c.l.b16 %v3281
    %v3316 = vunpack.c.l.b16 %v3282
    %v3317 = vpack.c.b16 %v3302, %v3301
    %v3318 = vpack.c.b16 %v3304, %v3303
    %v3319 = vpack.c.b16 %v3306, %v3305
    %v3320 = vpack.c.b16 %v3308, %v3307
    %v3321 = vpack.c.b16 %v3310, %v3309
    %v3322 = vpack.c.b16 %v3312, %v3311
    %v3323 = vpack.c.b16 %v3314, %v3313
    %v3324 = vpack.c.b16 %v3316, %v3315
    %3333 = vmatprep.subr.bf16.mxu0 0
    %3334 = vmatpush1.bf16.msra.mxu0 %v3324
    %3335 = vmatprep.subr.bf16.mxu0 0
    %3336 = vmatpush1.bf16.msra.mxu0 %v3323
    %3337 = vmatprep.subr.bf16.mxu0 0
    %3338 = vmatpush1.bf16.msra.mxu0 %v3322
    %3339 = vmatprep.subr.bf16.mxu0 0
    %3340 = vmatpush1.bf16.msra.mxu0 %v3321
    %3341 = vmatprep.subr.bf16.mxu0 0
    %3342 = vmatpush1.bf16.msra.mxu0 %v3320
    %3343 = vmatprep.subr.bf16.mxu0 0
    %3344 = vmatpush1.bf16.msra.mxu0 %v3319
    %3345 = vmatprep.subr.bf16.mxu0 0
    %3346 = vmatpush1.bf16.msra.mxu0 %v3318
    %3347 = vmatprep.subr.bf16.mxu0 0
    %3348 = vmatpush1.bf16.msra.mxu0 %v3317
    %3349 = vmatprep.subr.bf16.mxu0 0
    %3350 = vmatpush2.bf16.msra.mxu0 0
    %3351 = vmatprep.subr.bf16.mxu0 0
    %3352 = vmatpush2.bf16.msra.mxu0 0
    %3353 = vmatprep.subr.bf16.mxu0 0
    %3354 = vmatpush2.bf16.msra.mxu0 0
    %3355 = vmatprep.subr.bf16.mxu0 0
    %3356 = vmatpush2.bf16.msra.mxu0 0
    %3357 = vmatprep.subr.bf16.mxu0 0
    %3358 = vmatpush2.bf16.msra.mxu0 0
    %3359 = vmatprep.subr.bf16.mxu0 0
    %3360 = vmatpush2.bf16.msra.mxu0 0
    %3361 = vmatprep.subr.bf16.mxu0 0
    %3362 = vmatpush2.bf16.msra.mxu0 0
    %3363 = vmatprep.subr.bf16.mxu0 0
    %3364 = vmatpush2.bf16.msra.mxu0 0
    %3365 = vmatprep.mubr.bf16.mxu0 0
    %3366 = vmatmul.mubr.bf16.gmra.mxu0 %v3283
    %v3367 = vpop.f32.mrf.mxu0
    %v3368 = vadd.f32 0.0, %v3367
    %v3369 = vpop.f32.mrf.mxu0
    %v3370 = vpop.f32.mrf.mxu0
    %v3371 = vpop.f32.mrf.mxu0
    %3372 = vdwg.mxu0
    %v3373 = vadd.f32 %v3265, %v3368
    %s3374 = scalar_lea.vmem %s2, 832
    %v3375 = vld [vmem:[%s3374] sm:$0xf]
    %v3376 = vld [vmem:[%s3374 + $0x4] sm:$0xf]
    %v3377 = vld [vmem:[%s3374 + $0x8] sm:$0xf]
    %v3378 = vld [vmem:[%s3374 + $0xc] sm:$0xf]
    %v3379 = vld [vmem:[%s3374 + $0x10] sm:$0xf]
    %v3380 = vld [vmem:[%s3374 + $0x14] sm:$0xf]
    %v3381 = vld [vmem:[%s3374 + $0x18] sm:$0xf]
    %v3382 = vld [vmem:[%s3374 + $0x1c] sm:$0xf]
    %v3383 = vld [vmem:[%s3374 + $0x20] sm:$0xf]
    %v3384 = vld [vmem:[%s3374 + $0x24] sm:$0xf]
    %v3385 = vld [vmem:[%s3374 + $0x28] sm:$0xf]
    %v3386 = vld [vmem:[%s3374 + $0x2c] sm:$0xf]
    %v3387 = vld [vmem:[%s3374 + $0x30] sm:$0xf]
    %v3388 = vld [vmem:[%s3374 + $0x34] sm:$0xf]
    %v3389 = vld [vmem:[%s3374 + $0x38] sm:$0xf]
    %v3390 = vld [vmem:[%s3374 + $0x3c] sm:$0xf]
    %v3391 = vrot.slane %v1972, 5
    %v3409 = vunpack.c.l.b16 %v3375
    %v3410 = vunpack.c.l.b16 %v3376
    %v3411 = vunpack.c.l.b16 %v3377
    %v3412 = vunpack.c.l.b16 %v3378
    %v3413 = vunpack.c.l.b16 %v3379
    %v3414 = vunpack.c.l.b16 %v3380
    %v3415 = vunpack.c.l.b16 %v3381
    %v3416 = vunpack.c.l.b16 %v3382
    %v3417 = vunpack.c.l.b16 %v3383
    %v3418 = vunpack.c.l.b16 %v3384
    %v3419 = vunpack.c.l.b16 %v3385
    %v3420 = vunpack.c.l.b16 %v3386
    %v3421 = vunpack.c.l.b16 %v3387
    %v3422 = vunpack.c.l.b16 %v3388
    %v3423 = vunpack.c.l.b16 %v3389
    %v3424 = vunpack.c.l.b16 %v3390
    %v3425 = vpack.c.b16 %v3410, %v3409
    %v3426 = vpack.c.b16 %v3412, %v3411
    %v3427 = vpack.c.b16 %v3414, %v3413
    %v3428 = vpack.c.b16 %v3416, %v3415
    %v3429 = vpack.c.b16 %v3418, %v3417
    %v3430 = vpack.c.b16 %v3420, %v3419
    %v3431 = vpack.c.b16 %v3422, %v3421
    %v3432 = vpack.c.b16 %v3424, %v3423
    %3441 = vmatprep.subr.bf16.mxu0 0
    %3442 = vmatpush1.bf16.msra.mxu0 %v3432
    %3443 = vmatprep.subr.bf16.mxu0 0
    %3444 = vmatpush1.bf16.msra.mxu0 %v3431
    %3445 = vmatprep.subr.bf16.mxu0 0
    %3446 = vmatpush1.bf16.msra.mxu0 %v3430
    %3447 = vmatprep.subr.bf16.mxu0 0
    %3448 = vmatpush1.bf16.msra.mxu0 %v3429
    %3449 = vmatprep.subr.bf16.mxu0 0
    %3450 = vmatpush1.bf16.msra.mxu0 %v3428
    %3451 = vmatprep.subr.bf16.mxu0 0
    %3452 = vmatpush1.bf16.msra.mxu0 %v3427
    %3453 = vmatprep.subr.bf16.mxu0 0
    %3454 = vmatpush1.bf16.msra.mxu0 %v3426
    %3455 = vmatprep.subr.bf16.mxu0 0
    %3456 = vmatpush1.bf16.msra.mxu0 %v3425
    %3457 = vmatprep.subr.bf16.mxu0 0
    %3458 = vmatpush2.bf16.msra.mxu0 0
    %3459 = vmatprep.subr.bf16.mxu0 0
    %3460 = vmatpush2.bf16.msra.mxu0 0
    %3461 = vmatprep.subr.bf16.mxu0 0
    %3462 = vmatpush2.bf16.msra.mxu0 0
    %3463 = vmatprep.subr.bf16.mxu0 0
    %3464 = vmatpush2.bf16.msra.mxu0 0
    %3465 = vmatprep.subr.bf16.mxu0 0
    %3466 = vmatpush2.bf16.msra.mxu0 0
    %3467 = vmatprep.subr.bf16.mxu0 0
    %3468 = vmatpush2.bf16.msra.mxu0 0
    %3469 = vmatprep.subr.bf16.mxu0 0
    %3470 = vmatpush2.bf16.msra.mxu0 0
    %3471 = vmatprep.subr.bf16.mxu0 0
    %3472 = vmatpush2.bf16.msra.mxu0 0
    %3473 = vmatprep.mubr.bf16.mxu0 0
    %3474 = vmatmul.mubr.bf16.gmra.mxu0 %v3391
    %v3475 = vpop.f32.mrf.mxu0
    %v3476 = vadd.f32 0.0, %v3475
    %v3477 = vpop.f32.mrf.mxu0
    %v3478 = vpop.f32.mrf.mxu0
    %v3479 = vpop.f32.mrf.mxu0
    %3480 = vdwg.mxu0
    %v3481 = vadd.f32 %v3373, %v3476
    %s3482 = scalar_lea.vmem %s2, 896
    %v3483 = vld [vmem:[%s3482] sm:$0xf]
    %v3484 = vld [vmem:[%s3482 + $0x4] sm:$0xf]
    %v3485 = vld [vmem:[%s3482 + $0x8] sm:$0xf]
    %v3486 = vld [vmem:[%s3482 + $0xc] sm:$0xf]
    %v3487 = vld [vmem:[%s3482 + $0x10] sm:$0xf]
    %v3488 = vld [vmem:[%s3482 + $0x14] sm:$0xf]
    %v3489 = vld [vmem:[%s3482 + $0x18] sm:$0xf]
    %v3490 = vld [vmem:[%s3482 + $0x1c] sm:$0xf]
    %v3491 = vld [vmem:[%s3482 + $0x20] sm:$0xf]
    %v3492 = vld [vmem:[%s3482 + $0x24] sm:$0xf]
    %v3493 = vld [vmem:[%s3482 + $0x28] sm:$0xf]
    %v3494 = vld [vmem:[%s3482 + $0x2c] sm:$0xf]
    %v3495 = vld [vmem:[%s3482 + $0x30] sm:$0xf]
    %v3496 = vld [vmem:[%s3482 + $0x34] sm:$0xf]
    %v3497 = vld [vmem:[%s3482 + $0x38] sm:$0xf]
    %v3498 = vld [vmem:[%s3482 + $0x3c] sm:$0xf]
    %v3499 = vrot.slane %v1972, 6
    %v3517 = vunpack.c.l.b16 %v3483
    %v3518 = vunpack.c.l.b16 %v3484
    %v3519 = vunpack.c.l.b16 %v3485
    %v3520 = vunpack.c.l.b16 %v3486
    %v3521 = vunpack.c.l.b16 %v3487
    %v3522 = vunpack.c.l.b16 %v3488
    %v3523 = vunpack.c.l.b16 %v3489
    %v3524 = vunpack.c.l.b16 %v3490
    %v3525 = vunpack.c.l.b16 %v3491
    %v3526 = vunpack.c.l.b16 %v3492
    %v3527 = vunpack.c.l.b16 %v3493
    %v3528 = vunpack.c.l.b16 %v3494
    %v3529 = vunpack.c.l.b16 %v3495
    %v3530 = vunpack.c.l.b16 %v3496
    %v3531 = vunpack.c.l.b16 %v3497
    %v3532 = vunpack.c.l.b16 %v3498
    %v3533 = vpack.c.b16 %v3518, %v3517
    %v3534 = vpack.c.b16 %v3520, %v3519
    %v3535 = vpack.c.b16 %v3522, %v3521
    %v3536 = vpack.c.b16 %v3524, %v3523
    %v3537 = vpack.c.b16 %v3526, %v3525
    %v3538 = vpack.c.b16 %v3528, %v3527
    %v3539 = vpack.c.b16 %v3530, %v3529
    %v3540 = vpack.c.b16 %v3532, %v3531
    %3549 = vmatprep.subr.bf16.mxu0 0
    %3550 = vmatpush1.bf16.msra.mxu0 %v3540
    %3551 = vmatprep.subr.bf16.mxu0 0
    %3552 = vmatpush1.bf16.msra.mxu0 %v3539
    %3553 = vmatprep.subr.bf16.mxu0 0
    %3554 = vmatpush1.bf16.msra.mxu0 %v3538
    %3555 = vmatprep.subr.bf16.mxu0 0
    %3556 = vmatpush1.bf16.msra.mxu0 %v3537
    %3557 = vmatprep.subr.bf16.mxu0 0
    %3558 = vmatpush1.bf16.msra.mxu0 %v3536
    %3559 = vmatprep.subr.bf16.mxu0 0
    %3560 = vmatpush1.bf16.msra.mxu0 %v3535
    %3561 = vmatprep.subr.bf16.mxu0 0
    %3562 = vmatpush1.bf16.msra.mxu0 %v3534
    %3563 = vmatprep.subr.bf16.mxu0 0
    %3564 = vmatpush1.bf16.msra.mxu0 %v3533
    %3565 = vmatprep.subr.bf16.mxu0 0
    %3566 = vmatpush2.bf16.msra.mxu0 0
    %3567 = vmatprep.subr.bf16.mxu0 0
    %3568 = vmatpush2.bf16.msra.mxu0 0
    %3569 = vmatprep.subr.bf16.mxu0 0
    %3570 = vmatpush2.bf16.msra.mxu0 0
    %3571 = vmatprep.subr.bf16.mxu0 0
    %3572 = vmatpush2.bf16.msra.mxu0 0
    %3573 = vmatprep.subr.bf16.mxu0 0
    %3574 = vmatpush2.bf16.msra.mxu0 0
    %3575 = vmatprep.subr.bf16.mxu0 0
    %3576 = vmatpush2.bf16.msra.mxu0 0
    %3577 = vmatprep.subr.bf16.mxu0 0
    %3578 = vmatpush2.bf16.msra.mxu0 0
    %3579 = vmatprep.subr.bf16.mxu0 0
    %3580 = vmatpush2.bf16.msra.mxu0 0
    %3581 = vmatprep.mubr.bf16.mxu0 0
    %3582 = vmatmul.mubr.bf16.gmra.mxu0 %v3499
    %v3583 = vpop.f32.mrf.mxu0
    %v3584 = vadd.f32 0.0, %v3583
    %v3585 = vpop.f32.mrf.mxu0
    %v3586 = vpop.f32.mrf.mxu0
    %v3587 = vpop.f32.mrf.mxu0
    %3588 = vdwg.mxu0
    %v3589 = vadd.f32 %v3481, %v3584
    %s3590 = scalar_lea.vmem %s2, 960
    %v3591 = vld [vmem:[%s3590] sm:$0xf]
    %v3592 = vld [vmem:[%s3590 + $0x4] sm:$0xf]
    %v3593 = vld [vmem:[%s3590 + $0x8] sm:$0xf]
    %v3594 = vld [vmem:[%s3590 + $0xc] sm:$0xf]
    %v3595 = vld [vmem:[%s3590 + $0x10] sm:$0xf]
    %v3596 = vld [vmem:[%s3590 + $0x14] sm:$0xf]
    %v3597 = vld [vmem:[%s3590 + $0x18] sm:$0xf]
    %v3598 = vld [vmem:[%s3590 + $0x1c] sm:$0xf]
    %v3599 = vld [vmem:[%s3590 + $0x20] sm:$0xf]
    %v3600 = vld [vmem:[%s3590 + $0x24] sm:$0xf]
    %v3601 = vld [vmem:[%s3590 + $0x28] sm:$0xf]
    %v3602 = vld [vmem:[%s3590 + $0x2c] sm:$0xf]
    %v3603 = vld [vmem:[%s3590 + $0x30] sm:$0xf]
    %v3604 = vld [vmem:[%s3590 + $0x34] sm:$0xf]
    %v3605 = vld [vmem:[%s3590 + $0x38] sm:$0xf]
    %v3606 = vld [vmem:[%s3590 + $0x3c] sm:$0xf]
    %v3607 = vrot.slane %v1972, 7
    %v3625 = vunpack.c.l.b16 %v3591
    %v3626 = vunpack.c.l.b16 %v3592
    %v3627 = vunpack.c.l.b16 %v3593
    %v3628 = vunpack.c.l.b16 %v3594
    %v3629 = vunpack.c.l.b16 %v3595
    %v3630 = vunpack.c.l.b16 %v3596
    %v3631 = vunpack.c.l.b16 %v3597
    %v3632 = vunpack.c.l.b16 %v3598
    %v3633 = vunpack.c.l.b16 %v3599
    %v3634 = vunpack.c.l.b16 %v3600
    %v3635 = vunpack.c.l.b16 %v3601
    %v3636 = vunpack.c.l.b16 %v3602
    %v3637 = vunpack.c.l.b16 %v3603
    %v3638 = vunpack.c.l.b16 %v3604
    %v3639 = vunpack.c.l.b16 %v3605
    %v3640 = vunpack.c.l.b16 %v3606
    %v3641 = vpack.c.b16 %v3626, %v3625
    %v3642 = vpack.c.b16 %v3628, %v3627
    %v3643 = vpack.c.b16 %v3630, %v3629
    %v3644 = vpack.c.b16 %v3632, %v3631
    %v3645 = vpack.c.b16 %v3634, %v3633
    %v3646 = vpack.c.b16 %v3636, %v3635
    %v3647 = vpack.c.b16 %v3638, %v3637
    %v3648 = vpack.c.b16 %v3640, %v3639
    %3657 = vmatprep.subr.bf16.mxu0 0
    %3658 = vmatpush1.bf16.msra.mxu0 %v3648
    %3659 = vmatprep.subr.bf16.mxu0 0
    %3660 = vmatpush1.bf16.msra.mxu0 %v3647
    %3661 = vmatprep.subr.bf16.mxu0 0
    %3662 = vmatpush1.bf16.msra.mxu0 %v3646
    %3663 = vmatprep.subr.bf16.mxu0 0
    %3664 = vmatpush1.bf16.msra.mxu0 %v3645
    %3665 = vmatprep.subr.bf16.mxu0 0
    %3666 = vmatpush1.bf16.msra.mxu0 %v3644
    %3667 = vmatprep.subr.bf16.mxu0 0
    %3668 = vmatpush1.bf16.msra.mxu0 %v3643
    %3669 = vmatprep.subr.bf16.mxu0 0
    %3670 = vmatpush1.bf16.msra.mxu0 %v3642
    %3671 = vmatprep.subr.bf16.mxu0 0
    %3672 = vmatpush1.bf16.msra.mxu0 %v3641
    %3673 = vmatprep.subr.bf16.mxu0 0
    %3674 = vmatpush2.bf16.msra.mxu0 0
    %3675 = vmatprep.subr.bf16.mxu0 0
    %3676 = vmatpush2.bf16.msra.mxu0 0
    %3677 = vmatprep.subr.bf16.mxu0 0
    %3678 = vmatpush2.bf16.msra.mxu0 0
    %3679 = vmatprep.subr.bf16.mxu0 0
    %3680 = vmatpush2.bf16.msra.mxu0 0
    %3681 = vmatprep.subr.bf16.mxu0 0
    %3682 = vmatpush2.bf16.msra.mxu0 0
    %3683 = vmatprep.subr.bf16.mxu0 0
    %3684 = vmatpush2.bf16.msra.mxu0 0
    %3685 = vmatprep.subr.bf16.mxu0 0
    %3686 = vmatpush2.bf16.msra.mxu0 0
    %3687 = vmatprep.subr.bf16.mxu0 0
    %3688 = vmatpush2.bf16.msra.mxu0 0
    %3689 = vmatprep.mubr.bf16.mxu0 0
    %3690 = vmatmul.mubr.bf16.gmra.mxu0 %v3607
    %v3691 = vpop.f32.mrf.mxu0
    %v3692 = vadd.f32 0.0, %v3691
    %v3693 = vpop.f32.mrf.mxu0
    %v3694 = vpop.f32.mrf.mxu0
    %v3695 = vpop.f32.mrf.mxu0
    %3696 = vdwg.mxu0
    %v3697 = vadd.f32 %v3589, %v3692
    %s3698 = scalar_lea.vmem %s2, 1024
    %v3699 = vld [vmem:[%s3698] sm:$0xf]
    %v3700 = vld [vmem:[%s3698 + $0x4] sm:$0xf]
    %v3701 = vld [vmem:[%s3698 + $0x8] sm:$0xf]
    %v3702 = vld [vmem:[%s3698 + $0xc] sm:$0xf]
    %v3703 = vld [vmem:[%s3698 + $0x10] sm:$0xf]
    %v3704 = vld [vmem:[%s3698 + $0x14] sm:$0xf]
    %v3705 = vld [vmem:[%s3698 + $0x18] sm:$0xf]
    %v3706 = vld [vmem:[%s3698 + $0x1c] sm:$0xf]
    %v3707 = vld [vmem:[%s3698 + $0x20] sm:$0xf]
    %v3708 = vld [vmem:[%s3698 + $0x24] sm:$0xf]
    %v3709 = vld [vmem:[%s3698 + $0x28] sm:$0xf]
    %v3710 = vld [vmem:[%s3698 + $0x2c] sm:$0xf]
    %v3711 = vld [vmem:[%s3698 + $0x30] sm:$0xf]
    %v3712 = vld [vmem:[%s3698 + $0x34] sm:$0xf]
    %v3713 = vld [vmem:[%s3698 + $0x38] sm:$0xf]
    %v3714 = vld [vmem:[%s3698 + $0x3c] sm:$0xf]
    %v3731 = vunpack.c.l.b16 %v3699
    %v3732 = vunpack.c.l.b16 %v3700
    %v3733 = vunpack.c.l.b16 %v3701
    %v3734 = vunpack.c.l.b16 %v3702
    %v3735 = vunpack.c.l.b16 %v3703
    %v3736 = vunpack.c.l.b16 %v3704
    %v3737 = vunpack.c.l.b16 %v3705
    %v3738 = vunpack.c.l.b16 %v3706
    %v3739 = vunpack.c.l.b16 %v3707
    %v3740 = vunpack.c.l.b16 %v3708
    %v3741 = vunpack.c.l.b16 %v3709
    %v3742 = vunpack.c.l.b16 %v3710
    %v3743 = vunpack.c.l.b16 %v3711
    %v3744 = vunpack.c.l.b16 %v3712
    %v3745 = vunpack.c.l.b16 %v3713
    %v3746 = vunpack.c.l.b16 %v3714
    %v3747 = vpack.c.b16 %v3732, %v3731
    %v3748 = vpack.c.b16 %v3734, %v3733
    %v3749 = vpack.c.b16 %v3736, %v3735
    %v3750 = vpack.c.b16 %v3738, %v3737
    %v3751 = vpack.c.b16 %v3740, %v3739
    %v3752 = vpack.c.b16 %v3742, %v3741
    %v3753 = vpack.c.b16 %v3744, %v3743
    %v3754 = vpack.c.b16 %v3746, %v3745
    %3763 = vmatprep.subr.bf16.mxu0 0
    %3764 = vmatpush1.bf16.msra.mxu0 %v3754
    %3765 = vmatprep.subr.bf16.mxu0 0
    %3766 = vmatpush1.bf16.msra.mxu0 %v3753
    %3767 = vmatprep.subr.bf16.mxu0 0
    %3768 = vmatpush1.bf16.msra.mxu0 %v3752
    %3769 = vmatprep.subr.bf16.mxu0 0
    %3770 = vmatpush1.bf16.msra.mxu0 %v3751
    %3771 = vmatprep.subr.bf16.mxu0 0
    %3772 = vmatpush1.bf16.msra.mxu0 %v3750
    %3773 = vmatprep.subr.bf16.mxu0 0
    %3774 = vmatpush1.bf16.msra.mxu0 %v3749
    %3775 = vmatprep.subr.bf16.mxu0 0
    %3776 = vmatpush1.bf16.msra.mxu0 %v3748
    %3777 = vmatprep.subr.bf16.mxu0 0
    %3778 = vmatpush1.bf16.msra.mxu0 %v3747
    %3779 = vmatprep.subr.bf16.mxu0 0
    %3780 = vmatpush2.bf16.msra.mxu0 0
    %3781 = vmatprep.subr.bf16.mxu0 0
    %3782 = vmatpush2.bf16.msra.mxu0 0
    %3783 = vmatprep.subr.bf16.mxu0 0
    %3784 = vmatpush2.bf16.msra.mxu0 0
    %3785 = vmatprep.subr.bf16.mxu0 0
    %3786 = vmatpush2.bf16.msra.mxu0 0
    %3787 = vmatprep.subr.bf16.mxu0 0
    %3788 = vmatpush2.bf16.msra.mxu0 0
    %3789 = vmatprep.subr.bf16.mxu0 0
    %3790 = vmatpush2.bf16.msra.mxu0 0
    %3791 = vmatprep.subr.bf16.mxu0 0
    %3792 = vmatpush2.bf16.msra.mxu0 0
    %3793 = vmatprep.subr.bf16.mxu0 0
    %3794 = vmatpush2.bf16.msra.mxu0 0
    %3795 = vmatprep.mubr.bf16.mxu0 0
    %3796 = vmatmul.mubr.bf16.gmra.mxu0 %v1973
    %v3797 = vpop.f32.mrf.mxu0
    %v3798 = vadd.f32 0.0, %v3797
    %v3799 = vpop.f32.mrf.mxu0
    %v3800 = vpop.f32.mrf.mxu0
    %v3801 = vpop.f32.mrf.mxu0
    %3802 = vdwg.mxu0
    %v3803 = vadd.f32 %v3697, %v3798
    %s3804 = scalar_lea.vmem %s2, 1088
    %v3805 = vld [vmem:[%s3804] sm:$0xf]
    %v3806 = vld [vmem:[%s3804 + $0x4] sm:$0xf]
    %v3807 = vld [vmem:[%s3804 + $0x8] sm:$0xf]
    %v3808 = vld [vmem:[%s3804 + $0xc] sm:$0xf]
    %v3809 = vld [vmem:[%s3804 + $0x10] sm:$0xf]
    %v3810 = vld [vmem:[%s3804 + $0x14] sm:$0xf]
    %v3811 = vld [vmem:[%s3804 + $0x18] sm:$0xf]
    %v3812 = vld [vmem:[%s3804 + $0x1c] sm:$0xf]
    %v3813 = vld [vmem:[%s3804 + $0x20] sm:$0xf]
    %v3814 = vld [vmem:[%s3804 + $0x24] sm:$0xf]
    %v3815 = vld [vmem:[%s3804 + $0x28] sm:$0xf]
    %v3816 = vld [vmem:[%s3804 + $0x2c] sm:$0xf]
    %v3817 = vld [vmem:[%s3804 + $0x30] sm:$0xf]
    %v3818 = vld [vmem:[%s3804 + $0x34] sm:$0xf]
    %v3819 = vld [vmem:[%s3804 + $0x38] sm:$0xf]
    %v3820 = vld [vmem:[%s3804 + $0x3c] sm:$0xf]
    %v3822 = vrot.slane %v1973, 1
    %v3840 = vunpack.c.l.b16 %v3805
    %v3841 = vunpack.c.l.b16 %v3806
    %v3842 = vunpack.c.l.b16 %v3807
    %v3843 = vunpack.c.l.b16 %v3808
    %v3844 = vunpack.c.l.b16 %v3809
    %v3845 = vunpack.c.l.b16 %v3810
    %v3846 = vunpack.c.l.b16 %v3811
    %v3847 = vunpack.c.l.b16 %v3812
    %v3848 = vunpack.c.l.b16 %v3813
    %v3849 = vunpack.c.l.b16 %v3814
    %v3850 = vunpack.c.l.b16 %v3815
    %v3851 = vunpack.c.l.b16 %v3816
    %v3852 = vunpack.c.l.b16 %v3817
    %v3853 = vunpack.c.l.b16 %v3818
    %v3854 = vunpack.c.l.b16 %v3819
    %v3855 = vunpack.c.l.b16 %v3820
    %v3856 = vpack.c.b16 %v3841, %v3840
    %v3857 = vpack.c.b16 %v3843, %v3842
    %v3858 = vpack.c.b16 %v3845, %v3844
    %v3859 = vpack.c.b16 %v3847, %v3846
    %v3860 = vpack.c.b16 %v3849, %v3848
    %v3861 = vpack.c.b16 %v3851, %v3850
    %v3862 = vpack.c.b16 %v3853, %v3852
    %v3863 = vpack.c.b16 %v3855, %v3854
    %3872 = vmatprep.subr.bf16.mxu0 0
    %3873 = vmatpush1.bf16.msra.mxu0 %v3863
    %3874 = vmatprep.subr.bf16.mxu0 0
    %3875 = vmatpush1.bf16.msra.mxu0 %v3862
    %3876 = vmatprep.subr.bf16.mxu0 0
    %3877 = vmatpush1.bf16.msra.mxu0 %v3861
    %3878 = vmatprep.subr.bf16.mxu0 0
    %3879 = vmatpush1.bf16.msra.mxu0 %v3860
    %3880 = vmatprep.subr.bf16.mxu0 0
    %3881 = vmatpush1.bf16.msra.mxu0 %v3859
    %3882 = vmatprep.subr.bf16.mxu0 0
    %3883 = vmatpush1.bf16.msra.mxu0 %v3858
    %3884 = vmatprep.subr.bf16.mxu0 0
    %3885 = vmatpush1.bf16.msra.mxu0 %v3857
    %3886 = vmatprep.subr.bf16.mxu0 0
    %3887 = vmatpush1.bf16.msra.mxu0 %v3856
    %3888 = vmatprep.subr.bf16.mxu0 0
    %3889 = vmatpush2.bf16.msra.mxu0 0
    %3890 = vmatprep.subr.bf16.mxu0 0
    %3891 = vmatpush2.bf16.msra.mxu0 0
    %3892 = vmatprep.subr.bf16.mxu0 0
    %3893 = vmatpush2.bf16.msra.mxu0 0
    %3894 = vmatprep.subr.bf16.mxu0 0
    %3895 = vmatpush2.bf16.msra.mxu0 0
    %3896 = vmatprep.subr.bf16.mxu0 0
    %3897 = vmatpush2.bf16.msra.mxu0 0
    %3898 = vmatprep.subr.bf16.mxu0 0
    %3899 = vmatpush2.bf16.msra.mxu0 0
    %3900 = vmatprep.subr.bf16.mxu0 0
    %3901 = vmatpush2.bf16.msra.mxu0 0
    %3902 = vmatprep.subr.bf16.mxu0 0
    %3903 = vmatpush2.bf16.msra.mxu0 0
    %3904 = vmatprep.mubr.bf16.mxu0 0
    %3905 = vmatmul.mubr.bf16.gmra.mxu0 %v3822
    %v3906 = vpop.f32.mrf.mxu0
    %v3907 = vadd.f32 0.0, %v3906
    %v3908 = vpop.f32.mrf.mxu0
    %v3909 = vpop.f32.mrf.mxu0
    %v3910 = vpop.f32.mrf.mxu0
    %3911 = vdwg.mxu0
    %v3912 = vadd.f32 %v3803, %v3907
    %s3913 = scalar_lea.vmem %s2, 1152
    %v3914 = vld [vmem:[%s3913] sm:$0xf]
    %v3915 = vld [vmem:[%s3913 + $0x4] sm:$0xf]
    %v3916 = vld [vmem:[%s3913 + $0x8] sm:$0xf]
    %v3917 = vld [vmem:[%s3913 + $0xc] sm:$0xf]
    %v3918 = vld [vmem:[%s3913 + $0x10] sm:$0xf]
    %v3919 = vld [vmem:[%s3913 + $0x14] sm:$0xf]
    %v3920 = vld [vmem:[%s3913 + $0x18] sm:$0xf]
    %v3921 = vld [vmem:[%s3913 + $0x1c] sm:$0xf]
    %v3922 = vld [vmem:[%s3913 + $0x20] sm:$0xf]
    %v3923 = vld [vmem:[%s3913 + $0x24] sm:$0xf]
    %v3924 = vld [vmem:[%s3913 + $0x28] sm:$0xf]
    %v3925 = vld [vmem:[%s3913 + $0x2c] sm:$0xf]
    %v3926 = vld [vmem:[%s3913 + $0x30] sm:$0xf]
    %v3927 = vld [vmem:[%s3913 + $0x34] sm:$0xf]
    %v3928 = vld [vmem:[%s3913 + $0x38] sm:$0xf]
    %v3929 = vld [vmem:[%s3913 + $0x3c] sm:$0xf]
    %v3930 = vrot.slane %v1973, 2
    %v3948 = vunpack.c.l.b16 %v3914
    %v3949 = vunpack.c.l.b16 %v3915
    %v3950 = vunpack.c.l.b16 %v3916
    %v3951 = vunpack.c.l.b16 %v3917
    %v3952 = vunpack.c.l.b16 %v3918
    %v3953 = vunpack.c.l.b16 %v3919
    %v3954 = vunpack.c.l.b16 %v3920
    %v3955 = vunpack.c.l.b16 %v3921
    %v3956 = vunpack.c.l.b16 %v3922
    %v3957 = vunpack.c.l.b16 %v3923
    %v3958 = vunpack.c.l.b16 %v3924
    %v3959 = vunpack.c.l.b16 %v3925
    %v3960 = vunpack.c.l.b16 %v3926
    %v3961 = vunpack.c.l.b16 %v3927
    %v3962 = vunpack.c.l.b16 %v3928
    %v3963 = vunpack.c.l.b16 %v3929
    %v3964 = vpack.c.b16 %v3949, %v3948
    %v3965 = vpack.c.b16 %v3951, %v3950
    %v3966 = vpack.c.b16 %v3953, %v3952
    %v3967 = vpack.c.b16 %v3955, %v3954
    %v3968 = vpack.c.b16 %v3957, %v3956
    %v3969 = vpack.c.b16 %v3959, %v3958
    %v3970 = vpack.c.b16 %v3961, %v3960
    %v3971 = vpack.c.b16 %v3963, %v3962
    %3980 = vmatprep.subr.bf16.mxu0 0
    %3981 = vmatpush1.bf16.msra.mxu0 %v3971
    %3982 = vmatprep.subr.bf16.mxu0 0
    %3983 = vmatpush1.bf16.msra.mxu0 %v3970
    %3984 = vmatprep.subr.bf16.mxu0 0
    %3985 = vmatpush1.bf16.msra.mxu0 %v3969
    %3986 = vmatprep.subr.bf16.mxu0 0
    %3987 = vmatpush1.bf16.msra.mxu0 %v3968
    %3988 = vmatprep.subr.bf16.mxu0 0
    %3989 = vmatpush1.bf16.msra.mxu0 %v3967
    %3990 = vmatprep.subr.bf16.mxu0 0
    %3991 = vmatpush1.bf16.msra.mxu0 %v3966
    %3992 = vmatprep.subr.bf16.mxu0 0
    %3993 = vmatpush1.bf16.msra.mxu0 %v3965
    %3994 = vmatprep.subr.bf16.mxu0 0
    %3995 = vmatpush1.bf16.msra.mxu0 %v3964
    %3996 = vmatprep.subr.bf16.mxu0 0
    %3997 = vmatpush2.bf16.msra.mxu0 0
    %3998 = vmatprep.subr.bf16.mxu0 0
    %3999 = vmatpush2.bf16.msra.mxu0 0
    %4000 = vmatprep.subr.bf16.mxu0 0
    %4001 = vmatpush2.bf16.msra.mxu0 0
    %4002 = vmatprep.subr.bf16.mxu0 0
    %4003 = vmatpush2.bf16.msra.mxu0 0
    %4004 = vmatprep.subr.bf16.mxu0 0
    %4005 = vmatpush2.bf16.msra.mxu0 0
    %4006 = vmatprep.subr.bf16.mxu0 0
    %4007 = vmatpush2.bf16.msra.mxu0 0
    %4008 = vmatprep.subr.bf16.mxu0 0
    %4009 = vmatpush2.bf16.msra.mxu0 0
    %4010 = vmatprep.subr.bf16.mxu0 0
    %4011 = vmatpush2.bf16.msra.mxu0 0
    %4012 = vmatprep.mubr.bf16.mxu0 0
    %4013 = vmatmul.mubr.bf16.gmra.mxu0 %v3930
    %v4014 = vpop.f32.mrf.mxu0
    %v4015 = vadd.f32 0.0, %v4014
    %v4016 = vpop.f32.mrf.mxu0
    %v4017 = vpop.f32.mrf.mxu0
    %v4018 = vpop.f32.mrf.mxu0
    %4019 = vdwg.mxu0
    %v4020 = vadd.f32 %v3912, %v4015
    %s4021 = scalar_lea.vmem %s2, 1216
    %v4022 = vld [vmem:[%s4021] sm:$0xf]
    %v4023 = vld [vmem:[%s4021 + $0x4] sm:$0xf]
    %v4024 = vld [vmem:[%s4021 + $0x8] sm:$0xf]
    %v4025 = vld [vmem:[%s4021 + $0xc] sm:$0xf]
    %v4026 = vld [vmem:[%s4021 + $0x10] sm:$0xf]
    %v4027 = vld [vmem:[%s4021 + $0x14] sm:$0xf]
    %v4028 = vld [vmem:[%s4021 + $0x18] sm:$0xf]
    %v4029 = vld [vmem:[%s4021 + $0x1c] sm:$0xf]
    %v4030 = vld [vmem:[%s4021 + $0x20] sm:$0xf]
    %v4031 = vld [vmem:[%s4021 + $0x24] sm:$0xf]
    %v4032 = vld [vmem:[%s4021 + $0x28] sm:$0xf]
    %v4033 = vld [vmem:[%s4021 + $0x2c] sm:$0xf]
    %v4034 = vld [vmem:[%s4021 + $0x30] sm:$0xf]
    %v4035 = vld [vmem:[%s4021 + $0x34] sm:$0xf]
    %v4036 = vld [vmem:[%s4021 + $0x38] sm:$0xf]
    %v4037 = vld [vmem:[%s4021 + $0x3c] sm:$0xf]
    %v4038 = vrot.slane %v1973, 3
    %v4056 = vunpack.c.l.b16 %v4022
    %v4057 = vunpack.c.l.b16 %v4023
    %v4058 = vunpack.c.l.b16 %v4024
    %v4059 = vunpack.c.l.b16 %v4025
    %v4060 = vunpack.c.l.b16 %v4026
    %v4061 = vunpack.c.l.b16 %v4027
    %v4062 = vunpack.c.l.b16 %v4028
    %v4063 = vunpack.c.l.b16 %v4029
    %v4064 = vunpack.c.l.b16 %v4030
    %v4065 = vunpack.c.l.b16 %v4031
    %v4066 = vunpack.c.l.b16 %v4032
    %v4067 = vunpack.c.l.b16 %v4033
    %v4068 = vunpack.c.l.b16 %v4034
    %v4069 = vunpack.c.l.b16 %v4035
    %v4070 = vunpack.c.l.b16 %v4036
    %v4071 = vunpack.c.l.b16 %v4037
    %v4072 = vpack.c.b16 %v4057, %v4056
    %v4073 = vpack.c.b16 %v4059, %v4058
    %v4074 = vpack.c.b16 %v4061, %v4060
    %v4075 = vpack.c.b16 %v4063, %v4062
    %v4076 = vpack.c.b16 %v4065, %v4064
    %v4077 = vpack.c.b16 %v4067, %v4066
    %v4078 = vpack.c.b16 %v4069, %v4068
    %v4079 = vpack.c.b16 %v4071, %v4070
    %4088 = vmatprep.subr.bf16.mxu0 0
    %4089 = vmatpush1.bf16.msra.mxu0 %v4079
    %4090 = vmatprep.subr.bf16.mxu0 0
    %4091 = vmatpush1.bf16.msra.mxu0 %v4078
    %4092 = vmatprep.subr.bf16.mxu0 0
    %4093 = vmatpush1.bf16.msra.mxu0 %v4077
    %4094 = vmatprep.subr.bf16.mxu0 0
    %4095 = vmatpush1.bf16.msra.mxu0 %v4076
    %4096 = vmatprep.subr.bf16.mxu0 0
    %4097 = vmatpush1.bf16.msra.mxu0 %v4075
    %4098 = vmatprep.subr.bf16.mxu0 0
    %4099 = vmatpush1.bf16.msra.mxu0 %v4074
    %4100 = vmatprep.subr.bf16.mxu0 0
    %4101 = vmatpush1.bf16.msra.mxu0 %v4073
    %4102 = vmatprep.subr.bf16.mxu0 0
    %4103 = vmatpush1.bf16.msra.mxu0 %v4072
    %4104 = vmatprep.subr.bf16.mxu0 0
    %4105 = vmatpush2.bf16.msra.mxu0 0
    %4106 = vmatprep.subr.bf16.mxu0 0
    %4107 = vmatpush2.bf16.msra.mxu0 0
    %4108 = vmatprep.subr.bf16.mxu0 0
    %4109 = vmatpush2.bf16.msra.mxu0 0
    %4110 = vmatprep.subr.bf16.mxu0 0
    %4111 = vmatpush2.bf16.msra.mxu0 0
    %4112 = vmatprep.subr.bf16.mxu0 0
    %4113 = vmatpush2.bf16.msra.mxu0 0
    %4114 = vmatprep.subr.bf16.mxu0 0
    %4115 = vmatpush2.bf16.msra.mxu0 0
    %4116 = vmatprep.subr.bf16.mxu0 0
    %4117 = vmatpush2.bf16.msra.mxu0 0
    %4118 = vmatprep.subr.bf16.mxu0 0
    %4119 = vmatpush2.bf16.msra.mxu0 0
    %4120 = vmatprep.mubr.bf16.mxu0 0
    %4121 = vmatmul.mubr.bf16.gmra.mxu0 %v4038
    %v4122 = vpop.f32.mrf.mxu0
    %v4123 = vadd.f32 0.0, %v4122
    %v4124 = vpop.f32.mrf.mxu0
    %v4125 = vpop.f32.mrf.mxu0
    %v4126 = vpop.f32.mrf.mxu0
    %4127 = vdwg.mxu0
    %v4128 = vadd.f32 %v4020, %v4123
    %s4129 = scalar_lea.vmem %s2, 1280
    %v4130 = vld [vmem:[%s4129] sm:$0xf]
    %v4131 = vld [vmem:[%s4129 + $0x4] sm:$0xf]
    %v4132 = vld [vmem:[%s4129 + $0x8] sm:$0xf]
    %v4133 = vld [vmem:[%s4129 + $0xc] sm:$0xf]
    %v4134 = vld [vmem:[%s4129 + $0x10] sm:$0xf]
    %v4135 = vld [vmem:[%s4129 + $0x14] sm:$0xf]
    %v4136 = vld [vmem:[%s4129 + $0x18] sm:$0xf]
    %v4137 = vld [vmem:[%s4129 + $0x1c] sm:$0xf]
    %v4138 = vld [vmem:[%s4129 + $0x20] sm:$0xf]
    %v4139 = vld [vmem:[%s4129 + $0x24] sm:$0xf]
    %v4140 = vld [vmem:[%s4129 + $0x28] sm:$0xf]
    %v4141 = vld [vmem:[%s4129 + $0x2c] sm:$0xf]
    %v4142 = vld [vmem:[%s4129 + $0x30] sm:$0xf]
    %v4143 = vld [vmem:[%s4129 + $0x34] sm:$0xf]
    %v4144 = vld [vmem:[%s4129 + $0x38] sm:$0xf]
    %v4145 = vld [vmem:[%s4129 + $0x3c] sm:$0xf]
    %v4146 = vrot.slane %v1973, 4
    %v4164 = vunpack.c.l.b16 %v4130
    %v4165 = vunpack.c.l.b16 %v4131
    %v4166 = vunpack.c.l.b16 %v4132
    %v4167 = vunpack.c.l.b16 %v4133
    %v4168 = vunpack.c.l.b16 %v4134
    %v4169 = vunpack.c.l.b16 %v4135
    %v4170 = vunpack.c.l.b16 %v4136
    %v4171 = vunpack.c.l.b16 %v4137
    %v4172 = vunpack.c.l.b16 %v4138
    %v4173 = vunpack.c.l.b16 %v4139
    %v4174 = vunpack.c.l.b16 %v4140
    %v4175 = vunpack.c.l.b16 %v4141
    %v4176 = vunpack.c.l.b16 %v4142
    %v4177 = vunpack.c.l.b16 %v4143
    %v4178 = vunpack.c.l.b16 %v4144
    %v4179 = vunpack.c.l.b16 %v4145
    %v4180 = vpack.c.b16 %v4165, %v4164
    %v4181 = vpack.c.b16 %v4167, %v4166
    %v4182 = vpack.c.b16 %v4169, %v4168
    %v4183 = vpack.c.b16 %v4171, %v4170
    %v4184 = vpack.c.b16 %v4173, %v4172
    %v4185 = vpack.c.b16 %v4175, %v4174
    %v4186 = vpack.c.b16 %v4177, %v4176
    %v4187 = vpack.c.b16 %v4179, %v4178
    %4196 = vmatprep.subr.bf16.mxu0 0
    %4197 = vmatpush1.bf16.msra.mxu0 %v4187
    %4198 = vmatprep.subr.bf16.mxu0 0
    %4199 = vmatpush1.bf16.msra.mxu0 %v4186
    %4200 = vmatprep.subr.bf16.mxu0 0
    %4201 = vmatpush1.bf16.msra.mxu0 %v4185
    %4202 = vmatprep.subr.bf16.mxu0 0
    %4203 = vmatpush1.bf16.msra.mxu0 %v4184
    %4204 = vmatprep.subr.bf16.mxu0 0
    %4205 = vmatpush1.bf16.msra.mxu0 %v4183
    %4206 = vmatprep.subr.bf16.mxu0 0
    %4207 = vmatpush1.bf16.msra.mxu0 %v4182
    %4208 = vmatprep.subr.bf16.mxu0 0
    %4209 = vmatpush1.bf16.msra.mxu0 %v4181
    %4210 = vmatprep.subr.bf16.mxu0 0
    %4211 = vmatpush1.bf16.msra.mxu0 %v4180
    %4212 = vmatprep.subr.bf16.mxu0 0
    %4213 = vmatpush2.bf16.msra.mxu0 0
    %4214 = vmatprep.subr.bf16.mxu0 0
    %4215 = vmatpush2.bf16.msra.mxu0 0
    %4216 = vmatprep.subr.bf16.mxu0 0
    %4217 = vmatpush2.bf16.msra.mxu0 0
    %4218 = vmatprep.subr.bf16.mxu0 0
    %4219 = vmatpush2.bf16.msra.mxu0 0
    %4220 = vmatprep.subr.bf16.mxu0 0
    %4221 = vmatpush2.bf16.msra.mxu0 0
    %4222 = vmatprep.subr.bf16.mxu0 0
    %4223 = vmatpush2.bf16.msra.mxu0 0
    %4224 = vmatprep.subr.bf16.mxu0 0
    %4225 = vmatpush2.bf16.msra.mxu0 0
    %4226 = vmatprep.subr.bf16.mxu0 0
    %4227 = vmatpush2.bf16.msra.mxu0 0
    %4228 = vmatprep.mubr.bf16.mxu0 0
    %4229 = vmatmul.mubr.bf16.gmra.mxu0 %v4146
    %v4230 = vpop.f32.mrf.mxu0
    %v4231 = vadd.f32 0.0, %v4230
    %v4232 = vpop.f32.mrf.mxu0
    %v4233 = vpop.f32.mrf.mxu0
    %v4234 = vpop.f32.mrf.mxu0
    %4235 = vdwg.mxu0
    %v4236 = vadd.f32 %v4128, %v4231
    %s4237 = scalar_lea.vmem %s2, 1344
    %v4238 = vld [vmem:[%s4237] sm:$0xf]
    %v4239 = vld [vmem:[%s4237 + $0x4] sm:$0xf]
    %v4240 = vld [vmem:[%s4237 + $0x8] sm:$0xf]
    %v4241 = vld [vmem:[%s4237 + $0xc] sm:$0xf]
    %v4242 = vld [vmem:[%s4237 + $0x10] sm:$0xf]
    %v4243 = vld [vmem:[%s4237 + $0x14] sm:$0xf]
    %v4244 = vld [vmem:[%s4237 + $0x18] sm:$0xf]
    %v4245 = vld [vmem:[%s4237 + $0x1c] sm:$0xf]
    %v4246 = vld [vmem:[%s4237 + $0x20] sm:$0xf]
    %v4247 = vld [vmem:[%s4237 + $0x24] sm:$0xf]
    %v4248 = vld [vmem:[%s4237 + $0x28] sm:$0xf]
    %v4249 = vld [vmem:[%s4237 + $0x2c] sm:$0xf]
    %v4250 = vld [vmem:[%s4237 + $0x30] sm:$0xf]
    %v4251 = vld [vmem:[%s4237 + $0x34] sm:$0xf]
    %v4252 = vld [vmem:[%s4237 + $0x38] sm:$0xf]
    %v4253 = vld [vmem:[%s4237 + $0x3c] sm:$0xf]
    %v4254 = vrot.slane %v1973, 5
    %v4272 = vunpack.c.l.b16 %v4238
    %v4273 = vunpack.c.l.b16 %v4239
    %v4274 = vunpack.c.l.b16 %v4240
    %v4275 = vunpack.c.l.b16 %v4241
    %v4276 = vunpack.c.l.b16 %v4242
    %v4277 = vunpack.c.l.b16 %v4243
    %v4278 = vunpack.c.l.b16 %v4244
    %v4279 = vunpack.c.l.b16 %v4245
    %v4280 = vunpack.c.l.b16 %v4246
    %v4281 = vunpack.c.l.b16 %v4247
    %v4282 = vunpack.c.l.b16 %v4248
    %v4283 = vunpack.c.l.b16 %v4249
    %v4284 = vunpack.c.l.b16 %v4250
    %v4285 = vunpack.c.l.b16 %v4251
    %v4286 = vunpack.c.l.b16 %v4252
    %v4287 = vunpack.c.l.b16 %v4253
    %v4288 = vpack.c.b16 %v4273, %v4272
    %v4289 = vpack.c.b16 %v4275, %v4274
    %v4290 = vpack.c.b16 %v4277, %v4276
    %v4291 = vpack.c.b16 %v4279, %v4278
    %v4292 = vpack.c.b16 %v4281, %v4280
    %v4293 = vpack.c.b16 %v4283, %v4282
    %v4294 = vpack.c.b16 %v4285, %v4284
    %v4295 = vpack.c.b16 %v4287, %v4286
    %4304 = vmatprep.subr.bf16.mxu0 0
    %4305 = vmatpush1.bf16.msra.mxu0 %v4295
    %4306 = vmatprep.subr.bf16.mxu0 0
    %4307 = vmatpush1.bf16.msra.mxu0 %v4294
    %4308 = vmatprep.subr.bf16.mxu0 0
    %4309 = vmatpush1.bf16.msra.mxu0 %v4293
    %4310 = vmatprep.subr.bf16.mxu0 0
    %4311 = vmatpush1.bf16.msra.mxu0 %v4292
    %4312 = vmatprep.subr.bf16.mxu0 0
    %4313 = vmatpush1.bf16.msra.mxu0 %v4291
    %4314 = vmatprep.subr.bf16.mxu0 0
    %4315 = vmatpush1.bf16.msra.mxu0 %v4290
    %4316 = vmatprep.subr.bf16.mxu0 0
    %4317 = vmatpush1.bf16.msra.mxu0 %v4289
    %4318 = vmatprep.subr.bf16.mxu0 0
    %4319 = vmatpush1.bf16.msra.mxu0 %v4288
    %4320 = vmatprep.subr.bf16.mxu0 0
    %4321 = vmatpush2.bf16.msra.mxu0 0
    %4322 = vmatprep.subr.bf16.mxu0 0
    %4323 = vmatpush2.bf16.msra.mxu0 0
    %4324 = vmatprep.subr.bf16.mxu0 0
    %4325 = vmatpush2.bf16.msra.mxu0 0
    %4326 = vmatprep.subr.bf16.mxu0 0
    %4327 = vmatpush2.bf16.msra.mxu0 0
    %4328 = vmatprep.subr.bf16.mxu0 0
    %4329 = vmatpush2.bf16.msra.mxu0 0
    %4330 = vmatprep.subr.bf16.mxu0 0
    %4331 = vmatpush2.bf16.msra.mxu0 0
    %4332 = vmatprep.subr.bf16.mxu0 0
    %4333 = vmatpush2.bf16.msra.mxu0 0
    %4334 = vmatprep.subr.bf16.mxu0 0
    %4335 = vmatpush2.bf16.msra.mxu0 0
    %4336 = vmatprep.mubr.bf16.mxu0 0
    %4337 = vmatmul.mubr.bf16.gmra.mxu0 %v4254
    %v4338 = vpop.f32.mrf.mxu0
    %v4339 = vadd.f32 0.0, %v4338
    %v4340 = vpop.f32.mrf.mxu0
    %v4341 = vpop.f32.mrf.mxu0
    %v4342 = vpop.f32.mrf.mxu0
    %4343 = vdwg.mxu0
    %v4344 = vadd.f32 %v4236, %v4339
    %s4345 = scalar_lea.vmem %s2, 1408
    %v4346 = vld [vmem:[%s4345] sm:$0xf]
    %v4347 = vld [vmem:[%s4345 + $0x4] sm:$0xf]
    %v4348 = vld [vmem:[%s4345 + $0x8] sm:$0xf]
    %v4349 = vld [vmem:[%s4345 + $0xc] sm:$0xf]
    %v4350 = vld [vmem:[%s4345 + $0x10] sm:$0xf]
    %v4351 = vld [vmem:[%s4345 + $0x14] sm:$0xf]
    %v4352 = vld [vmem:[%s4345 + $0x18] sm:$0xf]
    %v4353 = vld [vmem:[%s4345 + $0x1c] sm:$0xf]
    %v4354 = vld [vmem:[%s4345 + $0x20] sm:$0xf]
    %v4355 = vld [vmem:[%s4345 + $0x24] sm:$0xf]
    %v4356 = vld [vmem:[%s4345 + $0x28] sm:$0xf]
    %v4357 = vld [vmem:[%s4345 + $0x2c] sm:$0xf]
    %v4358 = vld [vmem:[%s4345 + $0x30] sm:$0xf]
    %v4359 = vld [vmem:[%s4345 + $0x34] sm:$0xf]
    %v4360 = vld [vmem:[%s4345 + $0x38] sm:$0xf]
    %v4361 = vld [vmem:[%s4345 + $0x3c] sm:$0xf]
    %v4362 = vrot.slane %v1973, 6
    %v4380 = vunpack.c.l.b16 %v4346
    %v4381 = vunpack.c.l.b16 %v4347
    %v4382 = vunpack.c.l.b16 %v4348
    %v4383 = vunpack.c.l.b16 %v4349
    %v4384 = vunpack.c.l.b16 %v4350
    %v4385 = vunpack.c.l.b16 %v4351
    %v4386 = vunpack.c.l.b16 %v4352
    %v4387 = vunpack.c.l.b16 %v4353
    %v4388 = vunpack.c.l.b16 %v4354
    %v4389 = vunpack.c.l.b16 %v4355
    %v4390 = vunpack.c.l.b16 %v4356
    %v4391 = vunpack.c.l.b16 %v4357
    %v4392 = vunpack.c.l.b16 %v4358
    %v4393 = vunpack.c.l.b16 %v4359
    %v4394 = vunpack.c.l.b16 %v4360
    %v4395 = vunpack.c.l.b16 %v4361
    %v4396 = vpack.c.b16 %v4381, %v4380
    %v4397 = vpack.c.b16 %v4383, %v4382
    %v4398 = vpack.c.b16 %v4385, %v4384
    %v4399 = vpack.c.b16 %v4387, %v4386
    %v4400 = vpack.c.b16 %v4389, %v4388
    %v4401 = vpack.c.b16 %v4391, %v4390
    %v4402 = vpack.c.b16 %v4393, %v4392
    %v4403 = vpack.c.b16 %v4395, %v4394
    %4412 = vmatprep.subr.bf16.mxu0 0
    %4413 = vmatpush1.bf16.msra.mxu0 %v4403
    %4414 = vmatprep.subr.bf16.mxu0 0
    %4415 = vmatpush1.bf16.msra.mxu0 %v4402
    %4416 = vmatprep.subr.bf16.mxu0 0
    %4417 = vmatpush1.bf16.msra.mxu0 %v4401
    %4418 = vmatprep.subr.bf16.mxu0 0
    %4419 = vmatpush1.bf16.msra.mxu0 %v4400
    %4420 = vmatprep.subr.bf16.mxu0 0
    %4421 = vmatpush1.bf16.msra.mxu0 %v4399
    %4422 = vmatprep.subr.bf16.mxu0 0
    %4423 = vmatpush1.bf16.msra.mxu0 %v4398
    %4424 = vmatprep.subr.bf16.mxu0 0
    %4425 = vmatpush1.bf16.msra.mxu0 %v4397
    %4426 = vmatprep.subr.bf16.mxu0 0
    %4427 = vmatpush1.bf16.msra.mxu0 %v4396
    %4428 = vmatprep.subr.bf16.mxu0 0
    %4429 = vmatpush2.bf16.msra.mxu0 0
    %4430 = vmatprep.subr.bf16.mxu0 0
    %4431 = vmatpush2.bf16.msra.mxu0 0
    %4432 = vmatprep.subr.bf16.mxu0 0
    %4433 = vmatpush2.bf16.msra.mxu0 0
    %4434 = vmatprep.subr.bf16.mxu0 0
    %4435 = vmatpush2.bf16.msra.mxu0 0
    %4436 = vmatprep.subr.bf16.mxu0 0
    %4437 = vmatpush2.bf16.msra.mxu0 0
    %4438 = vmatprep.subr.bf16.mxu0 0
    %4439 = vmatpush2.bf16.msra.mxu0 0
    %4440 = vmatprep.subr.bf16.mxu0 0
    %4441 = vmatpush2.bf16.msra.mxu0 0
    %4442 = vmatprep.subr.bf16.mxu0 0
    %4443 = vmatpush2.bf16.msra.mxu0 0
    %4444 = vmatprep.mubr.bf16.mxu0 0
    %4445 = vmatmul.mubr.bf16.gmra.mxu0 %v4362
    %v4446 = vpop.f32.mrf.mxu0
    %v4447 = vadd.f32 0.0, %v4446
    %v4448 = vpop.f32.mrf.mxu0
    %v4449 = vpop.f32.mrf.mxu0
    %v4450 = vpop.f32.mrf.mxu0
    %4451 = vdwg.mxu0
    %v4452 = vadd.f32 %v4344, %v4447
    %s4453 = scalar_lea.vmem %s2, 1472
    %v4454 = vld [vmem:[%s4453] sm:$0xf]
    %v4455 = vld [vmem:[%s4453 + $0x4] sm:$0xf]
    %v4456 = vld [vmem:[%s4453 + $0x8] sm:$0xf]
    %v4457 = vld [vmem:[%s4453 + $0xc] sm:$0xf]
    %v4458 = vld [vmem:[%s4453 + $0x10] sm:$0xf]
    %v4459 = vld [vmem:[%s4453 + $0x14] sm:$0xf]
    %v4460 = vld [vmem:[%s4453 + $0x18] sm:$0xf]
    %v4461 = vld [vmem:[%s4453 + $0x1c] sm:$0xf]
    %v4462 = vld [vmem:[%s4453 + $0x20] sm:$0xf]
    %v4463 = vld [vmem:[%s4453 + $0x24] sm:$0xf]
    %v4464 = vld [vmem:[%s4453 + $0x28] sm:$0xf]
    %v4465 = vld [vmem:[%s4453 + $0x2c] sm:$0xf]
    %v4466 = vld [vmem:[%s4453 + $0x30] sm:$0xf]
    %v4467 = vld [vmem:[%s4453 + $0x34] sm:$0xf]
    %v4468 = vld [vmem:[%s4453 + $0x38] sm:$0xf]
    %v4469 = vld [vmem:[%s4453 + $0x3c] sm:$0xf]
    %v4470 = vrot.slane %v1973, 7
    %v4488 = vunpack.c.l.b16 %v4454
    %v4489 = vunpack.c.l.b16 %v4455
    %v4490 = vunpack.c.l.b16 %v4456
    %v4491 = vunpack.c.l.b16 %v4457
    %v4492 = vunpack.c.l.b16 %v4458
    %v4493 = vunpack.c.l.b16 %v4459
    %v4494 = vunpack.c.l.b16 %v4460
    %v4495 = vunpack.c.l.b16 %v4461
    %v4496 = vunpack.c.l.b16 %v4462
    %v4497 = vunpack.c.l.b16 %v4463
    %v4498 = vunpack.c.l.b16 %v4464
    %v4499 = vunpack.c.l.b16 %v4465
    %v4500 = vunpack.c.l.b16 %v4466
    %v4501 = vunpack.c.l.b16 %v4467
    %v4502 = vunpack.c.l.b16 %v4468
    %v4503 = vunpack.c.l.b16 %v4469
    %v4504 = vpack.c.b16 %v4489, %v4488
    %v4505 = vpack.c.b16 %v4491, %v4490
    %v4506 = vpack.c.b16 %v4493, %v4492
    %v4507 = vpack.c.b16 %v4495, %v4494
    %v4508 = vpack.c.b16 %v4497, %v4496
    %v4509 = vpack.c.b16 %v4499, %v4498
    %v4510 = vpack.c.b16 %v4501, %v4500
    %v4511 = vpack.c.b16 %v4503, %v4502
    %4520 = vmatprep.subr.bf16.mxu0 0
    %4521 = vmatpush1.bf16.msra.mxu0 %v4511
    %4522 = vmatprep.subr.bf16.mxu0 0
    %4523 = vmatpush1.bf16.msra.mxu0 %v4510
    %4524 = vmatprep.subr.bf16.mxu0 0
    %4525 = vmatpush1.bf16.msra.mxu0 %v4509
    %4526 = vmatprep.subr.bf16.mxu0 0
    %4527 = vmatpush1.bf16.msra.mxu0 %v4508
    %4528 = vmatprep.subr.bf16.mxu0 0
    %4529 = vmatpush1.bf16.msra.mxu0 %v4507
    %4530 = vmatprep.subr.bf16.mxu0 0
    %4531 = vmatpush1.bf16.msra.mxu0 %v4506
    %4532 = vmatprep.subr.bf16.mxu0 0
    %4533 = vmatpush1.bf16.msra.mxu0 %v4505
    %4534 = vmatprep.subr.bf16.mxu0 0
    %4535 = vmatpush1.bf16.msra.mxu0 %v4504
    %4536 = vmatprep.subr.bf16.mxu0 0
    %4537 = vmatpush2.bf16.msra.mxu0 0
    %4538 = vmatprep.subr.bf16.mxu0 0
    %4539 = vmatpush2.bf16.msra.mxu0 0
    %4540 = vmatprep.subr.bf16.mxu0 0
    %4541 = vmatpush2.bf16.msra.mxu0 0
    %4542 = vmatprep.subr.bf16.mxu0 0
    %4543 = vmatpush2.bf16.msra.mxu0 0
    %4544 = vmatprep.subr.bf16.mxu0 0
    %4545 = vmatpush2.bf16.msra.mxu0 0
    %4546 = vmatprep.subr.bf16.mxu0 0
    %4547 = vmatpush2.bf16.msra.mxu0 0
    %4548 = vmatprep.subr.bf16.mxu0 0
    %4549 = vmatpush2.bf16.msra.mxu0 0
    %4550 = vmatprep.subr.bf16.mxu0 0
    %4551 = vmatpush2.bf16.msra.mxu0 0
    %4552 = vmatprep.mubr.bf16.mxu0 0
    %4553 = vmatmul.mubr.bf16.gmra.mxu0 %v4470
    %v4554 = vpop.f32.mrf.mxu0
    %v4555 = vadd.f32 0.0, %v4554
    %v4556 = vpop.f32.mrf.mxu0
    %v4557 = vpop.f32.mrf.mxu0
    %v4558 = vpop.f32.mrf.mxu0
    %4559 = vdwg.mxu0
    %v4560 = vadd.f32 %v4452, %v4555
    %s4561 = scalar_lea.vmem %s2, 1536
    %v4562 = vld [vmem:[%s4561] sm:$0xf]
    %v4563 = vld [vmem:[%s4561 + $0x4] sm:$0xf]
    %v4564 = vld [vmem:[%s4561 + $0x8] sm:$0xf]
    %v4565 = vld [vmem:[%s4561 + $0xc] sm:$0xf]
    %v4566 = vld [vmem:[%s4561 + $0x10] sm:$0xf]
    %v4567 = vld [vmem:[%s4561 + $0x14] sm:$0xf]
    %v4568 = vld [vmem:[%s4561 + $0x18] sm:$0xf]
    %v4569 = vld [vmem:[%s4561 + $0x1c] sm:$0xf]
    %v4570 = vld [vmem:[%s4561 + $0x20] sm:$0xf]
    %v4571 = vld [vmem:[%s4561 + $0x24] sm:$0xf]
    %v4572 = vld [vmem:[%s4561 + $0x28] sm:$0xf]
    %v4573 = vld [vmem:[%s4561 + $0x2c] sm:$0xf]
    %v4574 = vld [vmem:[%s4561 + $0x30] sm:$0xf]
    %v4575 = vld [vmem:[%s4561 + $0x34] sm:$0xf]
    %v4576 = vld [vmem:[%s4561 + $0x38] sm:$0xf]
    %v4577 = vld [vmem:[%s4561 + $0x3c] sm:$0xf]
    %v4594 = vunpack.c.l.b16 %v4562
    %v4595 = vunpack.c.l.b16 %v4563
    %v4596 = vunpack.c.l.b16 %v4564
    %v4597 = vunpack.c.l.b16 %v4565
    %v4598 = vunpack.c.l.b16 %v4566
    %v4599 = vunpack.c.l.b16 %v4567
    %v4600 = vunpack.c.l.b16 %v4568
    %v4601 = vunpack.c.l.b16 %v4569
    %v4602 = vunpack.c.l.b16 %v4570
    %v4603 = vunpack.c.l.b16 %v4571
    %v4604 = vunpack.c.l.b16 %v4572
    %v4605 = vunpack.c.l.b16 %v4573
    %v4606 = vunpack.c.l.b16 %v4574
    %v4607 = vunpack.c.l.b16 %v4575
    %v4608 = vunpack.c.l.b16 %v4576
    %v4609 = vunpack.c.l.b16 %v4577
    %v4610 = vpack.c.b16 %v4595, %v4594
    %v4611 = vpack.c.b16 %v4597, %v4596
    %v4612 = vpack.c.b16 %v4599, %v4598
    %v4613 = vpack.c.b16 %v4601, %v4600
    %v4614 = vpack.c.b16 %v4603, %v4602
    %v4615 = vpack.c.b16 %v4605, %v4604
    %v4616 = vpack.c.b16 %v4607, %v4606
    %v4617 = vpack.c.b16 %v4609, %v4608
    %4626 = vmatprep.subr.bf16.mxu0 0
    %4627 = vmatpush1.bf16.msra.mxu0 %v4617
    %4628 = vmatprep.subr.bf16.mxu0 0
    %4629 = vmatpush1.bf16.msra.mxu0 %v4616
    %4630 = vmatprep.subr.bf16.mxu0 0
    %4631 = vmatpush1.bf16.msra.mxu0 %v4615
    %4632 = vmatprep.subr.bf16.mxu0 0
    %4633 = vmatpush1.bf16.msra.mxu0 %v4614
    %4634 = vmatprep.subr.bf16.mxu0 0
    %4635 = vmatpush1.bf16.msra.mxu0 %v4613
    %4636 = vmatprep.subr.bf16.mxu0 0
    %4637 = vmatpush1.bf16.msra.mxu0 %v4612
    %4638 = vmatprep.subr.bf16.mxu0 0
    %4639 = vmatpush1.bf16.msra.mxu0 %v4611
    %4640 = vmatprep.subr.bf16.mxu0 0
    %4641 = vmatpush1.bf16.msra.mxu0 %v4610
    %4642 = vmatprep.subr.bf16.mxu0 0
    %4643 = vmatpush2.bf16.msra.mxu0 0
    %4644 = vmatprep.subr.bf16.mxu0 0
    %4645 = vmatpush2.bf16.msra.mxu0 0
    %4646 = vmatprep.subr.bf16.mxu0 0
    %4647 = vmatpush2.bf16.msra.mxu0 0
    %4648 = vmatprep.subr.bf16.mxu0 0
    %4649 = vmatpush2.bf16.msra.mxu0 0
    %4650 = vmatprep.subr.bf16.mxu0 0
    %4651 = vmatpush2.bf16.msra.mxu0 0
    %4652 = vmatprep.subr.bf16.mxu0 0
    %4653 = vmatpush2.bf16.msra.mxu0 0
    %4654 = vmatprep.subr.bf16.mxu0 0
    %4655 = vmatpush2.bf16.msra.mxu0 0
    %4656 = vmatprep.subr.bf16.mxu0 0
    %4657 = vmatpush2.bf16.msra.mxu0 0
    %4658 = vmatprep.mubr.bf16.mxu0 0
    %4659 = vmatmul.mubr.bf16.gmra.mxu0 %v1974
    %v4660 = vpop.f32.mrf.mxu0
    %v4661 = vadd.f32 0.0, %v4660
    %v4662 = vpop.f32.mrf.mxu0
    %v4663 = vpop.f32.mrf.mxu0
    %v4664 = vpop.f32.mrf.mxu0
    %4665 = vdwg.mxu0
    %v4666 = vadd.f32 %v4560, %v4661
    %v4667 = vld [vmem:[%s3] sm:$0x1]
    %v4669 = vlaneseq
    %v4670 = vshrl.u32 %v4669, 7
    %v4671 = vsub.s32 0, %v4670
    %v4672 = vrot.slane %v4667, %v4671
    %v4674 = vadd.f32 %v4666, %v4672
    %4675 = vst [vmem:[#allocation2] sm:$0x3] %v4674
    // Predicated region
    $region18: #{student_net9_forward.3} parent=1 // pred_check
      _
    $region19: #{student_net9_forward.3} parent=1 // pred_check_branch
      %4677 = sbr.rel (0) target = $region21
    $region20: #{student_net9_forward.3} parent=1 // pred_region
      %s4679 = ssub.s32 32, 32
      %4680 = vsyncadd [#allocation3], %s4679
      %s4682 = sshll.u32 [#allocation2], 4
      %s4683 = int_to_ptr.vmem [resolvable:$true] %s4682
      %4685 = dma.vmem_to_hbm [thread:$0]  %s4683, 32, %s4, [#allocation3]
    $region21: #{student_net9_forward.3} parent=1 // pred_fallthru
      _
    // Predicated region
    $region22: #{student_net9_forward.3} parent=1 // pred_check
      _
    $region23: #{student_net9_forward.3} parent=1 // pred_check_branch
      %4687 = sbr.rel (0) target = $region25
    $region24: #{student_net9_forward.3} parent=1 // pred_region
      %4688 = dma.done [#allocation3], 32
    $region25: #{student_net9_forward.3} parent=1 // pred_fallthru
      _
    %4689 = vsyncpa [#allocation3], 1

</llo_original>
